<compile_context>
chip_gen: v7x
topology: tpu7x:2x2x1
jax: 0.10.0
libtpu: 0.0.40
codegen_flags: <defaults>
</compile_context>

<pallas_src>
import functools

import numpy as np
import jax
import jax.numpy as jnp
from jax.experimental import pallas as pl
from jax.experimental.pallas import tpu as pltpu

PSP_SIZES = (1, 3, 7, 11)   # 1 + 9 + 49 + 121 = 180 bins
S_REAL = sum(s * s for s in PSP_SIZES)    # 180
S_PAD = 256                               # lane/MXU-friendly padded bin axis
THW = 256                                 # per-sample spatial tile (and hw padding unit)


# ----------------------------------------------------------------------------
# Trace-time constant builders (numpy -> jnp constants)
# ----------------------------------------------------------------------------
def _round_up(x, m):
    return (x + m - 1) // m * m


def _interp_matrix(out_size, in_size):
    """1-D matrix of F.interpolate(mode='bilinear', align_corners=True)."""
    if out_size == 1 or in_size == 1:
        m = np.zeros((out_size, in_size), np.float32)
        m[:, 0] = 1.0
        return jnp.asarray(m)
    d = np.arange(out_size, dtype=np.float64)
    src = d * (in_size - 1) / (out_size - 1)
    i0 = np.clip(np.floor(src).astype(np.int64), 0, in_size - 1)
    i1 = np.minimum(i0 + 1, in_size - 1)
    w1 = src - i0
    m = np.zeros((out_size, in_size), np.float64)
    m[np.arange(out_size), i0] += 1.0 - w1
    m[np.arange(out_size), i1] += w1
    return jnp.asarray(m, dtype=jnp.float32)


def _adaptive_pool_matrix_1d(out_size, in_size):
    """1-D AdaptiveAvgPool matrix (PyTorch binning: floor/ceil edges)."""
    m = np.zeros((out_size, in_size), np.float32)
    for i in range(out_size):
        s = (i * in_size) // out_size
        e = -((-(i + 1) * in_size) // out_size)   # ceil((i+1)*in/out)
        m[i, s:e] = 1.0 / (e - s)
    return m


def _psp_matrix(h, w):
    """(180, h*w) pooling matrix: rows = concatenated PSP stages."""
    mats = [np.kron(_adaptive_pool_matrix_1d(s, h), _adaptive_pool_matrix_1d(s, w))
            for s in PSP_SIZES]
    return np.concatenate(mats, axis=0)


def _psp_matrix_padded(h, w, hw_pad):
    """(S_PAD, hw_pad) pooling matrix, zero-padded bins / spatial tail (bf16)."""
    p = _psp_matrix(h, w)
    out = np.zeros((S_PAD, hw_pad), np.float32)
    out[:p.shape[0], :p.shape[1]] = p
    return jnp.asarray(out, dtype=jnp.bfloat16)


def _bilinear_resize(x_nhwc, oh, ow):
    """F.interpolate(x, (oh, ow), mode='bilinear', align_corners=True), NHWC."""
    ih, iw = x_nhwc.shape[1], x_nhwc.shape[2]
    if (ih, iw) == (oh, ow):
        return x_nhwc
    ry = _interp_matrix(oh, ih)
    rx = _interp_matrix(ow, iw)
    return jnp.einsum('yi,xj,nijc->nyxc', ry, rx, x_nhwc)


def _divisor_tile(m, max_tile=1024, min_tile=256):
    """Largest power-of-two-ish tile <= max_tile that divides m (m % 256 == 0)."""
    assert m % min_tile == 0
    t = max_tile
    while t > min_tile and m % t:
        t //= 2
    return t


def _flat_tile(m, max_tile=512):
    """(tile, padded_rows) for an arbitrary flat row count m (tile % 8 == 0)."""
    tile = min(max_tile, _round_up(m, 8))
    return tile, _round_up(m, tile)


# ----------------------------------------------------------------------------
# Kernel 1: 1x1 conv (BN folded into W) + bias + ReLU, row-tiled -> bf16 out.
# ----------------------------------------------------------------------------
def _conv1x1_kernel(x_ref, w_ref, b_ref, o_ref):
    y = jnp.dot(x_ref[...], w_ref[...], preferred_element_type=jnp.float32)
    o_ref[...] = jnp.maximum(y + b_ref[...], 0.0).astype(o_ref.dtype)


def conv1x1_bn_relu(x_rows, w, b, tile):
    m, cin = x_rows.shape
    cout = w.shape[1]
    return pl.pallas_call(
        _conv1x1_kernel,
        out_shape=jax.ShapeDtypeStruct((m, cout), jnp.bfloat16),
        grid=(m // tile,),
        in_specs=[
            pl.BlockSpec((tile, cin), lambda i: (i, 0)),
            pl.BlockSpec((cin, cout), lambda i: (0, 0)),
            pl.BlockSpec((1, cout), lambda i: (0, 0)),
        ],
        out_specs=pl.BlockSpec((tile, cout), lambda i: (i, 0)),
        compiler_params=pltpu.CompilerParams(dimension_semantics=("parallel",)),
    )(x_rows, w.astype(jnp.bfloat16), b.reshape(1, cout).astype(jnp.float32))


# ----------------------------------------------------------------------------
# Kernel 2: conv_x4 (+BN+ReLU) fused with the conv_cmb slab matmul (@ wc4),
# run at stg4's NATIVE resolution (the product is bilinearly upsampled later).
# ----------------------------------------------------------------------------
def _conv1x1_then_mm_kernel(x_ref, w1_ref, b1_ref, w2_ref, o_ref):
    y = jnp.dot(x_ref[...], w1_ref[...], preferred_element_type=jnp.float32)
    y = jnp.maximum(y + b1_ref[...], 0.0)
    o_ref[...] = jnp.dot(y.astype(jnp.bfloat16), w2_ref[...],
                         preferred_element_type=jnp.float32).astype(o_ref.dtype)


def conv1x1_bn_relu_mm(x_rows, w1, b1, w2, tile):
    m, cin = x_rows.shape
    cmid = w1.shape[1]
    cout = w2.shape[1]
    return pl.pallas_call(
        _conv1x1_then_mm_kernel,
        out_shape=jax.ShapeDtypeStruct((m, cout), jnp.bfloat16),
        grid=(m // tile,),
        in_specs=[
            pl.BlockSpec((tile, cin), lambda i: (i, 0)),
            pl.BlockSpec((cin, cmid), lambda i: (0, 0)),
            pl.BlockSpec((1, cmid), lambda i: (0, 0)),
            pl.BlockSpec((cmid, cout), lambda i: (0, 0)),
        ],
        out_specs=pl.BlockSpec((tile, cout), lambda i: (i, 0)),
        compiler_params=pltpu.CompilerParams(dimension_semantics=("parallel",)),
    )(x_rows, w1.astype(jnp.bfloat16), b1.reshape(1, cmid).astype(jnp.float32),
      w2.astype(jnp.bfloat16))


# ----------------------------------------------------------------------------
# Kernel 3: conv_cmb fused with the channel concat.  The stg4 contribution
# already carries wc4 (computed at native res) and is just added on the VPU.
# ----------------------------------------------------------------------------
def _conv_cmb_kernel(x0_ref, x2_ref, s4_ref, w0_ref, w2_ref, b_ref, o_ref):
    acc = jnp.dot(x0_ref[...], w0_ref[...], preferred_element_type=jnp.float32)
    acc += jnp.dot(x2_ref[...], w2_ref[...], preferred_element_type=jnp.float32)
    acc += s4_ref[...].astype(jnp.float32)
    o_ref[...] = jnp.maximum(acc + b_ref[...], 0.0).astype(o_ref.dtype)


def conv_cmb_fused(x0, x2, s4, w0, w2, b, tile):
    m, c0 = x0.shape
    c2 = x2.shape[1]
    cmid = s4.shape[1]
    cout = w0.shape[1]
    return pl.pallas_call(
        _conv_cmb_kernel,
        out_shape=jax.ShapeDtypeStruct((m, cout), jnp.bfloat16),
        grid=(m // tile,),
        in_specs=[
            pl.BlockSpec((tile, c0), lambda i: (i, 0)),
            pl.BlockSpec((tile, c2), lambda i: (i, 0)),
            pl.BlockSpec((tile, cmid), lambda i: (i, 0)),
            pl.BlockSpec((c0, cout), lambda i: (0, 0)),
            pl.BlockSpec((c2, cout), lambda i: (0, 0)),
            pl.BlockSpec((1, cout), lambda i: (0, 0)),
        ],
        out_specs=pl.BlockSpec((tile, cout), lambda i: (i, 0)),
        compiler_params=pltpu.CompilerParams(dimension_semantics=("parallel",)),
    )(x0, x2, s4, w0.astype(jnp.bfloat16), w2.astype(jnp.bfloat16),
      b.reshape(1, cout).astype(jnp.float32))


# ----------------------------------------------------------------------------
# Kernel 4: PSP pooling of stgSum and relu(cam), tiled over HW with f32 VMEM
# accumulators; stgPool is emitted pre-scaled by c^-0.5, both pools in bf16.
# ----------------------------------------------------------------------------
def _psp_pool_kernel(scale, p_ref, stg_ref, cam_ref, sp_ref, cp_ref,
                     sp_acc, cp_acc):
    j = pl.program_id(1)

    @pl.when(j == 0)
    def _():
        sp_acc[...] = jnp.zeros_like(sp_acc)
        cp_acc[...] = jnp.zeros_like(cp_acc)

    p = p_ref[...]                                              # (S_PAD, thw) bf16
    sp_acc[...] += jnp.dot(p, stg_ref[0], preferred_element_type=jnp.float32)
    cam_d = jnp.maximum(cam_ref[0], 0)                          # relu(cam.detach())
    cp_acc[...] += jnp.dot(p, cam_d, preferred_element_type=jnp.float32)

    @pl.when(j == pl.num_programs(1) - 1)
    def _():
        sp_ref[0] = (sp_acc[...] * scale).astype(sp_ref.dtype)
        cp_ref[0] = cp_acc[...].astype(cp_ref.dtype)


def psp_pool(stg_sum, cam_rows, p_mat, scale):
    n, hw_pad, c = stg_sum.shape
    cc = cam_rows.shape[2]
    kernel = functools.partial(_psp_pool_kernel, scale)
    return pl.pallas_call(
        kernel,
        out_shape=(jax.ShapeDtypeStruct((n, S_PAD, c), jnp.bfloat16),
                   jax.ShapeDtypeStruct((n, S_PAD, cc), jnp.bfloat16)),
        grid=(n, hw_pad // THW),
        in_specs=[
            pl.BlockSpec((S_PAD, THW), lambda i, j: (0, j)),
            pl.BlockSpec((1, THW, c), lambda i, j: (i, j, 0)),
            pl.BlockSpec((1, THW, cc), lambda i, j: (i, j, 0)),
        ],
        out_specs=(pl.BlockSpec((1, S_PAD, c), lambda i, j: (i, 0, 0)),
                   pl.BlockSpec((1, S_PAD, cc), lambda i, j: (i, 0, 0))),
        scratch_shapes=[pltpu.VMEM((S_PAD, c), jnp.float32),
                        pltpu.VMEM((S_PAD, cc), jnp.float32)],
        compiler_params=pltpu.CompilerParams(
            dimension_semantics=("parallel", "arbitrary")),
    )(p_mat, stg_sum, cam_rows)


# ----------------------------------------------------------------------------
# Kernel 5: fused tail — affinity (pre-scaled pool) -> masked softmax ->
# cam_rv -> addCAM -> ReLU, written channel-major (n, C, HW): no wrapper
# transpose.  Padded PSP bins are masked to -1e30 before the softmax.
# ----------------------------------------------------------------------------
def _pcm_tail_kernel(s_real, stg_ref, cam_ref, sp_ref, cp_ref,
                     wa1_ref, wa2_ref, b_ref, o_ref):
    stg = stg_ref[0]                                            # (tm, C)  bf16
    sp = sp_ref[0]                                              # (S_PAD, C) bf16
    aff = jax.lax.dot_general(stg, sp, (((1,), (1,)), ((), ())),
                              preferred_element_type=jnp.float32)   # (tm, S_PAD)
    col = jax.lax.broadcasted_iota(jnp.int32, aff.shape, 1)
    aff = jnp.where(col < s_real, aff, -1e30)                   # mask padded bins
    m = jnp.max(aff, axis=-1, keepdims=True)
    e = jnp.exp(aff - m)
    p = e * pl.reciprocal(jnp.sum(e, axis=-1, keepdims=True), approx=True)
    cam_rv = jnp.dot(p.astype(jnp.bfloat16), cp_ref[0],
                     preferred_element_type=jnp.float32)        # (tm, Cc)
    out = jnp.dot(cam_ref[0], wa1_ref[...], preferred_element_type=jnp.float32)
    out += jnp.dot(cam_rv.astype(jnp.bfloat16), wa2_ref[...],
                   preferred_element_type=jnp.float32)
    out = jnp.maximum(out + b_ref[...], 0.0)                    # (tm, cout)
    o_ref[0] = out.T                                            # (cout, tm), XLU


def pcm_tail(stg_sum, cam_rows, stg_pool, cam_pool, wa1, wa2, ba):
    n, hw_pad, c = stg_sum.shape
    cc = cam_rows.shape[2]
    cout = wa1.shape[1]
    kernel = functools.partial(_pcm_tail_kernel, S_REAL)
    return pl.pallas_call(
        kernel,
        out_shape=jax.ShapeDtypeStruct((n, cout, hw_pad), jnp.float32),
        grid=(n, hw_pad // THW),
        in_specs=[
            pl.BlockSpec((1, THW, c), lambda i, j: (i, j, 0)),
            pl.BlockSpec((1, THW, cc), lambda i, j: (i, j, 0)),
            pl.BlockSpec((1, S_PAD, c), lambda i, j: (i, 0, 0)),
            pl.BlockSpec((1, S_PAD, cc), lambda i, j: (i, 0, 0)),
            pl.BlockSpec((cc, cout), lambda i, j: (0, 0)),
            pl.BlockSpec((cc, cout), lambda i, j: (0, 0)),
            pl.BlockSpec((1, cout), lambda i, j: (0, 0)),
        ],
        out_specs=pl.BlockSpec((1, cout, THW), lambda i, j: (i, 0, j)),
        compiler_params=pltpu.CompilerParams(
            dimension_semantics=("parallel", "parallel")),
    )(stg_sum, cam_rows, stg_pool, cam_pool,
      wa1.astype(jnp.bfloat16), wa2.astype(jnp.bfloat16),
      ba.reshape(1, cout).astype(jnp.float32))


# ----------------------------------------------------------------------------
# Parameter init (1x1 conv weights as (Cin, Cout); eval-mode BN folded in)
# ----------------------------------------------------------------------------
def init_pcm_params(key, feat1, feat2, mid, cam_ch):
    keys = iter(jax.random.split(key, 32))
    nk = lambda: next(keys)
    eps = 1e-5

    def fold_bn(c):
        g = 1.0 + 0.1 * jax.random.normal(nk(), (c,), jnp.float32)
        b = 0.1 * jax.random.normal(nk(), (c,), jnp.float32)
        mean = 0.1 * jax.random.normal(nk(), (c,), jnp.float32)
        var = jnp.abs(1.0 + 0.1 * jax.random.normal(nk(), (c,), jnp.float32))
        scale = g * jax.lax.rsqrt(var + eps)
        return scale, b - mean * scale

    def w(cin, cout):
        return 0.05 * jax.random.normal(nk(), (cin, cout), jnp.float32)

    sx2, bx2 = fold_bn(mid)          # conv_x2 BN
    sx4, bx4 = fold_bn(mid)          # conv_x4 BN
    sc, bc = fold_bn(mid)            # conv_cmb BN
    sa, ba = fold_bn(mid)            # addCAM BN

    return dict(
        wx2=w(feat1, mid) * sx2[None, :], bx2=bx2,
        wx4=w(feat2, mid) * sx4[None, :], bx4=bx4,
        wc0=w(3, mid) * sc[None, :],                 # conv_cmb slab for stg0
        wc2=w(mid, mid) * sc[None, :],               # conv_cmb slab for stg2
        wc4=w(mid, mid) * sc[None, :],               # conv_cmb slab for stg4
        bc=bc,
        wa1=w(cam_ch, mid) * sa[None, :],            # addCAM slab for cam
        wa2=w(cam_ch, mid) * sa[None, :],            # addCAM slab for cam_rv
        ba=ba,
    )


# ----------------------------------------------------------------------------
# PCM forward (Pallas path). Public layout: NCHW in, NCHW out.
# ----------------------------------------------------------------------------
@jax.jit
def pcm_forward(x_org, stg2, stg4, cam, params):
    n, feat1, h, w = stg2.shape
    h4, w4 = stg4.shape[2], stg4.shape[3]
    feat2 = stg4.shape[1]
    cam_ch = cam.shape[1]
    mid = params['wx2'].shape[1]
    hw = h * w
    hw_pad = _round_up(hw, THW)
    scale = float(feat1) ** -0.5

    def to_rows_padded(x_nchw):
        nn, c_, hh, ww = x_nchw.shape
        r = jnp.transpose(x_nchw, (0, 2, 3, 1)).reshape(nn, hh * ww, c_)
        if hw_pad != hh * ww:
            r = jnp.pad(r, ((0, 0), (0, hw_pad - hh * ww), (0, 0)))
        return r.astype(jnp.bfloat16)

    # --- conv_x2 at (h, w), flat rows over the padded spatial dim -----------
    stg2_rows = to_rows_padded(stg2).reshape(n * hw_pad, feat1)
    tile = _divisor_tile(n * hw_pad)
    stg2c = conv1x1_bn_relu(stg2_rows, params['wx2'], params['bx2'], tile)

    # --- conv_x4 + wc4 at NATIVE res, bilinear-upsample the product ---------
    m4 = n * h4 * w4
    tile4, m4_pad = _flat_tile(m4, max_tile=512)
    x4_rows = jnp.transpose(stg4, (0, 2, 3, 1)).reshape(m4, feat2).astype(jnp.bfloat16)
    if m4_pad != m4:
        x4_rows = jnp.pad(x4_rows, ((0, m4_pad - m4), (0, 0)))
    s4_small = conv1x1_bn_relu_mm(x4_rows, params['wx4'], params['bx4'],
                                  params['wc4'], tile4)          # (m4_pad, mid) bf16
    s4 = s4_small[:m4].reshape(n, h4, w4, mid).astype(jnp.float32)
    s4u = _bilinear_resize(s4, h, w).reshape(n, hw, mid)
    if hw_pad != hw:
        s4u = jnp.pad(s4u, ((0, 0), (0, hw_pad - hw), (0, 0)))
    s4u = s4u.astype(jnp.bfloat16).reshape(n * hw_pad, mid)

    # --- stg0 = bilinear(xOrg, (h, w)) ---------------------------------------
    x0 = _bilinear_resize(jnp.transpose(x_org, (0, 2, 3, 1)), h, w).reshape(n, hw, 3)
    if hw_pad != hw:
        x0 = jnp.pad(x0, ((0, 0), (0, hw_pad - hw), (0, 0)))
    x0 = x0.astype(jnp.bfloat16).reshape(n * hw_pad, 3)

    # --- conv_cmb on cat([stg0, stg2, stg4]) (concat fused in-kernel) -------
    stg_sum = conv_cmb_fused(x0, stg2c, s4u, params['wc0'], params['wc2'],
                             params['bc'], tile)                  # (n*hw_pad, mid) bf16
    stg_sum = stg_sum.reshape(n, hw_pad, mid)

    # --- cam rows (bf16; relu happens inside psp_pool for the pooled path) --
    # TODO(synk): F.interpolate(relu(cam), (h, w)) is the identity here because
    # torch.cat([cam, cam_rv]) already requires cam at (h, w); resize skipped.
    cam_rows = to_rows_padded(cam)                                # (n, hw_pad, cc)

    # --- PSP pooling (HW-tiled, accumulated in VMEM; stg_pool pre-scaled) ---
    p_mat = _psp_matrix_padded(h, w, hw_pad)                      # (S_PAD, hw_pad)
    stg_pool, cam_pool = psp_pool(stg_sum, cam_rows, p_mat, scale)

    # --- Fused tail: affinity + masked softmax + cam_rv + addCAM ------------
    out_chw = pcm_tail(stg_sum, cam_rows, stg_pool, cam_pool,
                       params['wa1'], params['wa2'], params['ba'])  # (n, mid, hw_pad)
    if hw_pad != hw:
        out_chw = out_chw[:, :, :hw]
    return out_chw.reshape(n, mid, h, w)


# ----------------------------------------------------------------------------
# Pure-JAX reference (mirrors the PyTorch forward, f32 throughout)
# ----------------------------------------------------------------------------
def ref_forward(x_org, stg2, stg4, cam, params):
    n, c1, h, w = stg2.shape
    cam_ch = cam.shape[1]

    nhwc = lambda x: jnp.transpose(x, (0, 2, 3, 1))
    nchw = lambda x: jnp.transpose(x, (0, 3, 1, 2))

    def conv1x1(x, wmat, bias):
        return jnp.maximum(jnp.einsum('nhwc,co->nhwo', x, wmat) + bias, 0.0)

    stg2c = conv1x1(nhwc(stg2), params['wx2'], params['bx2'])
    stg4c = conv1x1(nhwc(stg4), params['wx4'], params['bx4'])
    stg4u = _bilinear_resize(stg4c, h, w)
    stg0 = _bilinear_resize(nhwc(x_org), h, w)

    cat = jnp.concatenate([stg0, stg2c, stg4u], axis=-1)
    wc = jnp.concatenate([params['wc0'], params['wc2'], params['wc4']], axis=0)
    stg_sum = conv1x1(cat, wc, params['bc'])

    mid = stg_sum.shape[-1]
    p_mat = jnp.asarray(_psp_matrix(h, w))
    rows = stg_sum.reshape(n, h * w, mid)
    stg_pool = jnp.einsum('sp,npc->ncs', p_mat, rows)
    aff = jnp.einsum('npc,ncs->nps', rows, stg_pool) * (float(c1) ** -0.5)
    aff = jax.nn.softmax(aff, axis=-1)

    cam_d = _bilinear_resize(jnp.maximum(nhwc(cam), 0.0), h, w)
    cam_pool = jnp.einsum('sp,npc->nsc', p_mat, cam_d.reshape(n, h * w, cam_ch))
    cam_rv = jnp.einsum('nps,nsc->npc', aff, cam_pool).reshape(n, h, w, cam_ch)

    cat2 = jnp.concatenate([nhwc(cam), cam_rv], axis=-1)
    wa = jnp.concatenate([params['wa1'], params['wa2']], axis=0)
    return nchw(conv1x1(cat2, wa, params['ba']))


if __name__ == "__main__":
    key = jax.random.PRNGKey(0)
    kx, k2, k4, kc, kp = jax.random.split(key, 5)

    # Small shapes consistent with the module (real model: feat=[256,1024], mid=256).
    N = 2
    FEAT1, FEAT2 = 32, 64
    MID = 128
    CAM_CH = 128            # addCAM takes cat([cam, cam_rv]) -> 2*CAM_CH channels
    H = W = 16
    H4 = W4 = 8
    H0 = W0 = 32

    x_org = jax.random.normal(kx, (N, 3, H0, W0), jnp.float32)
    stg2 = jax.random.normal(k2, (N, FEAT1, H, W), jnp.float32)
    stg4 = jax.random.normal(k4, (N, FEAT2, H4, W4), jnp.float32)
    cam = jax.random.normal(kc, (N, CAM_CH, H, W), jnp.float32)
    params = init_pcm_params(kp, FEAT1, FEAT2, MID, CAM_CH)

    out = pcm_forward(x_org, stg2, stg4, cam, params)
    jax.block_until_ready(out)
    assert out.shape == (N, MID, H, W)

    ref = ref_forward(x_org, stg2, stg4, cam, params)
    max_err = float(jnp.max(jnp.abs(out - ref)))
    assert jnp.allclose(out, ref, atol=3e-2, rtol=3e-2), f"max abs err {max_err}"

    print("KERNEL_OK")
</pallas_src>

<mosaic_0001>
module attributes {stable_mosaic.version = 11 : i64} {
  func.func @_conv1x1_then_mm_kernel(%arg0: i32, %arg1: memref<128x64xbf16, #tpu.memory_space<vmem>>, %arg2: memref<64x128xbf16, #tpu.memory_space<vmem>>, %arg3: memref<1x128xf32, #tpu.memory_space<vmem>>, %arg4: memref<128x128xbf16, #tpu.memory_space<vmem>>, %arg5: memref<128x128xbf16, #tpu.memory_space<vmem>>) attributes {dimension_semantics = [#tpu.dimension_semantics<parallel>], iteration_bounds = array<i64: 1>, scalar_prefetch = 0 : i64, scratch_operands = 0 : i64, tpu.core_type = #tpu.core_type<tc>, window_params = [{transform_indices = @transform_0, window_bounds = array<i64: 128, 64>}, {pipeline_mode = #tpu.pipeline_mode<synchronous>, transform_indices = @transform_1, window_bounds = array<i64: 64, 128>}, {pipeline_mode = #tpu.pipeline_mode<synchronous>, transform_indices = @transform_2, window_bounds = array<i64: 1, 128>}, {pipeline_mode = #tpu.pipeline_mode<synchronous>, transform_indices = @transform_3, window_bounds = array<i64: 128, 128>}, {transform_indices = @transform_4, window_bounds = array<i64: 128, 128>}]} {
    %c0 = arith.constant 0 : index
    %c0_0 = arith.constant 0 : index
    %0 = vector.load %arg1[%c0, %c0_0] : memref<128x64xbf16, #tpu.memory_space<vmem>>, vector<128x64xbf16>
    %c0_1 = arith.constant 0 : index
    %c0_2 = arith.constant 0 : index
    %1 = vector.load %arg2[%c0_1, %c0_2] : memref<64x128xbf16, #tpu.memory_space<vmem>>, vector<64x128xbf16>
    %cst = arith.constant dense<0.000000e+00> : vector<128x128xf32>
    %2 = tpu.matmul %0, %1, %cst {dimension_numbers = #tpu.dot_dimension_numbers<[1], [0], [0], [1], [0, 0, 1, 1], [], []>} : vector<128x64xbf16>, vector<64x128xbf16>, vector<128x128xf32> -> vector<128x128xf32>
    %c0_3 = arith.constant 0 : index
    %c0_4 = arith.constant 0 : index
    %3 = vector.load %arg3[%c0_3, %c0_4] : memref<1x128xf32, #tpu.memory_space<vmem>>, vector<1x128xf32>
    %4 = vector.broadcast %3 : vector<1x128xf32> to vector<128x128xf32>
    %5 = arith.addf %2, %4 : vector<128x128xf32>
    %cst_5 = arith.constant 0.000000e+00 : f32
    %6 = vector.broadcast %cst_5 : f32 to vector<128x128xf32>
    %7 = arith.maximumf %5, %6 : vector<128x128xf32>
    %8 = arith.truncf %7 : vector<128x128xf32> to vector<128x128xbf16>
    %c0_6 = arith.constant 0 : index
    %c0_7 = arith.constant 0 : index
    %9 = vector.load %arg4[%c0_6, %c0_7] : memref<128x128xbf16, #tpu.memory_space<vmem>>, vector<128x128xbf16>
    %cst_8 = arith.constant dense<0.000000e+00> : vector<128x128xf32>
    %10 = tpu.matmul %8, %9, %cst_8 {dimension_numbers = #tpu.dot_dimension_numbers<[1], [0], [0], [1], [0, 0, 1, 1], [], []>} : vector<128x128xbf16>, vector<128x128xbf16>, vector<128x128xf32> -> vector<128x128xf32>
    %11 = arith.truncf %10 : vector<128x128xf32> to vector<128x128xbf16>
    %c0_9 = arith.constant 0 : index
    %c0_10 = arith.constant 0 : index
    %12 = vector.load %arg5[%c0_9, %c0_10] : memref<128x128xbf16, #tpu.memory_space<vmem>>, vector<128x128xbf16>
    tpu.vector_store %arg5[%c0_9, %c0_10], %11 {strides = array<i32>} : memref<128x128xbf16, #tpu.memory_space<vmem>>, vector<128x128xbf16>,
    return
  }
  func.func @transform_0(%arg0: i32) -> (i32, i32) {
    %c0_i32 = arith.constant 0 : i32
    %c0_i32_0 = arith.constant 0 : i32
    return %arg0, %c0_i32 : i32, i32
  }
  func.func @transform_1(%arg0: i32) -> (i32, i32) {
    %c0_i32 = arith.constant 0 : i32
    %c0_i32_0 = arith.constant 0 : i32
    %c0_i32_1 = arith.constant 0 : i32
    return %c0_i32, %c0_i32_0 : i32, i32
  }
  func.func @transform_2(%arg0: i32) -> (i32, i32) {
    %c0_i32 = arith.constant 0 : i32
    %c0_i32_0 = arith.constant 0 : i32
    %c0_i32_1 = arith.constant 0 : i32
    return %c0_i32, %c0_i32_0 : i32, i32
  }
  func.func @transform_3(%arg0: i32) -> (i32, i32) {
    %c0_i32 = arith.constant 0 : i32
    %c0_i32_0 = arith.constant 0 : i32
    %c0_i32_1 = arith.constant 0 : i32
    return %c0_i32, %c0_i32_0 : i32, i32
  }
  func.func @transform_4(%arg0: i32) -> (i32, i32) {
    %c0_i32 = arith.constant 0 : i32
    %c0_i32_0 = arith.constant 0 : i32
    return %arg0, %c0_i32 : i32, i32
  }
}

module attributes {stable_mosaic.version = 11 : i64} {
  func.func @_conv1x1_kernel(%arg0: i32, %arg1: memref<512x32xbf16, #tpu.memory_space<vmem>>, %arg2: memref<32x128xbf16, #tpu.memory_space<vmem>>, %arg3: memref<1x128xf32, #tpu.memory_space<vmem>>, %arg4: memref<512x128xbf16, #tpu.memory_space<vmem>>) attributes {dimension_semantics = [#tpu.dimension_semantics<parallel>], iteration_bounds = array<i64: 1>, scalar_prefetch = 0 : i64, scratch_operands = 0 : i64, tpu.core_type = #tpu.core_type<tc>, window_params = [{transform_indices = @transform_0, window_bounds = array<i64: 512, 32>}, {pipeline_mode = #tpu.pipeline_mode<synchronous>, transform_indices = @transform_1, window_bounds = array<i64: 32, 128>}, {pipeline_mode = #tpu.pipeline_mode<synchronous>, transform_indices = @transform_2, window_bounds = array<i64: 1, 128>}, {transform_indices = @transform_3, window_bounds = array<i64: 512, 128>}]} {
    %c0 = arith.constant 0 : index
    %c0_0 = arith.constant 0 : index
    %0 = vector.load %arg1[%c0, %c0_0] : memref<512x32xbf16, #tpu.memory_space<vmem>>, vector<512x32xbf16>
    %c0_1 = arith.constant 0 : index
    %c0_2 = arith.constant 0 : index
    %1 = vector.load %arg2[%c0_1, %c0_2] : memref<32x128xbf16, #tpu.memory_space<vmem>>, vector<32x128xbf16>
    %cst = arith.constant dense<0.000000e+00> : vector<512x128xf32>
    %2 = tpu.matmul %0, %1, %cst {dimension_numbers = #tpu.dot_dimension_numbers<[1], [0], [0], [1], [0, 0, 1, 1], [], []>} : vector<512x32xbf16>, vector<32x128xbf16>, vector<512x128xf32> -> vector<512x128xf32>
    %c0_3 = arith.constant 0 : index
    %c0_4 = arith.constant 0 : index
    %3 = vector.load %arg3[%c0_3, %c0_4] : memref<1x128xf32, #tpu.memory_space<vmem>>, vector<1x128xf32>
    %4 = vector.broadcast %3 : vector<1x128xf32> to vector<512x128xf32>
    %5 = arith.addf %2, %4 : vector<512x128xf32>
    %cst_5 = arith.constant 0.000000e+00 : f32
    %6 = vector.broadcast %cst_5 : f32 to vector<512x128xf32>
    %7 = arith.maximumf %5, %6 : vector<512x128xf32>
    %8 = arith.truncf %7 : vector<512x128xf32> to vector<512x128xbf16>
    %c0_6 = arith.constant 0 : index
    %c0_7 = arith.constant 0 : index
    %9 = vector.load %arg4[%c0_6, %c0_7] : memref<512x128xbf16, #tpu.memory_space<vmem>>, vector<512x128xbf16>
    tpu.vector_store %arg4[%c0_6, %c0_7], %8 {strides = array<i32>} : memref<512x128xbf16, #tpu.memory_space<vmem>>, vector<512x128xbf16>,
    return
  }
  func.func @transform_0(%arg0: i32) -> (i32, i32) {
    %c0_i32 = arith.constant 0 : i32
    %c0_i32_0 = arith.constant 0 : i32
    return %arg0, %c0_i32 : i32, i32
  }
  func.func @transform_1(%arg0: i32) -> (i32, i32) {
    %c0_i32 = arith.constant 0 : i32
    %c0_i32_0 = arith.constant 0 : i32
    %c0_i32_1 = arith.constant 0 : i32
    return %c0_i32, %c0_i32_0 : i32, i32
  }
  func.func @transform_2(%arg0: i32) -> (i32, i32) {
    %c0_i32 = arith.constant 0 : i32
    %c0_i32_0 = arith.constant 0 : i32
    %c0_i32_1 = arith.constant 0 : i32
    return %c0_i32, %c0_i32_0 : i32, i32
  }
  func.func @transform_3(%arg0: i32) -> (i32, i32) {
    %c0_i32 = arith.constant 0 : i32
    %c0_i32_0 = arith.constant 0 : i32
    return %arg0, %c0_i32 : i32, i32
  }
}

module attributes {stable_mosaic.version = 11 : i64} {
  func.func @_conv_cmb_kernel(%arg0: i32, %arg1: memref<512x3xbf16, #tpu.memory_space<vmem>>, %arg2: memref<512x128xbf16, #tpu.memory_space<vmem>>, %arg3: memref<512x128xbf16, #tpu.memory_space<vmem>>, %arg4: memref<3x128xbf16, #tpu.memory_space<vmem>>, %arg5: memref<128x128xbf16, #tpu.memory_space<vmem>>, %arg6: memref<1x128xf32, #tpu.memory_space<vmem>>, %arg7: memref<512x128xbf16, #tpu.memory_space<vmem>>) attributes {dimension_semantics = [#tpu.dimension_semantics<parallel>], iteration_bounds = array<i64: 1>, scalar_prefetch = 0 : i64, scratch_operands = 0 : i64, tpu.core_type = #tpu.core_type<tc>, window_params = [{transform_indices = @transform_0, window_bounds = array<i64: 512, 3>}, {transform_indices = @transform_1, window_bounds = array<i64: 512, 128>}, {transform_indices = @transform_2, window_bounds = array<i64: 512, 128>}, {pipeline_mode = #tpu.pipeline_mode<synchronous>, transform_indices = @transform_3, window_bounds = array<i64: 3, 128>}, {pipeline_mode = #tpu.pipeline_mode<synchronous>, transform_indices = @transform_4, window_bounds = array<i64: 128, 128>}, {pipeline_mode = #tpu.pipeline_mode<synchronous>, transform_indices = @transform_5, window_bounds = array<i64: 1, 128>}, {transform_indices = @transform_6, window_bounds = array<i64: 512, 128>}]} {
    %c0 = arith.constant 0 : index
    %c0_0 = arith.constant 0 : index
    %0 = vector.load %arg1[%c0, %c0_0] : memref<512x3xbf16, #tpu.memory_space<vmem>>, vector<512x3xbf16>
    %c0_1 = arith.constant 0 : index
    %c0_2 = arith.constant 0 : index
    %1 = vector.load %arg4[%c0_1, %c0_2] : memref<3x128xbf16, #tpu.memory_space<vmem>>, vector<3x128xbf16>
    %cst = arith.constant dense<0.000000e+00> : vector<512x128xf32>
    %2 = tpu.matmul %0, %1, %cst {dimension_numbers = #tpu.dot_dimension_numbers<[1], [0], [0], [1], [0, 0, 1, 1], [], []>} : vector<512x3xbf16>, vector<3x128xbf16>, vector<512x128xf32> -> vector<512x128xf32>
    %c0_3 = arith.constant 0 : index
    %c0_4 = arith.constant 0 : index
    %3 = vector.load %arg2[%c0_3, %c0_4] : memref<512x128xbf16, #tpu.memory_space<vmem>>, vector<512x128xbf16>
    %c0_5 = arith.constant 0 : index
    %c0_6 = arith.constant 0 : index
    %4 = vector.load %arg5[%c0_5, %c0_6] : memref<128x128xbf16, #tpu.memory_space<vmem>>, vector<128x128xbf16>
    %cst_7 = arith.constant dense<0.000000e+00> : vector<512x128xf32>
    %5 = tpu.matmul %3, %4, %cst_7 {dimension_numbers = #tpu.dot_dimension_numbers<[1], [0], [0], [1], [0, 0, 1, 1], [], []>} : vector<512x128xbf16>, vector<128x128xbf16>, vector<512x128xf32> -> vector<512x128xf32>
    %6 = arith.addf %2, %5 : vector<512x128xf32>
    %c0_8 = arith.constant 0 : index
    %c0_9 = arith.constant 0 : index
    %7 = vector.load %arg3[%c0_8, %c0_9] : memref<512x128xbf16, #tpu.memory_space<vmem>>, vector<512x128xbf16>
    %8 = arith.extf %7 : vector<512x128xbf16> to vector<512x128xf32>
    %9 = arith.addf %6, %8 : vector<512x128xf32>
    %c0_10 = arith.constant 0 : index
    %c0_11 = arith.constant 0 : index
    %10 = vector.load %arg6[%c0_10, %c0_11] : memref<1x128xf32, #tpu.memory_space<vmem>>, vector<1x128xf32>
    %11 = vector.broadcast %10 : vector<1x128xf32> to vector<512x128xf32>
    %12 = arith.addf %9, %11 : vector<512x128xf32>
    %cst_12 = arith.constant 0.000000e+00 : f32
    %13 = vector.broadcast %cst_12 : f32 to vector<512x128xf32>
    %14 = arith.maximumf %12, %13 : vector<512x128xf32>
    %15 = arith.truncf %14 : vector<512x128xf32> to vector<512x128xbf16>
    %c0_13 = arith.constant 0 : index
    %c0_14 = arith.constant 0 : index
    %16 = vector.load %arg7[%c0_13, %c0_14] : memref<512x128xbf16, #tpu.memory_space<vmem>>, vector<512x128xbf16>
    tpu.vector_store %arg7[%c0_13, %c0_14], %15 {strides = array<i32>} : memref<512x128xbf16, #tpu.memory_space<vmem>>, vector<512x128xbf16>,
    return
  }
  func.func @transform_0(%arg0: i32) -> (i32, i32) {
    %c0_i32 = arith.constant 0 : i32
    %c0_i32_0 = arith.constant 0 : i32
    return %arg0, %c0_i32 : i32, i32
  }
  func.func @transform_1(%arg0: i32) -> (i32, i32) {
    %c0_i32 = arith.constant 0 : i32
    %c0_i32_0 = arith.constant 0 : i32
    return %arg0, %c0_i32 : i32, i32
  }
  func.func @transform_2(%arg0: i32) -> (i32, i32) {
    %c0_i32 = arith.constant 0 : i32
    %c0_i32_0 = arith.constant 0 : i32
    return %arg0, %c0_i32 : i32, i32
  }
  func.func @transform_3(%arg0: i32) -> (i32, i32) {
    %c0_i32 = arith.constant 0 : i32
    %c0_i32_0 = arith.constant 0 : i32
    %c0_i32_1 = arith.constant 0 : i32
    return %c0_i32, %c0_i32_0 : i32, i32
  }
  func.func @transform_4(%arg0: i32) -> (i32, i32) {
    %c0_i32 = arith.constant 0 : i32
    %c0_i32_0 = arith.constant 0 : i32
    %c0_i32_1 = arith.constant 0 : i32
    return %c0_i32, %c0_i32_0 : i32, i32
  }
  func.func @transform_5(%arg0: i32) -> (i32, i32) {
    %c0_i32 = arith.constant 0 : i32
    %c0_i32_0 = arith.constant 0 : i32
    %c0_i32_1 = arith.constant 0 : i32
    return %c0_i32, %c0_i32_0 : i32, i32
  }
  func.func @transform_6(%arg0: i32) -> (i32, i32) {
    %c0_i32 = arith.constant 0 : i32
    %c0_i32_0 = arith.constant 0 : i32
    return %arg0, %c0_i32 : i32, i32
  }
}

module attributes {stable_mosaic.version = 11 : i64} {
  func.func @_psp_pool_kernel(%arg0: i32, %arg1: i32, %arg2: memref<256x256xbf16, #tpu.memory_space<vmem>>, %arg3: memref<1x256x128xbf16, #tpu.memory_space<vmem>>, %arg4: memref<1x256x128xbf16, #tpu.memory_space<vmem>>, %arg5: memref<1x256x128xbf16, #tpu.memory_space<vmem>>, %arg6: memref<1x256x128xbf16, #tpu.memory_space<vmem>>, %arg7: memref<256x128xf32, #tpu.memory_space<vmem>>, %arg8: memref<256x128xf32, #tpu.memory_space<vmem>>) attributes {dimension_semantics = [#tpu.dimension_semantics<parallel>, #tpu.dimension_semantics<arbitrary>], iteration_bounds = array<i64: 2, 1>, scalar_prefetch = 0 : i64, scratch_operands = 2 : i64, tpu.core_type = #tpu.core_type<tc>, window_params = [{transform_indices = @transform_0, window_bounds = array<i64: 256, 256>}, {transform_indices = @transform_1, window_bounds = array<i64: 1, 256, 128>}, {transform_indices = @transform_2, window_bounds = array<i64: 1, 256, 128>}, {transform_indices = @transform_3, window_bounds = array<i64: 1, 256, 128>}, {transform_indices = @transform_4, window_bounds = array<i64: 1, 256, 128>}]} {
    %c0_i32 = arith.constant 0 : i32
    %0 = arith.cmpi eq, %arg1, %c0_i32 : i32
    %1 = arith.extui %0 : i1 to i32
    %c0_i32_0 = arith.constant 0 : i32
    %2 = arith.cmpi ne, %1, %c0_i32_0 : i32
    scf.if %2 {
      %cst_20 = arith.constant 0.000000e+00 : f32
      %21 = vector.broadcast %cst_20 : f32 to vector<256x128xf32>
      %c0_21 = arith.constant 0 : index
      %c0_22 = arith.constant 0 : index
      %22 = vector.load %arg7[%c0_21, %c0_22] : memref<256x128xf32, #tpu.memory_space<vmem>>, vector<256x128xf32>
      tpu.vector_store %arg7[%c0_21, %c0_22], %21 {strides = array<i32>} : memref<256x128xf32, #tpu.memory_space<vmem>>, vector<256x128xf32>,
      %cst_23 = arith.constant 0.000000e+00 : f32
      %23 = vector.broadcast %cst_23 : f32 to vector<256x128xf32>
      %c0_24 = arith.constant 0 : index
      %c0_25 = arith.constant 0 : index
      %24 = vector.load %arg8[%c0_24, %c0_25] : memref<256x128xf32, #tpu.memory_space<vmem>>, vector<256x128xf32>
      tpu.vector_store %arg8[%c0_24, %c0_25], %23 {strides = array<i32>} : memref<256x128xf32, #tpu.memory_space<vmem>>, vector<256x128xf32>,
    } else {
    }
    %c0 = arith.constant 0 : index
    %c0_1 = arith.constant 0 : index
    %3 = vector.load %arg2[%c0, %c0_1] : memref<256x256xbf16, #tpu.memory_space<vmem>>, vector<256x256xbf16>
    %c0_2 = arith.constant 0 : index
    %c0_3 = arith.constant 0 : index
    %4 = vector.load %arg7[%c0_2, %c0_3] : memref<256x128xf32, #tpu.memory_space<vmem>>, vector<256x128xf32>
    %c0_4 = arith.constant 0 : index
    %c0_5 = arith.constant 0 : index
    %c0_6 = arith.constant 0 : index
    %5 = vector.load %arg3[%c0_4, %c0_5, %c0_6] : memref<1x256x128xbf16, #tpu.memory_space<vmem>>, vector<1x256x128xbf16>
    %6 = vector.shape_cast %5 : vector<1x256x128xbf16> to vector<256x128xbf16>
    %cst = arith.constant dense<0.000000e+00> : vector<256x128xf32>
    %7 = tpu.matmul %3, %6, %cst {dimension_numbers = #tpu.dot_dimension_numbers<[1], [0], [0], [1], [0, 0, 1, 1], [], []>} : vector<256x256xbf16>, vector<256x128xbf16>, vector<256x128xf32> -> vector<256x128xf32>
    %8 = arith.addf %4, %7 : vector<256x128xf32>
    %c0_7 = arith.constant 0 : index
    %c0_8 = arith.constant 0 : index
    %9 = vector.load %arg7[%c0_7, %c0_8] : memref<256x128xf32, #tpu.memory_space<vmem>>, vector<256x128xf32>
    tpu.vector_store %arg7[%c0_7, %c0_8], %8 {strides = array<i32>} : memref<256x128xf32, #tpu.memory_space<vmem>>, vector<256x128xf32>,
    %c0_9 = arith.constant 0 : index
    %c0_10 = arith.constant 0 : index
    %c0_11 = arith.constant 0 : index
    %10 = vector.load %arg4[%c0_9, %c0_10, %c0_11] : memref<1x256x128xbf16, #tpu.memory_space<vmem>>, vector<1x256x128xbf16>
    %11 = vector.shape_cast %10 : vector<1x256x128xbf16> to vector<256x128xbf16>
    %cst_12 = arith.constant 0.000000e+00 : bf16
    %12 = vector.broadcast %cst_12 : bf16 to vector<256x128xbf16>
    %13 = arith.maximumf %11, %12 : vector<256x128xbf16>
    %c0_13 = arith.constant 0 : index
    %c0_14 = arith.constant 0 : index
    %14 = vector.load %arg8[%c0_13, %c0_14] : memref<256x128xf32, #tpu.memory_space<vmem>>, vector<256x128xf32>
    %cst_15 = arith.constant dense<0.000000e+00> : vector<256x128xf32>
    %15 = tpu.matmul %3, %13, %cst_15 {dimension_numbers = #tpu.dot_dimension_numbers<[1], [0], [0], [1], [0, 0, 1, 1], [], []>} : vector<256x256xbf16>, vector<256x128xbf16>, vector<256x128xf32> -> vector<256x128xf32>
    %16 = arith.addf %14, %15 : vector<256x128xf32>
    %c0_16 = arith.constant 0 : index
    %c0_17 = arith.constant 0 : index
    %17 = vector.load %arg8[%c0_16, %c0_17] : memref<256x128xf32, #tpu.memory_space<vmem>>, vector<256x128xf32>
    tpu.vector_store %arg8[%c0_16, %c0_17], %16 {strides = array<i32>} : memref<256x128xf32, #tpu.memory_space<vmem>>, vector<256x128xf32>,
    %c0_i32_18 = arith.constant 0 : i32
    %18 = arith.cmpi eq, %arg1, %c0_i32_18 : i32
    %19 = arith.extui %18 : i1 to i32
    %c0_i32_19 = arith.constant 0 : i32
    %20 = arith.cmpi ne, %19, %c0_i32_19 : i32
    scf.if %20 {
      %c0_20 = arith.constant 0 : index
      %c0_21 = arith.constant 0 : index
      %21 = vector.load %arg7[%c0_20, %c0_21] : memref<256x128xf32, #tpu.memory_space<vmem>>, vector<256x128xf32>
      %cst_22 = arith.constant 0.176776692 : f32
      %22 = vector.broadcast %cst_22 : f32 to vector<256x128xf32>
      %23 = arith.mulf %21, %22 : vector<256x128xf32>
      %24 = arith.truncf %23 : vector<256x128xf32> to vector<256x128xbf16>
      %c0_23 = arith.constant 0 : index
      %c0_24 = arith.constant 0 : index
      %c0_25 = arith.constant 0 : index
      %25 = vector.load %arg5[%c0_23, %c0_24, %c0_25] : memref<1x256x128xbf16, #tpu.memory_space<vmem>>, vector<1x256x128xbf16>
      %26 = vector.shape_cast %25 : vector<1x256x128xbf16> to vector<256x128xbf16>
      %27 = vector.shape_cast %24 : vector<256x128xbf16> to vector<1x256x128xbf16>
      tpu.vector_store %arg5[%c0_23, %c0_24, %c0_25], %27 {strides = array<i32>} : memref<1x256x128xbf16, #tpu.memory_space<vmem>>, vector<1x256x128xbf16>,
      %c0_26 = arith.constant 0 : index
      %c0_27 = arith.constant 0 : index
      %28 = vector.load %arg8[%c0_26, %c0_27] : memref<256x128xf32, #tpu.memory_space<vmem>>, vector<256x128xf32>
      %29 = arith.truncf %28 : vector<256x128xf32> to vector<256x128xbf16>
      %c0_28 = arith.constant 0 : index
      %c0_29 = arith.constant 0 : index
      %c0_30 = arith.constant 0 : index
      %30 = vector.load %arg6[%c0_28, %c0_29, %c0_30] : memref<1x256x128xbf16, #tpu.memory_space<vmem>>, vector<1x256x128xbf16>
      %31 = vector.shape_cast %30 : vector<1x256x128xbf16> to vector<256x128xbf16>
      %32 = vector.shape_cast %29 : vector<256x128xbf16> to vector<1x256x128xbf16>
      tpu.vector_store %arg6[%c0_28, %c0_29, %c0_30], %32 {strides = array<i32>} : memref<1x256x128xbf16, #tpu.memory_space<vmem>>, vector<1x256x128xbf16>,
    } else {
    }
    return
  }
  func.func @transform_0(%arg0: i32, %arg1: i32) -> (i32, i32) {
    %c0_i32 = arith.constant 0 : i32
    %c0_i32_0 = arith.constant 0 : i32
    return %c0_i32, %arg1 : i32, i32
  }
  func.func @transform_1(%arg0: i32, %arg1: i32) -> (i32, i32, i32) {
    %c0_i32 = arith.constant 0 : i32
    %c0_i32_0 = arith.constant 0 : i32
    return %arg0, %arg1, %c0_i32 : i32, i32, i32
  }
  func.func @transform_2(%arg0: i32, %arg1: i32) -> (i32, i32, i32) {
    %c0_i32 = arith.constant 0 : i32
    %c0_i32_0 = arith.constant 0 : i32
    return %arg0, %arg1, %c0_i32 : i32, i32, i32
  }
  func.func @transform_3(%arg0: i32, %arg1: i32) -> (i32, i32, i32) {
    %c0_i32 = arith.constant 0 : i32
    %c0_i32_0 = arith.constant 0 : i32
    %c0_i32_1 = arith.constant 0 : i32
    return %arg0, %c0_i32, %c0_i32_0 : i32, i32, i32
  }
  func.func @transform_4(%arg0: i32, %arg1: i32) -> (i32, i32, i32) {
    %c0_i32 = arith.constant 0 : i32
    %c0_i32_0 = arith.constant 0 : i32
    %c0_i32_1 = arith.constant 0 : i32
    return %arg0, %c0_i32, %c0_i32_0 : i32, i32, i32
  }
}

module attributes {stable_mosaic.version = 11 : i64} {
  func.func @_pcm_tail_kernel(%arg0: i32, %arg1: i32, %arg2: memref<1x256x128xbf16, #tpu.memory_space<vmem>>, %arg3: memref<1x256x128xbf16, #tpu.memory_space<vmem>>, %arg4: memref<1x256x128xbf16, #tpu.memory_space<vmem>>, %arg5: memref<1x256x128xbf16, #tpu.memory_space<vmem>>, %arg6: memref<128x128xbf16, #tpu.memory_space<vmem>>, %arg7: memref<128x128xbf16, #tpu.memory_space<vmem>>, %arg8: memref<1x128xf32, #tpu.memory_space<vmem>>, %arg9: memref<1x128x256xf32, #tpu.memory_space<vmem>>) attributes {dimension_semantics = [#tpu.dimension_semantics<parallel>, #tpu.dimension_semantics<parallel>], iteration_bounds = array<i64: 2, 1>, scalar_prefetch = 0 : i64, scratch_operands = 0 : i64, tpu.core_type = #tpu.core_type<tc>, window_params = [{transform_indices = @transform_0, window_bounds = array<i64: 1, 256, 128>}, {transform_indices = @transform_1, window_bounds = array<i64: 1, 256, 128>}, {transform_indices = @transform_2, window_bounds = array<i64: 1, 256, 128>}, {transform_indices = @transform_3, window_bounds = array<i64: 1, 256, 128>}, {pipeline_mode = #tpu.pipeline_mode<synchronous>, transform_indices = @transform_4, window_bounds = array<i64: 128, 128>}, {pipeline_mode = #tpu.pipeline_mode<synchronous>, transform_indices = @transform_5, window_bounds = array<i64: 128, 128>}, {pipeline_mode = #tpu.pipeline_mode<synchronous>, transform_indices = @transform_6, window_bounds = array<i64: 1, 128>}, {transform_indices = @transform_7, window_bounds = array<i64: 1, 128, 256>}]} {
    %c0 = arith.constant 0 : index
    %c0_0 = arith.constant 0 : index
    %c0_1 = arith.constant 0 : index
    %0 = vector.load %arg2[%c0, %c0_0, %c0_1] : memref<1x256x128xbf16, #tpu.memory_space<vmem>>, vector<1x256x128xbf16>
    %1 = vector.shape_cast %0 : vector<1x256x128xbf16> to vector<256x128xbf16>
    %c0_2 = arith.constant 0 : index
    %c0_3 = arith.constant 0 : index
    %c0_4 = arith.constant 0 : index
    %2 = vector.load %arg4[%c0_2, %c0_3, %c0_4] : memref<1x256x128xbf16, #tpu.memory_space<vmem>>, vector<1x256x128xbf16>
    %3 = vector.shape_cast %2 : vector<1x256x128xbf16> to vector<256x128xbf16>
    %cst = arith.constant dense<0.000000e+00> : vector<256x256xf32>
    %4 = tpu.matmul %1, %3, %cst {dimension_numbers = #tpu.dot_dimension_numbers<[1], [1], [0], [0], [0, 0, 1, 0], [], []>} : vector<256x128xbf16>, vector<256x128xbf16>, vector<256x256xf32> -> vector<256x256xf32>
    %5 = tpu.iota {dimensions = array<i32: 1>} : vector<256x256xi32>
    %c180_i32 = arith.constant 180 : i32
    %6 = vector.broadcast %c180_i32 : i32 to vector<256x256xi32>
    %7 = arith.cmpi slt, %5, %6 : vector<256x256xi32>
    %cst_5 = arith.constant -1.000000e+30 : f32
    %8 = vector.broadcast %cst_5 : f32 to vector<256x256xf32>
    %9 = arith.select %7, %4, %8 : vector<256x256xi1>, vector<256x256xf32>
    %cst_6 = arith.constant dense<0xFF800000> : vector<256xf32>
    %10 = vector.multi_reduction <maximumf>, %9, %cst_6 [1] : vector<256x256xf32> to vector<256xf32>
    %11 = vector.shape_cast %10 : vector<256xf32> to vector<256x1xf32>
    %12 = vector.broadcast %11 : vector<256x1xf32> to vector<256x256xf32>
    %13 = arith.subf %9, %12 : vector<256x256xf32>
    %14 = math.exp %13 : vector<256x256xf32>
    %cst_7 = arith.constant dense<0.000000e+00> : vector<256xf32>
    %15 = vector.multi_reduction <add>, %14, %cst_7 [1] : vector<256x256xf32> to vector<256xf32>
    %16 = vector.shape_cast %15 : vector<256xf32> to vector<256x1xf32>
    %17 = tpu.reciprocal %16 {approx = true} : vector<256x1xf32> -> vector<256x1xf32>
    %18 = vector.broadcast %17 : vector<256x1xf32> to vector<256x256xf32>
    %19 = arith.mulf %14, %18 : vector<256x256xf32>
    %20 = arith.truncf %19 : vector<256x256xf32> to vector<256x256xbf16>
    %c0_8 = arith.constant 0 : index
    %c0_9 = arith.constant 0 : index
    %c0_10 = arith.constant 0 : index
    %21 = vector.load %arg5[%c0_8, %c0_9, %c0_10] : memref<1x256x128xbf16, #tpu.memory_space<vmem>>, vector<1x256x128xbf16>
    %22 = vector.shape_cast %21 : vector<1x256x128xbf16> to vector<256x128xbf16>
    %cst_11 = arith.constant dense<0.000000e+00> : vector<256x128xf32>
    %23 = tpu.matmul %20, %22, %cst_11 {dimension_numbers = #tpu.dot_dimension_numbers<[1], [0], [0], [1], [0, 0, 1, 1], [], []>} : vector<256x256xbf16>, vector<256x128xbf16>, vector<256x128xf32> -> vector<256x128xf32>
    %c0_12 = arith.constant 0 : index
    %c0_13 = arith.constant 0 : index
    %c0_14 = arith.constant 0 : index
    %24 = vector.load %arg3[%c0_12, %c0_13, %c0_14] : memref<1x256x128xbf16, #tpu.memory_space<vmem>>, vector<1x256x128xbf16>
    %25 = vector.shape_cast %24 : vector<1x256x128xbf16> to vector<256x128xbf16>
    %c0_15 = arith.constant 0 : index
    %c0_16 = arith.constant 0 : index
    %26 = vector.load %arg6[%c0_15, %c0_16] : memref<128x128xbf16, #tpu.memory_space<vmem>>, vector<128x128xbf16>
    %cst_17 = arith.constant dense<0.000000e+00> : vector<256x128xf32>
    %27 = tpu.matmul %25, %26, %cst_17 {dimension_numbers = #tpu.dot_dimension_numbers<[1], [0], [0], [1], [0, 0, 1, 1], [], []>} : vector<256x128xbf16>, vector<128x128xbf16>, vector<256x128xf32> -> vector<256x128xf32>
    %28 = arith.truncf %23 : vector<256x128xf32> to vector<256x128xbf16>
    %c0_18 = arith.constant 0 : index
    %c0_19 = arith.constant 0 : index
    %29 = vector.load %arg7[%c0_18, %c0_19] : memref<128x128xbf16, #tpu.memory_space<vmem>>, vector<128x128xbf16>
    %cst_20 = arith.constant dense<0.000000e+00> : vector<256x128xf32>
    %30 = tpu.matmul %28, %29, %cst_20 {dimension_numbers = #tpu.dot_dimension_numbers<[1], [0], [0], [1], [0, 0, 1, 1], [], []>} : vector<256x128xbf16>, vector<128x128xbf16>, vector<256x128xf32> -> vector<256x128xf32>
    %31 = arith.addf %27, %30 : vector<256x128xf32>
    %c0_21 = arith.constant 0 : index
    %c0_22 = arith.constant 0 : index
    %32 = vector.load %arg8[%c0_21, %c0_22] : memref<1x128xf32, #tpu.memory_space<vmem>>, vector<1x128xf32>
    %33 = vector.broadcast %32 : vector<1x128xf32> to vector<256x128xf32>
    %34 = arith.addf %31, %33 : vector<256x128xf32>
    %cst_23 = arith.constant 0.000000e+00 : f32
    %35 = vector.broadcast %cst_23 : f32 to vector<256x128xf32>
    %36 = arith.maximumf %34, %35 : vector<256x128xf32>
    %37 = tpu.transpose %36, [1, 0] : vector<256x128xf32> -> vector<128x256xf32>
    %c0_24 = arith.constant 0 : index
    %c0_25 = arith.constant 0 : index
    %c0_26 = arith.constant 0 : index
    %38 = vector.load %arg9[%c0_24, %c0_25, %c0_26] : memref<1x128x256xf32, #tpu.memory_space<vmem>>, vector<1x128x256xf32>
    %39 = vector.shape_cast %38 : vector<1x128x256xf32> to vector<128x256xf32>
    %40 = vector.shape_cast %37 : vector<128x256xf32> to vector<1x128x256xf32>
    tpu.vector_store %arg9[%c0_24, %c0_25, %c0_26], %40 {strides = array<i32>} : memref<1x128x256xf32, #tpu.memory_space<vmem>>, vector<1x128x256xf32>,
    return
  }
  func.func @transform_0(%arg0: i32, %arg1: i32) -> (i32, i32, i32) {
    %c0_i32 = arith.constant 0 : i32
    %c0_i32_0 = arith.constant 0 : i32
    return %arg0, %arg1, %c0_i32 : i32, i32, i32
  }
  func.func @transform_1(%arg0: i32, %arg1: i32) -> (i32, i32, i32) {
    %c0_i32 = arith.constant 0 : i32
    %c0_i32_0 = arith.constant 0 : i32
    return %arg0, %arg1, %c0_i32 : i32, i32, i32
  }
  func.func @transform_2(%arg0: i32, %arg1: i32) -> (i32, i32, i32) {
    %c0_i32 = arith.constant 0 : i32
    %c0_i32_0 = arith.constant 0 : i32
    %c0_i32_1 = arith.constant 0 : i32
    return %arg0, %c0_i32, %c0_i32_0 : i32, i32, i32
  }
  func.func @transform_3(%arg0: i32, %arg1: i32) -> (i32, i32, i32) {
    %c0_i32 = arith.constant 0 : i32
    %c0_i32_0 = arith.constant 0 : i32
    %c0_i32_1 = arith.constant 0 : i32
    return %arg0, %c0_i32, %c0_i32_0 : i32, i32, i32
  }
  func.func @transform_4(%arg0: i32, %arg1: i32) -> (i32, i32) {
    %c0_i32 = arith.constant 0 : i32
    %c0_i32_0 = arith.constant 0 : i32
    %c0_i32_1 = arith.constant 0 : i32
    return %c0_i32, %c0_i32_0 : i32, i32
  }
  func.func @transform_5(%arg0: i32, %arg1: i32) -> (i32, i32) {
    %c0_i32 = arith.constant 0 : i32
    %c0_i32_0 = arith.constant 0 : i32
    %c0_i32_1 = arith.constant 0 : i32
    return %c0_i32, %c0_i32_0 : i32, i32
  }
  func.func @transform_6(%arg0: i32, %arg1: i32) -> (i32, i32) {
    %c0_i32 = arith.constant 0 : i32
    %c0_i32_0 = arith.constant 0 : i32
    %c0_i32_1 = arith.constant 0 : i32
    return %c0_i32, %c0_i32_0 : i32, i32
  }
  func.func @transform_7(%arg0: i32, %arg1: i32) -> (i32, i32, i32) {
    %c0_i32 = arith.constant 0 : i32
    %c0_i32_0 = arith.constant 0 : i32
    return %arg0, %c0_i32, %arg1 : i32, i32, i32
  }
}

</mosaic_0001>

<llo_original>
// kernel: pcm_forward.6
$region0: #{pcm_forward.6}
  #allocation0 [shape = 'u32[]', space=smem, size = 0x4, offset = 0x4, fixed_abs, tag = 'smem constant byte address 0x4 - core index']
  #allocation1 [shape = 'u32[144,128]{1,0:T(1,128)}', space=vmem, size = 0x12000, scoped, tag = 'internal scratch']
  %s0 = inlined_call_operand.vmem [shape: bf16[128,64], index: 0, kind: input, shape index: {}]
  %s1 = inlined_call_operand.vmem [shape: bf16[64,128], index: 1, kind: input, shape index: {}]
  %s2 = inlined_call_operand.vmem [shape: f32[1,128], index: 2, kind: input, shape index: {}]
  %s3 = inlined_call_operand.vmem [shape: bf16[128,128], index: 3, kind: input, shape index: {}]
  %s4 = inlined_call_operand.vmem [shape: bf16[128,128], index: 4, kind: output, shape index: {}]
  %s5 = sld [smem:[#allocation0]]
  $region26: #{pcm_forward.6} parent=0
    _
  %s7 = ssub.s32 1, %s5
  %s8 = scalar_select 0, %s7, %s5
  // Predicated region
  $region2: #{pcm_forward.6} parent=0 // pred_check
    _
  $region3: #{pcm_forward.6} parent=0 // pred_check_branch
    %10 = sbr.rel (0) target = $region5
  $region4: #{pcm_forward.6} parent=0 // pred_region
    _
  $region5: #{pcm_forward.6} parent=0 // pred_fallthru
    _
  // Predicated region
  $region6: #{pcm_forward.6} parent=0 // pred_check
    _
  $region7: #{pcm_forward.6} parent=0 // pred_check_branch
    %12 = sbr.rel (0) target = $region9
  $region8: #{pcm_forward.6} parent=0 // pred_region
    _
  $region9: #{pcm_forward.6} parent=0 // pred_fallthru
    _
  // Predicated region
  $region10: #{pcm_forward.6} parent=0 // pred_check
    _
  $region11: #{pcm_forward.6} parent=0 // pred_check_branch
    %14 = sbr.rel (0) target = $region13
  $region12: #{pcm_forward.6} parent=0 // pred_region
    _
  $region13: #{pcm_forward.6} parent=0 // pred_fallthru
    _
  // Predicated region
  $region14: #{pcm_forward.6} parent=0 // pred_check
    _
  $region15: #{pcm_forward.6} parent=0 // pred_check_branch
    %16 = sbr.rel (0) target = $region17
  $region16: #{pcm_forward.6} parent=0 // pred_region
    _
  $region17: #{pcm_forward.6} parent=0 // pred_fallthru
    _
  %v18 = vld [vmem:[%s0] sm:$0xf]
  %v19 = vld [vmem:[%s0 + $0x4] sm:$0xf]
  %v20 = vld [vmem:[%s0 + $0x8] sm:$0xf]
  %v21 = vld [vmem:[%s0 + $0xc] sm:$0xf]
  %v22 = vld [vmem:[%s0 + $0x10] sm:$0xf]
  %v23 = vld [vmem:[%s0 + $0x14] sm:$0xf]
  %v24 = vld [vmem:[%s0 + $0x18] sm:$0xf]
  %v25 = vld [vmem:[%s0 + $0x1c] sm:$0xf]
  %v26 = vld [vmem:[%s0 + $0x20] sm:$0xf]
  %v27 = vld [vmem:[%s0 + $0x24] sm:$0xf]
  %v28 = vld [vmem:[%s0 + $0x28] sm:$0xf]
  %v29 = vld [vmem:[%s0 + $0x2c] sm:$0xf]
  %v30 = vld [vmem:[%s0 + $0x30] sm:$0xf]
  %v31 = vld [vmem:[%s0 + $0x34] sm:$0xf]
  %v32 = vld [vmem:[%s0 + $0x38] sm:$0xf]
  %v33 = vld [vmem:[%s0 + $0x3c] sm:$0xf]
  %v34 = vld [vmem:[%s1] sm:$0xf]
  %v35 = vld [vmem:[%s1 + $0x4] sm:$0xf]
  %v36 = vld [vmem:[%s1 + $0x8] sm:$0xf]
  %v37 = vld [vmem:[%s1 + $0xc] sm:$0xf]
  %v38 = vld [vmem:[%s1 + $0x10] sm:$0xf]
  %v39 = vld [vmem:[%s1 + $0x14] sm:$0xf]
  %v40 = vld [vmem:[%s1 + $0x18] sm:$0xf]
  %v41 = vld [vmem:[%s1 + $0x1c] sm:$0xf]
  %v42 = vld [vmem:[%s2] sm:$0x1]
  %v44 = vlaneseq
  %v45 = vshrl.u32 %v44, 7
  %v46 = vsub.s32 0, %v45
  %v47 = vrot.slane %v42, %v46
  %v65 = vunpack.c.l.b16 %v18
  %v66 = vunpack.c.l.b16 %v19
  %v67 = vunpack.c.l.b16 %v20
  %v68 = vunpack.c.l.b16 %v21
  %v69 = vunpack.c.l.b16 %v22
  %v70 = vunpack.c.l.b16 %v23
  %v71 = vunpack.c.l.b16 %v24
  %v72 = vunpack.c.l.b16 %v25
  %v73 = vunpack.c.l.b16 %v26
  %v74 = vunpack.c.l.b16 %v27
  %v75 = vunpack.c.l.b16 %v28
  %v76 = vunpack.c.l.b16 %v29
  %v77 = vunpack.c.l.b16 %v30
  %v78 = vunpack.c.l.b16 %v31
  %v79 = vunpack.c.l.b16 %v32
  %v80 = vunpack.c.l.b16 %v33
  %v81 = vpack.c.b16 %v66, %v65
  %v82 = vpack.c.b16 %v68, %v67
  %v83 = vpack.c.b16 %v70, %v69
  %v84 = vpack.c.b16 %v72, %v71
  %v85 = vpack.c.b16 %v74, %v73
  %v86 = vpack.c.b16 %v76, %v75
  %v87 = vpack.c.b16 %v78, %v77
  %v88 = vpack.c.b16 %v80, %v79
  %v97 = vunpack.c.l.b16 %v34
  %v98 = vunpack.c.l.b16 %v35
  %v99 = vunpack.c.l.b16 %v36
  %v100 = vunpack.c.l.b16 %v37
  %v101 = vunpack.c.l.b16 %v38
  %v102 = vunpack.c.l.b16 %v39
  %v103 = vunpack.c.l.b16 %v40
  %v104 = vunpack.c.l.b16 %v41
  %v105 = vpack.c.b16 %v98, %v97
  %v106 = vpack.c.b16 %v100, %v99
  %v107 = vpack.c.b16 %v102, %v101
  %v108 = vpack.c.b16 %v104, %v103
  %vm113 = vcmask 523264
  %v115 = vsel %vm113, %v81, 0
  %v118 = vsel %vm113, %v82, 0
  %v121 = vsel %vm113, %v83, 0
  %v124 = vsel %vm113, %v84, 0
  %v127 = vsel %vm113, %v85, 0
  %v130 = vsel %vm113, %v86, 0
  %v133 = vsel %vm113, %v87, 0
  %v136 = vsel %vm113, %v88, 0
  %138 = vmatprep.subr.bf16.mxu0 0
  %139 = vmatpush1.bf16.msra.mxu0 %v105
  %140 = vmatprep.subr.bf16.mxu0 0
  %141 = vmatpush1.bf16.msra.mxu0 %v106
  %142 = vmatprep.subr.bf16.mxu0 0
  %143 = vmatpush1.bf16.msra.mxu0 %v107
  %144 = vmatprep.subr.bf16.mxu0 0
  %145 = vmatpush1.bf16.msra.mxu0 %v108
  %146 = vmatprep.subr.bf16.mxu0 0
  %147 = vmatpush1.bf16.msra.mxu0 0
  %148 = vmatprep.subr.bf16.mxu0 0
  %149 = vmatpush1.bf16.msra.mxu0 0
  %150 = vmatprep.subr.bf16.mxu0 0
  %151 = vmatpush1.bf16.msra.mxu0 0
  %152 = vmatprep.subr.bf16.mxu0 0
  %153 = vmatpush1.bf16.msra.mxu0 0
  %154 = vmatprep.subr.bf16.mxu0 0
  %155 = vmatpush1.bf16.msra.mxu0 0
  %156 = vmatprep.subr.bf16.mxu0 0
  %157 = vmatpush1.bf16.msra.mxu0 0
  %158 = vmatprep.subr.bf16.mxu0 0
  %159 = vmatpush1.bf16.msra.mxu0 0
  %160 = vmatprep.subr.bf16.mxu0 0
  %161 = vmatpush1.bf16.msra.mxu0 0
  %162 = vmatprep.subr.bf16.mxu0 0
  %163 = vmatpush1.bf16.msra.mxu0 0
  %164 = vmatprep.subr.bf16.mxu0 0
  %165 = vmatpush1.bf16.msra.mxu0 0
  %166 = vmatprep.subr.bf16.mxu0 0
  %167 = vmatpush1.bf16.msra.mxu0 0
  %168 = vmatprep.subr.bf16.mxu0 0
  %169 = vmatpush1.bf16.msra.mxu0 0
  %170 = vmatprep.mubr.bf16.mxu0 0
  %171 = vmatmul.mubr.bf16.gmra.mrb[0].mxu0 %v115
  %v172 = vpop.f32.mrb[0].mxu0
  %v173 = vadd.f32 %v47, %v172
  %v174 = vpop.f32.mrb[0].mxu0
  %v175 = vpop.f32.mrb[0].mxu0
  %v176 = vadd.f32 %v47, %v175
  %v177 = vpop.f32.mrb[0].mxu0
  %178 = vmatprep.mubr.bf16.mxu0 0
  %179 = vmatmul.mubr.bf16.gmra.mrb[0].mxu0 %v118
  %v180 = vpop.f32.mrb[0].mxu0
  %v181 = vadd.f32 %v47, %v180
  %v182 = vpop.f32.mrb[0].mxu0
  %v183 = vpop.f32.mrb[0].mxu0
  %v184 = vadd.f32 %v47, %v183
  %v185 = vpop.f32.mrb[0].mxu0
  %186 = vmatprep.mubr.bf16.mxu0 0
  %187 = vmatmul.mubr.bf16.gmra.mrb[0].mxu0 %v121
  %v188 = vpop.f32.mrb[0].mxu0
  %v189 = vadd.f32 %v47, %v188
  %v190 = vpop.f32.mrb[0].mxu0
  %v191 = vpop.f32.mrb[0].mxu0
  %v192 = vadd.f32 %v47, %v191
  %v193 = vpop.f32.mrb[0].mxu0
  %194 = vmatprep.mubr.bf16.mxu0 0
  %195 = vmatmul.mubr.bf16.gmra.mrb[0].mxu0 %v124
  %v196 = vpop.f32.mrb[0].mxu0
  %v197 = vadd.f32 %v47, %v196
  %v198 = vpop.f32.mrb[0].mxu0
  %v199 = vpop.f32.mrb[0].mxu0
  %v200 = vadd.f32 %v47, %v199
  %v201 = vpop.f32.mrb[0].mxu0
  %202 = vmatprep.mubr.bf16.mxu0 0
  %203 = vmatmul.mubr.bf16.gmra.mrb[0].mxu0 %v127
  %v204 = vpop.f32.mrb[0].mxu0
  %v205 = vadd.f32 %v47, %v204
  %v206 = vpop.f32.mrb[0].mxu0
  %v207 = vpop.f32.mrb[0].mxu0
  %v208 = vadd.f32 %v47, %v207
  %v209 = vpop.f32.mrb[0].mxu0
  %210 = vmatprep.mubr.bf16.mxu0 0
  %211 = vmatmul.mubr.bf16.gmra.mrb[0].mxu0 %v130
  %v212 = vpop.f32.mrb[0].mxu0
  %v213 = vadd.f32 %v47, %v212
  %v214 = vpop.f32.mrb[0].mxu0
  %v215 = vpop.f32.mrb[0].mxu0
  %v216 = vadd.f32 %v47, %v215
  %v217 = vpop.f32.mrb[0].mxu0
  %218 = vmatprep.mubr.bf16.mxu0 0
  %219 = vmatmul.mubr.bf16.gmra.mrb[0].mxu0 %v133
  %v220 = vpop.f32.mrb[0].mxu0
  %v221 = vadd.f32 %v47, %v220
  %v222 = vpop.f32.mrb[0].mxu0
  %v223 = vpop.f32.mrb[0].mxu0
  %v224 = vadd.f32 %v47, %v223
  %v225 = vpop.f32.mrb[0].mxu0
  %226 = vmatprep.mubr.bf16.mxu0 0
  %227 = vmatmul.mubr.bf16.gmra.mrb[0].mxu0 %v136
  %v228 = vpop.f32.mrb[0].mxu0
  %v229 = vadd.f32 %v47, %v228
  %v230 = vpop.f32.mrb[0].mxu0
  %v231 = vpop.f32.mrb[0].mxu0
  %v232 = vadd.f32 %v47, %v231
  %v233 = vpop.f32.mrb[0].mxu0
  %234 = vdwg.mxu0
  %v235 = vmax.f32 %v173, 0.0
  %v236 = vmax.f32 %v176, 0.0
  %v237 = vmax.f32 %v181, 0.0
  %v238 = vmax.f32 %v184, 0.0
  %v239 = vmax.f32 %v189, 0.0
  %v240 = vmax.f32 %v192, 0.0
  %v241 = vmax.f32 %v197, 0.0
  %v242 = vmax.f32 %v200, 0.0
  %v243 = vmax.f32 %v205, 0.0
  %v244 = vmax.f32 %v208, 0.0
  %v245 = vmax.f32 %v213, 0.0
  %v246 = vmax.f32 %v216, 0.0
  %v247 = vmax.f32 %v221, 0.0
  %v248 = vmax.f32 %v224, 0.0
  %v249 = vmax.f32 %v229, 0.0
  %v250 = vmax.f32 %v232, 0.0
  %v251 = vpack.c.bf16 %v236, %v235
  %v252 = vpack.c.bf16 %v238, %v237
  %v253 = vpack.c.bf16 %v240, %v239
  %v254 = vpack.c.bf16 %v242, %v241
  %v255 = vpack.c.bf16 %v244, %v243
  %v256 = vpack.c.bf16 %v246, %v245
  %v257 = vpack.c.bf16 %v248, %v247
  %v258 = vpack.c.bf16 %v250, %v249
  %v259 = vld [vmem:[%s3] sm:$0xf]
  %v260 = vld [vmem:[%s3 + $0x4] sm:$0xf]
  %v261 = vld [vmem:[%s3 + $0x8] sm:$0xf]
  %v262 = vld [vmem:[%s3 + $0xc] sm:$0xf]
  %v263 = vld [vmem:[%s3 + $0x10] sm:$0xf]
  %v264 = vld [vmem:[%s3 + $0x14] sm:$0xf]
  %v265 = vld [vmem:[%s3 + $0x18] sm:$0xf]
  %v266 = vld [vmem:[%s3 + $0x1c] sm:$0xf]
  %v267 = vld [vmem:[%s3 + $0x20] sm:$0xf]
  %v268 = vld [vmem:[%s3 + $0x24] sm:$0xf]
  %v269 = vld [vmem:[%s3 + $0x28] sm:$0xf]
  %v270 = vld [vmem:[%s3 + $0x2c] sm:$0xf]
  %v271 = vld [vmem:[%s3 + $0x30] sm:$0xf]
  %v272 = vld [vmem:[%s3 + $0x34] sm:$0xf]
  %v273 = vld [vmem:[%s3 + $0x38] sm:$0xf]
  %v274 = vld [vmem:[%s3 + $0x3c] sm:$0xf]
  %v291 = vunpack.c.l.b16 %v259
  %v292 = vunpack.c.l.b16 %v260
  %v293 = vunpack.c.l.b16 %v261
  %v294 = vunpack.c.l.b16 %v262
  %v295 = vunpack.c.l.b16 %v263
  %v296 = vunpack.c.l.b16 %v264
  %v297 = vunpack.c.l.b16 %v265
  %v298 = vunpack.c.l.b16 %v266
  %v299 = vunpack.c.l.b16 %v267
  %v300 = vunpack.c.l.b16 %v268
  %v301 = vunpack.c.l.b16 %v269
  %v302 = vunpack.c.l.b16 %v270
  %v303 = vunpack.c.l.b16 %v271
  %v304 = vunpack.c.l.b16 %v272
  %v305 = vunpack.c.l.b16 %v273
  %v306 = vunpack.c.l.b16 %v274
  %v307 = vpack.c.b16 %v292, %v291
  %v308 = vpack.c.b16 %v294, %v293
  %v309 = vpack.c.b16 %v296, %v295
  %v310 = vpack.c.b16 %v298, %v297
  %v311 = vpack.c.b16 %v300, %v299
  %v312 = vpack.c.b16 %v302, %v301
  %v313 = vpack.c.b16 %v304, %v303
  %v314 = vpack.c.b16 %v306, %v305
  %323 = vmatprep.subr.bf16.mxu0 0
  %324 = vmatpush1.bf16.msra.mxu0 %v307
  %325 = vmatprep.subr.bf16.mxu0 0
  %326 = vmatpush1.bf16.msra.mxu0 %v308
  %327 = vmatprep.subr.bf16.mxu0 0
  %328 = vmatpush1.bf16.msra.mxu0 %v309
  %329 = vmatprep.subr.bf16.mxu0 0
  %330 = vmatpush1.bf16.msra.mxu0 %v310
  %331 = vmatprep.subr.bf16.mxu0 0
  %332 = vmatpush1.bf16.msra.mxu0 %v311
  %333 = vmatprep.subr.bf16.mxu0 0
  %334 = vmatpush1.bf16.msra.mxu0 %v312
  %335 = vmatprep.subr.bf16.mxu0 0
  %336 = vmatpush1.bf16.msra.mxu0 %v313
  %337 = vmatprep.subr.bf16.mxu0 0
  %338 = vmatpush1.bf16.msra.mxu0 %v314
  %339 = vmatprep.subr.bf16.mxu0 0
  %340 = vmatpush1.bf16.msra.mxu0 0
  %341 = vmatprep.subr.bf16.mxu0 0
  %342 = vmatpush1.bf16.msra.mxu0 0
  %343 = vmatprep.subr.bf16.mxu0 0
  %344 = vmatpush1.bf16.msra.mxu0 0
  %345 = vmatprep.subr.bf16.mxu0 0
  %346 = vmatpush1.bf16.msra.mxu0 0
  %347 = vmatprep.subr.bf16.mxu0 0
  %348 = vmatpush1.bf16.msra.mxu0 0
  %349 = vmatprep.subr.bf16.mxu0 0
  %350 = vmatpush1.bf16.msra.mxu0 0
  %351 = vmatprep.subr.bf16.mxu0 0
  %352 = vmatpush1.bf16.msra.mxu0 0
  %353 = vmatprep.subr.bf16.mxu0 0
  %354 = vmatpush1.bf16.msra.mxu0 0
  %355 = vmatprep.mubr.bf16.mxu0 0
  %356 = vmatmul.mubr.bf16.gmra.mrb[0].mxu0 %v251
  %v357 = vpop.f32.mrb[0].mxu0
  %v358 = vadd.f32 0.0, %v357
  %v359 = vpop.f32.mrb[0].mxu0
  %v360 = vpop.f32.mrb[0].mxu0
  %v361 = vadd.f32 0.0, %v360
  %v362 = vpop.f32.mrb[0].mxu0
  %363 = vmatprep.mubr.bf16.mxu0 0
  %364 = vmatmul.mubr.bf16.gmra.mrb[0].mxu0 %v252
  %v365 = vpop.f32.mrb[0].mxu0
  %v366 = vadd.f32 0.0, %v365
  %v367 = vpop.f32.mrb[0].mxu0
  %v368 = vpop.f32.mrb[0].mxu0
  %v369 = vadd.f32 0.0, %v368
  %v370 = vpop.f32.mrb[0].mxu0
  %371 = vmatprep.mubr.bf16.mxu0 0
  %372 = vmatmul.mubr.bf16.gmra.mrb[0].mxu0 %v253
  %v373 = vpop.f32.mrb[0].mxu0
  %v374 = vadd.f32 0.0, %v373
  %v375 = vpop.f32.mrb[0].mxu0
  %v376 = vpop.f32.mrb[0].mxu0
  %v377 = vadd.f32 0.0, %v376
  %v378 = vpop.f32.mrb[0].mxu0
  %379 = vmatprep.mubr.bf16.mxu0 0
  %380 = vmatmul.mubr.bf16.gmra.mrb[0].mxu0 %v254
  %v381 = vpop.f32.mrb[0].mxu0
  %v382 = vadd.f32 0.0, %v381
  %v383 = vpop.f32.mrb[0].mxu0
  %v384 = vpop.f32.mrb[0].mxu0
  %v385 = vadd.f32 0.0, %v384
  %v386 = vpop.f32.mrb[0].mxu0
  %387 = vmatprep.mubr.bf16.mxu0 0
  %388 = vmatmul.mubr.bf16.gmra.mrb[0].mxu0 %v255
  %v389 = vpop.f32.mrb[0].mxu0
  %v390 = vadd.f32 0.0, %v389
  %v391 = vpop.f32.mrb[0].mxu0
  %v392 = vpop.f32.mrb[0].mxu0
  %v393 = vadd.f32 0.0, %v392
  %v394 = vpop.f32.mrb[0].mxu0
  %395 = vmatprep.mubr.bf16.mxu0 0
  %396 = vmatmul.mubr.bf16.gmra.mrb[0].mxu0 %v256
  %v397 = vpop.f32.mrb[0].mxu0
  %v398 = vadd.f32 0.0, %v397
  %v399 = vpop.f32.mrb[0].mxu0
  %v400 = vpop.f32.mrb[0].mxu0
  %v401 = vadd.f32 0.0, %v400
  %v402 = vpop.f32.mrb[0].mxu0
  %403 = vmatprep.mubr.bf16.mxu0 0
  %404 = vmatmul.mubr.bf16.gmra.mrb[0].mxu0 %v257
  %v405 = vpop.f32.mrb[0].mxu0
  %v406 = vadd.f32 0.0, %v405
  %v407 = vpop.f32.mrb[0].mxu0
  %v408 = vpop.f32.mrb[0].mxu0
  %v409 = vadd.f32 0.0, %v408
  %v410 = vpop.f32.mrb[0].mxu0
  %411 = vmatprep.mubr.bf16.mxu0 0
  %412 = vmatmul.mubr.bf16.gmra.mrb[0].mxu0 %v258
  %v413 = vpop.f32.mrb[0].mxu0
  %v414 = vadd.f32 0.0, %v413
  %v415 = vpop.f32.mrb[0].mxu0
  %v416 = vpop.f32.mrb[0].mxu0
  %v417 = vadd.f32 0.0, %v416
  %v418 = vpop.f32.mrb[0].mxu0
  %419 = vdwg.mxu0
  %v420 = vpack.c.bf16 %v361, %v358
  %v421 = vpack.c.bf16 %v369, %v366
  %v422 = vpack.c.bf16 %v377, %v374
  %v423 = vpack.c.bf16 %v385, %v382
  %v424 = vpack.c.bf16 %v393, %v390
  %v425 = vpack.c.bf16 %v401, %v398
  %v426 = vpack.c.bf16 %v409, %v406
  %v427 = vpack.c.bf16 %v417, %v414
  %v436 = vunpack.c.l.b16 %v420
  %v437 = vunpack.c.h.b16 %v420
  %v438 = vunpack.c.l.b16 %v421
  %v439 = vunpack.c.h.b16 %v421
  %v440 = vunpack.c.l.b16 %v422
  %v441 = vunpack.c.h.b16 %v422
  %v442 = vunpack.c.l.b16 %v423
  %v443 = vunpack.c.h.b16 %v423
  %v444 = vunpack.c.l.b16 %v424
  %v445 = vunpack.c.h.b16 %v424
  %v446 = vunpack.c.l.b16 %v425
  %v447 = vunpack.c.h.b16 %v425
  %v448 = vunpack.c.l.b16 %v426
  %v449 = vunpack.c.h.b16 %v426
  %v450 = vunpack.c.l.b16 %v427
  %v451 = vunpack.c.h.b16 %v427
  %v452 = vpack.c.b16 %v436, %v436
  %v453 = vpack.c.b16 %v437, %v437
  %v454 = vpack.c.b16 %v438, %v438
  %v455 = vpack.c.b16 %v439, %v439
  %v456 = vpack.c.b16 %v440, %v440
  %v457 = vpack.c.b16 %v441, %v441
  %v458 = vpack.c.b16 %v442, %v442
  %v459 = vpack.c.b16 %v443, %v443
  %v460 = vpack.c.b16 %v444, %v444
  %v461 = vpack.c.b16 %v445, %v445
  %v462 = vpack.c.b16 %v446, %v446
  %v463 = vpack.c.b16 %v447, %v447
  %v464 = vpack.c.b16 %v448, %v448
  %v465 = vpack.c.b16 %v449, %v449
  %v466 = vpack.c.b16 %v450, %v450
  %v467 = vpack.c.b16 %v451, %v451
  %484 = vst [vmem:[%s4] sm:$0xf] %v452
  %485 = vst [vmem:[%s4 + $0x4] sm:$0xf] %v453
  %486 = vst [vmem:[%s4 + $0x8] sm:$0xf] %v454
  %487 = vst [vmem:[%s4 + $0xc] sm:$0xf] %v455
  %488 = vst [vmem:[%s4 + $0x10] sm:$0xf] %v456
  %489 = vst [vmem:[%s4 + $0x14] sm:$0xf] %v457
  %490 = vst [vmem:[%s4 + $0x18] sm:$0xf] %v458
  %491 = vst [vmem:[%s4 + $0x1c] sm:$0xf] %v459
  %492 = vst [vmem:[%s4 + $0x20] sm:$0xf] %v460
  %493 = vst [vmem:[%s4 + $0x24] sm:$0xf] %v461
  %494 = vst [vmem:[%s4 + $0x28] sm:$0xf] %v462
  %495 = vst [vmem:[%s4 + $0x2c] sm:$0xf] %v463
  %496 = vst [vmem:[%s4 + $0x30] sm:$0xf] %v464
  %497 = vst [vmem:[%s4 + $0x34] sm:$0xf] %v465
  %498 = vst [vmem:[%s4 + $0x38] sm:$0xf] %v466
  %499 = vst [vmem:[%s4 + $0x3c] sm:$0xf] %v467
  // Predicated region
  $region18: #{pcm_forward.6} parent=0 // pred_check
    _
  $region19: #{pcm_forward.6} parent=0 // pred_check_branch
    %501 = sbr.rel (0) target = $region21
  $region20: #{pcm_forward.6} parent=0 // pred_region
    _
  $region21: #{pcm_forward.6} parent=0 // pred_fallthru
    _
  // Predicated region
  $region22: #{pcm_forward.6} parent=0 // pred_check
    _
  $region23: #{pcm_forward.6} parent=0 // pred_check_branch
    %503 = sbr.rel (0) target = $region25
  $region24: #{pcm_forward.6} parent=0 // pred_region
    _
  $region25: #{pcm_forward.6} parent=0 // pred_fallthru
    _

// kernel: pcm_forward.5
$region0: #{pcm_forward.5}
  #allocation0 [shape = 'u32[]', space=smem, size = 0x4, offset = 0x4, fixed_abs, tag = 'smem constant byte address 0x4 - core index']
  #allocation1 [shape = 'u32[144,128]{1,0:T(1,128)}', space=vmem, size = 0x12000, scoped, tag = 'internal scratch']
  %s0 = inlined_call_operand.vmem [shape: bf16[512,32], index: 0, kind: input, shape index: {}]
  %s1 = inlined_call_operand.vmem [shape: bf16[32,128], index: 1, kind: input, shape index: {}]
  %s2 = inlined_call_operand.vmem [shape: f32[1,128], index: 2, kind: input, shape index: {}]
  %s3 = inlined_call_operand.vmem [shape: bf16[512,128], index: 3, kind: output, shape index: {}]
  %s4 = sld [smem:[#allocation0]]
  $region22: #{pcm_forward.5} parent=0
    _
  %s6 = ssub.s32 1, %s4
  %s7 = scalar_select 0, %s6, %s4
  // Predicated region
  $region2: #{pcm_forward.5} parent=0 // pred_check
    _
  $region3: #{pcm_forward.5} parent=0 // pred_check_branch
    %9 = sbr.rel (0) target = $region5
  $region4: #{pcm_forward.5} parent=0 // pred_region
    _
  $region5: #{pcm_forward.5} parent=0 // pred_fallthru
    _
  // Predicated region
  $region6: #{pcm_forward.5} parent=0 // pred_check
    _
  $region7: #{pcm_forward.5} parent=0 // pred_check_branch
    %11 = sbr.rel (0) target = $region9
  $region8: #{pcm_forward.5} parent=0 // pred_region
    _
  $region9: #{pcm_forward.5} parent=0 // pred_fallthru
    _
  // Predicated region
  $region10: #{pcm_forward.5} parent=0 // pred_check
    _
  $region11: #{pcm_forward.5} parent=0 // pred_check_branch
    %13 = sbr.rel (0) target = $region13
  $region12: #{pcm_forward.5} parent=0 // pred_region
    _
  $region13: #{pcm_forward.5} parent=0 // pred_fallthru
    _
  %v15 = vld [vmem:[%s0] sm:$0xf]
  %v16 = vld [vmem:[%s0 + $0x4] sm:$0xf]
  %v17 = vld [vmem:[%s0 + $0x8] sm:$0xf]
  %v18 = vld [vmem:[%s0 + $0xc] sm:$0xf]
  %v19 = vld [vmem:[%s0 + $0x10] sm:$0xf]
  %v20 = vld [vmem:[%s0 + $0x14] sm:$0xf]
  %v21 = vld [vmem:[%s0 + $0x18] sm:$0xf]
  %v22 = vld [vmem:[%s0 + $0x1c] sm:$0xf]
  %v23 = vld [vmem:[%s0 + $0x20] sm:$0xf]
  %v24 = vld [vmem:[%s0 + $0x24] sm:$0xf]
  %v25 = vld [vmem:[%s0 + $0x28] sm:$0xf]
  %v26 = vld [vmem:[%s0 + $0x2c] sm:$0xf]
  %v27 = vld [vmem:[%s0 + $0x30] sm:$0xf]
  %v28 = vld [vmem:[%s0 + $0x34] sm:$0xf]
  %v29 = vld [vmem:[%s0 + $0x38] sm:$0xf]
  %v30 = vld [vmem:[%s0 + $0x3c] sm:$0xf]
  %v31 = vld [vmem:[%s0 + $0x40] sm:$0xf]
  %v32 = vld [vmem:[%s0 + $0x44] sm:$0xf]
  %v33 = vld [vmem:[%s0 + $0x48] sm:$0xf]
  %v34 = vld [vmem:[%s0 + $0x4c] sm:$0xf]
  %v35 = vld [vmem:[%s0 + $0x50] sm:$0xf]
  %v36 = vld [vmem:[%s0 + $0x54] sm:$0xf]
  %v37 = vld [vmem:[%s0 + $0x58] sm:$0xf]
  %v38 = vld [vmem:[%s0 + $0x5c] sm:$0xf]
  %v39 = vld [vmem:[%s0 + $0x60] sm:$0xf]
  %v40 = vld [vmem:[%s0 + $0x64] sm:$0xf]
  %v41 = vld [vmem:[%s0 + $0x68] sm:$0xf]
  %v42 = vld [vmem:[%s0 + $0x6c] sm:$0xf]
  %v43 = vld [vmem:[%s0 + $0x70] sm:$0xf]
  %v44 = vld [vmem:[%s0 + $0x74] sm:$0xf]
  %v45 = vld [vmem:[%s0 + $0x78] sm:$0xf]
  %v46 = vld [vmem:[%s0 + $0x7c] sm:$0xf]
  %v47 = vld [vmem:[%s0 + $0x80] sm:$0xf]
  %v48 = vld [vmem:[%s0 + $0x84] sm:$0xf]
  %v49 = vld [vmem:[%s0 + $0x88] sm:$0xf]
  %v50 = vld [vmem:[%s0 + $0x8c] sm:$0xf]
  %v51 = vld [vmem:[%s0 + $0x90] sm:$0xf]
  %v52 = vld [vmem:[%s0 + $0x94] sm:$0xf]
  %v53 = vld [vmem:[%s0 + $0x98] sm:$0xf]
  %v54 = vld [vmem:[%s0 + $0x9c] sm:$0xf]
  %v55 = vld [vmem:[%s0 + $0xa0] sm:$0xf]
  %v56 = vld [vmem:[%s0 + $0xa4] sm:$0xf]
  %v57 = vld [vmem:[%s0 + $0xa8] sm:$0xf]
  %v58 = vld [vmem:[%s0 + $0xac] sm:$0xf]
  %v59 = vld [vmem:[%s0 + $0xb0] sm:$0xf]
  %v60 = vld [vmem:[%s0 + $0xb4] sm:$0xf]
  %v61 = vld [vmem:[%s0 + $0xb8] sm:$0xf]
  %v62 = vld [vmem:[%s0 + $0xbc] sm:$0xf]
  %v63 = vld [vmem:[%s0 + $0xc0] sm:$0xf]
  %v64 = vld [vmem:[%s0 + $0xc4] sm:$0xf]
  %v65 = vld [vmem:[%s0 + $0xc8] sm:$0xf]
  %v66 = vld [vmem:[%s0 + $0xcc] sm:$0xf]
  %v67 = vld [vmem:[%s0 + $0xd0] sm:$0xf]
  %v68 = vld [vmem:[%s0 + $0xd4] sm:$0xf]
  %v69 = vld [vmem:[%s0 + $0xd8] sm:$0xf]
  %v70 = vld [vmem:[%s0 + $0xdc] sm:$0xf]
  %v71 = vld [vmem:[%s0 + $0xe0] sm:$0xf]
  %v72 = vld [vmem:[%s0 + $0xe4] sm:$0xf]
  %v73 = vld [vmem:[%s0 + $0xe8] sm:$0xf]
  %v74 = vld [vmem:[%s0 + $0xec] sm:$0xf]
  %v75 = vld [vmem:[%s0 + $0xf0] sm:$0xf]
  %v76 = vld [vmem:[%s0 + $0xf4] sm:$0xf]
  %v77 = vld [vmem:[%s0 + $0xf8] sm:$0xf]
  %v78 = vld [vmem:[%s0 + $0xfc] sm:$0xf]
  %v79 = vld [vmem:[%s1] sm:$0xf]
  %v80 = vld [vmem:[%s1 + $0x4] sm:$0xf]
  %v81 = vld [vmem:[%s1 + $0x8] sm:$0xf]
  %v82 = vld [vmem:[%s1 + $0xc] sm:$0xf]
  %v83 = vld [vmem:[%s2] sm:$0x1]
  %v85 = vlaneseq
  %v86 = vshrl.u32 %v85, 7
  %v87 = vsub.s32 0, %v86
  %v88 = vrot.slane %v83, %v87
  %v154 = vunpack.c.l.b16 %v15
  %v155 = vunpack.c.l.b16 %v16
  %v156 = vunpack.c.l.b16 %v17
  %v157 = vunpack.c.l.b16 %v18
  %v158 = vunpack.c.l.b16 %v19
  %v159 = vunpack.c.l.b16 %v20
  %v160 = vunpack.c.l.b16 %v21
  %v161 = vunpack.c.l.b16 %v22
  %v162 = vunpack.c.l.b16 %v23
  %v163 = vunpack.c.l.b16 %v24
  %v164 = vunpack.c.l.b16 %v25
  %v165 = vunpack.c.l.b16 %v26
  %v166 = vunpack.c.l.b16 %v27
  %v167 = vunpack.c.l.b16 %v28
  %v168 = vunpack.c.l.b16 %v29
  %v169 = vunpack.c.l.b16 %v30
  %v170 = vunpack.c.l.b16 %v31
  %v171 = vunpack.c.l.b16 %v32
  %v172 = vunpack.c.l.b16 %v33
  %v173 = vunpack.c.l.b16 %v34
  %v174 = vunpack.c.l.b16 %v35
  %v175 = vunpack.c.l.b16 %v36
  %v176 = vunpack.c.l.b16 %v37
  %v177 = vunpack.c.l.b16 %v38
  %v178 = vunpack.c.l.b16 %v39
  %v179 = vunpack.c.l.b16 %v40
  %v180 = vunpack.c.l.b16 %v41
  %v181 = vunpack.c.l.b16 %v42
  %v182 = vunpack.c.l.b16 %v43
  %v183 = vunpack.c.l.b16 %v44
  %v184 = vunpack.c.l.b16 %v45
  %v185 = vunpack.c.l.b16 %v46
  %v186 = vunpack.c.l.b16 %v47
  %v187 = vunpack.c.l.b16 %v48
  %v188 = vunpack.c.l.b16 %v49
  %v189 = vunpack.c.l.b16 %v50
  %v190 = vunpack.c.l.b16 %v51
  %v191 = vunpack.c.l.b16 %v52
  %v192 = vunpack.c.l.b16 %v53
  %v193 = vunpack.c.l.b16 %v54
  %v194 = vunpack.c.l.b16 %v55
  %v195 = vunpack.c.l.b16 %v56
  %v196 = vunpack.c.l.b16 %v57
  %v197 = vunpack.c.l.b16 %v58
  %v198 = vunpack.c.l.b16 %v59
  %v199 = vunpack.c.l.b16 %v60
  %v200 = vunpack.c.l.b16 %v61
  %v201 = vunpack.c.l.b16 %v62
  %v202 = vunpack.c.l.b16 %v63
  %v203 = vunpack.c.l.b16 %v64
  %v204 = vunpack.c.l.b16 %v65
  %v205 = vunpack.c.l.b16 %v66
  %v206 = vunpack.c.l.b16 %v67
  %v207 = vunpack.c.l.b16 %v68
  %v208 = vunpack.c.l.b16 %v69
  %v209 = vunpack.c.l.b16 %v70
  %v210 = vunpack.c.l.b16 %v71
  %v211 = vunpack.c.l.b16 %v72
  %v212 = vunpack.c.l.b16 %v73
  %v213 = vunpack.c.l.b16 %v74
  %v214 = vunpack.c.l.b16 %v75
  %v215 = vunpack.c.l.b16 %v76
  %v216 = vunpack.c.l.b16 %v77
  %v217 = vunpack.c.l.b16 %v78
  %v218 = vpack.c.b16 %v155, %v154
  %v219 = vpack.c.b16 %v157, %v156
  %v220 = vpack.c.b16 %v159, %v158
  %v221 = vpack.c.b16 %v161, %v160
  %v222 = vpack.c.b16 %v163, %v162
  %v223 = vpack.c.b16 %v165, %v164
  %v224 = vpack.c.b16 %v167, %v166
  %v225 = vpack.c.b16 %v169, %v168
  %v226 = vpack.c.b16 %v171, %v170
  %v227 = vpack.c.b16 %v173, %v172
  %v228 = vpack.c.b16 %v175, %v174
  %v229 = vpack.c.b16 %v177, %v176
  %v230 = vpack.c.b16 %v179, %v178
  %v231 = vpack.c.b16 %v181, %v180
  %v232 = vpack.c.b16 %v183, %v182
  %v233 = vpack.c.b16 %v185, %v184
  %v234 = vpack.c.b16 %v187, %v186
  %v235 = vpack.c.b16 %v189, %v188
  %v236 = vpack.c.b16 %v191, %v190
  %v237 = vpack.c.b16 %v193, %v192
  %v238 = vpack.c.b16 %v195, %v194
  %v239 = vpack.c.b16 %v197, %v196
  %v240 = vpack.c.b16 %v199, %v198
  %v241 = vpack.c.b16 %v201, %v200
  %v242 = vpack.c.b16 %v203, %v202
  %v243 = vpack.c.b16 %v205, %v204
  %v244 = vpack.c.b16 %v207, %v206
  %v245 = vpack.c.b16 %v209, %v208
  %v246 = vpack.c.b16 %v211, %v210
  %v247 = vpack.c.b16 %v213, %v212
  %v248 = vpack.c.b16 %v215, %v214
  %v249 = vpack.c.b16 %v217, %v216
  %v254 = vunpack.c.l.b16 %v79
  %v255 = vunpack.c.l.b16 %v80
  %v256 = vunpack.c.l.b16 %v81
  %v257 = vunpack.c.l.b16 %v82
  %v258 = vpack.c.b16 %v255, %v254
  %v259 = vpack.c.b16 %v257, %v256
  %vm262 = vcmask 261120
  %v264 = vsel %vm262, %v218, 0
  %v267 = vsel %vm262, %v219, 0
  %v270 = vsel %vm262, %v220, 0
  %v273 = vsel %vm262, %v221, 0
  %v276 = vsel %vm262, %v222, 0
  %v279 = vsel %vm262, %v223, 0
  %v282 = vsel %vm262, %v224, 0
  %v285 = vsel %vm262, %v225, 0
  %v288 = vsel %vm262, %v226, 0
  %v291 = vsel %vm262, %v227, 0
  %v294 = vsel %vm262, %v228, 0
  %v297 = vsel %vm262, %v229, 0
  %v300 = vsel %vm262, %v230, 0
  %v303 = vsel %vm262, %v231, 0
  %v306 = vsel %vm262, %v232, 0
  %v309 = vsel %vm262, %v233, 0
  %v312 = vsel %vm262, %v234, 0
  %v315 = vsel %vm262, %v235, 0
  %v318 = vsel %vm262, %v236, 0
  %v321 = vsel %vm262, %v237, 0
  %v324 = vsel %vm262, %v238, 0
  %v327 = vsel %vm262, %v239, 0
  %v330 = vsel %vm262, %v240, 0
  %v333 = vsel %vm262, %v241, 0
  %v336 = vsel %vm262, %v242, 0
  %v339 = vsel %vm262, %v243, 0
  %v342 = vsel %vm262, %v244, 0
  %v345 = vsel %vm262, %v245, 0
  %v348 = vsel %vm262, %v246, 0
  %v351 = vsel %vm262, %v247, 0
  %v354 = vsel %vm262, %v248, 0
  %v357 = vsel %vm262, %v249, 0
  %359 = vmatprep.subr.bf16.mxu0 0
  %360 = vmatpush1.bf16.msra.mxu0 %v258
  %361 = vmatprep.subr.bf16.mxu0 0
  %362 = vmatpush1.bf16.msra.mxu0 %v259
  %363 = vmatprep.subr.bf16.mxu0 0
  %364 = vmatpush1.bf16.msra.mxu0 0
  %365 = vmatprep.subr.bf16.mxu0 0
  %366 = vmatpush1.bf16.msra.mxu0 0
  %367 = vmatprep.subr.bf16.mxu0 0
  %368 = vmatpush1.bf16.msra.mxu0 0
  %369 = vmatprep.subr.bf16.mxu0 0
  %370 = vmatpush1.bf16.msra.mxu0 0
  %371 = vmatprep.subr.bf16.mxu0 0
  %372 = vmatpush1.bf16.msra.mxu0 0
  %373 = vmatprep.subr.bf16.mxu0 0
  %374 = vmatpush1.bf16.msra.mxu0 0
  %375 = vmatprep.subr.bf16.mxu0 0
  %376 = vmatpush1.bf16.msra.mxu0 0
  %377 = vmatprep.subr.bf16.mxu0 0
  %378 = vmatpush1.bf16.msra.mxu0 0
  %379 = vmatprep.subr.bf16.mxu0 0
  %380 = vmatpush1.bf16.msra.mxu0 0
  %381 = vmatprep.subr.bf16.mxu0 0
  %382 = vmatpush1.bf16.msra.mxu0 0
  %383 = vmatprep.subr.bf16.mxu0 0
  %384 = vmatpush1.bf16.msra.mxu0 0
  %385 = vmatprep.subr.bf16.mxu0 0
  %386 = vmatpush1.bf16.msra.mxu0 0
  %387 = vmatprep.subr.bf16.mxu0 0
  %388 = vmatpush1.bf16.msra.mxu0 0
  %389 = vmatprep.subr.bf16.mxu0 0
  %390 = vmatpush1.bf16.msra.mxu0 0
  %391 = vmatprep.mubr.bf16.mxu0 0
  %392 = vmatmul.mubr.bf16.gmra.mrb[0].mxu0 %v264
  %v393 = vpop.f32.mrb[0].mxu0
  %v394 = vadd.f32 %v88, %v393
  %v395 = vpop.f32.mrb[0].mxu0
  %v396 = vpop.f32.mrb[0].mxu0
  %v397 = vadd.f32 %v88, %v396
  %v398 = vpop.f32.mrb[0].mxu0
  %399 = vmatprep.mubr.bf16.mxu0 0
  %400 = vmatmul.mubr.bf16.gmra.mrb[0].mxu0 %v267
  %v401 = vpop.f32.mrb[0].mxu0
  %v402 = vadd.f32 %v88, %v401
  %v403 = vpop.f32.mrb[0].mxu0
  %v404 = vpop.f32.mrb[0].mxu0
  %v405 = vadd.f32 %v88, %v404
  %v406 = vpop.f32.mrb[0].mxu0
  %407 = vmatprep.mubr.bf16.mxu0 0
  %408 = vmatmul.mubr.bf16.gmra.mrb[0].mxu0 %v270
  %v409 = vpop.f32.mrb[0].mxu0
  %v410 = vadd.f32 %v88, %v409
  %v411 = vpop.f32.mrb[0].mxu0
  %v412 = vpop.f32.mrb[0].mxu0
  %v413 = vadd.f32 %v88, %v412
  %v414 = vpop.f32.mrb[0].mxu0
  %415 = vmatprep.mubr.bf16.mxu0 0
  %416 = vmatmul.mubr.bf16.gmra.mrb[0].mxu0 %v273
  %v417 = vpop.f32.mrb[0].mxu0
  %v418 = vadd.f32 %v88, %v417
  %v419 = vpop.f32.mrb[0].mxu0
  %v420 = vpop.f32.mrb[0].mxu0
  %v421 = vadd.f32 %v88, %v420
  %v422 = vpop.f32.mrb[0].mxu0
  %423 = vmatprep.mubr.bf16.mxu0 0
  %424 = vmatmul.mubr.bf16.gmra.mrb[0].mxu0 %v276
  %v425 = vpop.f32.mrb[0].mxu0
  %v426 = vadd.f32 %v88, %v425
  %v427 = vpop.f32.mrb[0].mxu0
  %v428 = vpop.f32.mrb[0].mxu0
  %v429 = vadd.f32 %v88, %v428
  %v430 = vpop.f32.mrb[0].mxu0
  %431 = vmatprep.mubr.bf16.mxu0 0
  %432 = vmatmul.mubr.bf16.gmra.mrb[0].mxu0 %v279
  %v433 = vpop.f32.mrb[0].mxu0
  %v434 = vadd.f32 %v88, %v433
  %v435 = vpop.f32.mrb[0].mxu0
  %v436 = vpop.f32.mrb[0].mxu0
  %v437 = vadd.f32 %v88, %v436
  %v438 = vpop.f32.mrb[0].mxu0
  %439 = vmatprep.mubr.bf16.mxu0 0
  %440 = vmatmul.mubr.bf16.gmra.mrb[0].mxu0 %v282
  %v441 = vpop.f32.mrb[0].mxu0
  %v442 = vadd.f32 %v88, %v441
  %v443 = vpop.f32.mrb[0].mxu0
  %v444 = vpop.f32.mrb[0].mxu0
  %v445 = vadd.f32 %v88, %v444
  %v446 = vpop.f32.mrb[0].mxu0
  %447 = vmatprep.mubr.bf16.mxu0 0
  %448 = vmatmul.mubr.bf16.gmra.mrb[0].mxu0 %v285
  %v449 = vpop.f32.mrb[0].mxu0
  %v450 = vadd.f32 %v88, %v449
  %v451 = vpop.f32.mrb[0].mxu0
  %v452 = vpop.f32.mrb[0].mxu0
  %v453 = vadd.f32 %v88, %v452
  %v454 = vpop.f32.mrb[0].mxu0
  %455 = vmatprep.mubr.bf16.mxu0 0
  %456 = vmatmul.mubr.bf16.gmra.mrb[0].mxu0 %v288
  %v457 = vpop.f32.mrb[0].mxu0
  %v458 = vadd.f32 %v88, %v457
  %v459 = vpop.f32.mrb[0].mxu0
  %v460 = vpop.f32.mrb[0].mxu0
  %v461 = vadd.f32 %v88, %v460
  %v462 = vpop.f32.mrb[0].mxu0
  %463 = vmatprep.mubr.bf16.mxu0 0
  %464 = vmatmul.mubr.bf16.gmra.mrb[0].mxu0 %v291
  %v465 = vpop.f32.mrb[0].mxu0
  %v466 = vadd.f32 %v88, %v465
  %v467 = vpop.f32.mrb[0].mxu0
  %v468 = vpop.f32.mrb[0].mxu0
  %v469 = vadd.f32 %v88, %v468
  %v470 = vpop.f32.mrb[0].mxu0
  %471 = vmatprep.mubr.bf16.mxu0 0
  %472 = vmatmul.mubr.bf16.gmra.mrb[0].mxu0 %v294
  %v473 = vpop.f32.mrb[0].mxu0
  %v474 = vadd.f32 %v88, %v473
  %v475 = vpop.f32.mrb[0].mxu0
  %v476 = vpop.f32.mrb[0].mxu0
  %v477 = vadd.f32 %v88, %v476
  %v478 = vpop.f32.mrb[0].mxu0
  %479 = vmatprep.mubr.bf16.mxu0 0
  %480 = vmatmul.mubr.bf16.gmra.mrb[0].mxu0 %v297
  %v481 = vpop.f32.mrb[0].mxu0
  %v482 = vadd.f32 %v88, %v481
  %v483 = vpop.f32.mrb[0].mxu0
  %v484 = vpop.f32.mrb[0].mxu0
  %v485 = vadd.f32 %v88, %v484
  %v486 = vpop.f32.mrb[0].mxu0
  %487 = vmatprep.mubr.bf16.mxu0 0
  %488 = vmatmul.mubr.bf16.gmra.mrb[0].mxu0 %v300
  %v489 = vpop.f32.mrb[0].mxu0
  %v490 = vadd.f32 %v88, %v489
  %v491 = vpop.f32.mrb[0].mxu0
  %v492 = vpop.f32.mrb[0].mxu0
  %v493 = vadd.f32 %v88, %v492
  %v494 = vpop.f32.mrb[0].mxu0
  %495 = vmatprep.mubr.bf16.mxu0 0
  %496 = vmatmul.mubr.bf16.gmra.mrb[0].mxu0 %v303
  %v497 = vpop.f32.mrb[0].mxu0
  %v498 = vadd.f32 %v88, %v497
  %v499 = vpop.f32.mrb[0].mxu0
  %v500 = vpop.f32.mrb[0].mxu0
  %v501 = vadd.f32 %v88, %v500
  %v502 = vpop.f32.mrb[0].mxu0
  %503 = vmatprep.mubr.bf16.mxu0 0
  %504 = vmatmul.mubr.bf16.gmra.mrb[0].mxu0 %v306
  %v505 = vpop.f32.mrb[0].mxu0
  %v506 = vadd.f32 %v88, %v505
  %v507 = vpop.f32.mrb[0].mxu0
  %v508 = vpop.f32.mrb[0].mxu0
  %v509 = vadd.f32 %v88, %v508
  %v510 = vpop.f32.mrb[0].mxu0
  %511 = vmatprep.mubr.bf16.mxu0 0
  %512 = vmatmul.mubr.bf16.gmra.mrb[0].mxu0 %v309
  %v513 = vpop.f32.mrb[0].mxu0
  %v514 = vadd.f32 %v88, %v513
  %v515 = vpop.f32.mrb[0].mxu0
  %v516 = vpop.f32.mrb[0].mxu0
  %v517 = vadd.f32 %v88, %v516
  %v518 = vpop.f32.mrb[0].mxu0
  %519 = vmatprep.mubr.bf16.mxu0 0
  %520 = vmatmul.mubr.bf16.gmra.mrb[0].mxu0 %v312
  %v521 = vpop.f32.mrb[0].mxu0
  %v522 = vadd.f32 %v88, %v521
  %v523 = vpop.f32.mrb[0].mxu0
  %v524 = vpop.f32.mrb[0].mxu0
  %v525 = vadd.f32 %v88, %v524
  %v526 = vpop.f32.mrb[0].mxu0
  %527 = vmatprep.mubr.bf16.mxu0 0
  %528 = vmatmul.mubr.bf16.gmra.mrb[0].mxu0 %v315
  %v529 = vpop.f32.mrb[0].mxu0
  %v530 = vadd.f32 %v88, %v529
  %v531 = vpop.f32.mrb[0].mxu0
  %v532 = vpop.f32.mrb[0].mxu0
  %v533 = vadd.f32 %v88, %v532
  %v534 = vpop.f32.mrb[0].mxu0
  %535 = vmatprep.mubr.bf16.mxu0 0
  %536 = vmatmul.mubr.bf16.gmra.mrb[0].mxu0 %v318
  %v537 = vpop.f32.mrb[0].mxu0
  %v538 = vadd.f32 %v88, %v537
  %v539 = vpop.f32.mrb[0].mxu0
  %v540 = vpop.f32.mrb[0].mxu0
  %v541 = vadd.f32 %v88, %v540
  %v542 = vpop.f32.mrb[0].mxu0
  %543 = vmatprep.mubr.bf16.mxu0 0
  %544 = vmatmul.mubr.bf16.gmra.mrb[0].mxu0 %v321
  %v545 = vpop.f32.mrb[0].mxu0
  %v546 = vadd.f32 %v88, %v545
  %v547 = vpop.f32.mrb[0].mxu0
  %v548 = vpop.f32.mrb[0].mxu0
  %v549 = vadd.f32 %v88, %v548
  %v550 = vpop.f32.mrb[0].mxu0
  %551 = vmatprep.mubr.bf16.mxu0 0
  %552 = vmatmul.mubr.bf16.gmra.mrb[0].mxu0 %v324
  %v553 = vpop.f32.mrb[0].mxu0
  %v554 = vadd.f32 %v88, %v553
  %v555 = vpop.f32.mrb[0].mxu0
  %v556 = vpop.f32.mrb[0].mxu0
  %v557 = vadd.f32 %v88, %v556
  %v558 = vpop.f32.mrb[0].mxu0
  %559 = vmatprep.mubr.bf16.mxu0 0
  %560 = vmatmul.mubr.bf16.gmra.mrb[0].mxu0 %v327
  %v561 = vpop.f32.mrb[0].mxu0
  %v562 = vadd.f32 %v88, %v561
  %v563 = vpop.f32.mrb[0].mxu0
  %v564 = vpop.f32.mrb[0].mxu0
  %v565 = vadd.f32 %v88, %v564
  %v566 = vpop.f32.mrb[0].mxu0
  %567 = vmatprep.mubr.bf16.mxu0 0
  %568 = vmatmul.mubr.bf16.gmra.mrb[0].mxu0 %v330
  %v569 = vpop.f32.mrb[0].mxu0
  %v570 = vadd.f32 %v88, %v569
  %v571 = vpop.f32.mrb[0].mxu0
  %v572 = vpop.f32.mrb[0].mxu0
  %v573 = vadd.f32 %v88, %v572
  %v574 = vpop.f32.mrb[0].mxu0
  %575 = vmatprep.mubr.bf16.mxu0 0
  %576 = vmatmul.mubr.bf16.gmra.mrb[0].mxu0 %v333
  %v577 = vpop.f32.mrb[0].mxu0
  %v578 = vadd.f32 %v88, %v577
  %v579 = vpop.f32.mrb[0].mxu0
  %v580 = vpop.f32.mrb[0].mxu0
  %v581 = vadd.f32 %v88, %v580
  %v582 = vpop.f32.mrb[0].mxu0
  %583 = vmatprep.mubr.bf16.mxu0 0
  %584 = vmatmul.mubr.bf16.gmra.mrb[0].mxu0 %v336
  %v585 = vpop.f32.mrb[0].mxu0
  %v586 = vadd.f32 %v88, %v585
  %v587 = vpop.f32.mrb[0].mxu0
  %v588 = vpop.f32.mrb[0].mxu0
  %v589 = vadd.f32 %v88, %v588
  %v590 = vpop.f32.mrb[0].mxu0
  %591 = vmatprep.mubr.bf16.mxu0 0
  %592 = vmatmul.mubr.bf16.gmra.mrb[0].mxu0 %v339
  %v593 = vpop.f32.mrb[0].mxu0
  %v594 = vadd.f32 %v88, %v593
  %v595 = vpop.f32.mrb[0].mxu0
  %v596 = vpop.f32.mrb[0].mxu0
  %v597 = vadd.f32 %v88, %v596
  %v598 = vpop.f32.mrb[0].mxu0
  %599 = vmatprep.mubr.bf16.mxu0 0
  %600 = vmatmul.mubr.bf16.gmra.mrb[0].mxu0 %v342
  %v601 = vpop.f32.mrb[0].mxu0
  %v602 = vadd.f32 %v88, %v601
  %v603 = vpop.f32.mrb[0].mxu0
  %v604 = vpop.f32.mrb[0].mxu0
  %v605 = vadd.f32 %v88, %v604
  %v606 = vpop.f32.mrb[0].mxu0
  %607 = vmatprep.mubr.bf16.mxu0 0
  %608 = vmatmul.mubr.bf16.gmra.mrb[0].mxu0 %v345
  %v609 = vpop.f32.mrb[0].mxu0
  %v610 = vadd.f32 %v88, %v609
  %v611 = vpop.f32.mrb[0].mxu0
  %v612 = vpop.f32.mrb[0].mxu0
  %v613 = vadd.f32 %v88, %v612
  %v614 = vpop.f32.mrb[0].mxu0
  %615 = vmatprep.mubr.bf16.mxu0 0
  %616 = vmatmul.mubr.bf16.gmra.mrb[0].mxu0 %v348
  %v617 = vpop.f32.mrb[0].mxu0
  %v618 = vadd.f32 %v88, %v617
  %v619 = vpop.f32.mrb[0].mxu0
  %v620 = vpop.f32.mrb[0].mxu0
  %v621 = vadd.f32 %v88, %v620
  %v622 = vpop.f32.mrb[0].mxu0
  %623 = vmatprep.mubr.bf16.mxu0 0
  %624 = vmatmul.mubr.bf16.gmra.mrb[0].mxu0 %v351
  %v625 = vpop.f32.mrb[0].mxu0
  %v626 = vadd.f32 %v88, %v625
  %v627 = vpop.f32.mrb[0].mxu0
  %v628 = vpop.f32.mrb[0].mxu0
  %v629 = vadd.f32 %v88, %v628
  %v630 = vpop.f32.mrb[0].mxu0
  %631 = vmatprep.mubr.bf16.mxu0 0
  %632 = vmatmul.mubr.bf16.gmra.mrb[0].mxu0 %v354
  %v633 = vpop.f32.mrb[0].mxu0
  %v634 = vadd.f32 %v88, %v633
  %v635 = vpop.f32.mrb[0].mxu0
  %v636 = vpop.f32.mrb[0].mxu0
  %v637 = vadd.f32 %v88, %v636
  %v638 = vpop.f32.mrb[0].mxu0
  %639 = vmatprep.mubr.bf16.mxu0 0
  %640 = vmatmul.mubr.bf16.gmra.mrb[0].mxu0 %v357
  %v641 = vpop.f32.mrb[0].mxu0
  %v642 = vadd.f32 %v88, %v641
  %v643 = vpop.f32.mrb[0].mxu0
  %v644 = vpop.f32.mrb[0].mxu0
  %v645 = vadd.f32 %v88, %v644
  %v646 = vpop.f32.mrb[0].mxu0
  %647 = vdwg.mxu0
  %v648 = vmax.f32 %v394, 0.0
  %v649 = vmax.f32 %v397, 0.0
  %v650 = vmax.f32 %v402, 0.0
  %v651 = vmax.f32 %v405, 0.0
  %v652 = vmax.f32 %v410, 0.0
  %v653 = vmax.f32 %v413, 0.0
  %v654 = vmax.f32 %v418, 0.0
  %v655 = vmax.f32 %v421, 0.0
  %v656 = vmax.f32 %v426, 0.0
  %v657 = vmax.f32 %v429, 0.0
  %v658 = vmax.f32 %v434, 0.0
  %v659 = vmax.f32 %v437, 0.0
  %v660 = vmax.f32 %v442, 0.0
  %v661 = vmax.f32 %v445, 0.0
  %v662 = vmax.f32 %v450, 0.0
  %v663 = vmax.f32 %v453, 0.0
  %v664 = vmax.f32 %v458, 0.0
  %v665 = vmax.f32 %v461, 0.0
  %v666 = vmax.f32 %v466, 0.0
  %v667 = vmax.f32 %v469, 0.0
  %v668 = vmax.f32 %v474, 0.0
  %v669 = vmax.f32 %v477, 0.0
  %v670 = vmax.f32 %v482, 0.0
  %v671 = vmax.f32 %v485, 0.0
  %v672 = vmax.f32 %v490, 0.0
  %v673 = vmax.f32 %v493, 0.0
  %v674 = vmax.f32 %v498, 0.0
  %v675 = vmax.f32 %v501, 0.0
  %v676 = vmax.f32 %v506, 0.0
  %v677 = vmax.f32 %v509, 0.0
  %v678 = vmax.f32 %v514, 0.0
  %v679 = vmax.f32 %v517, 0.0
  %v680 = vmax.f32 %v522, 0.0
  %v681 = vmax.f32 %v525, 0.0
  %v682 = vmax.f32 %v530, 0.0
  %v683 = vmax.f32 %v533, 0.0
  %v684 = vmax.f32 %v538, 0.0
  %v685 = vmax.f32 %v541, 0.0
  %v686 = vmax.f32 %v546, 0.0
  %v687 = vmax.f32 %v549, 0.0
  %v688 = vmax.f32 %v554, 0.0
  %v689 = vmax.f32 %v557, 0.0
  %v690 = vmax.f32 %v562, 0.0
  %v691 = vmax.f32 %v565, 0.0
  %v692 = vmax.f32 %v570, 0.0
  %v693 = vmax.f32 %v573, 0.0
  %v694 = vmax.f32 %v578, 0.0
  %v695 = vmax.f32 %v581, 0.0
  %v696 = vmax.f32 %v586, 0.0
  %v697 = vmax.f32 %v589, 0.0
  %v698 = vmax.f32 %v594, 0.0
  %v699 = vmax.f32 %v597, 0.0
  %v700 = vmax.f32 %v602, 0.0
  %v701 = vmax.f32 %v605, 0.0
  %v702 = vmax.f32 %v610, 0.0
  %v703 = vmax.f32 %v613, 0.0
  %v704 = vmax.f32 %v618, 0.0
  %v705 = vmax.f32 %v621, 0.0
  %v706 = vmax.f32 %v626, 0.0
  %v707 = vmax.f32 %v629, 0.0
  %v708 = vmax.f32 %v634, 0.0
  %v709 = vmax.f32 %v637, 0.0
  %v710 = vmax.f32 %v642, 0.0
  %v711 = vmax.f32 %v645, 0.0
  %v712 = vpack.c.bf16 %v649, %v648
  %v713 = vpack.c.bf16 %v651, %v650
  %v714 = vpack.c.bf16 %v653, %v652
  %v715 = vpack.c.bf16 %v655, %v654
  %v716 = vpack.c.bf16 %v657, %v656
  %v717 = vpack.c.bf16 %v659, %v658
  %v718 = vpack.c.bf16 %v661, %v660
  %v719 = vpack.c.bf16 %v663, %v662
  %v720 = vpack.c.bf16 %v665, %v664
  %v721 = vpack.c.bf16 %v667, %v666
  %v722 = vpack.c.bf16 %v669, %v668
  %v723 = vpack.c.bf16 %v671, %v670
  %v724 = vpack.c.bf16 %v673, %v672
  %v725 = vpack.c.bf16 %v675, %v674
  %v726 = vpack.c.bf16 %v677, %v676
  %v727 = vpack.c.bf16 %v679, %v678
  %v728 = vpack.c.bf16 %v681, %v680
  %v729 = vpack.c.bf16 %v683, %v682
  %v730 = vpack.c.bf16 %v685, %v684
  %v731 = vpack.c.bf16 %v687, %v686
  %v732 = vpack.c.bf16 %v689, %v688
  %v733 = vpack.c.bf16 %v691, %v690
  %v734 = vpack.c.bf16 %v693, %v692
  %v735 = vpack.c.bf16 %v695, %v694
  %v736 = vpack.c.bf16 %v697, %v696
  %v737 = vpack.c.bf16 %v699, %v698
  %v738 = vpack.c.bf16 %v701, %v700
  %v739 = vpack.c.bf16 %v703, %v702
  %v740 = vpack.c.bf16 %v705, %v704
  %v741 = vpack.c.bf16 %v707, %v706
  %v742 = vpack.c.bf16 %v709, %v708
  %v743 = vpack.c.bf16 %v711, %v710
  %v776 = vunpack.c.l.b16 %v712
  %v777 = vunpack.c.h.b16 %v712
  %v778 = vunpack.c.l.b16 %v713
  %v779 = vunpack.c.h.b16 %v713
  %v780 = vunpack.c.l.b16 %v714
  %v781 = vunpack.c.h.b16 %v714
  %v782 = vunpack.c.l.b16 %v715
  %v783 = vunpack.c.h.b16 %v715
  %v784 = vunpack.c.l.b16 %v716
  %v785 = vunpack.c.h.b16 %v716
  %v786 = vunpack.c.l.b16 %v717
  %v787 = vunpack.c.h.b16 %v717
  %v788 = vunpack.c.l.b16 %v718
  %v789 = vunpack.c.h.b16 %v718
  %v790 = vunpack.c.l.b16 %v719
  %v791 = vunpack.c.h.b16 %v719
  %v792 = vunpack.c.l.b16 %v720
  %v793 = vunpack.c.h.b16 %v720
  %v794 = vunpack.c.l.b16 %v721
  %v795 = vunpack.c.h.b16 %v721
  %v796 = vunpack.c.l.b16 %v722
  %v797 = vunpack.c.h.b16 %v722
  %v798 = vunpack.c.l.b16 %v723
  %v799 = vunpack.c.h.b16 %v723
  %v800 = vunpack.c.l.b16 %v724
  %v801 = vunpack.c.h.b16 %v724
  %v802 = vunpack.c.l.b16 %v725
  %v803 = vunpack.c.h.b16 %v725
  %v804 = vunpack.c.l.b16 %v726
  %v805 = vunpack.c.h.b16 %v726
  %v806 = vunpack.c.l.b16 %v727
  %v807 = vunpack.c.h.b16 %v727
  %v808 = vunpack.c.l.b16 %v728
  %v809 = vunpack.c.h.b16 %v728
  %v810 = vunpack.c.l.b16 %v729
  %v811 = vunpack.c.h.b16 %v729
  %v812 = vunpack.c.l.b16 %v730
  %v813 = vunpack.c.h.b16 %v730
  %v814 = vunpack.c.l.b16 %v731
  %v815 = vunpack.c.h.b16 %v731
  %v816 = vunpack.c.l.b16 %v732
  %v817 = vunpack.c.h.b16 %v732
  %v818 = vunpack.c.l.b16 %v733
  %v819 = vunpack.c.h.b16 %v733
  %v820 = vunpack.c.l.b16 %v734
  %v821 = vunpack.c.h.b16 %v734
  %v822 = vunpack.c.l.b16 %v735
  %v823 = vunpack.c.h.b16 %v735
  %v824 = vunpack.c.l.b16 %v736
  %v825 = vunpack.c.h.b16 %v736
  %v826 = vunpack.c.l.b16 %v737
  %v827 = vunpack.c.h.b16 %v737
  %v828 = vunpack.c.l.b16 %v738
  %v829 = vunpack.c.h.b16 %v738
  %v830 = vunpack.c.l.b16 %v739
  %v831 = vunpack.c.h.b16 %v739
  %v832 = vunpack.c.l.b16 %v740
  %v833 = vunpack.c.h.b16 %v740
  %v834 = vunpack.c.l.b16 %v741
  %v835 = vunpack.c.h.b16 %v741
  %v836 = vunpack.c.l.b16 %v742
  %v837 = vunpack.c.h.b16 %v742
  %v838 = vunpack.c.l.b16 %v743
  %v839 = vunpack.c.h.b16 %v743
  %v840 = vpack.c.b16 %v776, %v776
  %v841 = vpack.c.b16 %v777, %v777
  %v842 = vpack.c.b16 %v778, %v778
  %v843 = vpack.c.b16 %v779, %v779
  %v844 = vpack.c.b16 %v780, %v780
  %v845 = vpack.c.b16 %v781, %v781
  %v846 = vpack.c.b16 %v782, %v782
  %v847 = vpack.c.b16 %v783, %v783
  %v848 = vpack.c.b16 %v784, %v784
  %v849 = vpack.c.b16 %v785, %v785
  %v850 = vpack.c.b16 %v786, %v786
  %v851 = vpack.c.b16 %v787, %v787
  %v852 = vpack.c.b16 %v788, %v788
  %v853 = vpack.c.b16 %v789, %v789
  %v854 = vpack.c.b16 %v790, %v790
  %v855 = vpack.c.b16 %v791, %v791
  %v856 = vpack.c.b16 %v792, %v792
  %v857 = vpack.c.b16 %v793, %v793
  %v858 = vpack.c.b16 %v794, %v794
  %v859 = vpack.c.b16 %v795, %v795
  %v860 = vpack.c.b16 %v796, %v796
  %v861 = vpack.c.b16 %v797, %v797
  %v862 = vpack.c.b16 %v798, %v798
  %v863 = vpack.c.b16 %v799, %v799
  %v864 = vpack.c.b16 %v800, %v800
  %v865 = vpack.c.b16 %v801, %v801
  %v866 = vpack.c.b16 %v802, %v802
  %v867 = vpack.c.b16 %v803, %v803
  %v868 = vpack.c.b16 %v804, %v804
  %v869 = vpack.c.b16 %v805, %v805
  %v870 = vpack.c.b16 %v806, %v806
  %v871 = vpack.c.b16 %v807, %v807
  %v872 = vpack.c.b16 %v808, %v808
  %v873 = vpack.c.b16 %v809, %v809
  %v874 = vpack.c.b16 %v810, %v810
  %v875 = vpack.c.b16 %v811, %v811
  %v876 = vpack.c.b16 %v812, %v812
  %v877 = vpack.c.b16 %v813, %v813
  %v878 = vpack.c.b16 %v814, %v814
  %v879 = vpack.c.b16 %v815, %v815
  %v880 = vpack.c.b16 %v816, %v816
  %v881 = vpack.c.b16 %v817, %v817
  %v882 = vpack.c.b16 %v818, %v818
  %v883 = vpack.c.b16 %v819, %v819
  %v884 = vpack.c.b16 %v820, %v820
  %v885 = vpack.c.b16 %v821, %v821
  %v886 = vpack.c.b16 %v822, %v822
  %v887 = vpack.c.b16 %v823, %v823
  %v888 = vpack.c.b16 %v824, %v824
  %v889 = vpack.c.b16 %v825, %v825
  %v890 = vpack.c.b16 %v826, %v826
  %v891 = vpack.c.b16 %v827, %v827
  %v892 = vpack.c.b16 %v828, %v828
  %v893 = vpack.c.b16 %v829, %v829
  %v894 = vpack.c.b16 %v830, %v830
  %v895 = vpack.c.b16 %v831, %v831
  %v896 = vpack.c.b16 %v832, %v832
  %v897 = vpack.c.b16 %v833, %v833
  %v898 = vpack.c.b16 %v834, %v834
  %v899 = vpack.c.b16 %v835, %v835
  %v900 = vpack.c.b16 %v836, %v836
  %v901 = vpack.c.b16 %v837, %v837
  %v902 = vpack.c.b16 %v838, %v838
  %v903 = vpack.c.b16 %v839, %v839
  %968 = vst [vmem:[%s3] sm:$0xf] %v840
  %969 = vst [vmem:[%s3 + $0x4] sm:$0xf] %v841
  %970 = vst [vmem:[%s3 + $0x8] sm:$0xf] %v842
  %971 = vst [vmem:[%s3 + $0xc] sm:$0xf] %v843
  %972 = vst [vmem:[%s3 + $0x10] sm:$0xf] %v844
  %973 = vst [vmem:[%s3 + $0x14] sm:$0xf] %v845
  %974 = vst [vmem:[%s3 + $0x18] sm:$0xf] %v846
  %975 = vst [vmem:[%s3 + $0x1c] sm:$0xf] %v847
  %976 = vst [vmem:[%s3 + $0x20] sm:$0xf] %v848
  %977 = vst [vmem:[%s3 + $0x24] sm:$0xf] %v849
  %978 = vst [vmem:[%s3 + $0x28] sm:$0xf] %v850
  %979 = vst [vmem:[%s3 + $0x2c] sm:$0xf] %v851
  %980 = vst [vmem:[%s3 + $0x30] sm:$0xf] %v852
  %981 = vst [vmem:[%s3 + $0x34] sm:$0xf] %v853
  %982 = vst [vmem:[%s3 + $0x38] sm:$0xf] %v854
  %983 = vst [vmem:[%s3 + $0x3c] sm:$0xf] %v855
  %984 = vst [vmem:[%s3 + $0x40] sm:$0xf] %v856
  %985 = vst [vmem:[%s3 + $0x44] sm:$0xf] %v857
  %986 = vst [vmem:[%s3 + $0x48] sm:$0xf] %v858
  %987 = vst [vmem:[%s3 + $0x4c] sm:$0xf] %v859
  %988 = vst [vmem:[%s3 + $0x50] sm:$0xf] %v860
  %989 = vst [vmem:[%s3 + $0x54] sm:$0xf] %v861
  %990 = vst [vmem:[%s3 + $0x58] sm:$0xf] %v862
  %991 = vst [vmem:[%s3 + $0x5c] sm:$0xf] %v863
  %992 = vst [vmem:[%s3 + $0x60] sm:$0xf] %v864
  %993 = vst [vmem:[%s3 + $0x64] sm:$0xf] %v865
  %994 = vst [vmem:[%s3 + $0x68] sm:$0xf] %v866
  %995 = vst [vmem:[%s3 + $0x6c] sm:$0xf] %v867
  %996 = vst [vmem:[%s3 + $0x70] sm:$0xf] %v868
  %997 = vst [vmem:[%s3 + $0x74] sm:$0xf] %v869
  %998 = vst [vmem:[%s3 + $0x78] sm:$0xf] %v870
  %999 = vst [vmem:[%s3 + $0x7c] sm:$0xf] %v871
  %1000 = vst [vmem:[%s3 + $0x80] sm:$0xf] %v872
  %1001 = vst [vmem:[%s3 + $0x84] sm:$0xf] %v873
  %1002 = vst [vmem:[%s3 + $0x88] sm:$0xf] %v874
  %1003 = vst [vmem:[%s3 + $0x8c] sm:$0xf] %v875
  %1004 = vst [vmem:[%s3 + $0x90] sm:$0xf] %v876
  %1005 = vst [vmem:[%s3 + $0x94] sm:$0xf] %v877
  %1006 = vst [vmem:[%s3 + $0x98] sm:$0xf] %v878
  %1007 = vst [vmem:[%s3 + $0x9c] sm:$0xf] %v879
  %1008 = vst [vmem:[%s3 + $0xa0] sm:$0xf] %v880
  %1009 = vst [vmem:[%s3 + $0xa4] sm:$0xf] %v881
  %1010 = vst [vmem:[%s3 + $0xa8] sm:$0xf] %v882
  %1011 = vst [vmem:[%s3 + $0xac] sm:$0xf] %v883
  %1012 = vst [vmem:[%s3 + $0xb0] sm:$0xf] %v884
  %1013 = vst [vmem:[%s3 + $0xb4] sm:$0xf] %v885
  %1014 = vst [vmem:[%s3 + $0xb8] sm:$0xf] %v886
  %1015 = vst [vmem:[%s3 + $0xbc] sm:$0xf] %v887
  %1016 = vst [vmem:[%s3 + $0xc0] sm:$0xf] %v888
  %1017 = vst [vmem:[%s3 + $0xc4] sm:$0xf] %v889
  %1018 = vst [vmem:[%s3 + $0xc8] sm:$0xf] %v890
  %1019 = vst [vmem:[%s3 + $0xcc] sm:$0xf] %v891
  %1020 = vst [vmem:[%s3 + $0xd0] sm:$0xf] %v892
  %1021 = vst [vmem:[%s3 + $0xd4] sm:$0xf] %v893
  %1022 = vst [vmem:[%s3 + $0xd8] sm:$0xf] %v894
  %1023 = vst [vmem:[%s3 + $0xdc] sm:$0xf] %v895
  %1024 = vst [vmem:[%s3 + $0xe0] sm:$0xf] %v896
  %1025 = vst [vmem:[%s3 + $0xe4] sm:$0xf] %v897
  %1026 = vst [vmem:[%s3 + $0xe8] sm:$0xf] %v898
  %1027 = vst [vmem:[%s3 + $0xec] sm:$0xf] %v899
  %1028 = vst [vmem:[%s3 + $0xf0] sm:$0xf] %v900
  %1029 = vst [vmem:[%s3 + $0xf4] sm:$0xf] %v901
  %1030 = vst [vmem:[%s3 + $0xf8] sm:$0xf] %v902
  %1031 = vst [vmem:[%s3 + $0xfc] sm:$0xf] %v903
  // Predicated region
  $region14: #{pcm_forward.5} parent=0 // pred_check
    _
  $region15: #{pcm_forward.5} parent=0 // pred_check_branch
    %1033 = sbr.rel (0) target = $region17
  $region16: #{pcm_forward.5} parent=0 // pred_region
    _
  $region17: #{pcm_forward.5} parent=0 // pred_fallthru
    _
  // Predicated region
  $region18: #{pcm_forward.5} parent=0 // pred_check
    _
  $region19: #{pcm_forward.5} parent=0 // pred_check_branch
    %1035 = sbr.rel (0) target = $region21
  $region20: #{pcm_forward.5} parent=0 // pred_region
    _
  $region21: #{pcm_forward.5} parent=0 // pred_fallthru
    _

// kernel: pcm_forward.8
$region0: #{pcm_forward.8}
  #allocation0 [shape = 'u32[]', space=smem, size = 0x4, offset = 0x4, fixed_abs, tag = 'smem constant byte address 0x4 - core index']
  #allocation1 [shape = 'u32[144,128]{1,0:T(1,128)}', space=vmem, size = 0x12000, scoped, tag = 'internal scratch']
  #allocation2 [shape = 'f32[256,128]{1,0:T(8,128)}', space=vmem, size = 0x20000, scoped, tag = 'scratch operand']
  #allocation3 [shape = 'f32[256,128]{1,0:T(8,128)}', space=vmem, size = 0x20000, scoped, tag = 'scratch operand']
  %s0 = inlined_call_operand.vmem [shape: bf16[256,256], index: 0, kind: input, shape index: {}]
  %s1 = inlined_call_operand.vmem [shape: bf16[2,256,128], index: 1, kind: input, shape index: {}]
  %s2 = inlined_call_operand.vmem [shape: bf16[2,256,128], index: 2, kind: input, shape index: {}]
  %s3 = inlined_call_operand.vmem [shape: bf16[2,256,128], index: 3, kind: output, shape index: {0}]
  %s4 = inlined_call_operand.vmem [shape: bf16[2,256,128], index: 4, kind: output, shape index: {1}]
  %5 = xla_tuple %s3, %s4
  %s6 = sld [smem:[#allocation0]]
  $region61: #{pcm_forward.8} parent=0
    _
  %s8 = ssub.s32 1, %s6
  %s9 = scalar_select 0, %s8, %s6
  loop: start=0, step=1, limit=4
  $region2: #{pcm_forward.8} parent=0 // loop_pre_header
    _
  $region3: #{pcm_forward.8} parent=0 // loop_header
    %s11 = sphi 0, %s15
    %p12 = scmp.ge.s32.totalorder %s11, 4
    %s18 = sphi 0, %s30
    %s19 = sphi 0, %s26
    %s20 = sphi 0, %s18
    %s21 = sphi 0, %s19
    %s22 = sphi 0, %s20
    %s23 = sphi 0, %s21
    %s33 = sphi 0, %s35
    %s36 = sphi 0, %s33
    %s37 = sphi 0, %s36
    %s53 = sphi 0, %s37
    %s61 = sphi 0, %s63
    %s64 = sphi 0, %s61
    %s65 = sphi 0, %s64
    %s81 = sphi 0, %s65
    %s89 = sphi 0, %s91
    %s92 = sphi 0, %s89
    %s93 = sphi 0, %s92
    %s109 = sphi 0, %s93
    %s115 = sphi 0, %s117
    %s118 = sphi 0, %s115
    %s119 = sphi 0, %s118
    %s135 = sphi 0, %s119
    %s141 = sphi 0, %s143
    %s144 = sphi 0, %s141
    %s145 = sphi 0, %s144
    %s161 = sphi 0, %s145
  $region4: #{pcm_forward.8} parent=0 // loop_header_branch
    %14 = sbr.rel (%p12) target = $region8
  $region5: #{pcm_forward.8} parent=0 // loop_body
    %s16 = ssub.s32 %s11, 1
    %s17 = ssub.s32 %s11, 2
    %s24 = sadd.s32 1, %s19
    %p25 = scmp.ge.s32.totalorder %s24, 1
    %s26 = scalar_select %p25, 0, %s24
    %s27 = sadd.s32 1, %s18
    %s28 = scalar_select %p25, %s27, %s18
    %p29 = scmp.ge.s32.totalorder %s28, 2
    %s30 = scalar_select %p29, 0, %s28
    %s31 = ssub.s32 %s19, %s26
    %p32 = scmp.eq.s32.totalorder %s31, 0
    %s34 = sadd.s32 %s33, 1
    %s35 = scalar_select %p32, %s33, %s34
    %p38 = pneg %p32
    %p39 = scmp.eq.s32.totalorder %s11, 1
    %p40 = por %p38, %p39
    %p41 = scmp.ne.s32.totalorder %s33, %s36
    %p42 = scmp.eq.s32.totalorder %s11, 0
    %p43 = por %p41, %p42
    %p44 = scmp.ne.s32.totalorder %s33, %s36
    %p45 = scmp.eq.s32.totalorder %s16, 1
    %p46 = por %p44, %p45
    %p47 = scmp.ne.s32.totalorder %s36, %s37
    %p48 = scmp.eq.s32.totalorder %s16, 0
    %p49 = por %p47, %p48
    %p50 = scmp.ne.s32.totalorder %s36, %s37
    %p51 = scmp.eq.s32.totalorder %s17, 1
    %p52 = por %p50, %p51
    %p54 = scmp.ne.s32.totalorder %s37, %s53
    %p55 = scmp.eq.s32.totalorder %s17, 0
    %p56 = por %p54, %p55
    %s57 = ssub.s32 %s18, %s30
    %s58 = ssub.s32 %s19, %s26
    %s59 = sor.u32 %s57, %s58
    %p60 = scmp.eq.s32.totalorder %s59, 0
    %s62 = sadd.s32 %s61, 1
    %s63 = scalar_select %p60, %s61, %s62
    %p66 = pneg %p60
    %p67 = scmp.eq.s32.totalorder %s11, 1
    %p68 = por %p66, %p67
    %p69 = scmp.ne.s32.totalorder %s61, %s64
    %p70 = scmp.eq.s32.totalorder %s11, 0
    %p71 = por %p69, %p70
    %p72 = scmp.ne.s32.totalorder %s61, %s64
    %p73 = scmp.eq.s32.totalorder %s16, 1
    %p74 = por %p72, %p73
    %p75 = scmp.ne.s32.totalorder %s64, %s65
    %p76 = scmp.eq.s32.totalorder %s16, 0
    %p77 = por %p75, %p76
    %p78 = scmp.ne.s32.totalorder %s64, %s65
    %p79 = scmp.eq.s32.totalorder %s17, 1
    %p80 = por %p78, %p79
    %p82 = scmp.ne.s32.totalorder %s65, %s81
    %p83 = scmp.eq.s32.totalorder %s17, 0
    %p84 = por %p82, %p83
    %s85 = ssub.s32 %s18, %s30
    %s86 = ssub.s32 %s19, %s26
    %s87 = sor.u32 %s85, %s86
    %p88 = scmp.eq.s32.totalorder %s87, 0
    %s90 = sadd.s32 %s89, 1
    %s91 = scalar_select %p88, %s89, %s90
    %p94 = pneg %p88
    %p95 = scmp.eq.s32.totalorder %s11, 1
    %p96 = por %p94, %p95
    %p97 = scmp.ne.s32.totalorder %s89, %s92
    %p98 = scmp.eq.s32.totalorder %s11, 0
    %p99 = por %p97, %p98
    %p100 = scmp.ne.s32.totalorder %s89, %s92
    %p101 = scmp.eq.s32.totalorder %s16, 1
    %p102 = por %p100, %p101
    %p103 = scmp.ne.s32.totalorder %s92, %s93
    %p104 = scmp.eq.s32.totalorder %s16, 0
    %p105 = por %p103, %p104
    %p106 = scmp.ne.s32.totalorder %s92, %s93
    %p107 = scmp.eq.s32.totalorder %s17, 1
    %p108 = por %p106, %p107
    %p110 = scmp.ne.s32.totalorder %s93, %s109
    %p111 = scmp.eq.s32.totalorder %s17, 0
    %p112 = por %p110, %p111
    %s113 = ssub.s32 %s18, %s30
    %p114 = scmp.eq.s32.totalorder %s113, 0
    %s116 = sadd.s32 %s115, 1
    %s117 = scalar_select %p114, %s115, %s116
    %p120 = pneg %p114
    %p121 = scmp.eq.s32.totalorder %s11, 1
    %p122 = por %p120, %p121
    %p123 = scmp.ne.s32.totalorder %s115, %s118
    %p124 = scmp.eq.s32.totalorder %s11, 0
    %p125 = por %p123, %p124
    %p126 = scmp.ne.s32.totalorder %s115, %s118
    %p127 = scmp.eq.s32.totalorder %s16, 1
    %p128 = por %p126, %p127
    %p129 = scmp.ne.s32.totalorder %s118, %s119
    %p130 = scmp.eq.s32.totalorder %s16, 0
    %p131 = por %p129, %p130
    %p132 = scmp.ne.s32.totalorder %s118, %s119
    %p133 = scmp.eq.s32.totalorder %s17, 1
    %p134 = por %p132, %p133
    %p136 = scmp.ne.s32.totalorder %s119, %s135
    %p137 = scmp.eq.s32.totalorder %s17, 0
    %p138 = por %p136, %p137
    %s139 = ssub.s32 %s18, %s30
    %p140 = scmp.eq.s32.totalorder %s139, 0
    %s142 = sadd.s32 %s141, 1
    %s143 = scalar_select %p140, %s141, %s142
    %p146 = pneg %p140
    %p147 = scmp.eq.s32.totalorder %s11, 1
    %p148 = por %p146, %p147
    %p149 = scmp.ne.s32.totalorder %s141, %s144
    %p150 = scmp.eq.s32.totalorder %s11, 0
    %p151 = por %p149, %p150
    %p152 = scmp.ne.s32.totalorder %s141, %s144
    %p153 = scmp.eq.s32.totalorder %s16, 1
    %p154 = por %p152, %p153
    %p155 = scmp.ne.s32.totalorder %s144, %s145
    %p156 = scmp.eq.s32.totalorder %s16, 0
    %p157 = por %p155, %p156
    %p158 = scmp.ne.s32.totalorder %s144, %s145
    %p159 = scmp.eq.s32.totalorder %s17, 1
    %p160 = por %p158, %p159
    %p162 = scmp.ne.s32.totalorder %s145, %s161
    %p163 = scmp.eq.s32.totalorder %s17, 0
    %p164 = por %p162, %p163
    %p165 = scmp.le.s32.totalorder 1, %s11
    %p166 = scmp.lt.s32.totalorder %s11, 3
    %p167 = pnand %p165, %p166
    %p168 = pneg %p167
    // Predicated region
    $region9: #{pcm_forward.8} parent=5 // pred_check
      _
    $region10: #{pcm_forward.8} parent=5 // pred_check_branch
      %170 = sbr.rel (%p167) target = $region12
    $region11: #{pcm_forward.8} parent=5 // pred_region
      %s171 = ssub.s32 %s11, 1
      // Predicated region
      $region13: #{pcm_forward.8} parent=11 // pred_check
        %p172 = pneg %p49
      $region14: #{pcm_forward.8} parent=11 // pred_check_branch
        %174 = sbr.rel (%p172) target = $region16
      $region15: #{pcm_forward.8} parent=11 // pred_region
        %s175 = smul.u32 2, %s21
        %p176 = scmp.lt.s32.totalorder %s175, 1
        %s177 = scalar_select %p176, %s175, 1
        %s178 = smul.addr %s177, 4
        %s179 = scalar_lea.vmem %s0, %s178
        %s180 = smul.u32 2, %s21
      $region16: #{pcm_forward.8} parent=11 // pred_fallthru
        _
    $region12: #{pcm_forward.8} parent=5 // pred_fallthru
      _
    %p181 = scmp.lt.s32.totalorder %s11, 2
    // Predicated region
    $region17: #{pcm_forward.8} parent=5 // pred_check
      %p182 = pneg %p181
    $region18: #{pcm_forward.8} parent=5 // pred_check_branch
      %184 = sbr.rel (%p182) target = $region20
    $region19: #{pcm_forward.8} parent=5 // pred_region
      // Predicated region
      $region21: #{pcm_forward.8} parent=19 // pred_check
        %p185 = pneg %p71
      $region22: #{pcm_forward.8} parent=19 // pred_check_branch
        %187 = sbr.rel (%p185) target = $region24
      $region23: #{pcm_forward.8} parent=19 // pred_region
        %s188 = smul.u32 32, %s19
        %p189 = scmp.lt.s32.totalorder %s18, 1
        %s190 = scalar_select %p189, %s18, 1
        %p191 = scmp.lt.s32.totalorder %s188, 31
        %s192 = scalar_select %p191, %s188, 31
        %s193 = smul.addr %s190, 32
        %s194 = sadd.s32 %s192, %s193
        %s195 = smul.addr %s194, 4
        %s196 = scalar_lea.vmem %s1, %s195
        %s197 = smul.u32 32, %s19
      $region24: #{pcm_forward.8} parent=19 // pred_fallthru
        _
      // Predicated region
      $region25: #{pcm_forward.8} parent=19 // pred_check
        %p198 = pneg %p99
      $region26: #{pcm_forward.8} parent=19 // pred_check_branch
        %200 = sbr.rel (%p198) target = $region28
      $region27: #{pcm_forward.8} parent=19 // pred_region
        %s201 = smul.u32 32, %s19
        %p202 = scmp.lt.s32.totalorder %s18, 1
        %s203 = scalar_select %p202, %s18, 1
        %p204 = scmp.lt.s32.totalorder %s201, 31
        %s205 = scalar_select %p204, %s201, 31
        %s206 = smul.addr %s203, 32
        %s207 = sadd.s32 %s205, %s206
        %s208 = smul.addr %s207, 4
        %s209 = scalar_lea.vmem %s2, %s208
        %s210 = smul.u32 32, %s19
      $region28: #{pcm_forward.8} parent=19 // pred_fallthru
        _
    $region20: #{pcm_forward.8} parent=5 // pred_fallthru
      _
    %p211 = scmp.le.s32.totalorder 1, %s11
    %p212 = scmp.lt.s32.totalorder %s11, 3
    %p213 = pnand %p211, %p212
    %p214 = pneg %p213
    // Predicated region
    $region29: #{pcm_forward.8} parent=5 // pred_check
      _
    $region30: #{pcm_forward.8} parent=5 // pred_check_branch
      %216 = sbr.rel (%p213) target = $region32
    $region31: #{pcm_forward.8} parent=5 // pred_region
      %s217 = ssub.s32 %s11, 1
      %s218 = smul.u32 2, %s21
      %p219 = scmp.lt.s32.totalorder %s218, 1
      %s220 = scalar_select %p219, %s218, 1
      %s221 = smul.addr %s220, 4
      %s222 = scalar_lea.vmem %s0, %s221
      %p223 = pneg %p49
      %p224 = pneg %p46
      %s225 = smul.u32 32, %s21
      %p226 = scmp.lt.s32.totalorder %s20, 1
      %s227 = scalar_select %p226, %s20, 1
      %p228 = scmp.lt.s32.totalorder %s225, 31
      %s229 = scalar_select %p228, %s225, 31
      %s230 = smul.addr %s227, 32
      %s231 = sadd.s32 %s229, %s230
      %s232 = smul.addr %s231, 4
      %s233 = scalar_lea.vmem %s1, %s232
      %p234 = pneg %p77
      %p235 = pneg %p74
      %s236 = smul.u32 32, %s21
      %p237 = scmp.lt.s32.totalorder %s20, 1
      %s238 = scalar_select %p237, %s20, 1
      %p239 = scmp.lt.s32.totalorder %s236, 31
      %s240 = scalar_select %p239, %s236, 31
      %s241 = smul.addr %s238, 32
      %s242 = sadd.s32 %s240, %s241
      %s243 = smul.addr %s242, 4
      %s244 = scalar_lea.vmem %s2, %s243
      %p245 = pneg %p105
      %p246 = pneg %p102
      %p247 = pneg %p131
      %p248 = pneg %p128
      %p249 = scmp.lt.s32.totalorder %s20, 1
      %s250 = scalar_select %p249, %s20, 1
      %s251 = smul.addr %s250, 32
      %s252 = smul.addr %s251, 4
      %s253 = scalar_lea.vmem %s3, %s252
      %p254 = pneg %p157
      %p255 = pneg %p154
      %p256 = scmp.lt.s32.totalorder %s20, 1
      %s257 = scalar_select %p256, %s20, 1
      %s258 = smul.addr %s257, 32
      %s259 = smul.addr %s258, 4
      %s260 = scalar_lea.vmem %s4, %s259
      %s261 = smul.u32 2, %s21
      %p262 = scmp.lt.s32.totalorder %s261, 1
      %s263 = scalar_select %p262, %s261, 1
      %s264 = smul.addr %s263, 4
      %s265 = scalar_lea.vmem %s0, %s264
      %s266 = smul.u32 2, %s21
      %s267 = smul.u32 32, %s21
      %p268 = scmp.lt.s32.totalorder %s20, 1
      %s269 = scalar_select %p268, %s20, 1
      %p270 = scmp.lt.s32.totalorder %s267, 31
      %s271 = scalar_select %p270, %s267, 31
      %s272 = smul.addr %s269, 32
      %s273 = sadd.s32 %s271, %s272
      %s274 = smul.addr %s273, 4
      %s275 = scalar_lea.vmem %s1, %s274
      %s276 = smul.u32 32, %s21
      %s277 = smul.u32 32, %s21
      %p278 = scmp.lt.s32.totalorder %s20, 1
      %s279 = scalar_select %p278, %s20, 1
      %p280 = scmp.lt.s32.totalorder %s277, 31
      %s281 = scalar_select %p280, %s277, 31
      %s282 = smul.addr %s279, 32
      %s283 = sadd.s32 %s281, %s282
      %s284 = smul.addr %s283, 4
      %s285 = scalar_lea.vmem %s2, %s284
      %s286 = smul.u32 32, %s21
      %p287 = scmp.lt.s32.totalorder %s20, 1
      %s288 = scalar_select %p287, %s20, 1
      %s289 = smul.addr %s288, 32
      %s290 = smul.addr %s289, 4
      %s291 = scalar_lea.vmem %s3, %s290
      %p292 = scmp.lt.s32.totalorder %s20, 1
      %s293 = scalar_select %p292, %s20, 1
      %s294 = smul.addr %s293, 32
      %s295 = smul.addr %s294, 4
      %s296 = scalar_lea.vmem %s4, %s295
      %p298 = scmp.eq.s32.totalorder %s21, 0
      // Predicated region
      $region33: #{pcm_forward.8} parent=31 // pred_check
        %p299 = pneg %p298
      $region34: #{pcm_forward.8} parent=31 // pred_check_branch
        %301 = sbr.rel (%p299) target = $region36
      $region35: #{pcm_forward.8} parent=31 // pred_region
        %302 = vst [vmem:[#allocation2] sm:$0xff] 0.0
        %303 = vst [vmem:[#allocation2 + $0x8] sm:$0xff] 0.0
        %304 = vst [vmem:[#allocation2 + $0x10] sm:$0xff] 0.0
        %305 = vst [vmem:[#allocation2 + $0x18] sm:$0xff] 0.0
        %306 = vst [vmem:[#allocation2 + $0x20] sm:$0xff] 0.0
        %307 = vst [vmem:[#allocation2 + $0x28] sm:$0xff] 0.0
        %308 = vst [vmem:[#allocation2 + $0x30] sm:$0xff] 0.0
        %309 = vst [vmem:[#allocation2 + $0x38] sm:$0xff] 0.0
        %310 = vst [vmem:[#allocation2 + $0x40] sm:$0xff] 0.0
        %311 = vst [vmem:[#allocation2 + $0x48] sm:$0xff] 0.0
        %312 = vst [vmem:[#allocation2 + $0x50] sm:$0xff] 0.0
        %313 = vst [vmem:[#allocation2 + $0x58] sm:$0xff] 0.0
        %314 = vst [vmem:[#allocation2 + $0x60] sm:$0xff] 0.0
        %315 = vst [vmem:[#allocation2 + $0x68] sm:$0xff] 0.0
        %316 = vst [vmem:[#allocation2 + $0x70] sm:$0xff] 0.0
        %317 = vst [vmem:[#allocation2 + $0x78] sm:$0xff] 0.0
        %318 = vst [vmem:[#allocation2 + $0x80] sm:$0xff] 0.0
        %319 = vst [vmem:[#allocation2 + $0x88] sm:$0xff] 0.0
        %320 = vst [vmem:[#allocation2 + $0x90] sm:$0xff] 0.0
        %321 = vst [vmem:[#allocation2 + $0x98] sm:$0xff] 0.0
        %322 = vst [vmem:[#allocation2 + $0xa0] sm:$0xff] 0.0
        %323 = vst [vmem:[#allocation2 + $0xa8] sm:$0xff] 0.0
        %324 = vst [vmem:[#allocation2 + $0xb0] sm:$0xff] 0.0
        %325 = vst [vmem:[#allocation2 + $0xb8] sm:$0xff] 0.0
        %326 = vst [vmem:[#allocation2 + $0xc0] sm:$0xff] 0.0
        %327 = vst [vmem:[#allocation2 + $0xc8] sm:$0xff] 0.0
        %328 = vst [vmem:[#allocation2 + $0xd0] sm:$0xff] 0.0
        %329 = vst [vmem:[#allocation2 + $0xd8] sm:$0xff] 0.0
        %330 = vst [vmem:[#allocation2 + $0xe0] sm:$0xff] 0.0
        %331 = vst [vmem:[#allocation2 + $0xe8] sm:$0xff] 0.0
        %332 = vst [vmem:[#allocation2 + $0xf0] sm:$0xff] 0.0
        %333 = vst [vmem:[#allocation2 + $0xf8] sm:$0xff] 0.0
        %334 = vst [vmem:[#allocation3] sm:$0xff] 0.0
        %335 = vst [vmem:[#allocation3 + $0x8] sm:$0xff] 0.0
        %336 = vst [vmem:[#allocation3 + $0x10] sm:$0xff] 0.0
        %337 = vst [vmem:[#allocation3 + $0x18] sm:$0xff] 0.0
        %338 = vst [vmem:[#allocation3 + $0x20] sm:$0xff] 0.0
        %339 = vst [vmem:[#allocation3 + $0x28] sm:$0xff] 0.0
        %340 = vst [vmem:[#allocation3 + $0x30] sm:$0xff] 0.0
        %341 = vst [vmem:[#allocation3 + $0x38] sm:$0xff] 0.0
        %342 = vst [vmem:[#allocation3 + $0x40] sm:$0xff] 0.0
        %343 = vst [vmem:[#allocation3 + $0x48] sm:$0xff] 0.0
        %344 = vst [vmem:[#allocation3 + $0x50] sm:$0xff] 0.0
        %345 = vst [vmem:[#allocation3 + $0x58] sm:$0xff] 0.0
        %346 = vst [vmem:[#allocation3 + $0x60] sm:$0xff] 0.0
        %347 = vst [vmem:[#allocation3 + $0x68] sm:$0xff] 0.0
        %348 = vst [vmem:[#allocation3 + $0x70] sm:$0xff] 0.0
        %349 = vst [vmem:[#allocation3 + $0x78] sm:$0xff] 0.0
        %350 = vst [vmem:[#allocation3 + $0x80] sm:$0xff] 0.0
        %351 = vst [vmem:[#allocation3 + $0x88] sm:$0xff] 0.0
        %352 = vst [vmem:[#allocation3 + $0x90] sm:$0xff] 0.0
        %353 = vst [vmem:[#allocation3 + $0x98] sm:$0xff] 0.0
        %354 = vst [vmem:[#allocation3 + $0xa0] sm:$0xff] 0.0
        %355 = vst [vmem:[#allocation3 + $0xa8] sm:$0xff] 0.0
        %356 = vst [vmem:[#allocation3 + $0xb0] sm:$0xff] 0.0
        %357 = vst [vmem:[#allocation3 + $0xb8] sm:$0xff] 0.0
        %358 = vst [vmem:[#allocation3 + $0xc0] sm:$0xff] 0.0
        %359 = vst [vmem:[#allocation3 + $0xc8] sm:$0xff] 0.0
        %360 = vst [vmem:[#allocation3 + $0xd0] sm:$0xff] 0.0
        %361 = vst [vmem:[#allocation3 + $0xd8] sm:$0xff] 0.0
        %362 = vst [vmem:[#allocation3 + $0xe0] sm:$0xff] 0.0
        %363 = vst [vmem:[#allocation3 + $0xe8] sm:$0xff] 0.0
        %364 = vst [vmem:[#allocation3 + $0xf0] sm:$0xff] 0.0
        %365 = vst [vmem:[#allocation3 + $0xf8] sm:$0xff] 0.0
      $region36: #{pcm_forward.8} parent=31 // pred_fallthru
        _
      %v366 = vld [vmem:[%s265] sm:$0xff]
      %v367 = vld [vmem:[%s265 + $0x8] sm:$0xff]
      %v368 = vld [vmem:[%s265 + $0x10] sm:$0xff]
      %v369 = vld [vmem:[%s265 + $0x18] sm:$0xff]
      %v370 = vld [vmem:[%s265 + $0x20] sm:$0xff]
      %v371 = vld [vmem:[%s265 + $0x28] sm:$0xff]
      %v372 = vld [vmem:[%s265 + $0x30] sm:$0xff]
      %v373 = vld [vmem:[%s265 + $0x38] sm:$0xff]
      %v374 = vld [vmem:[%s265 + $0x40] sm:$0xff]
      %v375 = vld [vmem:[%s265 + $0x48] sm:$0xff]
      %v376 = vld [vmem:[%s265 + $0x50] sm:$0xff]
      %v377 = vld [vmem:[%s265 + $0x58] sm:$0xff]
      %v378 = vld [vmem:[%s265 + $0x60] sm:$0xff]
      %v379 = vld [vmem:[%s265 + $0x68] sm:$0xff]
      %v380 = vld [vmem:[%s265 + $0x70] sm:$0xff]
      %v381 = vld [vmem:[%s265 + $0x78] sm:$0xff]
      %v382 = vld [vmem:[%s265 + $0x80] sm:$0xff]
      %v383 = vld [vmem:[%s265 + $0x88] sm:$0xff]
      %v384 = vld [vmem:[%s265 + $0x90] sm:$0xff]
      %v385 = vld [vmem:[%s265 + $0x98] sm:$0xff]
      %v386 = vld [vmem:[%s265 + $0xa0] sm:$0xff]
      %v387 = vld [vmem:[%s265 + $0xa8] sm:$0xff]
      %v388 = vld [vmem:[%s265 + $0xb0] sm:$0xff]
      %v389 = vld [vmem:[%s265 + $0xb8] sm:$0xff]
      %v390 = vld [vmem:[%s265 + $0xc0] sm:$0xff]
      %v391 = vld [vmem:[%s265 + $0xc8] sm:$0xff]
      %v392 = vld [vmem:[%s265 + $0xd0] sm:$0xff]
      %v393 = vld [vmem:[%s265 + $0xd8] sm:$0xff]
      %v394 = vld [vmem:[%s265 + $0xe0] sm:$0xff]
      %v395 = vld [vmem:[%s265 + $0xe8] sm:$0xff]
      %v396 = vld [vmem:[%s265 + $0xf0] sm:$0xff]
      %v397 = vld [vmem:[%s265 + $0xf8] sm:$0xff]
      %v398 = vld [vmem:[#allocation2] sm:$0xff]
      %v399 = vld [vmem:[#allocation2 + $0x8] sm:$0xff]
      %v400 = vld [vmem:[#allocation2 + $0x10] sm:$0xff]
      %v401 = vld [vmem:[#allocation2 + $0x18] sm:$0xff]
      %v402 = vld [vmem:[#allocation2 + $0x20] sm:$0xff]
      %v403 = vld [vmem:[#allocation2 + $0x28] sm:$0xff]
      %v404 = vld [vmem:[#allocation2 + $0x30] sm:$0xff]
      %v405 = vld [vmem:[#allocation2 + $0x38] sm:$0xff]
      %v406 = vld [vmem:[#allocation2 + $0x40] sm:$0xff]
      %v407 = vld [vmem:[#allocation2 + $0x48] sm:$0xff]
      %v408 = vld [vmem:[#allocation2 + $0x50] sm:$0xff]
      %v409 = vld [vmem:[#allocation2 + $0x58] sm:$0xff]
      %v410 = vld [vmem:[#allocation2 + $0x60] sm:$0xff]
      %v411 = vld [vmem:[#allocation2 + $0x68] sm:$0xff]
      %v412 = vld [vmem:[#allocation2 + $0x70] sm:$0xff]
      %v413 = vld [vmem:[#allocation2 + $0x78] sm:$0xff]
      %v414 = vld [vmem:[#allocation2 + $0x80] sm:$0xff]
      %v415 = vld [vmem:[#allocation2 + $0x88] sm:$0xff]
      %v416 = vld [vmem:[#allocation2 + $0x90] sm:$0xff]
      %v417 = vld [vmem:[#allocation2 + $0x98] sm:$0xff]
      %v418 = vld [vmem:[#allocation2 + $0xa0] sm:$0xff]
      %v419 = vld [vmem:[#allocation2 + $0xa8] sm:$0xff]
      %v420 = vld [vmem:[#allocation2 + $0xb0] sm:$0xff]
      %v421 = vld [vmem:[#allocation2 + $0xb8] sm:$0xff]
      %v422 = vld [vmem:[#allocation2 + $0xc0] sm:$0xff]
      %v423 = vld [vmem:[#allocation2 + $0xc8] sm:$0xff]
      %v424 = vld [vmem:[#allocation2 + $0xd0] sm:$0xff]
      %v425 = vld [vmem:[#allocation2 + $0xd8] sm:$0xff]
      %v426 = vld [vmem:[#allocation2 + $0xe0] sm:$0xff]
      %v427 = vld [vmem:[#allocation2 + $0xe8] sm:$0xff]
      %v428 = vld [vmem:[#allocation2 + $0xf0] sm:$0xff]
      %v429 = vld [vmem:[#allocation2 + $0xf8] sm:$0xff]
      %v430 = vld [vmem:[%s275] sm:$0xf]
      %v431 = vld [vmem:[%s275 + $0x4] sm:$0xf]
      %v432 = vld [vmem:[%s275 + $0x8] sm:$0xf]
      %v433 = vld [vmem:[%s275 + $0xc] sm:$0xf]
      %v434 = vld [vmem:[%s275 + $0x10] sm:$0xf]
      %v435 = vld [vmem:[%s275 + $0x14] sm:$0xf]
      %v436 = vld [vmem:[%s275 + $0x18] sm:$0xf]
      %v437 = vld [vmem:[%s275 + $0x1c] sm:$0xf]
      %v438 = vld [vmem:[%s275 + $0x20] sm:$0xf]
      %v439 = vld [vmem:[%s275 + $0x24] sm:$0xf]
      %v440 = vld [vmem:[%s275 + $0x28] sm:$0xf]
      %v441 = vld [vmem:[%s275 + $0x2c] sm:$0xf]
      %v442 = vld [vmem:[%s275 + $0x30] sm:$0xf]
      %v443 = vld [vmem:[%s275 + $0x34] sm:$0xf]
      %v444 = vld [vmem:[%s275 + $0x38] sm:$0xf]
      %v445 = vld [vmem:[%s275 + $0x3c] sm:$0xf]
      %v446 = vld [vmem:[%s275 + $0x40] sm:$0xf]
      %v447 = vld [vmem:[%s275 + $0x44] sm:$0xf]
      %v448 = vld [vmem:[%s275 + $0x48] sm:$0xf]
      %v449 = vld [vmem:[%s275 + $0x4c] sm:$0xf]
      %v450 = vld [vmem:[%s275 + $0x50] sm:$0xf]
      %v451 = vld [vmem:[%s275 + $0x54] sm:$0xf]
      %v452 = vld [vmem:[%s275 + $0x58] sm:$0xf]
      %v453 = vld [vmem:[%s275 + $0x5c] sm:$0xf]
      %v454 = vld [vmem:[%s275 + $0x60] sm:$0xf]
      %v455 = vld [vmem:[%s275 + $0x64] sm:$0xf]
      %v456 = vld [vmem:[%s275 + $0x68] sm:$0xf]
      %v457 = vld [vmem:[%s275 + $0x6c] sm:$0xf]
      %v458 = vld [vmem:[%s275 + $0x70] sm:$0xf]
      %v459 = vld [vmem:[%s275 + $0x74] sm:$0xf]
      %v460 = vld [vmem:[%s275 + $0x78] sm:$0xf]
      %v461 = vld [vmem:[%s275 + $0x7c] sm:$0xf]
      %v494 = vunpack.c.l.b16 %v366
      %v495 = vunpack.c.h.b16 %v366
      %v496 = vunpack.c.l.b16 %v367
      %v497 = vunpack.c.h.b16 %v367
      %v498 = vunpack.c.l.b16 %v368
      %v499 = vunpack.c.h.b16 %v368
      %v500 = vunpack.c.l.b16 %v369
      %v501 = vunpack.c.h.b16 %v369
      %v502 = vunpack.c.l.b16 %v370
      %v503 = vunpack.c.h.b16 %v370
      %v504 = vunpack.c.l.b16 %v371
      %v505 = vunpack.c.h.b16 %v371
      %v506 = vunpack.c.l.b16 %v372
      %v507 = vunpack.c.h.b16 %v372
      %v508 = vunpack.c.l.b16 %v373
      %v509 = vunpack.c.h.b16 %v373
      %v510 = vunpack.c.l.b16 %v374
      %v511 = vunpack.c.h.b16 %v374
      %v512 = vunpack.c.l.b16 %v375
      %v513 = vunpack.c.h.b16 %v375
      %v514 = vunpack.c.l.b16 %v376
      %v515 = vunpack.c.h.b16 %v376
      %v516 = vunpack.c.l.b16 %v377
      %v517 = vunpack.c.h.b16 %v377
      %v518 = vunpack.c.l.b16 %v378
      %v519 = vunpack.c.h.b16 %v378
      %v520 = vunpack.c.l.b16 %v379
      %v521 = vunpack.c.h.b16 %v379
      %v522 = vunpack.c.l.b16 %v380
      %v523 = vunpack.c.h.b16 %v380
      %v524 = vunpack.c.l.b16 %v381
      %v525 = vunpack.c.h.b16 %v381
      %v526 = vunpack.c.l.b16 %v382
      %v527 = vunpack.c.h.b16 %v382
      %v528 = vunpack.c.l.b16 %v383
      %v529 = vunpack.c.h.b16 %v383
      %v530 = vunpack.c.l.b16 %v384
      %v531 = vunpack.c.h.b16 %v384
      %v532 = vunpack.c.l.b16 %v385
      %v533 = vunpack.c.h.b16 %v385
      %v534 = vunpack.c.l.b16 %v386
      %v535 = vunpack.c.h.b16 %v386
      %v536 = vunpack.c.l.b16 %v387
      %v537 = vunpack.c.h.b16 %v387
      %v538 = vunpack.c.l.b16 %v388
      %v539 = vunpack.c.h.b16 %v388
      %v540 = vunpack.c.l.b16 %v389
      %v541 = vunpack.c.h.b16 %v389
      %v542 = vunpack.c.l.b16 %v390
      %v543 = vunpack.c.h.b16 %v390
      %v544 = vunpack.c.l.b16 %v391
      %v545 = vunpack.c.h.b16 %v391
      %v546 = vunpack.c.l.b16 %v392
      %v547 = vunpack.c.h.b16 %v392
      %v548 = vunpack.c.l.b16 %v393
      %v549 = vunpack.c.h.b16 %v393
      %v550 = vunpack.c.l.b16 %v394
      %v551 = vunpack.c.h.b16 %v394
      %v552 = vunpack.c.l.b16 %v395
      %v553 = vunpack.c.h.b16 %v395
      %v554 = vunpack.c.l.b16 %v396
      %v555 = vunpack.c.h.b16 %v396
      %v556 = vunpack.c.l.b16 %v397
      %v557 = vunpack.c.h.b16 %v397
      %v558 = vpack.c.b16 %v496, %v494
      %v559 = vpack.c.b16 %v497, %v495
      %v560 = vpack.c.b16 %v500, %v498
      %v561 = vpack.c.b16 %v501, %v499
      %v562 = vpack.c.b16 %v504, %v502
      %v563 = vpack.c.b16 %v505, %v503
      %v564 = vpack.c.b16 %v508, %v506
      %v565 = vpack.c.b16 %v509, %v507
      %v566 = vpack.c.b16 %v512, %v510
      %v567 = vpack.c.b16 %v513, %v511
      %v568 = vpack.c.b16 %v516, %v514
      %v569 = vpack.c.b16 %v517, %v515
      %v570 = vpack.c.b16 %v520, %v518
      %v571 = vpack.c.b16 %v521, %v519
      %v572 = vpack.c.b16 %v524, %v522
      %v573 = vpack.c.b16 %v525, %v523
      %v574 = vpack.c.b16 %v528, %v526
      %v575 = vpack.c.b16 %v529, %v527
      %v576 = vpack.c.b16 %v532, %v530
      %v577 = vpack.c.b16 %v533, %v531
      %v578 = vpack.c.b16 %v536, %v534
      %v579 = vpack.c.b16 %v537, %v535
      %v580 = vpack.c.b16 %v540, %v538
      %v581 = vpack.c.b16 %v541, %v539
      %v582 = vpack.c.b16 %v544, %v542
      %v583 = vpack.c.b16 %v545, %v543
      %v584 = vpack.c.b16 %v548, %v546
      %v585 = vpack.c.b16 %v549, %v547
      %v586 = vpack.c.b16 %v552, %v550
      %v587 = vpack.c.b16 %v553, %v551
      %v588 = vpack.c.b16 %v556, %v554
      %v589 = vpack.c.b16 %v557, %v555
      %v654 = vunpack.c.l.b16 %v430
      %v655 = vunpack.c.l.b16 %v431
      %v656 = vunpack.c.l.b16 %v432
      %v657 = vunpack.c.l.b16 %v433
      %v658 = vunpack.c.l.b16 %v434
      %v659 = vunpack.c.l.b16 %v435
      %v660 = vunpack.c.l.b16 %v436
      %v661 = vunpack.c.l.b16 %v437
      %v662 = vunpack.c.l.b16 %v438
      %v663 = vunpack.c.l.b16 %v439
      %v664 = vunpack.c.l.b16 %v440
      %v665 = vunpack.c.l.b16 %v441
      %v666 = vunpack.c.l.b16 %v442
      %v667 = vunpack.c.l.b16 %v443
      %v668 = vunpack.c.l.b16 %v444
      %v669 = vunpack.c.l.b16 %v445
      %v670 = vunpack.c.l.b16 %v446
      %v671 = vunpack.c.l.b16 %v447
      %v672 = vunpack.c.l.b16 %v448
      %v673 = vunpack.c.l.b16 %v449
      %v674 = vunpack.c.l.b16 %v450
      %v675 = vunpack.c.l.b16 %v451
      %v676 = vunpack.c.l.b16 %v452
      %v677 = vunpack.c.l.b16 %v453
      %v678 = vunpack.c.l.b16 %v454
      %v679 = vunpack.c.l.b16 %v455
      %v680 = vunpack.c.l.b16 %v456
      %v681 = vunpack.c.l.b16 %v457
      %v682 = vunpack.c.l.b16 %v458
      %v683 = vunpack.c.l.b16 %v459
      %v684 = vunpack.c.l.b16 %v460
      %v685 = vunpack.c.l.b16 %v461
      %v686 = vpack.c.b16 %v655, %v654
      %v687 = vpack.c.b16 %v657, %v656
      %v688 = vpack.c.b16 %v659, %v658
      %v689 = vpack.c.b16 %v661, %v660
      %v690 = vpack.c.b16 %v663, %v662
      %v691 = vpack.c.b16 %v665, %v664
      %v692 = vpack.c.b16 %v667, %v666
      %v693 = vpack.c.b16 %v669, %v668
      %v694 = vpack.c.b16 %v671, %v670
      %v695 = vpack.c.b16 %v673, %v672
      %v696 = vpack.c.b16 %v675, %v674
      %v697 = vpack.c.b16 %v677, %v676
      %v698 = vpack.c.b16 %v679, %v678
      %v699 = vpack.c.b16 %v681, %v680
      %v700 = vpack.c.b16 %v683, %v682
      %v701 = vpack.c.b16 %v685, %v684
      %718 = vmatprep.subr.bf16.mxu0 0
      %719 = vmatpush1.bf16.msra.mxu0 %v686
      %720 = vmatprep.subr.bf16.mxu0 0
      %721 = vmatpush1.bf16.msra.mxu0 %v687
      %722 = vmatprep.subr.bf16.mxu0 0
      %723 = vmatpush1.bf16.msra.mxu0 %v688
      %724 = vmatprep.subr.bf16.mxu0 0
      %725 = vmatpush1.bf16.msra.mxu0 %v689
      %726 = vmatprep.subr.bf16.mxu0 0
      %727 = vmatpush1.bf16.msra.mxu0 %v690
      %728 = vmatprep.subr.bf16.mxu0 0
      %729 = vmatpush1.bf16.msra.mxu0 %v691
      %730 = vmatprep.subr.bf16.mxu0 0
      %731 = vmatpush1.bf16.msra.mxu0 %v692
      %732 = vmatprep.subr.bf16.mxu0 0
      %733 = vmatpush1.bf16.msra.mxu0 %v693
      %734 = vmatprep.subr.bf16.mxu0 0
      %735 = vmatpush1.bf16.msra.mxu0 %v694
      %736 = vmatprep.subr.bf16.mxu0 0
      %737 = vmatpush1.bf16.msra.mxu0 %v695
      %738 = vmatprep.subr.bf16.mxu0 0
      %739 = vmatpush1.bf16.msra.mxu0 %v696
      %740 = vmatprep.subr.bf16.mxu0 0
      %741 = vmatpush1.bf16.msra.mxu0 %v697
      %742 = vmatprep.subr.bf16.mxu0 0
      %743 = vmatpush1.bf16.msra.mxu0 %v698
      %744 = vmatprep.subr.bf16.mxu0 0
      %745 = vmatpush1.bf16.msra.mxu0 %v699
      %746 = vmatprep.subr.bf16.mxu0 0
      %747 = vmatpush1.bf16.msra.mxu0 %v700
      %748 = vmatprep.subr.bf16.mxu0 0
      %749 = vmatpush1.bf16.msra.mxu0 %v701
      %750 = vmatprep.mubr.bf16.mxu0 %v559
      %751 = vmatmul.mubr.bf16.gmra.mrb[0].mxu0 %v558
      %v752 = vpop.f32.mrb[0].mxu0
      %v753 = vadd.f32 0.0, %v752
      %v754 = vpop.f32.mrb[0].mxu0
      %v755 = vpop.f32.mrb[0].mxu0
      %v756 = vadd.f32 0.0, %v755
      %v757 = vpop.f32.mrb[0].mxu0
      %758 = vmatprep.mubr.bf16.mxu0 %v561
      %759 = vmatmul.mubr.bf16.gmra.mrb[0].mxu0 %v560
      %v760 = vpop.f32.mrb[0].mxu0
      %v761 = vadd.f32 0.0, %v760
      %v762 = vpop.f32.mrb[0].mxu0
      %v763 = vpop.f32.mrb[0].mxu0
      %v764 = vadd.f32 0.0, %v763
      %v765 = vpop.f32.mrb[0].mxu0
      %766 = vmatprep.mubr.bf16.mxu0 %v563
      %767 = vmatmul.mubr.bf16.gmra.mrb[0].mxu0 %v562
      %v768 = vpop.f32.mrb[0].mxu0
      %v769 = vadd.f32 0.0, %v768
      %v770 = vpop.f32.mrb[0].mxu0
      %v771 = vpop.f32.mrb[0].mxu0
      %v772 = vadd.f32 0.0, %v771
      %v773 = vpop.f32.mrb[0].mxu0
      %774 = vmatprep.mubr.bf16.mxu0 %v565
      %775 = vmatmul.mubr.bf16.gmra.mrb[0].mxu0 %v564
      %v776 = vpop.f32.mrb[0].mxu0
      %v777 = vadd.f32 0.0, %v776
      %v778 = vpop.f32.mrb[0].mxu0
      %v779 = vpop.f32.mrb[0].mxu0
      %v780 = vadd.f32 0.0, %v779
      %v781 = vpop.f32.mrb[0].mxu0
      %782 = vmatprep.mubr.bf16.mxu0 %v567
      %783 = vmatmul.mubr.bf16.gmra.mrb[0].mxu0 %v566
      %v784 = vpop.f32.mrb[0].mxu0
      %v785 = vadd.f32 0.0, %v784
      %v786 = vpop.f32.mrb[0].mxu0
      %v787 = vpop.f32.mrb[0].mxu0
      %v788 = vadd.f32 0.0, %v787
      %v789 = vpop.f32.mrb[0].mxu0
      %790 = vmatprep.mubr.bf16.mxu0 %v569
      %791 = vmatmul.mubr.bf16.gmra.mrb[0].mxu0 %v568
      %v792 = vpop.f32.mrb[0].mxu0
      %v793 = vadd.f32 0.0, %v792
      %v794 = vpop.f32.mrb[0].mxu0
      %v795 = vpop.f32.mrb[0].mxu0
      %v796 = vadd.f32 0.0, %v795
      %v797 = vpop.f32.mrb[0].mxu0
      %798 = vmatprep.mubr.bf16.mxu0 %v571
      %799 = vmatmul.mubr.bf16.gmra.mrb[0].mxu0 %v570
      %v800 = vpop.f32.mrb[0].mxu0
      %v801 = vadd.f32 0.0, %v800
      %v802 = vpop.f32.mrb[0].mxu0
      %v803 = vpop.f32.mrb[0].mxu0
      %v804 = vadd.f32 0.0, %v803
      %v805 = vpop.f32.mrb[0].mxu0
      %806 = vmatprep.mubr.bf16.mxu0 %v573
      %807 = vmatmul.mubr.bf16.gmra.mrb[0].mxu0 %v572
      %v808 = vpop.f32.mrb[0].mxu0
      %v809 = vadd.f32 0.0, %v808
      %v810 = vpop.f32.mrb[0].mxu0
      %v811 = vpop.f32.mrb[0].mxu0
      %v812 = vadd.f32 0.0, %v811
      %v813 = vpop.f32.mrb[0].mxu0
      %814 = vmatprep.mubr.bf16.mxu0 %v575
      %815 = vmatmul.mubr.bf16.gmra.mrb[0].mxu0 %v574
      %v816 = vpop.f32.mrb[0].mxu0
      %v817 = vadd.f32 0.0, %v816
      %v818 = vpop.f32.mrb[0].mxu0
      %v819 = vpop.f32.mrb[0].mxu0
      %v820 = vadd.f32 0.0, %v819
      %v821 = vpop.f32.mrb[0].mxu0
      %822 = vmatprep.mubr.bf16.mxu0 %v577
      %823 = vmatmul.mubr.bf16.gmra.mrb[0].mxu0 %v576
      %v824 = vpop.f32.mrb[0].mxu0
      %v825 = vadd.f32 0.0, %v824
      %v826 = vpop.f32.mrb[0].mxu0
      %v827 = vpop.f32.mrb[0].mxu0
      %v828 = vadd.f32 0.0, %v827
      %v829 = vpop.f32.mrb[0].mxu0
      %830 = vmatprep.mubr.bf16.mxu0 %v579
      %831 = vmatmul.mubr.bf16.gmra.mrb[0].mxu0 %v578
      %v832 = vpop.f32.mrb[0].mxu0
      %v833 = vadd.f32 0.0, %v832
      %v834 = vpop.f32.mrb[0].mxu0
      %v835 = vpop.f32.mrb[0].mxu0
      %v836 = vadd.f32 0.0, %v835
      %v837 = vpop.f32.mrb[0].mxu0
      %838 = vmatprep.mubr.bf16.mxu0 %v581
      %839 = vmatmul.mubr.bf16.gmra.mrb[0].mxu0 %v580
      %v840 = vpop.f32.mrb[0].mxu0
      %v841 = vadd.f32 0.0, %v840
      %v842 = vpop.f32.mrb[0].mxu0
      %v843 = vpop.f32.mrb[0].mxu0
      %v844 = vadd.f32 0.0, %v843
      %v845 = vpop.f32.mrb[0].mxu0
      %846 = vmatprep.mubr.bf16.mxu0 %v583
      %847 = vmatmul.mubr.bf16.gmra.mrb[0].mxu0 %v582
      %v848 = vpop.f32.mrb[0].mxu0
      %v849 = vadd.f32 0.0, %v848
      %v850 = vpop.f32.mrb[0].mxu0
      %v851 = vpop.f32.mrb[0].mxu0
      %v852 = vadd.f32 0.0, %v851
      %v853 = vpop.f32.mrb[0].mxu0
      %854 = vmatprep.mubr.bf16.mxu0 %v585
      %855 = vmatmul.mubr.bf16.gmra.mrb[0].mxu0 %v584
      %v856 = vpop.f32.mrb[0].mxu0
      %v857 = vadd.f32 0.0, %v856
      %v858 = vpop.f32.mrb[0].mxu0
      %v859 = vpop.f32.mrb[0].mxu0
      %v860 = vadd.f32 0.0, %v859
      %v861 = vpop.f32.mrb[0].mxu0
      %862 = vmatprep.mubr.bf16.mxu0 %v587
      %863 = vmatmul.mubr.bf16.gmra.mrb[0].mxu0 %v586
      %v864 = vpop.f32.mrb[0].mxu0
      %v865 = vadd.f32 0.0, %v864
      %v866 = vpop.f32.mrb[0].mxu0
      %v867 = vpop.f32.mrb[0].mxu0
      %v868 = vadd.f32 0.0, %v867
      %v869 = vpop.f32.mrb[0].mxu0
      %870 = vmatprep.mubr.bf16.mxu0 %v589
      %871 = vmatmul.mubr.bf16.gmra.mrb[0].mxu0 %v588
      %v872 = vpop.f32.mrb[0].mxu0
      %v873 = vadd.f32 0.0, %v872
      %v874 = vpop.f32.mrb[0].mxu0
      %v875 = vpop.f32.mrb[0].mxu0
      %v876 = vadd.f32 0.0, %v875
      %v877 = vpop.f32.mrb[0].mxu0
      %878 = vdwg.mxu0
      %v879 = vadd.f32 %v398, %v753
      %v880 = vadd.f32 %v399, %v756
      %v881 = vadd.f32 %v400, %v761
      %v882 = vadd.f32 %v401, %v764
      %v883 = vadd.f32 %v402, %v769
      %v884 = vadd.f32 %v403, %v772
      %v885 = vadd.f32 %v404, %v777
      %v886 = vadd.f32 %v405, %v780
      %v887 = vadd.f32 %v406, %v785
      %v888 = vadd.f32 %v407, %v788
      %v889 = vadd.f32 %v408, %v793
      %v890 = vadd.f32 %v409, %v796
      %v891 = vadd.f32 %v410, %v801
      %v892 = vadd.f32 %v411, %v804
      %v893 = vadd.f32 %v412, %v809
      %v894 = vadd.f32 %v413, %v812
      %v895 = vadd.f32 %v414, %v817
      %v896 = vadd.f32 %v415, %v820
      %v897 = vadd.f32 %v416, %v825
      %v898 = vadd.f32 %v417, %v828
      %v899 = vadd.f32 %v418, %v833
      %v900 = vadd.f32 %v419, %v836
      %v901 = vadd.f32 %v420, %v841
      %v902 = vadd.f32 %v421, %v844
      %v903 = vadd.f32 %v422, %v849
      %v904 = vadd.f32 %v423, %v852
      %v905 = vadd.f32 %v424, %v857
      %v906 = vadd.f32 %v425, %v860
      %v907 = vadd.f32 %v426, %v865
      %v908 = vadd.f32 %v427, %v868
      %v909 = vadd.f32 %v428, %v873
      %v910 = vadd.f32 %v429, %v876
      %911 = vst [vmem:[#allocation2] sm:$0xff] %v879
      %912 = vst [vmem:[#allocation2 + $0x8] sm:$0xff] %v880
      %913 = vst [vmem:[#allocation2 + $0x10] sm:$0xff] %v881
      %914 = vst [vmem:[#allocation2 + $0x18] sm:$0xff] %v882
      %915 = vst [vmem:[#allocation2 + $0x20] sm:$0xff] %v883
      %916 = vst [vmem:[#allocation2 + $0x28] sm:$0xff] %v884
      %917 = vst [vmem:[#allocation2 + $0x30] sm:$0xff] %v885
      %918 = vst [vmem:[#allocation2 + $0x38] sm:$0xff] %v886
      %919 = vst [vmem:[#allocation2 + $0x40] sm:$0xff] %v887
      %920 = vst [vmem:[#allocation2 + $0x48] sm:$0xff] %v888
      %921 = vst [vmem:[#allocation2 + $0x50] sm:$0xff] %v889
      %922 = vst [vmem:[#allocation2 + $0x58] sm:$0xff] %v890
      %923 = vst [vmem:[#allocation2 + $0x60] sm:$0xff] %v891
      %924 = vst [vmem:[#allocation2 + $0x68] sm:$0xff] %v892
      %925 = vst [vmem:[#allocation2 + $0x70] sm:$0xff] %v893
      %926 = vst [vmem:[#allocation2 + $0x78] sm:$0xff] %v894
      %927 = vst [vmem:[#allocation2 + $0x80] sm:$0xff] %v895
      %928 = vst [vmem:[#allocation2 + $0x88] sm:$0xff] %v896
      %929 = vst [vmem:[#allocation2 + $0x90] sm:$0xff] %v897
      %930 = vst [vmem:[#allocation2 + $0x98] sm:$0xff] %v898
      %931 = vst [vmem:[#allocation2 + $0xa0] sm:$0xff] %v899
      %932 = vst [vmem:[#allocation2 + $0xa8] sm:$0xff] %v900
      %933 = vst [vmem:[#allocation2 + $0xb0] sm:$0xff] %v901
      %934 = vst [vmem:[#allocation2 + $0xb8] sm:$0xff] %v902
      %935 = vst [vmem:[#allocation2 + $0xc0] sm:$0xff] %v903
      %936 = vst [vmem:[#allocation2 + $0xc8] sm:$0xff] %v904
      %937 = vst [vmem:[#allocation2 + $0xd0] sm:$0xff] %v905
      %938 = vst [vmem:[#allocation2 + $0xd8] sm:$0xff] %v906
      %939 = vst [vmem:[#allocation2 + $0xe0] sm:$0xff] %v907
      %940 = vst [vmem:[#allocation2 + $0xe8] sm:$0xff] %v908
      %941 = vst [vmem:[#allocation2 + $0xf0] sm:$0xff] %v909
      %942 = vst [vmem:[#allocation2 + $0xf8] sm:$0xff] %v910
      %v943 = vld [vmem:[%s285] sm:$0xf]
      %v944 = vld [vmem:[%s285 + $0x4] sm:$0xf]
      %v945 = vld [vmem:[%s285 + $0x8] sm:$0xf]
      %v946 = vld [vmem:[%s285 + $0xc] sm:$0xf]
      %v947 = vld [vmem:[%s285 + $0x10] sm:$0xf]
      %v948 = vld [vmem:[%s285 + $0x14] sm:$0xf]
      %v949 = vld [vmem:[%s285 + $0x18] sm:$0xf]
      %v950 = vld [vmem:[%s285 + $0x1c] sm:$0xf]
      %v951 = vld [vmem:[%s285 + $0x20] sm:$0xf]
      %v952 = vld [vmem:[%s285 + $0x24] sm:$0xf]
      %v953 = vld [vmem:[%s285 + $0x28] sm:$0xf]
      %v954 = vld [vmem:[%s285 + $0x2c] sm:$0xf]
      %v955 = vld [vmem:[%s285 + $0x30] sm:$0xf]
      %v956 = vld [vmem:[%s285 + $0x34] sm:$0xf]
      %v957 = vld [vmem:[%s285 + $0x38] sm:$0xf]
      %v958 = vld [vmem:[%s285 + $0x3c] sm:$0xf]
      %v959 = vld [vmem:[%s285 + $0x40] sm:$0xf]
      %v960 = vld [vmem:[%s285 + $0x44] sm:$0xf]
      %v961 = vld [vmem:[%s285 + $0x48] sm:$0xf]
      %v962 = vld [vmem:[%s285 + $0x4c] sm:$0xf]
      %v963 = vld [vmem:[%s285 + $0x50] sm:$0xf]
      %v964 = vld [vmem:[%s285 + $0x54] sm:$0xf]
      %v965 = vld [vmem:[%s285 + $0x58] sm:$0xf]
      %v966 = vld [vmem:[%s285 + $0x5c] sm:$0xf]
      %v967 = vld [vmem:[%s285 + $0x60] sm:$0xf]
      %v968 = vld [vmem:[%s285 + $0x64] sm:$0xf]
      %v969 = vld [vmem:[%s285 + $0x68] sm:$0xf]
      %v970 = vld [vmem:[%s285 + $0x6c] sm:$0xf]
      %v971 = vld [vmem:[%s285 + $0x70] sm:$0xf]
      %v972 = vld [vmem:[%s285 + $0x74] sm:$0xf]
      %v973 = vld [vmem:[%s285 + $0x78] sm:$0xf]
      %v974 = vld [vmem:[%s285 + $0x7c] sm:$0xf]
      %v975 = vmax.bf16 %v943, 0
      %v976 = vmax.bf16 %v944, 0
      %v977 = vmax.bf16 %v945, 0
      %v978 = vmax.bf16 %v946, 0
      %v979 = vmax.bf16 %v947, 0
      %v980 = vmax.bf16 %v948, 0
      %v981 = vmax.bf16 %v949, 0
      %v982 = vmax.bf16 %v950, 0
      %v983 = vmax.bf16 %v951, 0
      %v984 = vmax.bf16 %v952, 0
      %v985 = vmax.bf16 %v953, 0
      %v986 = vmax.bf16 %v954, 0
      %v987 = vmax.bf16 %v955, 0
      %v988 = vmax.bf16 %v956, 0
      %v989 = vmax.bf16 %v957, 0
      %v990 = vmax.bf16 %v958, 0
      %v991 = vmax.bf16 %v959, 0
      %v992 = vmax.bf16 %v960, 0
      %v993 = vmax.bf16 %v961, 0
      %v994 = vmax.bf16 %v962, 0
      %v995 = vmax.bf16 %v963, 0
      %v996 = vmax.bf16 %v964, 0
      %v997 = vmax.bf16 %v965, 0
      %v998 = vmax.bf16 %v966, 0
      %v999 = vmax.bf16 %v967, 0
      %v1000 = vmax.bf16 %v968, 0
      %v1001 = vmax.bf16 %v969, 0
      %v1002 = vmax.bf16 %v970, 0
      %v1003 = vmax.bf16 %v971, 0
      %v1004 = vmax.bf16 %v972, 0
      %v1005 = vmax.bf16 %v973, 0
      %v1006 = vmax.bf16 %v974, 0
      %v1007 = vld [vmem:[#allocation3] sm:$0xff]
      %v1008 = vld [vmem:[#allocation3 + $0x8] sm:$0xff]
      %v1009 = vld [vmem:[#allocation3 + $0x10] sm:$0xff]
      %v1010 = vld [vmem:[#allocation3 + $0x18] sm:$0xff]
      %v1011 = vld [vmem:[#allocation3 + $0x20] sm:$0xff]
      %v1012 = vld [vmem:[#allocation3 + $0x28] sm:$0xff]
      %v1013 = vld [vmem:[#allocation3 + $0x30] sm:$0xff]
      %v1014 = vld [vmem:[#allocation3 + $0x38] sm:$0xff]
      %v1015 = vld [vmem:[#allocation3 + $0x40] sm:$0xff]
      %v1016 = vld [vmem:[#allocation3 + $0x48] sm:$0xff]
      %v1017 = vld [vmem:[#allocation3 + $0x50] sm:$0xff]
      %v1018 = vld [vmem:[#allocation3 + $0x58] sm:$0xff]
      %v1019 = vld [vmem:[#allocation3 + $0x60] sm:$0xff]
      %v1020 = vld [vmem:[#allocation3 + $0x68] sm:$0xff]
      %v1021 = vld [vmem:[#allocation3 + $0x70] sm:$0xff]
      %v1022 = vld [vmem:[#allocation3 + $0x78] sm:$0xff]
      %v1023 = vld [vmem:[#allocation3 + $0x80] sm:$0xff]
      %v1024 = vld [vmem:[#allocation3 + $0x88] sm:$0xff]
      %v1025 = vld [vmem:[#allocation3 + $0x90] sm:$0xff]
      %v1026 = vld [vmem:[#allocation3 + $0x98] sm:$0xff]
      %v1027 = vld [vmem:[#allocation3 + $0xa0] sm:$0xff]
      %v1028 = vld [vmem:[#allocation3 + $0xa8] sm:$0xff]
      %v1029 = vld [vmem:[#allocation3 + $0xb0] sm:$0xff]
      %v1030 = vld [vmem:[#allocation3 + $0xb8] sm:$0xff]
      %v1031 = vld [vmem:[#allocation3 + $0xc0] sm:$0xff]
      %v1032 = vld [vmem:[#allocation3 + $0xc8] sm:$0xff]
      %v1033 = vld [vmem:[#allocation3 + $0xd0] sm:$0xff]
      %v1034 = vld [vmem:[#allocation3 + $0xd8] sm:$0xff]
      %v1035 = vld [vmem:[#allocation3 + $0xe0] sm:$0xff]
      %v1036 = vld [vmem:[#allocation3 + $0xe8] sm:$0xff]
      %v1037 = vld [vmem:[#allocation3 + $0xf0] sm:$0xff]
      %v1038 = vld [vmem:[#allocation3 + $0xf8] sm:$0xff]
      %v1071 = vunpack.c.l.b16 %v975
      %v1072 = vunpack.c.l.b16 %v976
      %v1073 = vunpack.c.l.b16 %v977
      %v1074 = vunpack.c.l.b16 %v978
      %v1075 = vunpack.c.l.b16 %v979
      %v1076 = vunpack.c.l.b16 %v980
      %v1077 = vunpack.c.l.b16 %v981
      %v1078 = vunpack.c.l.b16 %v982
      %v1079 = vunpack.c.l.b16 %v983
      %v1080 = vunpack.c.l.b16 %v984
      %v1081 = vunpack.c.l.b16 %v985
      %v1082 = vunpack.c.l.b16 %v986
      %v1083 = vunpack.c.l.b16 %v987
      %v1084 = vunpack.c.l.b16 %v988
      %v1085 = vunpack.c.l.b16 %v989
      %v1086 = vunpack.c.l.b16 %v990
      %v1087 = vunpack.c.l.b16 %v991
      %v1088 = vunpack.c.l.b16 %v992
      %v1089 = vunpack.c.l.b16 %v993
      %v1090 = vunpack.c.l.b16 %v994
      %v1091 = vunpack.c.l.b16 %v995
      %v1092 = vunpack.c.l.b16 %v996
      %v1093 = vunpack.c.l.b16 %v997
      %v1094 = vunpack.c.l.b16 %v998
      %v1095 = vunpack.c.l.b16 %v999
      %v1096 = vunpack.c.l.b16 %v1000
      %v1097 = vunpack.c.l.b16 %v1001
      %v1098 = vunpack.c.l.b16 %v1002
      %v1099 = vunpack.c.l.b16 %v1003
      %v1100 = vunpack.c.l.b16 %v1004
      %v1101 = vunpack.c.l.b16 %v1005
      %v1102 = vunpack.c.l.b16 %v1006
      %v1103 = vpack.c.b16 %v1072, %v1071
      %v1104 = vpack.c.b16 %v1074, %v1073
      %v1105 = vpack.c.b16 %v1076, %v1075
      %v1106 = vpack.c.b16 %v1078, %v1077
      %v1107 = vpack.c.b16 %v1080, %v1079
      %v1108 = vpack.c.b16 %v1082, %v1081
      %v1109 = vpack.c.b16 %v1084, %v1083
      %v1110 = vpack.c.b16 %v1086, %v1085
      %v1111 = vpack.c.b16 %v1088, %v1087
      %v1112 = vpack.c.b16 %v1090, %v1089
      %v1113 = vpack.c.b16 %v1092, %v1091
      %v1114 = vpack.c.b16 %v1094, %v1093
      %v1115 = vpack.c.b16 %v1096, %v1095
      %v1116 = vpack.c.b16 %v1098, %v1097
      %v1117 = vpack.c.b16 %v1100, %v1099
      %v1118 = vpack.c.b16 %v1102, %v1101
      %1135 = vmatprep.subr.bf16.mxu0 0
      %1136 = vmatpush1.bf16.msra.mxu0 %v1103
      %1137 = vmatprep.subr.bf16.mxu0 0
      %1138 = vmatpush1.bf16.msra.mxu0 %v1104
      %1139 = vmatprep.subr.bf16.mxu0 0
      %1140 = vmatpush1.bf16.msra.mxu0 %v1105
      %1141 = vmatprep.subr.bf16.mxu0 0
      %1142 = vmatpush1.bf16.msra.mxu0 %v1106
      %1143 = vmatprep.subr.bf16.mxu0 0
      %1144 = vmatpush1.bf16.msra.mxu0 %v1107
      %1145 = vmatprep.subr.bf16.mxu0 0
      %1146 = vmatpush1.bf16.msra.mxu0 %v1108
      %1147 = vmatprep.subr.bf16.mxu0 0
      %1148 = vmatpush1.bf16.msra.mxu0 %v1109
      %1149 = vmatprep.subr.bf16.mxu0 0
      %1150 = vmatpush1.bf16.msra.mxu0 %v1110
      %1151 = vmatprep.subr.bf16.mxu0 0
      %1152 = vmatpush1.bf16.msra.mxu0 %v1111
      %1153 = vmatprep.subr.bf16.mxu0 0
      %1154 = vmatpush1.bf16.msra.mxu0 %v1112
      %1155 = vmatprep.subr.bf16.mxu0 0
      %1156 = vmatpush1.bf16.msra.mxu0 %v1113
      %1157 = vmatprep.subr.bf16.mxu0 0
      %1158 = vmatpush1.bf16.msra.mxu0 %v1114
      %1159 = vmatprep.subr.bf16.mxu0 0
      %1160 = vmatpush1.bf16.msra.mxu0 %v1115
      %1161 = vmatprep.subr.bf16.mxu0 0
      %1162 = vmatpush1.bf16.msra.mxu0 %v1116
      %1163 = vmatprep.subr.bf16.mxu0 0
      %1164 = vmatpush1.bf16.msra.mxu0 %v1117
      %1165 = vmatprep.subr.bf16.mxu0 0
      %1166 = vmatpush1.bf16.msra.mxu0 %v1118
      %1167 = vmatprep.mubr.bf16.mxu0 %v559
      %1168 = vmatmul.mubr.bf16.gmra.mrb[0].mxu0 %v558
      %v1169 = vpop.f32.mrb[0].mxu0
      %v1170 = vadd.f32 0.0, %v1169
      %v1171 = vpop.f32.mrb[0].mxu0
      %v1172 = vpop.f32.mrb[0].mxu0
      %v1173 = vadd.f32 0.0, %v1172
      %v1174 = vpop.f32.mrb[0].mxu0
      %1175 = vmatprep.mubr.bf16.mxu0 %v561
      %1176 = vmatmul.mubr.bf16.gmra.mrb[0].mxu0 %v560
      %v1177 = vpop.f32.mrb[0].mxu0
      %v1178 = vadd.f32 0.0, %v1177
      %v1179 = vpop.f32.mrb[0].mxu0
      %v1180 = vpop.f32.mrb[0].mxu0
      %v1181 = vadd.f32 0.0, %v1180
      %v1182 = vpop.f32.mrb[0].mxu0
      %1183 = vmatprep.mubr.bf16.mxu0 %v563
      %1184 = vmatmul.mubr.bf16.gmra.mrb[0].mxu0 %v562
      %v1185 = vpop.f32.mrb[0].mxu0
      %v1186 = vadd.f32 0.0, %v1185
      %v1187 = vpop.f32.mrb[0].mxu0
      %v1188 = vpop.f32.mrb[0].mxu0
      %v1189 = vadd.f32 0.0, %v1188
      %v1190 = vpop.f32.mrb[0].mxu0
      %1191 = vmatprep.mubr.bf16.mxu0 %v565
      %1192 = vmatmul.mubr.bf16.gmra.mrb[0].mxu0 %v564
      %v1193 = vpop.f32.mrb[0].mxu0
      %v1194 = vadd.f32 0.0, %v1193
      %v1195 = vpop.f32.mrb[0].mxu0
      %v1196 = vpop.f32.mrb[0].mxu0
      %v1197 = vadd.f32 0.0, %v1196
      %v1198 = vpop.f32.mrb[0].mxu0
      %1199 = vmatprep.mubr.bf16.mxu0 %v567
      %1200 = vmatmul.mubr.bf16.gmra.mrb[0].mxu0 %v566
      %v1201 = vpop.f32.mrb[0].mxu0
      %v1202 = vadd.f32 0.0, %v1201
      %v1203 = vpop.f32.mrb[0].mxu0
      %v1204 = vpop.f32.mrb[0].mxu0
      %v1205 = vadd.f32 0.0, %v1204
      %v1206 = vpop.f32.mrb[0].mxu0
      %1207 = vmatprep.mubr.bf16.mxu0 %v569
      %1208 = vmatmul.mubr.bf16.gmra.mrb[0].mxu0 %v568
      %v1209 = vpop.f32.mrb[0].mxu0
      %v1210 = vadd.f32 0.0, %v1209
      %v1211 = vpop.f32.mrb[0].mxu0
      %v1212 = vpop.f32.mrb[0].mxu0
      %v1213 = vadd.f32 0.0, %v1212
      %v1214 = vpop.f32.mrb[0].mxu0
      %1215 = vmatprep.mubr.bf16.mxu0 %v571
      %1216 = vmatmul.mubr.bf16.gmra.mrb[0].mxu0 %v570
      %v1217 = vpop.f32.mrb[0].mxu0
      %v1218 = vadd.f32 0.0, %v1217
      %v1219 = vpop.f32.mrb[0].mxu0
      %v1220 = vpop.f32.mrb[0].mxu0
      %v1221 = vadd.f32 0.0, %v1220
      %v1222 = vpop.f32.mrb[0].mxu0
      %1223 = vmatprep.mubr.bf16.mxu0 %v573
      %1224 = vmatmul.mubr.bf16.gmra.mrb[0].mxu0 %v572
      %v1225 = vpop.f32.mrb[0].mxu0
      %v1226 = vadd.f32 0.0, %v1225
      %v1227 = vpop.f32.mrb[0].mxu0
      %v1228 = vpop.f32.mrb[0].mxu0
      %v1229 = vadd.f32 0.0, %v1228
      %v1230 = vpop.f32.mrb[0].mxu0
      %1231 = vmatprep.mubr.bf16.mxu0 %v575
      %1232 = vmatmul.mubr.bf16.gmra.mrb[0].mxu0 %v574
      %v1233 = vpop.f32.mrb[0].mxu0
      %v1234 = vadd.f32 0.0, %v1233
      %v1235 = vpop.f32.mrb[0].mxu0
      %v1236 = vpop.f32.mrb[0].mxu0
      %v1237 = vadd.f32 0.0, %v1236
      %v1238 = vpop.f32.mrb[0].mxu0
      %1239 = vmatprep.mubr.bf16.mxu0 %v577
      %1240 = vmatmul.mubr.bf16.gmra.mrb[0].mxu0 %v576
      %v1241 = vpop.f32.mrb[0].mxu0
      %v1242 = vadd.f32 0.0, %v1241
      %v1243 = vpop.f32.mrb[0].mxu0
      %v1244 = vpop.f32.mrb[0].mxu0
      %v1245 = vadd.f32 0.0, %v1244
      %v1246 = vpop.f32.mrb[0].mxu0
      %1247 = vmatprep.mubr.bf16.mxu0 %v579
      %1248 = vmatmul.mubr.bf16.gmra.mrb[0].mxu0 %v578
      %v1249 = vpop.f32.mrb[0].mxu0
      %v1250 = vadd.f32 0.0, %v1249
      %v1251 = vpop.f32.mrb[0].mxu0
      %v1252 = vpop.f32.mrb[0].mxu0
      %v1253 = vadd.f32 0.0, %v1252
      %v1254 = vpop.f32.mrb[0].mxu0
      %1255 = vmatprep.mubr.bf16.mxu0 %v581
      %1256 = vmatmul.mubr.bf16.gmra.mrb[0].mxu0 %v580
      %v1257 = vpop.f32.mrb[0].mxu0
      %v1258 = vadd.f32 0.0, %v1257
      %v1259 = vpop.f32.mrb[0].mxu0
      %v1260 = vpop.f32.mrb[0].mxu0
      %v1261 = vadd.f32 0.0, %v1260
      %v1262 = vpop.f32.mrb[0].mxu0
      %1263 = vmatprep.mubr.bf16.mxu0 %v583
      %1264 = vmatmul.mubr.bf16.gmra.mrb[0].mxu0 %v582
      %v1265 = vpop.f32.mrb[0].mxu0
      %v1266 = vadd.f32 0.0, %v1265
      %v1267 = vpop.f32.mrb[0].mxu0
      %v1268 = vpop.f32.mrb[0].mxu0
      %v1269 = vadd.f32 0.0, %v1268
      %v1270 = vpop.f32.mrb[0].mxu0
      %1271 = vmatprep.mubr.bf16.mxu0 %v585
      %1272 = vmatmul.mubr.bf16.gmra.mrb[0].mxu0 %v584
      %v1273 = vpop.f32.mrb[0].mxu0
      %v1274 = vadd.f32 0.0, %v1273
      %v1275 = vpop.f32.mrb[0].mxu0
      %v1276 = vpop.f32.mrb[0].mxu0
      %v1277 = vadd.f32 0.0, %v1276
      %v1278 = vpop.f32.mrb[0].mxu0
      %1279 = vmatprep.mubr.bf16.mxu0 %v587
      %1280 = vmatmul.mubr.bf16.gmra.mrb[0].mxu0 %v586
      %v1281 = vpop.f32.mrb[0].mxu0
      %v1282 = vadd.f32 0.0, %v1281
      %v1283 = vpop.f32.mrb[0].mxu0
      %v1284 = vpop.f32.mrb[0].mxu0
      %v1285 = vadd.f32 0.0, %v1284
      %v1286 = vpop.f32.mrb[0].mxu0
      %1287 = vmatprep.mubr.bf16.mxu0 %v589
      %1288 = vmatmul.mubr.bf16.gmra.mrb[0].mxu0 %v588
      %v1289 = vpop.f32.mrb[0].mxu0
      %v1290 = vadd.f32 0.0, %v1289
      %v1291 = vpop.f32.mrb[0].mxu0
      %v1292 = vpop.f32.mrb[0].mxu0
      %v1293 = vadd.f32 0.0, %v1292
      %v1294 = vpop.f32.mrb[0].mxu0
      %1295 = vdwg.mxu0
      %v1296 = vadd.f32 %v1007, %v1170
      %v1297 = vadd.f32 %v1008, %v1173
      %v1298 = vadd.f32 %v1009, %v1178
      %v1299 = vadd.f32 %v1010, %v1181
      %v1300 = vadd.f32 %v1011, %v1186
      %v1301 = vadd.f32 %v1012, %v1189
      %v1302 = vadd.f32 %v1013, %v1194
      %v1303 = vadd.f32 %v1014, %v1197
      %v1304 = vadd.f32 %v1015, %v1202
      %v1305 = vadd.f32 %v1016, %v1205
      %v1306 = vadd.f32 %v1017, %v1210
      %v1307 = vadd.f32 %v1018, %v1213
      %v1308 = vadd.f32 %v1019, %v1218
      %v1309 = vadd.f32 %v1020, %v1221
      %v1310 = vadd.f32 %v1021, %v1226
      %v1311 = vadd.f32 %v1022, %v1229
      %v1312 = vadd.f32 %v1023, %v1234
      %v1313 = vadd.f32 %v1024, %v1237
      %v1314 = vadd.f32 %v1025, %v1242
      %v1315 = vadd.f32 %v1026, %v1245
      %v1316 = vadd.f32 %v1027, %v1250
      %v1317 = vadd.f32 %v1028, %v1253
      %v1318 = vadd.f32 %v1029, %v1258
      %v1319 = vadd.f32 %v1030, %v1261
      %v1320 = vadd.f32 %v1031, %v1266
      %v1321 = vadd.f32 %v1032, %v1269
      %v1322 = vadd.f32 %v1033, %v1274
      %v1323 = vadd.f32 %v1034, %v1277
      %v1324 = vadd.f32 %v1035, %v1282
      %v1325 = vadd.f32 %v1036, %v1285
      %v1326 = vadd.f32 %v1037, %v1290
      %v1327 = vadd.f32 %v1038, %v1293
      %1328 = vst [vmem:[#allocation3] sm:$0xff] %v1296
      %1329 = vst [vmem:[#allocation3 + $0x8] sm:$0xff] %v1297
      %1330 = vst [vmem:[#allocation3 + $0x10] sm:$0xff] %v1298
      %1331 = vst [vmem:[#allocation3 + $0x18] sm:$0xff] %v1299
      %1332 = vst [vmem:[#allocation3 + $0x20] sm:$0xff] %v1300
      %1333 = vst [vmem:[#allocation3 + $0x28] sm:$0xff] %v1301
      %1334 = vst [vmem:[#allocation3 + $0x30] sm:$0xff] %v1302
      %1335 = vst [vmem:[#allocation3 + $0x38] sm:$0xff] %v1303
      %1336 = vst [vmem:[#allocation3 + $0x40] sm:$0xff] %v1304
      %1337 = vst [vmem:[#allocation3 + $0x48] sm:$0xff] %v1305
      %1338 = vst [vmem:[#allocation3 + $0x50] sm:$0xff] %v1306
      %1339 = vst [vmem:[#allocation3 + $0x58] sm:$0xff] %v1307
      %1340 = vst [vmem:[#allocation3 + $0x60] sm:$0xff] %v1308
      %1341 = vst [vmem:[#allocation3 + $0x68] sm:$0xff] %v1309
      %1342 = vst [vmem:[#allocation3 + $0x70] sm:$0xff] %v1310
      %1343 = vst [vmem:[#allocation3 + $0x78] sm:$0xff] %v1311
      %1344 = vst [vmem:[#allocation3 + $0x80] sm:$0xff] %v1312
      %1345 = vst [vmem:[#allocation3 + $0x88] sm:$0xff] %v1313
      %1346 = vst [vmem:[#allocation3 + $0x90] sm:$0xff] %v1314
      %1347 = vst [vmem:[#allocation3 + $0x98] sm:$0xff] %v1315
      %1348 = vst [vmem:[#allocation3 + $0xa0] sm:$0xff] %v1316
      %1349 = vst [vmem:[#allocation3 + $0xa8] sm:$0xff] %v1317
      %1350 = vst [vmem:[#allocation3 + $0xb0] sm:$0xff] %v1318
      %1351 = vst [vmem:[#allocation3 + $0xb8] sm:$0xff] %v1319
      %1352 = vst [vmem:[#allocation3 + $0xc0] sm:$0xff] %v1320
      %1353 = vst [vmem:[#allocation3 + $0xc8] sm:$0xff] %v1321
      %1354 = vst [vmem:[#allocation3 + $0xd0] sm:$0xff] %v1322
      %1355 = vst [vmem:[#allocation3 + $0xd8] sm:$0xff] %v1323
      %1356 = vst [vmem:[#allocation3 + $0xe0] sm:$0xff] %v1324
      %1357 = vst [vmem:[#allocation3 + $0xe8] sm:$0xff] %v1325
      %1358 = vst [vmem:[#allocation3 + $0xf0] sm:$0xff] %v1326
      %1359 = vst [vmem:[#allocation3 + $0xf8] sm:$0xff] %v1327
      // Predicated region
      $region37: #{pcm_forward.8} parent=31 // pred_check
        %p1360 = pneg %p298
      $region38: #{pcm_forward.8} parent=31 // pred_check_branch
        %1362 = sbr.rel (%p1360) target = $region40
      $region39: #{pcm_forward.8} parent=31 // pred_region
        %v1363 = vld [vmem:[#allocation2] sm:$0xff]
        %v1364 = vld [vmem:[#allocation2 + $0x8] sm:$0xff]
        %v1365 = vld [vmem:[#allocation2 + $0x10] sm:$0xff]
        %v1366 = vld [vmem:[#allocation2 + $0x18] sm:$0xff]
        %v1367 = vld [vmem:[#allocation2 + $0x20] sm:$0xff]
        %v1368 = vld [vmem:[#allocation2 + $0x28] sm:$0xff]
        %v1369 = vld [vmem:[#allocation2 + $0x30] sm:$0xff]
        %v1370 = vld [vmem:[#allocation2 + $0x38] sm:$0xff]
        %v1371 = vld [vmem:[#allocation2 + $0x40] sm:$0xff]
        %v1372 = vld [vmem:[#allocation2 + $0x48] sm:$0xff]
        %v1373 = vld [vmem:[#allocation2 + $0x50] sm:$0xff]
        %v1374 = vld [vmem:[#allocation2 + $0x58] sm:$0xff]
        %v1375 = vld [vmem:[#allocation2 + $0x60] sm:$0xff]
        %v1376 = vld [vmem:[#allocation2 + $0x68] sm:$0xff]
        %v1377 = vld [vmem:[#allocation2 + $0x70] sm:$0xff]
        %v1378 = vld [vmem:[#allocation2 + $0x78] sm:$0xff]
        %v1379 = vld [vmem:[#allocation2 + $0x80] sm:$0xff]
        %v1380 = vld [vmem:[#allocation2 + $0x88] sm:$0xff]
        %v1381 = vld [vmem:[#allocation2 + $0x90] sm:$0xff]
        %v1382 = vld [vmem:[#allocation2 + $0x98] sm:$0xff]
        %v1383 = vld [vmem:[#allocation2 + $0xa0] sm:$0xff]
        %v1384 = vld [vmem:[#allocation2 + $0xa8] sm:$0xff]
        %v1385 = vld [vmem:[#allocation2 + $0xb0] sm:$0xff]
        %v1386 = vld [vmem:[#allocation2 + $0xb8] sm:$0xff]
        %v1387 = vld [vmem:[#allocation2 + $0xc0] sm:$0xff]
        %v1388 = vld [vmem:[#allocation2 + $0xc8] sm:$0xff]
        %v1389 = vld [vmem:[#allocation2 + $0xd0] sm:$0xff]
        %v1390 = vld [vmem:[#allocation2 + $0xd8] sm:$0xff]
        %v1391 = vld [vmem:[#allocation2 + $0xe0] sm:$0xff]
        %v1392 = vld [vmem:[#allocation2 + $0xe8] sm:$0xff]
        %v1393 = vld [vmem:[#allocation2 + $0xf0] sm:$0xff]
        %v1394 = vld [vmem:[#allocation2 + $0xf8] sm:$0xff]
        %v1395 = vmul.f32 %v1363, 0.17677669
        %v1396 = vmul.f32 %v1364, 0.17677669
        %v1397 = vmul.f32 %v1365, 0.17677669
        %v1398 = vmul.f32 %v1366, 0.17677669
        %v1399 = vmul.f32 %v1367, 0.17677669
        %v1400 = vmul.f32 %v1368, 0.17677669
        %v1401 = vmul.f32 %v1369, 0.17677669
        %v1402 = vmul.f32 %v1370, 0.17677669
        %v1403 = vmul.f32 %v1371, 0.17677669
        %v1404 = vmul.f32 %v1372, 0.17677669
        %v1405 = vmul.f32 %v1373, 0.17677669
        %v1406 = vmul.f32 %v1374, 0.17677669
        %v1407 = vmul.f32 %v1375, 0.17677669
        %v1408 = vmul.f32 %v1376, 0.17677669
        %v1409 = vmul.f32 %v1377, 0.17677669
        %v1410 = vmul.f32 %v1378, 0.17677669
        %v1411 = vmul.f32 %v1379, 0.17677669
        %v1412 = vmul.f32 %v1380, 0.17677669
        %v1413 = vmul.f32 %v1381, 0.17677669
        %v1414 = vmul.f32 %v1382, 0.17677669
        %v1415 = vmul.f32 %v1383, 0.17677669
        %v1416 = vmul.f32 %v1384, 0.17677669
        %v1417 = vmul.f32 %v1385, 0.17677669
        %v1418 = vmul.f32 %v1386, 0.17677669
        %v1419 = vmul.f32 %v1387, 0.17677669
        %v1420 = vmul.f32 %v1388, 0.17677669
        %v1421 = vmul.f32 %v1389, 0.17677669
        %v1422 = vmul.f32 %v1390, 0.17677669
        %v1423 = vmul.f32 %v1391, 0.17677669
        %v1424 = vmul.f32 %v1392, 0.17677669
        %v1425 = vmul.f32 %v1393, 0.17677669
        %v1426 = vmul.f32 %v1394, 0.17677669
        %v1427 = vpack.c.bf16 %v1396, %v1395
        %v1428 = vpack.c.bf16 %v1398, %v1397
        %v1429 = vpack.c.bf16 %v1400, %v1399
        %v1430 = vpack.c.bf16 %v1402, %v1401
        %v1431 = vpack.c.bf16 %v1404, %v1403
        %v1432 = vpack.c.bf16 %v1406, %v1405
        %v1433 = vpack.c.bf16 %v1408, %v1407
        %v1434 = vpack.c.bf16 %v1410, %v1409
        %v1435 = vpack.c.bf16 %v1412, %v1411
        %v1436 = vpack.c.bf16 %v1414, %v1413
        %v1437 = vpack.c.bf16 %v1416, %v1415
        %v1438 = vpack.c.bf16 %v1418, %v1417
        %v1439 = vpack.c.bf16 %v1420, %v1419
        %v1440 = vpack.c.bf16 %v1422, %v1421
        %v1441 = vpack.c.bf16 %v1424, %v1423
        %v1442 = vpack.c.bf16 %v1426, %v1425
        %v1459 = vunpack.c.l.b16 %v1427
        %v1460 = vunpack.c.h.b16 %v1427
        %v1461 = vunpack.c.l.b16 %v1428
        %v1462 = vunpack.c.h.b16 %v1428
        %v1463 = vunpack.c.l.b16 %v1429
        %v1464 = vunpack.c.h.b16 %v1429
        %v1465 = vunpack.c.l.b16 %v1430
        %v1466 = vunpack.c.h.b16 %v1430
        %v1467 = vunpack.c.l.b16 %v1431
        %v1468 = vunpack.c.h.b16 %v1431
        %v1469 = vunpack.c.l.b16 %v1432
        %v1470 = vunpack.c.h.b16 %v1432
        %v1471 = vunpack.c.l.b16 %v1433
        %v1472 = vunpack.c.h.b16 %v1433
        %v1473 = vunpack.c.l.b16 %v1434
        %v1474 = vunpack.c.h.b16 %v1434
        %v1475 = vunpack.c.l.b16 %v1435
        %v1476 = vunpack.c.h.b16 %v1435
        %v1477 = vunpack.c.l.b16 %v1436
        %v1478 = vunpack.c.h.b16 %v1436
        %v1479 = vunpack.c.l.b16 %v1437
        %v1480 = vunpack.c.h.b16 %v1437
        %v1481 = vunpack.c.l.b16 %v1438
        %v1482 = vunpack.c.h.b16 %v1438
        %v1483 = vunpack.c.l.b16 %v1439
        %v1484 = vunpack.c.h.b16 %v1439
        %v1485 = vunpack.c.l.b16 %v1440
        %v1486 = vunpack.c.h.b16 %v1440
        %v1487 = vunpack.c.l.b16 %v1441
        %v1488 = vunpack.c.h.b16 %v1441
        %v1489 = vunpack.c.l.b16 %v1442
        %v1490 = vunpack.c.h.b16 %v1442
        %v1491 = vpack.c.b16 %v1459, %v1459
        %v1492 = vpack.c.b16 %v1460, %v1460
        %v1493 = vpack.c.b16 %v1461, %v1461
        %v1494 = vpack.c.b16 %v1462, %v1462
        %v1495 = vpack.c.b16 %v1463, %v1463
        %v1496 = vpack.c.b16 %v1464, %v1464
        %v1497 = vpack.c.b16 %v1465, %v1465
        %v1498 = vpack.c.b16 %v1466, %v1466
        %v1499 = vpack.c.b16 %v1467, %v1467
        %v1500 = vpack.c.b16 %v1468, %v1468
        %v1501 = vpack.c.b16 %v1469, %v1469
        %v1502 = vpack.c.b16 %v1470, %v1470
        %v1503 = vpack.c.b16 %v1471, %v1471
        %v1504 = vpack.c.b16 %v1472, %v1472
        %v1505 = vpack.c.b16 %v1473, %v1473
        %v1506 = vpack.c.b16 %v1474, %v1474
        %v1507 = vpack.c.b16 %v1475, %v1475
        %v1508 = vpack.c.b16 %v1476, %v1476
        %v1509 = vpack.c.b16 %v1477, %v1477
        %v1510 = vpack.c.b16 %v1478, %v1478
        %v1511 = vpack.c.b16 %v1479, %v1479
        %v1512 = vpack.c.b16 %v1480, %v1480
        %v1513 = vpack.c.b16 %v1481, %v1481
        %v1514 = vpack.c.b16 %v1482, %v1482
        %v1515 = vpack.c.b16 %v1483, %v1483
        %v1516 = vpack.c.b16 %v1484, %v1484
        %v1517 = vpack.c.b16 %v1485, %v1485
        %v1518 = vpack.c.b16 %v1486, %v1486
        %v1519 = vpack.c.b16 %v1487, %v1487
        %v1520 = vpack.c.b16 %v1488, %v1488
        %v1521 = vpack.c.b16 %v1489, %v1489
        %v1522 = vpack.c.b16 %v1490, %v1490
        %1555 = vst [vmem:[%s291] sm:$0xf] %v1491
        %1556 = vst [vmem:[%s291 + $0x4] sm:$0xf] %v1492
        %1557 = vst [vmem:[%s291 + $0x8] sm:$0xf] %v1493
        %1558 = vst [vmem:[%s291 + $0xc] sm:$0xf] %v1494
        %1559 = vst [vmem:[%s291 + $0x10] sm:$0xf] %v1495
        %1560 = vst [vmem:[%s291 + $0x14] sm:$0xf] %v1496
        %1561 = vst [vmem:[%s291 + $0x18] sm:$0xf] %v1497
        %1562 = vst [vmem:[%s291 + $0x1c] sm:$0xf] %v1498
        %1563 = vst [vmem:[%s291 + $0x20] sm:$0xf] %v1499
        %1564 = vst [vmem:[%s291 + $0x24] sm:$0xf] %v1500
        %1565 = vst [vmem:[%s291 + $0x28] sm:$0xf] %v1501
        %1566 = vst [vmem:[%s291 + $0x2c] sm:$0xf] %v1502
        %1567 = vst [vmem:[%s291 + $0x30] sm:$0xf] %v1503
        %1568 = vst [vmem:[%s291 + $0x34] sm:$0xf] %v1504
        %1569 = vst [vmem:[%s291 + $0x38] sm:$0xf] %v1505
        %1570 = vst [vmem:[%s291 + $0x3c] sm:$0xf] %v1506
        %1571 = vst [vmem:[%s291 + $0x40] sm:$0xf] %v1507
        %1572 = vst [vmem:[%s291 + $0x44] sm:$0xf] %v1508
        %1573 = vst [vmem:[%s291 + $0x48] sm:$0xf] %v1509
        %1574 = vst [vmem:[%s291 + $0x4c] sm:$0xf] %v1510
        %1575 = vst [vmem:[%s291 + $0x50] sm:$0xf] %v1511
        %1576 = vst [vmem:[%s291 + $0x54] sm:$0xf] %v1512
        %1577 = vst [vmem:[%s291 + $0x58] sm:$0xf] %v1513
        %1578 = vst [vmem:[%s291 + $0x5c] sm:$0xf] %v1514
        %1579 = vst [vmem:[%s291 + $0x60] sm:$0xf] %v1515
        %1580 = vst [vmem:[%s291 + $0x64] sm:$0xf] %v1516
        %1581 = vst [vmem:[%s291 + $0x68] sm:$0xf] %v1517
        %1582 = vst [vmem:[%s291 + $0x6c] sm:$0xf] %v1518
        %1583 = vst [vmem:[%s291 + $0x70] sm:$0xf] %v1519
        %1584 = vst [vmem:[%s291 + $0x74] sm:$0xf] %v1520
        %1585 = vst [vmem:[%s291 + $0x78] sm:$0xf] %v1521
        %1586 = vst [vmem:[%s291 + $0x7c] sm:$0xf] %v1522
        %v1587 = vld [vmem:[#allocation3] sm:$0xff]
        %v1588 = vld [vmem:[#allocation3 + $0x8] sm:$0xff]
        %v1589 = vld [vmem:[#allocation3 + $0x10] sm:$0xff]
        %v1590 = vld [vmem:[#allocation3 + $0x18] sm:$0xff]
        %v1591 = vld [vmem:[#allocation3 + $0x20] sm:$0xff]
        %v1592 = vld [vmem:[#allocation3 + $0x28] sm:$0xff]
        %v1593 = vld [vmem:[#allocation3 + $0x30] sm:$0xff]
        %v1594 = vld [vmem:[#allocation3 + $0x38] sm:$0xff]
        %v1595 = vld [vmem:[#allocation3 + $0x40] sm:$0xff]
        %v1596 = vld [vmem:[#allocation3 + $0x48] sm:$0xff]
        %v1597 = vld [vmem:[#allocation3 + $0x50] sm:$0xff]
        %v1598 = vld [vmem:[#allocation3 + $0x58] sm:$0xff]
        %v1599 = vld [vmem:[#allocation3 + $0x60] sm:$0xff]
        %v1600 = vld [vmem:[#allocation3 + $0x68] sm:$0xff]
        %v1601 = vld [vmem:[#allocation3 + $0x70] sm:$0xff]
        %v1602 = vld [vmem:[#allocation3 + $0x78] sm:$0xff]
        %v1603 = vld [vmem:[#allocation3 + $0x80] sm:$0xff]
        %v1604 = vld [vmem:[#allocation3 + $0x88] sm:$0xff]
        %v1605 = vld [vmem:[#allocation3 + $0x90] sm:$0xff]
        %v1606 = vld [vmem:[#allocation3 + $0x98] sm:$0xff]
        %v1607 = vld [vmem:[#allocation3 + $0xa0] sm:$0xff]
        %v1608 = vld [vmem:[#allocation3 + $0xa8] sm:$0xff]
        %v1609 = vld [vmem:[#allocation3 + $0xb0] sm:$0xff]
        %v1610 = vld [vmem:[#allocation3 + $0xb8] sm:$0xff]
        %v1611 = vld [vmem:[#allocation3 + $0xc0] sm:$0xff]
        %v1612 = vld [vmem:[#allocation3 + $0xc8] sm:$0xff]
        %v1613 = vld [vmem:[#allocation3 + $0xd0] sm:$0xff]
        %v1614 = vld [vmem:[#allocation3 + $0xd8] sm:$0xff]
        %v1615 = vld [vmem:[#allocation3 + $0xe0] sm:$0xff]
        %v1616 = vld [vmem:[#allocation3 + $0xe8] sm:$0xff]
        %v1617 = vld [vmem:[#allocation3 + $0xf0] sm:$0xff]
        %v1618 = vld [vmem:[#allocation3 + $0xf8] sm:$0xff]
        %v1619 = vpack.c.bf16 %v1588, %v1587
        %v1620 = vpack.c.bf16 %v1590, %v1589
        %v1621 = vpack.c.bf16 %v1592, %v1591
        %v1622 = vpack.c.bf16 %v1594, %v1593
        %v1623 = vpack.c.bf16 %v1596, %v1595
        %v1624 = vpack.c.bf16 %v1598, %v1597
        %v1625 = vpack.c.bf16 %v1600, %v1599
        %v1626 = vpack.c.bf16 %v1602, %v1601
        %v1627 = vpack.c.bf16 %v1604, %v1603
        %v1628 = vpack.c.bf16 %v1606, %v1605
        %v1629 = vpack.c.bf16 %v1608, %v1607
        %v1630 = vpack.c.bf16 %v1610, %v1609
        %v1631 = vpack.c.bf16 %v1612, %v1611
        %v1632 = vpack.c.bf16 %v1614, %v1613
        %v1633 = vpack.c.bf16 %v1616, %v1615
        %v1634 = vpack.c.bf16 %v1618, %v1617
        %v1651 = vunpack.c.l.b16 %v1619
        %v1652 = vunpack.c.h.b16 %v1619
        %v1653 = vunpack.c.l.b16 %v1620
        %v1654 = vunpack.c.h.b16 %v1620
        %v1655 = vunpack.c.l.b16 %v1621
        %v1656 = vunpack.c.h.b16 %v1621
        %v1657 = vunpack.c.l.b16 %v1622
        %v1658 = vunpack.c.h.b16 %v1622
        %v1659 = vunpack.c.l.b16 %v1623
        %v1660 = vunpack.c.h.b16 %v1623
        %v1661 = vunpack.c.l.b16 %v1624
        %v1662 = vunpack.c.h.b16 %v1624
        %v1663 = vunpack.c.l.b16 %v1625
        %v1664 = vunpack.c.h.b16 %v1625
        %v1665 = vunpack.c.l.b16 %v1626
        %v1666 = vunpack.c.h.b16 %v1626
        %v1667 = vunpack.c.l.b16 %v1627
        %v1668 = vunpack.c.h.b16 %v1627
        %v1669 = vunpack.c.l.b16 %v1628
        %v1670 = vunpack.c.h.b16 %v1628
        %v1671 = vunpack.c.l.b16 %v1629
        %v1672 = vunpack.c.h.b16 %v1629
        %v1673 = vunpack.c.l.b16 %v1630
        %v1674 = vunpack.c.h.b16 %v1630
        %v1675 = vunpack.c.l.b16 %v1631
        %v1676 = vunpack.c.h.b16 %v1631
        %v1677 = vunpack.c.l.b16 %v1632
        %v1678 = vunpack.c.h.b16 %v1632
        %v1679 = vunpack.c.l.b16 %v1633
        %v1680 = vunpack.c.h.b16 %v1633
        %v1681 = vunpack.c.l.b16 %v1634
        %v1682 = vunpack.c.h.b16 %v1634
        %v1683 = vpack.c.b16 %v1651, %v1651
        %v1684 = vpack.c.b16 %v1652, %v1652
        %v1685 = vpack.c.b16 %v1653, %v1653
        %v1686 = vpack.c.b16 %v1654, %v1654
        %v1687 = vpack.c.b16 %v1655, %v1655
        %v1688 = vpack.c.b16 %v1656, %v1656
        %v1689 = vpack.c.b16 %v1657, %v1657
        %v1690 = vpack.c.b16 %v1658, %v1658
        %v1691 = vpack.c.b16 %v1659, %v1659
        %v1692 = vpack.c.b16 %v1660, %v1660
        %v1693 = vpack.c.b16 %v1661, %v1661
        %v1694 = vpack.c.b16 %v1662, %v1662
        %v1695 = vpack.c.b16 %v1663, %v1663
        %v1696 = vpack.c.b16 %v1664, %v1664
        %v1697 = vpack.c.b16 %v1665, %v1665
        %v1698 = vpack.c.b16 %v1666, %v1666
        %v1699 = vpack.c.b16 %v1667, %v1667
        %v1700 = vpack.c.b16 %v1668, %v1668
        %v1701 = vpack.c.b16 %v1669, %v1669
        %v1702 = vpack.c.b16 %v1670, %v1670
        %v1703 = vpack.c.b16 %v1671, %v1671
        %v1704 = vpack.c.b16 %v1672, %v1672
        %v1705 = vpack.c.b16 %v1673, %v1673
        %v1706 = vpack.c.b16 %v1674, %v1674
        %v1707 = vpack.c.b16 %v1675, %v1675
        %v1708 = vpack.c.b16 %v1676, %v1676
        %v1709 = vpack.c.b16 %v1677, %v1677
        %v1710 = vpack.c.b16 %v1678, %v1678
        %v1711 = vpack.c.b16 %v1679, %v1679
        %v1712 = vpack.c.b16 %v1680, %v1680
        %v1713 = vpack.c.b16 %v1681, %v1681
        %v1714 = vpack.c.b16 %v1682, %v1682
        %1747 = vst [vmem:[%s296] sm:$0xf] %v1683
        %1748 = vst [vmem:[%s296 + $0x4] sm:$0xf] %v1684
        %1749 = vst [vmem:[%s296 + $0x8] sm:$0xf] %v1685
        %1750 = vst [vmem:[%s296 + $0xc] sm:$0xf] %v1686
        %1751 = vst [vmem:[%s296 + $0x10] sm:$0xf] %v1687
        %1752 = vst [vmem:[%s296 + $0x14] sm:$0xf] %v1688
        %1753 = vst [vmem:[%s296 + $0x18] sm:$0xf] %v1689
        %1754 = vst [vmem:[%s296 + $0x1c] sm:$0xf] %v1690
        %1755 = vst [vmem:[%s296 + $0x20] sm:$0xf] %v1691
        %1756 = vst [vmem:[%s296 + $0x24] sm:$0xf] %v1692
        %1757 = vst [vmem:[%s296 + $0x28] sm:$0xf] %v1693
        %1758 = vst [vmem:[%s296 + $0x2c] sm:$0xf] %v1694
        %1759 = vst [vmem:[%s296 + $0x30] sm:$0xf] %v1695
        %1760 = vst [vmem:[%s296 + $0x34] sm:$0xf] %v1696
        %1761 = vst [vmem:[%s296 + $0x38] sm:$0xf] %v1697
        %1762 = vst [vmem:[%s296 + $0x3c] sm:$0xf] %v1698
        %1763 = vst [vmem:[%s296 + $0x40] sm:$0xf] %v1699
        %1764 = vst [vmem:[%s296 + $0x44] sm:$0xf] %v1700
        %1765 = vst [vmem:[%s296 + $0x48] sm:$0xf] %v1701
        %1766 = vst [vmem:[%s296 + $0x4c] sm:$0xf] %v1702
        %1767 = vst [vmem:[%s296 + $0x50] sm:$0xf] %v1703
        %1768 = vst [vmem:[%s296 + $0x54] sm:$0xf] %v1704
        %1769 = vst [vmem:[%s296 + $0x58] sm:$0xf] %v1705
        %1770 = vst [vmem:[%s296 + $0x5c] sm:$0xf] %v1706
        %1771 = vst [vmem:[%s296 + $0x60] sm:$0xf] %v1707
        %1772 = vst [vmem:[%s296 + $0x64] sm:$0xf] %v1708
        %1773 = vst [vmem:[%s296 + $0x68] sm:$0xf] %v1709
        %1774 = vst [vmem:[%s296 + $0x6c] sm:$0xf] %v1710
        %1775 = vst [vmem:[%s296 + $0x70] sm:$0xf] %v1711
        %1776 = vst [vmem:[%s296 + $0x74] sm:$0xf] %v1712
        %1777 = vst [vmem:[%s296 + $0x78] sm:$0xf] %v1713
        %1778 = vst [vmem:[%s296 + $0x7c] sm:$0xf] %v1714
      $region40: #{pcm_forward.8} parent=31 // pred_fallthru
        _
      %p1779 = scmp.lt.s32.totalorder %s20, 1
      %s1780 = scalar_select %p1779, %s20, 1
      %s1781 = smul.addr %s1780, 32
      %s1782 = smul.addr %s1781, 4
      %s1783 = scalar_lea.vmem %s3, %s1782
      %p1784 = scmp.lt.s32.totalorder %s20, 1
      %s1785 = scalar_select %p1784, %s20, 1
      %s1786 = smul.addr %s1785, 32
      %s1787 = smul.addr %s1786, 4
      %s1788 = scalar_lea.vmem %s4, %s1787
      // Predicated region
      $region41: #{pcm_forward.8} parent=31 // pred_check
        %p1789 = pneg %p128
      $region42: #{pcm_forward.8} parent=31 // pred_check_branch
        %1791 = sbr.rel (%p1789) target = $region44
      $region43: #{pcm_forward.8} parent=31 // pred_region
        _
      $region44: #{pcm_forward.8} parent=31 // pred_fallthru
        _
      // Predicated region
      $region45: #{pcm_forward.8} parent=31 // pred_check
        %p1792 = pneg %p154
      $region46: #{pcm_forward.8} parent=31 // pred_check_branch
        %1794 = sbr.rel (%p1792) target = $region48
      $region47: #{pcm_forward.8} parent=31 // pred_region
        _
      $region48: #{pcm_forward.8} parent=31 // pred_fallthru
        _
    $region32: #{pcm_forward.8} parent=5 // pred_fallthru
      _
    %p1795 = scmp.le.s32.totalorder 2, %s11
    // Predicated region
    $region49: #{pcm_forward.8} parent=5 // pred_check
      %p1796 = pneg %p1795
    $region50: #{pcm_forward.8} parent=5 // pred_check_branch
      %1798 = sbr.rel (%p1796) target = $region52
    $region51: #{pcm_forward.8} parent=5 // pred_region
      %s1799 = ssub.s32 %s11, 2
      // Predicated region
      $region53: #{pcm_forward.8} parent=51 // pred_check
        %p1800 = pneg %p134
      $region54: #{pcm_forward.8} parent=51 // pred_check_branch
        %1802 = sbr.rel (%p1800) target = $region56
      $region55: #{pcm_forward.8} parent=51 // pred_region
        %p1803 = scmp.lt.s32.totalorder %s22, 1
        %s1804 = scalar_select %p1803, %s22, 1
        %s1805 = smul.addr %s1804, 32
        %s1806 = smul.addr %s1805, 4
        %s1807 = scalar_lea.vmem %s3, %s1806
      $region56: #{pcm_forward.8} parent=51 // pred_fallthru
        _
      // Predicated region
      $region57: #{pcm_forward.8} parent=51 // pred_check
        %p1808 = pneg %p160
      $region58: #{pcm_forward.8} parent=51 // pred_check_branch
        %1810 = sbr.rel (%p1808) target = $region60
      $region59: #{pcm_forward.8} parent=51 // pred_region
        %p1811 = scmp.lt.s32.totalorder %s22, 1
        %s1812 = scalar_select %p1811, %s22, 1
        %s1813 = smul.addr %s1812, 32
        %s1814 = smul.addr %s1813, 4
        %s1815 = scalar_lea.vmem %s4, %s1814
      $region60: #{pcm_forward.8} parent=51 // pred_fallthru
        _
    $region52: #{pcm_forward.8} parent=5 // pred_fallthru
      _
  $region6: #{pcm_forward.8} parent=0 // loop_footer
    %s15 = sadd.s32 1, %s11
  $region7: #{pcm_forward.8} parent=0 // loop_footer_branch
    %10 = sbr.rel target = $region3
  $region8: #{pcm_forward.8} parent=0 // loop_exit
    _

// kernel: pcm_forward.7
$region0: #{pcm_forward.7}
  #allocation0 [shape = 'u32[]', space=smem, size = 0x4, offset = 0x4, fixed_abs, tag = 'smem constant byte address 0x4 - core index']
  #allocation1 [shape = 'u32[144,128]{1,0:T(1,128)}', space=vmem, size = 0x12000, scoped, tag = 'internal scratch']
  %s0 = inlined_call_operand.vmem [shape: bf16[512,3], index: 0, kind: input, shape index: {}]
  %s1 = inlined_call_operand.vmem [shape: bf16[512,128], index: 1, kind: input, shape index: {}]
  %s2 = inlined_call_operand.vmem [shape: bf16[512,128], index: 2, kind: input, shape index: {}]
  %s3 = inlined_call_operand.vmem [shape: bf16[3,128], index: 3, kind: input, shape index: {}]
  %s4 = inlined_call_operand.vmem [shape: bf16[128,128], index: 4, kind: input, shape index: {}]
  %s5 = inlined_call_operand.vmem [shape: f32[1,128], index: 5, kind: input, shape index: {}]
  %s6 = inlined_call_operand.vmem [shape: bf16[512,128], index: 6, kind: output, shape index: {}]
  %s7 = sld [smem:[#allocation0]]
  $region34: #{pcm_forward.7} parent=0
    _
  %s9 = ssub.s32 1, %s7
  %s10 = scalar_select 0, %s9, %s7
  // Predicated region
  $region2: #{pcm_forward.7} parent=0 // pred_check
    _
  $region3: #{pcm_forward.7} parent=0 // pred_check_branch
    %12 = sbr.rel (0) target = $region5
  $region4: #{pcm_forward.7} parent=0 // pred_region
    _
  $region5: #{pcm_forward.7} parent=0 // pred_fallthru
    _
  // Predicated region
  $region6: #{pcm_forward.7} parent=0 // pred_check
    _
  $region7: #{pcm_forward.7} parent=0 // pred_check_branch
    %14 = sbr.rel (0) target = $region9
  $region8: #{pcm_forward.7} parent=0 // pred_region
    _
  $region9: #{pcm_forward.7} parent=0 // pred_fallthru
    _
  // Predicated region
  $region10: #{pcm_forward.7} parent=0 // pred_check
    _
  $region11: #{pcm_forward.7} parent=0 // pred_check_branch
    %16 = sbr.rel (0) target = $region13
  $region12: #{pcm_forward.7} parent=0 // pred_region
    _
  $region13: #{pcm_forward.7} parent=0 // pred_fallthru
    _
  // Predicated region
  $region14: #{pcm_forward.7} parent=0 // pred_check
    _
  $region15: #{pcm_forward.7} parent=0 // pred_check_branch
    %18 = sbr.rel (0) target = $region17
  $region16: #{pcm_forward.7} parent=0 // pred_region
    _
  $region17: #{pcm_forward.7} parent=0 // pred_fallthru
    _
  // Predicated region
  $region18: #{pcm_forward.7} parent=0 // pred_check
    _
  $region19: #{pcm_forward.7} parent=0 // pred_check_branch
    %20 = sbr.rel (0) target = $region21
  $region20: #{pcm_forward.7} parent=0 // pred_region
    _
  $region21: #{pcm_forward.7} parent=0 // pred_fallthru
    _
  // Predicated region
  $region22: #{pcm_forward.7} parent=0 // pred_check
    _
  $region23: #{pcm_forward.7} parent=0 // pred_check_branch
    %22 = sbr.rel (0) target = $region25
  $region24: #{pcm_forward.7} parent=0 // pred_region
    _
  $region25: #{pcm_forward.7} parent=0 // pred_fallthru
    _
  %v24 = vld [vmem:[%s0] sm:$0xf]
  %v25 = vld [vmem:[%s0 + $0x4] sm:$0xf]
  %v26 = vld [vmem:[%s0 + $0x8] sm:$0xf]
  %v27 = vld [vmem:[%s0 + $0xc] sm:$0xf]
  %v28 = vld [vmem:[%s0 + $0x10] sm:$0xf]
  %v29 = vld [vmem:[%s0 + $0x14] sm:$0xf]
  %v30 = vld [vmem:[%s0 + $0x18] sm:$0xf]
  %v31 = vld [vmem:[%s0 + $0x1c] sm:$0xf]
  %v32 = vld [vmem:[%s0 + $0x20] sm:$0xf]
  %v33 = vld [vmem:[%s0 + $0x24] sm:$0xf]
  %v34 = vld [vmem:[%s0 + $0x28] sm:$0xf]
  %v35 = vld [vmem:[%s0 + $0x2c] sm:$0xf]
  %v36 = vld [vmem:[%s0 + $0x30] sm:$0xf]
  %v37 = vld [vmem:[%s0 + $0x34] sm:$0xf]
  %v38 = vld [vmem:[%s0 + $0x38] sm:$0xf]
  %v39 = vld [vmem:[%s0 + $0x3c] sm:$0xf]
  %v40 = vld [vmem:[%s0 + $0x40] sm:$0xf]
  %v41 = vld [vmem:[%s0 + $0x44] sm:$0xf]
  %v42 = vld [vmem:[%s0 + $0x48] sm:$0xf]
  %v43 = vld [vmem:[%s0 + $0x4c] sm:$0xf]
  %v44 = vld [vmem:[%s0 + $0x50] sm:$0xf]
  %v45 = vld [vmem:[%s0 + $0x54] sm:$0xf]
  %v46 = vld [vmem:[%s0 + $0x58] sm:$0xf]
  %v47 = vld [vmem:[%s0 + $0x5c] sm:$0xf]
  %v48 = vld [vmem:[%s0 + $0x60] sm:$0xf]
  %v49 = vld [vmem:[%s0 + $0x64] sm:$0xf]
  %v50 = vld [vmem:[%s0 + $0x68] sm:$0xf]
  %v51 = vld [vmem:[%s0 + $0x6c] sm:$0xf]
  %v52 = vld [vmem:[%s0 + $0x70] sm:$0xf]
  %v53 = vld [vmem:[%s0 + $0x74] sm:$0xf]
  %v54 = vld [vmem:[%s0 + $0x78] sm:$0xf]
  %v55 = vld [vmem:[%s0 + $0x7c] sm:$0xf]
  %v56 = vld [vmem:[%s0 + $0x80] sm:$0xf]
  %v57 = vld [vmem:[%s0 + $0x84] sm:$0xf]
  %v58 = vld [vmem:[%s0 + $0x88] sm:$0xf]
  %v59 = vld [vmem:[%s0 + $0x8c] sm:$0xf]
  %v60 = vld [vmem:[%s0 + $0x90] sm:$0xf]
  %v61 = vld [vmem:[%s0 + $0x94] sm:$0xf]
  %v62 = vld [vmem:[%s0 + $0x98] sm:$0xf]
  %v63 = vld [vmem:[%s0 + $0x9c] sm:$0xf]
  %v64 = vld [vmem:[%s0 + $0xa0] sm:$0xf]
  %v65 = vld [vmem:[%s0 + $0xa4] sm:$0xf]
  %v66 = vld [vmem:[%s0 + $0xa8] sm:$0xf]
  %v67 = vld [vmem:[%s0 + $0xac] sm:$0xf]
  %v68 = vld [vmem:[%s0 + $0xb0] sm:$0xf]
  %v69 = vld [vmem:[%s0 + $0xb4] sm:$0xf]
  %v70 = vld [vmem:[%s0 + $0xb8] sm:$0xf]
  %v71 = vld [vmem:[%s0 + $0xbc] sm:$0xf]
  %v72 = vld [vmem:[%s0 + $0xc0] sm:$0xf]
  %v73 = vld [vmem:[%s0 + $0xc4] sm:$0xf]
  %v74 = vld [vmem:[%s0 + $0xc8] sm:$0xf]
  %v75 = vld [vmem:[%s0 + $0xcc] sm:$0xf]
  %v76 = vld [vmem:[%s0 + $0xd0] sm:$0xf]
  %v77 = vld [vmem:[%s0 + $0xd4] sm:$0xf]
  %v78 = vld [vmem:[%s0 + $0xd8] sm:$0xf]
  %v79 = vld [vmem:[%s0 + $0xdc] sm:$0xf]
  %v80 = vld [vmem:[%s0 + $0xe0] sm:$0xf]
  %v81 = vld [vmem:[%s0 + $0xe4] sm:$0xf]
  %v82 = vld [vmem:[%s0 + $0xe8] sm:$0xf]
  %v83 = vld [vmem:[%s0 + $0xec] sm:$0xf]
  %v84 = vld [vmem:[%s0 + $0xf0] sm:$0xf]
  %v85 = vld [vmem:[%s0 + $0xf4] sm:$0xf]
  %v86 = vld [vmem:[%s0 + $0xf8] sm:$0xf]
  %v87 = vld [vmem:[%s0 + $0xfc] sm:$0xf]
  %v88 = vld [vmem:[%s3] sm:$0x3]
  %v89 = vld [vmem:[%s1] sm:$0xf]
  %v90 = vld [vmem:[%s1 + $0x4] sm:$0xf]
  %v91 = vld [vmem:[%s1 + $0x8] sm:$0xf]
  %v92 = vld [vmem:[%s1 + $0xc] sm:$0xf]
  %v93 = vld [vmem:[%s1 + $0x10] sm:$0xf]
  %v94 = vld [vmem:[%s1 + $0x14] sm:$0xf]
  %v95 = vld [vmem:[%s1 + $0x18] sm:$0xf]
  %v96 = vld [vmem:[%s1 + $0x1c] sm:$0xf]
  %v97 = vld [vmem:[%s1 + $0x20] sm:$0xf]
  %v98 = vld [vmem:[%s1 + $0x24] sm:$0xf]
  %v99 = vld [vmem:[%s1 + $0x28] sm:$0xf]
  %v100 = vld [vmem:[%s1 + $0x2c] sm:$0xf]
  %v101 = vld [vmem:[%s1 + $0x30] sm:$0xf]
  %v102 = vld [vmem:[%s1 + $0x34] sm:$0xf]
  %v103 = vld [vmem:[%s1 + $0x38] sm:$0xf]
  %v104 = vld [vmem:[%s1 + $0x3c] sm:$0xf]
  %v105 = vld [vmem:[%s1 + $0x40] sm:$0xf]
  %v106 = vld [vmem:[%s1 + $0x44] sm:$0xf]
  %v107 = vld [vmem:[%s1 + $0x48] sm:$0xf]
  %v108 = vld [vmem:[%s1 + $0x4c] sm:$0xf]
  %v109 = vld [vmem:[%s1 + $0x50] sm:$0xf]
  %v110 = vld [vmem:[%s1 + $0x54] sm:$0xf]
  %v111 = vld [vmem:[%s1 + $0x58] sm:$0xf]
  %v112 = vld [vmem:[%s1 + $0x5c] sm:$0xf]
  %v113 = vld [vmem:[%s1 + $0x60] sm:$0xf]
  %v114 = vld [vmem:[%s1 + $0x64] sm:$0xf]
  %v115 = vld [vmem:[%s1 + $0x68] sm:$0xf]
  %v116 = vld [vmem:[%s1 + $0x6c] sm:$0xf]
  %v117 = vld [vmem:[%s1 + $0x70] sm:$0xf]
  %v118 = vld [vmem:[%s1 + $0x74] sm:$0xf]
  %v119 = vld [vmem:[%s1 + $0x78] sm:$0xf]
  %v120 = vld [vmem:[%s1 + $0x7c] sm:$0xf]
  %v121 = vld [vmem:[%s1 + $0x80] sm:$0xf]
  %v122 = vld [vmem:[%s1 + $0x84] sm:$0xf]
  %v123 = vld [vmem:[%s1 + $0x88] sm:$0xf]
  %v124 = vld [vmem:[%s1 + $0x8c] sm:$0xf]
  %v125 = vld [vmem:[%s1 + $0x90] sm:$0xf]
  %v126 = vld [vmem:[%s1 + $0x94] sm:$0xf]
  %v127 = vld [vmem:[%s1 + $0x98] sm:$0xf]
  %v128 = vld [vmem:[%s1 + $0x9c] sm:$0xf]
  %v129 = vld [vmem:[%s1 + $0xa0] sm:$0xf]
  %v130 = vld [vmem:[%s1 + $0xa4] sm:$0xf]
  %v131 = vld [vmem:[%s1 + $0xa8] sm:$0xf]
  %v132 = vld [vmem:[%s1 + $0xac] sm:$0xf]
  %v133 = vld [vmem:[%s1 + $0xb0] sm:$0xf]
  %v134 = vld [vmem:[%s1 + $0xb4] sm:$0xf]
  %v135 = vld [vmem:[%s1 + $0xb8] sm:$0xf]
  %v136 = vld [vmem:[%s1 + $0xbc] sm:$0xf]
  %v137 = vld [vmem:[%s1 + $0xc0] sm:$0xf]
  %v138 = vld [vmem:[%s1 + $0xc4] sm:$0xf]
  %v139 = vld [vmem:[%s1 + $0xc8] sm:$0xf]
  %v140 = vld [vmem:[%s1 + $0xcc] sm:$0xf]
  %v141 = vld [vmem:[%s1 + $0xd0] sm:$0xf]
  %v142 = vld [vmem:[%s1 + $0xd4] sm:$0xf]
  %v143 = vld [vmem:[%s1 + $0xd8] sm:$0xf]
  %v144 = vld [vmem:[%s1 + $0xdc] sm:$0xf]
  %v145 = vld [vmem:[%s1 + $0xe0] sm:$0xf]
  %v146 = vld [vmem:[%s1 + $0xe4] sm:$0xf]
  %v147 = vld [vmem:[%s1 + $0xe8] sm:$0xf]
  %v148 = vld [vmem:[%s1 + $0xec] sm:$0xf]
  %v149 = vld [vmem:[%s1 + $0xf0] sm:$0xf]
  %v150 = vld [vmem:[%s1 + $0xf4] sm:$0xf]
  %v151 = vld [vmem:[%s1 + $0xf8] sm:$0xf]
  %v152 = vld [vmem:[%s1 + $0xfc] sm:$0xf]
  %v153 = vld [vmem:[%s4] sm:$0xf]
  %v154 = vld [vmem:[%s4 + $0x4] sm:$0xf]
  %v155 = vld [vmem:[%s4 + $0x8] sm:$0xf]
  %v156 = vld [vmem:[%s4 + $0xc] sm:$0xf]
  %v157 = vld [vmem:[%s4 + $0x10] sm:$0xf]
  %v158 = vld [vmem:[%s4 + $0x14] sm:$0xf]
  %v159 = vld [vmem:[%s4 + $0x18] sm:$0xf]
  %v160 = vld [vmem:[%s4 + $0x1c] sm:$0xf]
  %v161 = vld [vmem:[%s4 + $0x20] sm:$0xf]
  %v162 = vld [vmem:[%s4 + $0x24] sm:$0xf]
  %v163 = vld [vmem:[%s4 + $0x28] sm:$0xf]
  %v164 = vld [vmem:[%s4 + $0x2c] sm:$0xf]
  %v165 = vld [vmem:[%s4 + $0x30] sm:$0xf]
  %v166 = vld [vmem:[%s4 + $0x34] sm:$0xf]
  %v167 = vld [vmem:[%s4 + $0x38] sm:$0xf]
  %v168 = vld [vmem:[%s4 + $0x3c] sm:$0xf]
  %v233 = vunpack.c.l.b16 %v89
  %v234 = vunpack.c.l.b16 %v90
  %v235 = vunpack.c.l.b16 %v91
  %v236 = vunpack.c.l.b16 %v92
  %v237 = vunpack.c.l.b16 %v93
  %v238 = vunpack.c.l.b16 %v94
  %v239 = vunpack.c.l.b16 %v95
  %v240 = vunpack.c.l.b16 %v96
  %v241 = vunpack.c.l.b16 %v97
  %v242 = vunpack.c.l.b16 %v98
  %v243 = vunpack.c.l.b16 %v99
  %v244 = vunpack.c.l.b16 %v100
  %v245 = vunpack.c.l.b16 %v101
  %v246 = vunpack.c.l.b16 %v102
  %v247 = vunpack.c.l.b16 %v103
  %v248 = vunpack.c.l.b16 %v104
  %v249 = vunpack.c.l.b16 %v105
  %v250 = vunpack.c.l.b16 %v106
  %v251 = vunpack.c.l.b16 %v107
  %v252 = vunpack.c.l.b16 %v108
  %v253 = vunpack.c.l.b16 %v109
  %v254 = vunpack.c.l.b16 %v110
  %v255 = vunpack.c.l.b16 %v111
  %v256 = vunpack.c.l.b16 %v112
  %v257 = vunpack.c.l.b16 %v113
  %v258 = vunpack.c.l.b16 %v114
  %v259 = vunpack.c.l.b16 %v115
  %v260 = vunpack.c.l.b16 %v116
  %v261 = vunpack.c.l.b16 %v117
  %v262 = vunpack.c.l.b16 %v118
  %v263 = vunpack.c.l.b16 %v119
  %v264 = vunpack.c.l.b16 %v120
  %v265 = vunpack.c.l.b16 %v121
  %v266 = vunpack.c.l.b16 %v122
  %v267 = vunpack.c.l.b16 %v123
  %v268 = vunpack.c.l.b16 %v124
  %v269 = vunpack.c.l.b16 %v125
  %v270 = vunpack.c.l.b16 %v126
  %v271 = vunpack.c.l.b16 %v127
  %v272 = vunpack.c.l.b16 %v128
  %v273 = vunpack.c.l.b16 %v129
  %v274 = vunpack.c.l.b16 %v130
  %v275 = vunpack.c.l.b16 %v131
  %v276 = vunpack.c.l.b16 %v132
  %v277 = vunpack.c.l.b16 %v133
  %v278 = vunpack.c.l.b16 %v134
  %v279 = vunpack.c.l.b16 %v135
  %v280 = vunpack.c.l.b16 %v136
  %v281 = vunpack.c.l.b16 %v137
  %v282 = vunpack.c.l.b16 %v138
  %v283 = vunpack.c.l.b16 %v139
  %v284 = vunpack.c.l.b16 %v140
  %v285 = vunpack.c.l.b16 %v141
  %v286 = vunpack.c.l.b16 %v142
  %v287 = vunpack.c.l.b16 %v143
  %v288 = vunpack.c.l.b16 %v144
  %v289 = vunpack.c.l.b16 %v145
  %v290 = vunpack.c.l.b16 %v146
  %v291 = vunpack.c.l.b16 %v147
  %v292 = vunpack.c.l.b16 %v148
  %v293 = vunpack.c.l.b16 %v149
  %v294 = vunpack.c.l.b16 %v150
  %v295 = vunpack.c.l.b16 %v151
  %v296 = vunpack.c.l.b16 %v152
  %v297 = vpack.c.b16 %v234, %v233
  %v298 = vpack.c.b16 %v236, %v235
  %v299 = vpack.c.b16 %v238, %v237
  %v300 = vpack.c.b16 %v240, %v239
  %v301 = vpack.c.b16 %v242, %v241
  %v302 = vpack.c.b16 %v244, %v243
  %v303 = vpack.c.b16 %v246, %v245
  %v304 = vpack.c.b16 %v248, %v247
  %v305 = vpack.c.b16 %v250, %v249
  %v306 = vpack.c.b16 %v252, %v251
  %v307 = vpack.c.b16 %v254, %v253
  %v308 = vpack.c.b16 %v256, %v255
  %v309 = vpack.c.b16 %v258, %v257
  %v310 = vpack.c.b16 %v260, %v259
  %v311 = vpack.c.b16 %v262, %v261
  %v312 = vpack.c.b16 %v264, %v263
  %v313 = vpack.c.b16 %v266, %v265
  %v314 = vpack.c.b16 %v268, %v267
  %v315 = vpack.c.b16 %v270, %v269
  %v316 = vpack.c.b16 %v272, %v271
  %v317 = vpack.c.b16 %v274, %v273
  %v318 = vpack.c.b16 %v276, %v275
  %v319 = vpack.c.b16 %v278, %v277
  %v320 = vpack.c.b16 %v280, %v279
  %v321 = vpack.c.b16 %v282, %v281
  %v322 = vpack.c.b16 %v284, %v283
  %v323 = vpack.c.b16 %v286, %v285
  %v324 = vpack.c.b16 %v288, %v287
  %v325 = vpack.c.b16 %v290, %v289
  %v326 = vpack.c.b16 %v292, %v291
  %v327 = vpack.c.b16 %v294, %v293
  %v328 = vpack.c.b16 %v296, %v295
  %v377 = vunpack.c.l.b16 %v153
  %v378 = vunpack.c.l.b16 %v154
  %v379 = vunpack.c.l.b16 %v155
  %v380 = vunpack.c.l.b16 %v156
  %v381 = vunpack.c.l.b16 %v157
  %v382 = vunpack.c.l.b16 %v158
  %v383 = vunpack.c.l.b16 %v159
  %v384 = vunpack.c.l.b16 %v160
  %v385 = vunpack.c.l.b16 %v161
  %v386 = vunpack.c.l.b16 %v162
  %v387 = vunpack.c.l.b16 %v163
  %v388 = vunpack.c.l.b16 %v164
  %v389 = vunpack.c.l.b16 %v165
  %v390 = vunpack.c.l.b16 %v166
  %v391 = vunpack.c.l.b16 %v167
  %v392 = vunpack.c.l.b16 %v168
  %v393 = vpack.c.b16 %v378, %v377
  %v394 = vpack.c.b16 %v380, %v379
  %v395 = vpack.c.b16 %v382, %v381
  %v396 = vpack.c.b16 %v384, %v383
  %v397 = vpack.c.b16 %v386, %v385
  %v398 = vpack.c.b16 %v388, %v387
  %v399 = vpack.c.b16 %v390, %v389
  %v400 = vpack.c.b16 %v392, %v391
  %409 = vmatprep.subr.bf16.mxu0 0
  %410 = vmatpush1.bf16.msra.mxu0 %v393
  %411 = vmatprep.subr.bf16.mxu0 0
  %412 = vmatpush1.bf16.msra.mxu0 %v394
  %413 = vmatprep.subr.bf16.mxu0 0
  %414 = vmatpush1.bf16.msra.mxu0 %v395
  %415 = vmatprep.subr.bf16.mxu0 0
  %416 = vmatpush1.bf16.msra.mxu0 %v396
  %417 = vmatprep.subr.bf16.mxu0 0
  %418 = vmatpush1.bf16.msra.mxu0 %v397
  %419 = vmatprep.subr.bf16.mxu0 0
  %420 = vmatpush1.bf16.msra.mxu0 %v398
  %421 = vmatprep.subr.bf16.mxu0 0
  %422 = vmatpush1.bf16.msra.mxu0 %v399
  %423 = vmatprep.subr.bf16.mxu0 0
  %424 = vmatpush1.bf16.msra.mxu0 %v400
  %425 = vmatprep.subr.bf16.mxu0 0
  %426 = vmatpush1.bf16.msra.mxu0 0
  %427 = vmatprep.subr.bf16.mxu0 0
  %428 = vmatpush1.bf16.msra.mxu0 0
  %429 = vmatprep.subr.bf16.mxu0 0
  %430 = vmatpush1.bf16.msra.mxu0 0
  %431 = vmatprep.subr.bf16.mxu0 0
  %432 = vmatpush1.bf16.msra.mxu0 0
  %433 = vmatprep.subr.bf16.mxu0 0
  %434 = vmatpush1.bf16.msra.mxu0 0
  %435 = vmatprep.subr.bf16.mxu0 0
  %436 = vmatpush1.bf16.msra.mxu0 0
  %437 = vmatprep.subr.bf16.mxu0 0
  %438 = vmatpush1.bf16.msra.mxu0 0
  %439 = vmatprep.subr.bf16.mxu0 0
  %440 = vmatpush1.bf16.msra.mxu0 0
  %441 = vmatprep.mubr.bf16.mxu0 0
  %442 = vmatmul.mubr.bf16.gmra.mrb[0].mxu0 %v297
  %v443 = vpop.f32.mrb[0].mxu0
  %v444 = vadd.f32 0.0, %v443
  %v445 = vpop.f32.mrb[0].mxu0
  %v446 = vpop.f32.mrb[0].mxu0
  %v447 = vadd.f32 0.0, %v446
  %v448 = vpop.f32.mrb[0].mxu0
  %449 = vmatprep.mubr.bf16.mxu0 0
  %450 = vmatmul.mubr.bf16.gmra.mrb[0].mxu0 %v298
  %v451 = vpop.f32.mrb[0].mxu0
  %v452 = vadd.f32 0.0, %v451
  %v453 = vpop.f32.mrb[0].mxu0
  %v454 = vpop.f32.mrb[0].mxu0
  %v455 = vadd.f32 0.0, %v454
  %v456 = vpop.f32.mrb[0].mxu0
  %457 = vmatprep.mubr.bf16.mxu0 0
  %458 = vmatmul.mubr.bf16.gmra.mrb[0].mxu0 %v299
  %v459 = vpop.f32.mrb[0].mxu0
  %v460 = vadd.f32 0.0, %v459
  %v461 = vpop.f32.mrb[0].mxu0
  %v462 = vpop.f32.mrb[0].mxu0
  %v463 = vadd.f32 0.0, %v462
  %v464 = vpop.f32.mrb[0].mxu0
  %465 = vmatprep.mubr.bf16.mxu0 0
  %466 = vmatmul.mubr.bf16.gmra.mrb[0].mxu0 %v300
  %v467 = vpop.f32.mrb[0].mxu0
  %v468 = vadd.f32 0.0, %v467
  %v469 = vpop.f32.mrb[0].mxu0
  %v470 = vpop.f32.mrb[0].mxu0
  %v471 = vadd.f32 0.0, %v470
  %v472 = vpop.f32.mrb[0].mxu0
  %473 = vmatprep.mubr.bf16.mxu0 0
  %474 = vmatmul.mubr.bf16.gmra.mrb[0].mxu0 %v301
  %v475 = vpop.f32.mrb[0].mxu0
  %v476 = vadd.f32 0.0, %v475
  %v477 = vpop.f32.mrb[0].mxu0
  %v478 = vpop.f32.mrb[0].mxu0
  %v479 = vadd.f32 0.0, %v478
  %v480 = vpop.f32.mrb[0].mxu0
  %481 = vmatprep.mubr.bf16.mxu0 0
  %482 = vmatmul.mubr.bf16.gmra.mrb[0].mxu0 %v302
  %v483 = vpop.f32.mrb[0].mxu0
  %v484 = vadd.f32 0.0, %v483
  %v485 = vpop.f32.mrb[0].mxu0
  %v486 = vpop.f32.mrb[0].mxu0
  %v487 = vadd.f32 0.0, %v486
  %v488 = vpop.f32.mrb[0].mxu0
  %489 = vmatprep.mubr.bf16.mxu0 0
  %490 = vmatmul.mubr.bf16.gmra.mrb[0].mxu0 %v303
  %v491 = vpop.f32.mrb[0].mxu0
  %v492 = vadd.f32 0.0, %v491
  %v493 = vpop.f32.mrb[0].mxu0
  %v494 = vpop.f32.mrb[0].mxu0
  %v495 = vadd.f32 0.0, %v494
  %v496 = vpop.f32.mrb[0].mxu0
  %497 = vmatprep.mubr.bf16.mxu0 0
  %498 = vmatmul.mubr.bf16.gmra.mrb[0].mxu0 %v304
  %v499 = vpop.f32.mrb[0].mxu0
  %v500 = vadd.f32 0.0, %v499
  %v501 = vpop.f32.mrb[0].mxu0
  %v502 = vpop.f32.mrb[0].mxu0
  %v503 = vadd.f32 0.0, %v502
  %v504 = vpop.f32.mrb[0].mxu0
  %505 = vmatprep.mubr.bf16.mxu0 0
  %506 = vmatmul.mubr.bf16.gmra.mrb[0].mxu0 %v305
  %v507 = vpop.f32.mrb[0].mxu0
  %v508 = vadd.f32 0.0, %v507
  %v509 = vpop.f32.mrb[0].mxu0
  %v510 = vpop.f32.mrb[0].mxu0
  %v511 = vadd.f32 0.0, %v510
  %v512 = vpop.f32.mrb[0].mxu0
  %513 = vmatprep.mubr.bf16.mxu0 0
  %514 = vmatmul.mubr.bf16.gmra.mrb[0].mxu0 %v306
  %v515 = vpop.f32.mrb[0].mxu0
  %v516 = vadd.f32 0.0, %v515
  %v517 = vpop.f32.mrb[0].mxu0
  %v518 = vpop.f32.mrb[0].mxu0
  %v519 = vadd.f32 0.0, %v518
  %v520 = vpop.f32.mrb[0].mxu0
  %521 = vmatprep.mubr.bf16.mxu0 0
  %522 = vmatmul.mubr.bf16.gmra.mrb[0].mxu0 %v307
  %v523 = vpop.f32.mrb[0].mxu0
  %v524 = vadd.f32 0.0, %v523
  %v525 = vpop.f32.mrb[0].mxu0
  %v526 = vpop.f32.mrb[0].mxu0
  %v527 = vadd.f32 0.0, %v526
  %v528 = vpop.f32.mrb[0].mxu0
  %529 = vmatprep.mubr.bf16.mxu0 0
  %530 = vmatmul.mubr.bf16.gmra.mrb[0].mxu0 %v308
  %v531 = vpop.f32.mrb[0].mxu0
  %v532 = vadd.f32 0.0, %v531
  %v533 = vpop.f32.mrb[0].mxu0
  %v534 = vpop.f32.mrb[0].mxu0
  %v535 = vadd.f32 0.0, %v534
  %v536 = vpop.f32.mrb[0].mxu0
  %537 = vmatprep.mubr.bf16.mxu0 0
  %538 = vmatmul.mubr.bf16.gmra.mrb[0].mxu0 %v309
  %v539 = vpop.f32.mrb[0].mxu0
  %v540 = vadd.f32 0.0, %v539
  %v541 = vpop.f32.mrb[0].mxu0
  %v542 = vpop.f32.mrb[0].mxu0
  %v543 = vadd.f32 0.0, %v542
  %v544 = vpop.f32.mrb[0].mxu0
  %545 = vmatprep.mubr.bf16.mxu0 0
  %546 = vmatmul.mubr.bf16.gmra.mrb[0].mxu0 %v310
  %v547 = vpop.f32.mrb[0].mxu0
  %v548 = vadd.f32 0.0, %v547
  %v549 = vpop.f32.mrb[0].mxu0
  %v550 = vpop.f32.mrb[0].mxu0
  %v551 = vadd.f32 0.0, %v550
  %v552 = vpop.f32.mrb[0].mxu0
  %553 = vmatprep.mubr.bf16.mxu0 0
  %554 = vmatmul.mubr.bf16.gmra.mrb[0].mxu0 %v311
  %v555 = vpop.f32.mrb[0].mxu0
  %v556 = vadd.f32 0.0, %v555
  %v557 = vpop.f32.mrb[0].mxu0
  %v558 = vpop.f32.mrb[0].mxu0
  %v559 = vadd.f32 0.0, %v558
  %v560 = vpop.f32.mrb[0].mxu0
  %561 = vmatprep.mubr.bf16.mxu0 0
  %562 = vmatmul.mubr.bf16.gmra.mrb[0].mxu0 %v312
  %v563 = vpop.f32.mrb[0].mxu0
  %v564 = vadd.f32 0.0, %v563
  %v565 = vpop.f32.mrb[0].mxu0
  %v566 = vpop.f32.mrb[0].mxu0
  %v567 = vadd.f32 0.0, %v566
  %v568 = vpop.f32.mrb[0].mxu0
  %569 = vmatprep.mubr.bf16.mxu0 0
  %570 = vmatmul.mubr.bf16.gmra.mrb[0].mxu0 %v313
  %v571 = vpop.f32.mrb[0].mxu0
  %v572 = vadd.f32 0.0, %v571
  %v573 = vpop.f32.mrb[0].mxu0
  %v574 = vpop.f32.mrb[0].mxu0
  %v575 = vadd.f32 0.0, %v574
  %v576 = vpop.f32.mrb[0].mxu0
  %577 = vmatprep.mubr.bf16.mxu0 0
  %578 = vmatmul.mubr.bf16.gmra.mrb[0].mxu0 %v314
  %v579 = vpop.f32.mrb[0].mxu0
  %v580 = vadd.f32 0.0, %v579
  %v581 = vpop.f32.mrb[0].mxu0
  %v582 = vpop.f32.mrb[0].mxu0
  %v583 = vadd.f32 0.0, %v582
  %v584 = vpop.f32.mrb[0].mxu0
  %585 = vmatprep.mubr.bf16.mxu0 0
  %586 = vmatmul.mubr.bf16.gmra.mrb[0].mxu0 %v315
  %v587 = vpop.f32.mrb[0].mxu0
  %v588 = vadd.f32 0.0, %v587
  %v589 = vpop.f32.mrb[0].mxu0
  %v590 = vpop.f32.mrb[0].mxu0
  %v591 = vadd.f32 0.0, %v590
  %v592 = vpop.f32.mrb[0].mxu0
  %593 = vmatprep.mubr.bf16.mxu0 0
  %594 = vmatmul.mubr.bf16.gmra.mrb[0].mxu0 %v316
  %v595 = vpop.f32.mrb[0].mxu0
  %v596 = vadd.f32 0.0, %v595
  %v597 = vpop.f32.mrb[0].mxu0
  %v598 = vpop.f32.mrb[0].mxu0
  %v599 = vadd.f32 0.0, %v598
  %v600 = vpop.f32.mrb[0].mxu0
  %601 = vmatprep.mubr.bf16.mxu0 0
  %602 = vmatmul.mubr.bf16.gmra.mrb[0].mxu0 %v317
  %v603 = vpop.f32.mrb[0].mxu0
  %v604 = vadd.f32 0.0, %v603
  %v605 = vpop.f32.mrb[0].mxu0
  %v606 = vpop.f32.mrb[0].mxu0
  %v607 = vadd.f32 0.0, %v606
  %v608 = vpop.f32.mrb[0].mxu0
  %609 = vmatprep.mubr.bf16.mxu0 0
  %610 = vmatmul.mubr.bf16.gmra.mrb[0].mxu0 %v318
  %v611 = vpop.f32.mrb[0].mxu0
  %v612 = vadd.f32 0.0, %v611
  %v613 = vpop.f32.mrb[0].mxu0
  %v614 = vpop.f32.mrb[0].mxu0
  %v615 = vadd.f32 0.0, %v614
  %v616 = vpop.f32.mrb[0].mxu0
  %617 = vmatprep.mubr.bf16.mxu0 0
  %618 = vmatmul.mubr.bf16.gmra.mrb[0].mxu0 %v319
  %v619 = vpop.f32.mrb[0].mxu0
  %v620 = vadd.f32 0.0, %v619
  %v621 = vpop.f32.mrb[0].mxu0
  %v622 = vpop.f32.mrb[0].mxu0
  %v623 = vadd.f32 0.0, %v622
  %v624 = vpop.f32.mrb[0].mxu0
  %625 = vmatprep.mubr.bf16.mxu0 0
  %626 = vmatmul.mubr.bf16.gmra.mrb[0].mxu0 %v320
  %v627 = vpop.f32.mrb[0].mxu0
  %v628 = vadd.f32 0.0, %v627
  %v629 = vpop.f32.mrb[0].mxu0
  %v630 = vpop.f32.mrb[0].mxu0
  %v631 = vadd.f32 0.0, %v630
  %v632 = vpop.f32.mrb[0].mxu0
  %633 = vmatprep.mubr.bf16.mxu0 0
  %634 = vmatmul.mubr.bf16.gmra.mrb[0].mxu0 %v321
  %v635 = vpop.f32.mrb[0].mxu0
  %v636 = vadd.f32 0.0, %v635
  %v637 = vpop.f32.mrb[0].mxu0
  %v638 = vpop.f32.mrb[0].mxu0
  %v639 = vadd.f32 0.0, %v638
  %v640 = vpop.f32.mrb[0].mxu0
  %641 = vmatprep.mubr.bf16.mxu0 0
  %642 = vmatmul.mubr.bf16.gmra.mrb[0].mxu0 %v322
  %v643 = vpop.f32.mrb[0].mxu0
  %v644 = vadd.f32 0.0, %v643
  %v645 = vpop.f32.mrb[0].mxu0
  %v646 = vpop.f32.mrb[0].mxu0
  %v647 = vadd.f32 0.0, %v646
  %v648 = vpop.f32.mrb[0].mxu0
  %649 = vmatprep.mubr.bf16.mxu0 0
  %650 = vmatmul.mubr.bf16.gmra.mrb[0].mxu0 %v323
  %v651 = vpop.f32.mrb[0].mxu0
  %v652 = vadd.f32 0.0, %v651
  %v653 = vpop.f32.mrb[0].mxu0
  %v654 = vpop.f32.mrb[0].mxu0
  %v655 = vadd.f32 0.0, %v654
  %v656 = vpop.f32.mrb[0].mxu0
  %657 = vmatprep.mubr.bf16.mxu0 0
  %658 = vmatmul.mubr.bf16.gmra.mrb[0].mxu0 %v324
  %v659 = vpop.f32.mrb[0].mxu0
  %v660 = vadd.f32 0.0, %v659
  %v661 = vpop.f32.mrb[0].mxu0
  %v662 = vpop.f32.mrb[0].mxu0
  %v663 = vadd.f32 0.0, %v662
  %v664 = vpop.f32.mrb[0].mxu0
  %665 = vmatprep.mubr.bf16.mxu0 0
  %666 = vmatmul.mubr.bf16.gmra.mrb[0].mxu0 %v325
  %v667 = vpop.f32.mrb[0].mxu0
  %v668 = vadd.f32 0.0, %v667
  %v669 = vpop.f32.mrb[0].mxu0
  %v670 = vpop.f32.mrb[0].mxu0
  %v671 = vadd.f32 0.0, %v670
  %v672 = vpop.f32.mrb[0].mxu0
  %673 = vmatprep.mubr.bf16.mxu0 0
  %674 = vmatmul.mubr.bf16.gmra.mrb[0].mxu0 %v326
  %v675 = vpop.f32.mrb[0].mxu0
  %v676 = vadd.f32 0.0, %v675
  %v677 = vpop.f32.mrb[0].mxu0
  %v678 = vpop.f32.mrb[0].mxu0
  %v679 = vadd.f32 0.0, %v678
  %v680 = vpop.f32.mrb[0].mxu0
  %681 = vmatprep.mubr.bf16.mxu0 0
  %682 = vmatmul.mubr.bf16.gmra.mrb[0].mxu0 %v327
  %v683 = vpop.f32.mrb[0].mxu0
  %v684 = vadd.f32 0.0, %v683
  %v685 = vpop.f32.mrb[0].mxu0
  %v686 = vpop.f32.mrb[0].mxu0
  %v687 = vadd.f32 0.0, %v686
  %v688 = vpop.f32.mrb[0].mxu0
  %689 = vmatprep.mubr.bf16.mxu0 0
  %690 = vmatmul.mubr.bf16.gmra.mrb[0].mxu0 %v328
  %v691 = vpop.f32.mrb[0].mxu0
  %v692 = vadd.f32 0.0, %v691
  %v693 = vpop.f32.mrb[0].mxu0
  %v694 = vpop.f32.mrb[0].mxu0
  %v695 = vadd.f32 0.0, %v694
  %v696 = vpop.f32.mrb[0].mxu0
  %697 = vdwg.mxu0
  %v762 = vunpack.c.l.b16 %v24
  %v763 = vunpack.c.l.b16 %v25
  %v764 = vunpack.c.l.b16 %v26
  %v765 = vunpack.c.l.b16 %v27
  %v766 = vunpack.c.l.b16 %v28
  %v767 = vunpack.c.l.b16 %v29
  %v768 = vunpack.c.l.b16 %v30
  %v769 = vunpack.c.l.b16 %v31
  %v770 = vunpack.c.l.b16 %v32
  %v771 = vunpack.c.l.b16 %v33
  %v772 = vunpack.c.l.b16 %v34
  %v773 = vunpack.c.l.b16 %v35
  %v774 = vunpack.c.l.b16 %v36
  %v775 = vunpack.c.l.b16 %v37
  %v776 = vunpack.c.l.b16 %v38
  %v777 = vunpack.c.l.b16 %v39
  %v778 = vunpack.c.l.b16 %v40
  %v779 = vunpack.c.l.b16 %v41
  %v780 = vunpack.c.l.b16 %v42
  %v781 = vunpack.c.l.b16 %v43
  %v782 = vunpack.c.l.b16 %v44
  %v783 = vunpack.c.l.b16 %v45
  %v784 = vunpack.c.l.b16 %v46
  %v785 = vunpack.c.l.b16 %v47
  %v786 = vunpack.c.l.b16 %v48
  %v787 = vunpack.c.l.b16 %v49
  %v788 = vunpack.c.l.b16 %v50
  %v789 = vunpack.c.l.b16 %v51
  %v790 = vunpack.c.l.b16 %v52
  %v791 = vunpack.c.l.b16 %v53
  %v792 = vunpack.c.l.b16 %v54
  %v793 = vunpack.c.l.b16 %v55
  %v794 = vunpack.c.l.b16 %v56
  %v795 = vunpack.c.l.b16 %v57
  %v796 = vunpack.c.l.b16 %v58
  %v797 = vunpack.c.l.b16 %v59
  %v798 = vunpack.c.l.b16 %v60
  %v799 = vunpack.c.l.b16 %v61
  %v800 = vunpack.c.l.b16 %v62
  %v801 = vunpack.c.l.b16 %v63
  %v802 = vunpack.c.l.b16 %v64
  %v803 = vunpack.c.l.b16 %v65
  %v804 = vunpack.c.l.b16 %v66
  %v805 = vunpack.c.l.b16 %v67
  %v806 = vunpack.c.l.b16 %v68
  %v807 = vunpack.c.l.b16 %v69
  %v808 = vunpack.c.l.b16 %v70
  %v809 = vunpack.c.l.b16 %v71
  %v810 = vunpack.c.l.b16 %v72
  %v811 = vunpack.c.l.b16 %v73
  %v812 = vunpack.c.l.b16 %v74
  %v813 = vunpack.c.l.b16 %v75
  %v814 = vunpack.c.l.b16 %v76
  %v815 = vunpack.c.l.b16 %v77
  %v816 = vunpack.c.l.b16 %v78
  %v817 = vunpack.c.l.b16 %v79
  %v818 = vunpack.c.l.b16 %v80
  %v819 = vunpack.c.l.b16 %v81
  %v820 = vunpack.c.l.b16 %v82
  %v821 = vunpack.c.l.b16 %v83
  %v822 = vunpack.c.l.b16 %v84
  %v823 = vunpack.c.l.b16 %v85
  %v824 = vunpack.c.l.b16 %v86
  %v825 = vunpack.c.l.b16 %v87
  %v826 = vpack.c.b16 %v763, %v762
  %v827 = vpack.c.b16 %v765, %v764
  %v828 = vpack.c.b16 %v767, %v766
  %v829 = vpack.c.b16 %v769, %v768
  %v830 = vpack.c.b16 %v771, %v770
  %v831 = vpack.c.b16 %v773, %v772
  %v832 = vpack.c.b16 %v775, %v774
  %v833 = vpack.c.b16 %v777, %v776
  %v834 = vpack.c.b16 %v779, %v778
  %v835 = vpack.c.b16 %v781, %v780
  %v836 = vpack.c.b16 %v783, %v782
  %v837 = vpack.c.b16 %v785, %v784
  %v838 = vpack.c.b16 %v787, %v786
  %v839 = vpack.c.b16 %v789, %v788
  %v840 = vpack.c.b16 %v791, %v790
  %v841 = vpack.c.b16 %v793, %v792
  %v842 = vpack.c.b16 %v795, %v794
  %v843 = vpack.c.b16 %v797, %v796
  %v844 = vpack.c.b16 %v799, %v798
  %v845 = vpack.c.b16 %v801, %v800
  %v846 = vpack.c.b16 %v803, %v802
  %v847 = vpack.c.b16 %v805, %v804
  %v848 = vpack.c.b16 %v807, %v806
  %v849 = vpack.c.b16 %v809, %v808
  %v850 = vpack.c.b16 %v811, %v810
  %v851 = vpack.c.b16 %v813, %v812
  %v852 = vpack.c.b16 %v815, %v814
  %v853 = vpack.c.b16 %v817, %v816
  %v854 = vpack.c.b16 %v819, %v818
  %v855 = vpack.c.b16 %v821, %v820
  %v856 = vpack.c.b16 %v823, %v822
  %v857 = vpack.c.b16 %v825, %v824
  %vm858 = vcmask 23552
  %v860 = vsel %vm858, %v826, 0
  %v863 = vsel %vm858, %v827, 0
  %v866 = vsel %vm858, %v828, 0
  %v869 = vsel %vm858, %v829, 0
  %v872 = vsel %vm858, %v830, 0
  %v875 = vsel %vm858, %v831, 0
  %v878 = vsel %vm858, %v832, 0
  %v881 = vsel %vm858, %v833, 0
  %v884 = vsel %vm858, %v834, 0
  %v887 = vsel %vm858, %v835, 0
  %v890 = vsel %vm858, %v836, 0
  %v893 = vsel %vm858, %v837, 0
  %v896 = vsel %vm858, %v838, 0
  %v899 = vsel %vm858, %v839, 0
  %v902 = vsel %vm858, %v840, 0
  %v905 = vsel %vm858, %v841, 0
  %v908 = vsel %vm858, %v842, 0
  %v911 = vsel %vm858, %v843, 0
  %v914 = vsel %vm858, %v844, 0
  %v917 = vsel %vm858, %v845, 0
  %v920 = vsel %vm858, %v846, 0
  %v923 = vsel %vm858, %v847, 0
  %v926 = vsel %vm858, %v848, 0
  %v929 = vsel %vm858, %v849, 0
  %v932 = vsel %vm858, %v850, 0
  %v935 = vsel %vm858, %v851, 0
  %v938 = vsel %vm858, %v852, 0
  %v941 = vsel %vm858, %v853, 0
  %v944 = vsel %vm858, %v854, 0
  %v947 = vsel %vm858, %v855, 0
  %v950 = vsel %vm858, %v856, 0
  %v953 = vsel %vm858, %v857, 0
  %vm955 = vcmask 1040384
  %vm956 = vcmask 1041408
  %v957 = vsel %vm955, 4294967295, 65535
  %v958 = vsel %vm956, %v957, 0
  %v960 = vand.u32 %v88, %v958
  %962 = vmatprep.subr.bf16.mxu0 0
  %963 = vmatpush1.bf16.msra.mxu0 %v960
  %964 = vmatprep.subr.bf16.mxu0 0
  %965 = vmatpush1.bf16.msra.mxu0 0
  %966 = vmatprep.subr.bf16.mxu0 0
  %967 = vmatpush1.bf16.msra.mxu0 0
  %968 = vmatprep.subr.bf16.mxu0 0
  %969 = vmatpush1.bf16.msra.mxu0 0
  %970 = vmatprep.subr.bf16.mxu0 0
  %971 = vmatpush1.bf16.msra.mxu0 0
  %972 = vmatprep.subr.bf16.mxu0 0
  %973 = vmatpush1.bf16.msra.mxu0 0
  %974 = vmatprep.subr.bf16.mxu0 0
  %975 = vmatpush1.bf16.msra.mxu0 0
  %976 = vmatprep.subr.bf16.mxu0 0
  %977 = vmatpush1.bf16.msra.mxu0 0
  %978 = vmatprep.subr.bf16.mxu0 0
  %979 = vmatpush1.bf16.msra.mxu0 0
  %980 = vmatprep.subr.bf16.mxu0 0
  %981 = vmatpush1.bf16.msra.mxu0 0
  %982 = vmatprep.subr.bf16.mxu0 0
  %983 = vmatpush1.bf16.msra.mxu0 0
  %984 = vmatprep.subr.bf16.mxu0 0
  %985 = vmatpush1.bf16.msra.mxu0 0
  %986 = vmatprep.subr.bf16.mxu0 0
  %987 = vmatpush1.bf16.msra.mxu0 0
  %988 = vmatprep.subr.bf16.mxu0 0
  %989 = vmatpush1.bf16.msra.mxu0 0
  %990 = vmatprep.subr.bf16.mxu0 0
  %991 = vmatpush1.bf16.msra.mxu0 0
  %992 = vmatprep.subr.bf16.mxu0 0
  %993 = vmatpush1.bf16.msra.mxu0 0
  %994 = vmatprep.mubr.bf16.mxu0 0
  %995 = vmatmul.mubr.bf16.gmra.mrb[0].mxu0 %v860
  %v996 = vpop.f32.mrb[0].mxu0
  %v997 = vadd.f32 %v444, %v996
  %v998 = vpop.f32.mrb[0].mxu0
  %v999 = vpop.f32.mrb[0].mxu0
  %v1000 = vadd.f32 %v447, %v999
  %v1001 = vpop.f32.mrb[0].mxu0
  %1002 = vmatprep.mubr.bf16.mxu0 0
  %1003 = vmatmul.mubr.bf16.gmra.mrb[0].mxu0 %v863
  %v1004 = vpop.f32.mrb[0].mxu0
  %v1005 = vadd.f32 %v452, %v1004
  %v1006 = vpop.f32.mrb[0].mxu0
  %v1007 = vpop.f32.mrb[0].mxu0
  %v1008 = vadd.f32 %v455, %v1007
  %v1009 = vpop.f32.mrb[0].mxu0
  %1010 = vmatprep.mubr.bf16.mxu0 0
  %1011 = vmatmul.mubr.bf16.gmra.mrb[0].mxu0 %v866
  %v1012 = vpop.f32.mrb[0].mxu0
  %v1013 = vadd.f32 %v460, %v1012
  %v1014 = vpop.f32.mrb[0].mxu0
  %v1015 = vpop.f32.mrb[0].mxu0
  %v1016 = vadd.f32 %v463, %v1015
  %v1017 = vpop.f32.mrb[0].mxu0
  %1018 = vmatprep.mubr.bf16.mxu0 0
  %1019 = vmatmul.mubr.bf16.gmra.mrb[0].mxu0 %v869
  %v1020 = vpop.f32.mrb[0].mxu0
  %v1021 = vadd.f32 %v468, %v1020
  %v1022 = vpop.f32.mrb[0].mxu0
  %v1023 = vpop.f32.mrb[0].mxu0
  %v1024 = vadd.f32 %v471, %v1023
  %v1025 = vpop.f32.mrb[0].mxu0
  %1026 = vmatprep.mubr.bf16.mxu0 0
  %1027 = vmatmul.mubr.bf16.gmra.mrb[0].mxu0 %v872
  %v1028 = vpop.f32.mrb[0].mxu0
  %v1029 = vadd.f32 %v476, %v1028
  %v1030 = vpop.f32.mrb[0].mxu0
  %v1031 = vpop.f32.mrb[0].mxu0
  %v1032 = vadd.f32 %v479, %v1031
  %v1033 = vpop.f32.mrb[0].mxu0
  %1034 = vmatprep.mubr.bf16.mxu0 0
  %1035 = vmatmul.mubr.bf16.gmra.mrb[0].mxu0 %v875
  %v1036 = vpop.f32.mrb[0].mxu0
  %v1037 = vadd.f32 %v484, %v1036
  %v1038 = vpop.f32.mrb[0].mxu0
  %v1039 = vpop.f32.mrb[0].mxu0
  %v1040 = vadd.f32 %v487, %v1039
  %v1041 = vpop.f32.mrb[0].mxu0
  %1042 = vmatprep.mubr.bf16.mxu0 0
  %1043 = vmatmul.mubr.bf16.gmra.mrb[0].mxu0 %v878
  %v1044 = vpop.f32.mrb[0].mxu0
  %v1045 = vadd.f32 %v492, %v1044
  %v1046 = vpop.f32.mrb[0].mxu0
  %v1047 = vpop.f32.mrb[0].mxu0
  %v1048 = vadd.f32 %v495, %v1047
  %v1049 = vpop.f32.mrb[0].mxu0
  %1050 = vmatprep.mubr.bf16.mxu0 0
  %1051 = vmatmul.mubr.bf16.gmra.mrb[0].mxu0 %v881
  %v1052 = vpop.f32.mrb[0].mxu0
  %v1053 = vadd.f32 %v500, %v1052
  %v1054 = vpop.f32.mrb[0].mxu0
  %v1055 = vpop.f32.mrb[0].mxu0
  %v1056 = vadd.f32 %v503, %v1055
  %v1057 = vpop.f32.mrb[0].mxu0
  %1058 = vmatprep.mubr.bf16.mxu0 0
  %1059 = vmatmul.mubr.bf16.gmra.mrb[0].mxu0 %v884
  %v1060 = vpop.f32.mrb[0].mxu0
  %v1061 = vadd.f32 %v508, %v1060
  %v1062 = vpop.f32.mrb[0].mxu0
  %v1063 = vpop.f32.mrb[0].mxu0
  %v1064 = vadd.f32 %v511, %v1063
  %v1065 = vpop.f32.mrb[0].mxu0
  %1066 = vmatprep.mubr.bf16.mxu0 0
  %1067 = vmatmul.mubr.bf16.gmra.mrb[0].mxu0 %v887
  %v1068 = vpop.f32.mrb[0].mxu0
  %v1069 = vadd.f32 %v516, %v1068
  %v1070 = vpop.f32.mrb[0].mxu0
  %v1071 = vpop.f32.mrb[0].mxu0
  %v1072 = vadd.f32 %v519, %v1071
  %v1073 = vpop.f32.mrb[0].mxu0
  %1074 = vmatprep.mubr.bf16.mxu0 0
  %1075 = vmatmul.mubr.bf16.gmra.mrb[0].mxu0 %v890
  %v1076 = vpop.f32.mrb[0].mxu0
  %v1077 = vadd.f32 %v524, %v1076
  %v1078 = vpop.f32.mrb[0].mxu0
  %v1079 = vpop.f32.mrb[0].mxu0
  %v1080 = vadd.f32 %v527, %v1079
  %v1081 = vpop.f32.mrb[0].mxu0
  %1082 = vmatprep.mubr.bf16.mxu0 0
  %1083 = vmatmul.mubr.bf16.gmra.mrb[0].mxu0 %v893
  %v1084 = vpop.f32.mrb[0].mxu0
  %v1085 = vadd.f32 %v532, %v1084
  %v1086 = vpop.f32.mrb[0].mxu0
  %v1087 = vpop.f32.mrb[0].mxu0
  %v1088 = vadd.f32 %v535, %v1087
  %v1089 = vpop.f32.mrb[0].mxu0
  %1090 = vmatprep.mubr.bf16.mxu0 0
  %1091 = vmatmul.mubr.bf16.gmra.mrb[0].mxu0 %v896
  %v1092 = vpop.f32.mrb[0].mxu0
  %v1093 = vadd.f32 %v540, %v1092
  %v1094 = vpop.f32.mrb[0].mxu0
  %v1095 = vpop.f32.mrb[0].mxu0
  %v1096 = vadd.f32 %v543, %v1095
  %v1097 = vpop.f32.mrb[0].mxu0
  %1098 = vmatprep.mubr.bf16.mxu0 0
  %1099 = vmatmul.mubr.bf16.gmra.mrb[0].mxu0 %v899
  %v1100 = vpop.f32.mrb[0].mxu0
  %v1101 = vadd.f32 %v548, %v1100
  %v1102 = vpop.f32.mrb[0].mxu0
  %v1103 = vpop.f32.mrb[0].mxu0
  %v1104 = vadd.f32 %v551, %v1103
  %v1105 = vpop.f32.mrb[0].mxu0
  %1106 = vmatprep.mubr.bf16.mxu0 0
  %1107 = vmatmul.mubr.bf16.gmra.mrb[0].mxu0 %v902
  %v1108 = vpop.f32.mrb[0].mxu0
  %v1109 = vadd.f32 %v556, %v1108
  %v1110 = vpop.f32.mrb[0].mxu0
  %v1111 = vpop.f32.mrb[0].mxu0
  %v1112 = vadd.f32 %v559, %v1111
  %v1113 = vpop.f32.mrb[0].mxu0
  %1114 = vmatprep.mubr.bf16.mxu0 0
  %1115 = vmatmul.mubr.bf16.gmra.mrb[0].mxu0 %v905
  %v1116 = vpop.f32.mrb[0].mxu0
  %v1117 = vadd.f32 %v564, %v1116
  %v1118 = vpop.f32.mrb[0].mxu0
  %v1119 = vpop.f32.mrb[0].mxu0
  %v1120 = vadd.f32 %v567, %v1119
  %v1121 = vpop.f32.mrb[0].mxu0
  %1122 = vmatprep.mubr.bf16.mxu0 0
  %1123 = vmatmul.mubr.bf16.gmra.mrb[0].mxu0 %v908
  %v1124 = vpop.f32.mrb[0].mxu0
  %v1125 = vadd.f32 %v572, %v1124
  %v1126 = vpop.f32.mrb[0].mxu0
  %v1127 = vpop.f32.mrb[0].mxu0
  %v1128 = vadd.f32 %v575, %v1127
  %v1129 = vpop.f32.mrb[0].mxu0
  %1130 = vmatprep.mubr.bf16.mxu0 0
  %1131 = vmatmul.mubr.bf16.gmra.mrb[0].mxu0 %v911
  %v1132 = vpop.f32.mrb[0].mxu0
  %v1133 = vadd.f32 %v580, %v1132
  %v1134 = vpop.f32.mrb[0].mxu0
  %v1135 = vpop.f32.mrb[0].mxu0
  %v1136 = vadd.f32 %v583, %v1135
  %v1137 = vpop.f32.mrb[0].mxu0
  %1138 = vmatprep.mubr.bf16.mxu0 0
  %1139 = vmatmul.mubr.bf16.gmra.mrb[0].mxu0 %v914
  %v1140 = vpop.f32.mrb[0].mxu0
  %v1141 = vadd.f32 %v588, %v1140
  %v1142 = vpop.f32.mrb[0].mxu0
  %v1143 = vpop.f32.mrb[0].mxu0
  %v1144 = vadd.f32 %v591, %v1143
  %v1145 = vpop.f32.mrb[0].mxu0
  %1146 = vmatprep.mubr.bf16.mxu0 0
  %1147 = vmatmul.mubr.bf16.gmra.mrb[0].mxu0 %v917
  %v1148 = vpop.f32.mrb[0].mxu0
  %v1149 = vadd.f32 %v596, %v1148
  %v1150 = vpop.f32.mrb[0].mxu0
  %v1151 = vpop.f32.mrb[0].mxu0
  %v1152 = vadd.f32 %v599, %v1151
  %v1153 = vpop.f32.mrb[0].mxu0
  %1154 = vmatprep.mubr.bf16.mxu0 0
  %1155 = vmatmul.mubr.bf16.gmra.mrb[0].mxu0 %v920
  %v1156 = vpop.f32.mrb[0].mxu0
  %v1157 = vadd.f32 %v604, %v1156
  %v1158 = vpop.f32.mrb[0].mxu0
  %v1159 = vpop.f32.mrb[0].mxu0
  %v1160 = vadd.f32 %v607, %v1159
  %v1161 = vpop.f32.mrb[0].mxu0
  %1162 = vmatprep.mubr.bf16.mxu0 0
  %1163 = vmatmul.mubr.bf16.gmra.mrb[0].mxu0 %v923
  %v1164 = vpop.f32.mrb[0].mxu0
  %v1165 = vadd.f32 %v612, %v1164
  %v1166 = vpop.f32.mrb[0].mxu0
  %v1167 = vpop.f32.mrb[0].mxu0
  %v1168 = vadd.f32 %v615, %v1167
  %v1169 = vpop.f32.mrb[0].mxu0
  %1170 = vmatprep.mubr.bf16.mxu0 0
  %1171 = vmatmul.mubr.bf16.gmra.mrb[0].mxu0 %v926
  %v1172 = vpop.f32.mrb[0].mxu0
  %v1173 = vadd.f32 %v620, %v1172
  %v1174 = vpop.f32.mrb[0].mxu0
  %v1175 = vpop.f32.mrb[0].mxu0
  %v1176 = vadd.f32 %v623, %v1175
  %v1177 = vpop.f32.mrb[0].mxu0
  %1178 = vmatprep.mubr.bf16.mxu0 0
  %1179 = vmatmul.mubr.bf16.gmra.mrb[0].mxu0 %v929
  %v1180 = vpop.f32.mrb[0].mxu0
  %v1181 = vadd.f32 %v628, %v1180
  %v1182 = vpop.f32.mrb[0].mxu0
  %v1183 = vpop.f32.mrb[0].mxu0
  %v1184 = vadd.f32 %v631, %v1183
  %v1185 = vpop.f32.mrb[0].mxu0
  %1186 = vmatprep.mubr.bf16.mxu0 0
  %1187 = vmatmul.mubr.bf16.gmra.mrb[0].mxu0 %v932
  %v1188 = vpop.f32.mrb[0].mxu0
  %v1189 = vadd.f32 %v636, %v1188
  %v1190 = vpop.f32.mrb[0].mxu0
  %v1191 = vpop.f32.mrb[0].mxu0
  %v1192 = vadd.f32 %v639, %v1191
  %v1193 = vpop.f32.mrb[0].mxu0
  %1194 = vmatprep.mubr.bf16.mxu0 0
  %1195 = vmatmul.mubr.bf16.gmra.mrb[0].mxu0 %v935
  %v1196 = vpop.f32.mrb[0].mxu0
  %v1197 = vadd.f32 %v644, %v1196
  %v1198 = vpop.f32.mrb[0].mxu0
  %v1199 = vpop.f32.mrb[0].mxu0
  %v1200 = vadd.f32 %v647, %v1199
  %v1201 = vpop.f32.mrb[0].mxu0
  %1202 = vmatprep.mubr.bf16.mxu0 0
  %1203 = vmatmul.mubr.bf16.gmra.mrb[0].mxu0 %v938
  %v1204 = vpop.f32.mrb[0].mxu0
  %v1205 = vadd.f32 %v652, %v1204
  %v1206 = vpop.f32.mrb[0].mxu0
  %v1207 = vpop.f32.mrb[0].mxu0
  %v1208 = vadd.f32 %v655, %v1207
  %v1209 = vpop.f32.mrb[0].mxu0
  %1210 = vmatprep.mubr.bf16.mxu0 0
  %1211 = vmatmul.mubr.bf16.gmra.mrb[0].mxu0 %v941
  %v1212 = vpop.f32.mrb[0].mxu0
  %v1213 = vadd.f32 %v660, %v1212
  %v1214 = vpop.f32.mrb[0].mxu0
  %v1215 = vpop.f32.mrb[0].mxu0
  %v1216 = vadd.f32 %v663, %v1215
  %v1217 = vpop.f32.mrb[0].mxu0
  %1218 = vmatprep.mubr.bf16.mxu0 0
  %1219 = vmatmul.mubr.bf16.gmra.mrb[0].mxu0 %v944
  %v1220 = vpop.f32.mrb[0].mxu0
  %v1221 = vadd.f32 %v668, %v1220
  %v1222 = vpop.f32.mrb[0].mxu0
  %v1223 = vpop.f32.mrb[0].mxu0
  %v1224 = vadd.f32 %v671, %v1223
  %v1225 = vpop.f32.mrb[0].mxu0
  %1226 = vmatprep.mubr.bf16.mxu0 0
  %1227 = vmatmul.mubr.bf16.gmra.mrb[0].mxu0 %v947
  %v1228 = vpop.f32.mrb[0].mxu0
  %v1229 = vadd.f32 %v676, %v1228
  %v1230 = vpop.f32.mrb[0].mxu0
  %v1231 = vpop.f32.mrb[0].mxu0
  %v1232 = vadd.f32 %v679, %v1231
  %v1233 = vpop.f32.mrb[0].mxu0
  %1234 = vmatprep.mubr.bf16.mxu0 0
  %1235 = vmatmul.mubr.bf16.gmra.mrb[0].mxu0 %v950
  %v1236 = vpop.f32.mrb[0].mxu0
  %v1237 = vadd.f32 %v684, %v1236
  %v1238 = vpop.f32.mrb[0].mxu0
  %v1239 = vpop.f32.mrb[0].mxu0
  %v1240 = vadd.f32 %v687, %v1239
  %v1241 = vpop.f32.mrb[0].mxu0
  %1242 = vmatprep.mubr.bf16.mxu0 0
  %1243 = vmatmul.mubr.bf16.gmra.mrb[0].mxu0 %v953
  %v1244 = vpop.f32.mrb[0].mxu0
  %v1245 = vadd.f32 %v692, %v1244
  %v1246 = vpop.f32.mrb[0].mxu0
  %v1247 = vpop.f32.mrb[0].mxu0
  %v1248 = vadd.f32 %v695, %v1247
  %v1249 = vpop.f32.mrb[0].mxu0
  %1250 = vdwg.mxu0
  %v1251 = vld [vmem:[%s2] sm:$0xf]
  %v1252 = vld [vmem:[%s2 + $0x4] sm:$0xf]
  %v1253 = vld [vmem:[%s2 + $0x8] sm:$0xf]
  %v1254 = vld [vmem:[%s2 + $0xc] sm:$0xf]
  %v1255 = vld [vmem:[%s2 + $0x10] sm:$0xf]
  %v1256 = vld [vmem:[%s2 + $0x14] sm:$0xf]
  %v1257 = vld [vmem:[%s2 + $0x18] sm:$0xf]
  %v1258 = vld [vmem:[%s2 + $0x1c] sm:$0xf]
  %v1259 = vld [vmem:[%s2 + $0x20] sm:$0xf]
  %v1260 = vld [vmem:[%s2 + $0x24] sm:$0xf]
  %v1261 = vld [vmem:[%s2 + $0x28] sm:$0xf]
  %v1262 = vld [vmem:[%s2 + $0x2c] sm:$0xf]
  %v1263 = vld [vmem:[%s2 + $0x30] sm:$0xf]
  %v1264 = vld [vmem:[%s2 + $0x34] sm:$0xf]
  %v1265 = vld [vmem:[%s2 + $0x38] sm:$0xf]
  %v1266 = vld [vmem:[%s2 + $0x3c] sm:$0xf]
  %v1267 = vld [vmem:[%s2 + $0x40] sm:$0xf]
  %v1268 = vld [vmem:[%s2 + $0x44] sm:$0xf]
  %v1269 = vld [vmem:[%s2 + $0x48] sm:$0xf]
  %v1270 = vld [vmem:[%s2 + $0x4c] sm:$0xf]
  %v1271 = vld [vmem:[%s2 + $0x50] sm:$0xf]
  %v1272 = vld [vmem:[%s2 + $0x54] sm:$0xf]
  %v1273 = vld [vmem:[%s2 + $0x58] sm:$0xf]
  %v1274 = vld [vmem:[%s2 + $0x5c] sm:$0xf]
  %v1275 = vld [vmem:[%s2 + $0x60] sm:$0xf]
  %v1276 = vld [vmem:[%s2 + $0x64] sm:$0xf]
  %v1277 = vld [vmem:[%s2 + $0x68] sm:$0xf]
  %v1278 = vld [vmem:[%s2 + $0x6c] sm:$0xf]
  %v1279 = vld [vmem:[%s2 + $0x70] sm:$0xf]
  %v1280 = vld [vmem:[%s2 + $0x74] sm:$0xf]
  %v1281 = vld [vmem:[%s2 + $0x78] sm:$0xf]
  %v1282 = vld [vmem:[%s2 + $0x7c] sm:$0xf]
  %v1283 = vld [vmem:[%s2 + $0x80] sm:$0xf]
  %v1284 = vld [vmem:[%s2 + $0x84] sm:$0xf]
  %v1285 = vld [vmem:[%s2 + $0x88] sm:$0xf]
  %v1286 = vld [vmem:[%s2 + $0x8c] sm:$0xf]
  %v1287 = vld [vmem:[%s2 + $0x90] sm:$0xf]
  %v1288 = vld [vmem:[%s2 + $0x94] sm:$0xf]
  %v1289 = vld [vmem:[%s2 + $0x98] sm:$0xf]
  %v1290 = vld [vmem:[%s2 + $0x9c] sm:$0xf]
  %v1291 = vld [vmem:[%s2 + $0xa0] sm:$0xf]
  %v1292 = vld [vmem:[%s2 + $0xa4] sm:$0xf]
  %v1293 = vld [vmem:[%s2 + $0xa8] sm:$0xf]
  %v1294 = vld [vmem:[%s2 + $0xac] sm:$0xf]
  %v1295 = vld [vmem:[%s2 + $0xb0] sm:$0xf]
  %v1296 = vld [vmem:[%s2 + $0xb4] sm:$0xf]
  %v1297 = vld [vmem:[%s2 + $0xb8] sm:$0xf]
  %v1298 = vld [vmem:[%s2 + $0xbc] sm:$0xf]
  %v1299 = vld [vmem:[%s2 + $0xc0] sm:$0xf]
  %v1300 = vld [vmem:[%s2 + $0xc4] sm:$0xf]
  %v1301 = vld [vmem:[%s2 + $0xc8] sm:$0xf]
  %v1302 = vld [vmem:[%s2 + $0xcc] sm:$0xf]
  %v1303 = vld [vmem:[%s2 + $0xd0] sm:$0xf]
  %v1304 = vld [vmem:[%s2 + $0xd4] sm:$0xf]
  %v1305 = vld [vmem:[%s2 + $0xd8] sm:$0xf]
  %v1306 = vld [vmem:[%s2 + $0xdc] sm:$0xf]
  %v1307 = vld [vmem:[%s2 + $0xe0] sm:$0xf]
  %v1308 = vld [vmem:[%s2 + $0xe4] sm:$0xf]
  %v1309 = vld [vmem:[%s2 + $0xe8] sm:$0xf]
  %v1310 = vld [vmem:[%s2 + $0xec] sm:$0xf]
  %v1311 = vld [vmem:[%s2 + $0xf0] sm:$0xf]
  %v1312 = vld [vmem:[%s2 + $0xf4] sm:$0xf]
  %v1313 = vld [vmem:[%s2 + $0xf8] sm:$0xf]
  %v1314 = vld [vmem:[%s2 + $0xfc] sm:$0xf]
  %v1315 = vunpack.c.l.bf16 %v1251
  %v1316 = vunpack.c.l.bf16 %v1252
  %v1317 = vunpack.c.l.bf16 %v1253
  %v1318 = vunpack.c.l.bf16 %v1254
  %v1319 = vunpack.c.l.bf16 %v1255
  %v1320 = vunpack.c.l.bf16 %v1256
  %v1321 = vunpack.c.l.bf16 %v1257
  %v1322 = vunpack.c.l.bf16 %v1258
  %v1323 = vunpack.c.l.bf16 %v1259
  %v1324 = vunpack.c.l.bf16 %v1260
  %v1325 = vunpack.c.l.bf16 %v1261
  %v1326 = vunpack.c.l.bf16 %v1262
  %v1327 = vunpack.c.l.bf16 %v1263
  %v1328 = vunpack.c.l.bf16 %v1264
  %v1329 = vunpack.c.l.bf16 %v1265
  %v1330 = vunpack.c.l.bf16 %v1266
  %v1331 = vunpack.c.l.bf16 %v1267
  %v1332 = vunpack.c.l.bf16 %v1268
  %v1333 = vunpack.c.l.bf16 %v1269
  %v1334 = vunpack.c.l.bf16 %v1270
  %v1335 = vunpack.c.l.bf16 %v1271
  %v1336 = vunpack.c.l.bf16 %v1272
  %v1337 = vunpack.c.l.bf16 %v1273
  %v1338 = vunpack.c.l.bf16 %v1274
  %v1339 = vunpack.c.l.bf16 %v1275
  %v1340 = vunpack.c.l.bf16 %v1276
  %v1341 = vunpack.c.l.bf16 %v1277
  %v1342 = vunpack.c.l.bf16 %v1278
  %v1343 = vunpack.c.l.bf16 %v1279
  %v1344 = vunpack.c.l.bf16 %v1280
  %v1345 = vunpack.c.l.bf16 %v1281
  %v1346 = vunpack.c.l.bf16 %v1282
  %v1347 = vunpack.c.l.bf16 %v1283
  %v1348 = vunpack.c.l.bf16 %v1284
  %v1349 = vunpack.c.l.bf16 %v1285
  %v1350 = vunpack.c.l.bf16 %v1286
  %v1351 = vunpack.c.l.bf16 %v1287
  %v1352 = vunpack.c.l.bf16 %v1288
  %v1353 = vunpack.c.l.bf16 %v1289
  %v1354 = vunpack.c.l.bf16 %v1290
  %v1355 = vunpack.c.l.bf16 %v1291
  %v1356 = vunpack.c.l.bf16 %v1292
  %v1357 = vunpack.c.l.bf16 %v1293
  %v1358 = vunpack.c.l.bf16 %v1294
  %v1359 = vunpack.c.l.bf16 %v1295
  %v1360 = vunpack.c.l.bf16 %v1296
  %v1361 = vunpack.c.l.bf16 %v1297
  %v1362 = vunpack.c.l.bf16 %v1298
  %v1363 = vunpack.c.l.bf16 %v1299
  %v1364 = vunpack.c.l.bf16 %v1300
  %v1365 = vunpack.c.l.bf16 %v1301
  %v1366 = vunpack.c.l.bf16 %v1302
  %v1367 = vunpack.c.l.bf16 %v1303
  %v1368 = vunpack.c.l.bf16 %v1304
  %v1369 = vunpack.c.l.bf16 %v1305
  %v1370 = vunpack.c.l.bf16 %v1306
  %v1371 = vunpack.c.l.bf16 %v1307
  %v1372 = vunpack.c.l.bf16 %v1308
  %v1373 = vunpack.c.l.bf16 %v1309
  %v1374 = vunpack.c.l.bf16 %v1310
  %v1375 = vunpack.c.l.bf16 %v1311
  %v1376 = vunpack.c.l.bf16 %v1312
  %v1377 = vunpack.c.l.bf16 %v1313
  %v1378 = vunpack.c.l.bf16 %v1314
  %v1379 = vadd.f32 %v997, %v1315
  %v1380 = vadd.f32 %v1000, %v1316
  %v1381 = vadd.f32 %v1005, %v1317
  %v1382 = vadd.f32 %v1008, %v1318
  %v1383 = vadd.f32 %v1013, %v1319
  %v1384 = vadd.f32 %v1016, %v1320
  %v1385 = vadd.f32 %v1021, %v1321
  %v1386 = vadd.f32 %v1024, %v1322
  %v1387 = vadd.f32 %v1029, %v1323
  %v1388 = vadd.f32 %v1032, %v1324
  %v1389 = vadd.f32 %v1037, %v1325
  %v1390 = vadd.f32 %v1040, %v1326
  %v1391 = vadd.f32 %v1045, %v1327
  %v1392 = vadd.f32 %v1048, %v1328
  %v1393 = vadd.f32 %v1053, %v1329
  %v1394 = vadd.f32 %v1056, %v1330
  %v1395 = vadd.f32 %v1061, %v1331
  %v1396 = vadd.f32 %v1064, %v1332
  %v1397 = vadd.f32 %v1069, %v1333
  %v1398 = vadd.f32 %v1072, %v1334
  %v1399 = vadd.f32 %v1077, %v1335
  %v1400 = vadd.f32 %v1080, %v1336
  %v1401 = vadd.f32 %v1085, %v1337
  %v1402 = vadd.f32 %v1088, %v1338
  %v1403 = vadd.f32 %v1093, %v1339
  %v1404 = vadd.f32 %v1096, %v1340
  %v1405 = vadd.f32 %v1101, %v1341
  %v1406 = vadd.f32 %v1104, %v1342
  %v1407 = vadd.f32 %v1109, %v1343
  %v1408 = vadd.f32 %v1112, %v1344
  %v1409 = vadd.f32 %v1117, %v1345
  %v1410 = vadd.f32 %v1120, %v1346
  %v1411 = vadd.f32 %v1125, %v1347
  %v1412 = vadd.f32 %v1128, %v1348
  %v1413 = vadd.f32 %v1133, %v1349
  %v1414 = vadd.f32 %v1136, %v1350
  %v1415 = vadd.f32 %v1141, %v1351
  %v1416 = vadd.f32 %v1144, %v1352
  %v1417 = vadd.f32 %v1149, %v1353
  %v1418 = vadd.f32 %v1152, %v1354
  %v1419 = vadd.f32 %v1157, %v1355
  %v1420 = vadd.f32 %v1160, %v1356
  %v1421 = vadd.f32 %v1165, %v1357
  %v1422 = vadd.f32 %v1168, %v1358
  %v1423 = vadd.f32 %v1173, %v1359
  %v1424 = vadd.f32 %v1176, %v1360
  %v1425 = vadd.f32 %v1181, %v1361
  %v1426 = vadd.f32 %v1184, %v1362
  %v1427 = vadd.f32 %v1189, %v1363
  %v1428 = vadd.f32 %v1192, %v1364
  %v1429 = vadd.f32 %v1197, %v1365
  %v1430 = vadd.f32 %v1200, %v1366
  %v1431 = vadd.f32 %v1205, %v1367
  %v1432 = vadd.f32 %v1208, %v1368
  %v1433 = vadd.f32 %v1213, %v1369
  %v1434 = vadd.f32 %v1216, %v1370
  %v1435 = vadd.f32 %v1221, %v1371
  %v1436 = vadd.f32 %v1224, %v1372
  %v1437 = vadd.f32 %v1229, %v1373
  %v1438 = vadd.f32 %v1232, %v1374
  %v1439 = vadd.f32 %v1237, %v1375
  %v1440 = vadd.f32 %v1240, %v1376
  %v1441 = vadd.f32 %v1245, %v1377
  %v1442 = vadd.f32 %v1248, %v1378
  %v1443 = vld [vmem:[%s5] sm:$0x1]
  %v1445 = vlaneseq
  %v1446 = vshrl.u32 %v1445, 7
  %v1447 = vsub.s32 0, %v1446
  %v1448 = vrot.slane %v1443, %v1447
  %v1450 = vadd.f32 %v1379, %v1448
  %v1451 = vadd.f32 %v1380, %v1448
  %v1452 = vadd.f32 %v1381, %v1448
  %v1453 = vadd.f32 %v1382, %v1448
  %v1454 = vadd.f32 %v1383, %v1448
  %v1455 = vadd.f32 %v1384, %v1448
  %v1456 = vadd.f32 %v1385, %v1448
  %v1457 = vadd.f32 %v1386, %v1448
  %v1458 = vadd.f32 %v1387, %v1448
  %v1459 = vadd.f32 %v1388, %v1448
  %v1460 = vadd.f32 %v1389, %v1448
  %v1461 = vadd.f32 %v1390, %v1448
  %v1462 = vadd.f32 %v1391, %v1448
  %v1463 = vadd.f32 %v1392, %v1448
  %v1464 = vadd.f32 %v1393, %v1448
  %v1465 = vadd.f32 %v1394, %v1448
  %v1466 = vadd.f32 %v1395, %v1448
  %v1467 = vadd.f32 %v1396, %v1448
  %v1468 = vadd.f32 %v1397, %v1448
  %v1469 = vadd.f32 %v1398, %v1448
  %v1470 = vadd.f32 %v1399, %v1448
  %v1471 = vadd.f32 %v1400, %v1448
  %v1472 = vadd.f32 %v1401, %v1448
  %v1473 = vadd.f32 %v1402, %v1448
  %v1474 = vadd.f32 %v1403, %v1448
  %v1475 = vadd.f32 %v1404, %v1448
  %v1476 = vadd.f32 %v1405, %v1448
  %v1477 = vadd.f32 %v1406, %v1448
  %v1478 = vadd.f32 %v1407, %v1448
  %v1479 = vadd.f32 %v1408, %v1448
  %v1480 = vadd.f32 %v1409, %v1448
  %v1481 = vadd.f32 %v1410, %v1448
  %v1482 = vadd.f32 %v1411, %v1448
  %v1483 = vadd.f32 %v1412, %v1448
  %v1484 = vadd.f32 %v1413, %v1448
  %v1485 = vadd.f32 %v1414, %v1448
  %v1486 = vadd.f32 %v1415, %v1448
  %v1487 = vadd.f32 %v1416, %v1448
  %v1488 = vadd.f32 %v1417, %v1448
  %v1489 = vadd.f32 %v1418, %v1448
  %v1490 = vadd.f32 %v1419, %v1448
  %v1491 = vadd.f32 %v1420, %v1448
  %v1492 = vadd.f32 %v1421, %v1448
  %v1493 = vadd.f32 %v1422, %v1448
  %v1494 = vadd.f32 %v1423, %v1448
  %v1495 = vadd.f32 %v1424, %v1448
  %v1496 = vadd.f32 %v1425, %v1448
  %v1497 = vadd.f32 %v1426, %v1448
  %v1498 = vadd.f32 %v1427, %v1448
  %v1499 = vadd.f32 %v1428, %v1448
  %v1500 = vadd.f32 %v1429, %v1448
  %v1501 = vadd.f32 %v1430, %v1448
  %v1502 = vadd.f32 %v1431, %v1448
  %v1503 = vadd.f32 %v1432, %v1448
  %v1504 = vadd.f32 %v1433, %v1448
  %v1505 = vadd.f32 %v1434, %v1448
  %v1506 = vadd.f32 %v1435, %v1448
  %v1507 = vadd.f32 %v1436, %v1448
  %v1508 = vadd.f32 %v1437, %v1448
  %v1509 = vadd.f32 %v1438, %v1448
  %v1510 = vadd.f32 %v1439, %v1448
  %v1511 = vadd.f32 %v1440, %v1448
  %v1512 = vadd.f32 %v1441, %v1448
  %v1513 = vadd.f32 %v1442, %v1448
  %v1514 = vmax.f32 %v1450, 0.0
  %v1515 = vmax.f32 %v1451, 0.0
  %v1516 = vmax.f32 %v1452, 0.0
  %v1517 = vmax.f32 %v1453, 0.0
  %v1518 = vmax.f32 %v1454, 0.0
  %v1519 = vmax.f32 %v1455, 0.0
  %v1520 = vmax.f32 %v1456, 0.0
  %v1521 = vmax.f32 %v1457, 0.0
  %v1522 = vmax.f32 %v1458, 0.0
  %v1523 = vmax.f32 %v1459, 0.0
  %v1524 = vmax.f32 %v1460, 0.0
  %v1525 = vmax.f32 %v1461, 0.0
  %v1526 = vmax.f32 %v1462, 0.0
  %v1527 = vmax.f32 %v1463, 0.0
  %v1528 = vmax.f32 %v1464, 0.0
  %v1529 = vmax.f32 %v1465, 0.0
  %v1530 = vmax.f32 %v1466, 0.0
  %v1531 = vmax.f32 %v1467, 0.0
  %v1532 = vmax.f32 %v1468, 0.0
  %v1533 = vmax.f32 %v1469, 0.0
  %v1534 = vmax.f32 %v1470, 0.0
  %v1535 = vmax.f32 %v1471, 0.0
  %v1536 = vmax.f32 %v1472, 0.0
  %v1537 = vmax.f32 %v1473, 0.0
  %v1538 = vmax.f32 %v1474, 0.0
  %v1539 = vmax.f32 %v1475, 0.0
  %v1540 = vmax.f32 %v1476, 0.0
  %v1541 = vmax.f32 %v1477, 0.0
  %v1542 = vmax.f32 %v1478, 0.0
  %v1543 = vmax.f32 %v1479, 0.0
  %v1544 = vmax.f32 %v1480, 0.0
  %v1545 = vmax.f32 %v1481, 0.0
  %v1546 = vmax.f32 %v1482, 0.0
  %v1547 = vmax.f32 %v1483, 0.0
  %v1548 = vmax.f32 %v1484, 0.0
  %v1549 = vmax.f32 %v1485, 0.0
  %v1550 = vmax.f32 %v1486, 0.0
  %v1551 = vmax.f32 %v1487, 0.0
  %v1552 = vmax.f32 %v1488, 0.0
  %v1553 = vmax.f32 %v1489, 0.0
  %v1554 = vmax.f32 %v1490, 0.0
  %v1555 = vmax.f32 %v1491, 0.0
  %v1556 = vmax.f32 %v1492, 0.0
  %v1557 = vmax.f32 %v1493, 0.0
  %v1558 = vmax.f32 %v1494, 0.0
  %v1559 = vmax.f32 %v1495, 0.0
  %v1560 = vmax.f32 %v1496, 0.0
  %v1561 = vmax.f32 %v1497, 0.0
  %v1562 = vmax.f32 %v1498, 0.0
  %v1563 = vmax.f32 %v1499, 0.0
  %v1564 = vmax.f32 %v1500, 0.0
  %v1565 = vmax.f32 %v1501, 0.0
  %v1566 = vmax.f32 %v1502, 0.0
  %v1567 = vmax.f32 %v1503, 0.0
  %v1568 = vmax.f32 %v1504, 0.0
  %v1569 = vmax.f32 %v1505, 0.0
  %v1570 = vmax.f32 %v1506, 0.0
  %v1571 = vmax.f32 %v1507, 0.0
  %v1572 = vmax.f32 %v1508, 0.0
  %v1573 = vmax.f32 %v1509, 0.0
  %v1574 = vmax.f32 %v1510, 0.0
  %v1575 = vmax.f32 %v1511, 0.0
  %v1576 = vmax.f32 %v1512, 0.0
  %v1577 = vmax.f32 %v1513, 0.0
  %v1578 = vpack.c.bf16 %v1515, %v1514
  %v1579 = vpack.c.bf16 %v1517, %v1516
  %v1580 = vpack.c.bf16 %v1519, %v1518
  %v1581 = vpack.c.bf16 %v1521, %v1520
  %v1582 = vpack.c.bf16 %v1523, %v1522
  %v1583 = vpack.c.bf16 %v1525, %v1524
  %v1584 = vpack.c.bf16 %v1527, %v1526
  %v1585 = vpack.c.bf16 %v1529, %v1528
  %v1586 = vpack.c.bf16 %v1531, %v1530
  %v1587 = vpack.c.bf16 %v1533, %v1532
  %v1588 = vpack.c.bf16 %v1535, %v1534
  %v1589 = vpack.c.bf16 %v1537, %v1536
  %v1590 = vpack.c.bf16 %v1539, %v1538
  %v1591 = vpack.c.bf16 %v1541, %v1540
  %v1592 = vpack.c.bf16 %v1543, %v1542
  %v1593 = vpack.c.bf16 %v1545, %v1544
  %v1594 = vpack.c.bf16 %v1547, %v1546
  %v1595 = vpack.c.bf16 %v1549, %v1548
  %v1596 = vpack.c.bf16 %v1551, %v1550
  %v1597 = vpack.c.bf16 %v1553, %v1552
  %v1598 = vpack.c.bf16 %v1555, %v1554
  %v1599 = vpack.c.bf16 %v1557, %v1556
  %v1600 = vpack.c.bf16 %v1559, %v1558
  %v1601 = vpack.c.bf16 %v1561, %v1560
  %v1602 = vpack.c.bf16 %v1563, %v1562
  %v1603 = vpack.c.bf16 %v1565, %v1564
  %v1604 = vpack.c.bf16 %v1567, %v1566
  %v1605 = vpack.c.bf16 %v1569, %v1568
  %v1606 = vpack.c.bf16 %v1571, %v1570
  %v1607 = vpack.c.bf16 %v1573, %v1572
  %v1608 = vpack.c.bf16 %v1575, %v1574
  %v1609 = vpack.c.bf16 %v1577, %v1576
  %v1642 = vunpack.c.l.b16 %v1578
  %v1643 = vunpack.c.h.b16 %v1578
  %v1644 = vunpack.c.l.b16 %v1579
  %v1645 = vunpack.c.h.b16 %v1579
  %v1646 = vunpack.c.l.b16 %v1580
  %v1647 = vunpack.c.h.b16 %v1580
  %v1648 = vunpack.c.l.b16 %v1581
  %v1649 = vunpack.c.h.b16 %v1581
  %v1650 = vunpack.c.l.b16 %v1582
  %v1651 = vunpack.c.h.b16 %v1582
  %v1652 = vunpack.c.l.b16 %v1583
  %v1653 = vunpack.c.h.b16 %v1583
  %v1654 = vunpack.c.l.b16 %v1584
  %v1655 = vunpack.c.h.b16 %v1584
  %v1656 = vunpack.c.l.b16 %v1585
  %v1657 = vunpack.c.h.b16 %v1585
  %v1658 = vunpack.c.l.b16 %v1586
  %v1659 = vunpack.c.h.b16 %v1586
  %v1660 = vunpack.c.l.b16 %v1587
  %v1661 = vunpack.c.h.b16 %v1587
  %v1662 = vunpack.c.l.b16 %v1588
  %v1663 = vunpack.c.h.b16 %v1588
  %v1664 = vunpack.c.l.b16 %v1589
  %v1665 = vunpack.c.h.b16 %v1589
  %v1666 = vunpack.c.l.b16 %v1590
  %v1667 = vunpack.c.h.b16 %v1590
  %v1668 = vunpack.c.l.b16 %v1591
  %v1669 = vunpack.c.h.b16 %v1591
  %v1670 = vunpack.c.l.b16 %v1592
  %v1671 = vunpack.c.h.b16 %v1592
  %v1672 = vunpack.c.l.b16 %v1593
  %v1673 = vunpack.c.h.b16 %v1593
  %v1674 = vunpack.c.l.b16 %v1594
  %v1675 = vunpack.c.h.b16 %v1594
  %v1676 = vunpack.c.l.b16 %v1595
  %v1677 = vunpack.c.h.b16 %v1595
  %v1678 = vunpack.c.l.b16 %v1596
  %v1679 = vunpack.c.h.b16 %v1596
  %v1680 = vunpack.c.l.b16 %v1597
  %v1681 = vunpack.c.h.b16 %v1597
  %v1682 = vunpack.c.l.b16 %v1598
  %v1683 = vunpack.c.h.b16 %v1598
  %v1684 = vunpack.c.l.b16 %v1599
  %v1685 = vunpack.c.h.b16 %v1599
  %v1686 = vunpack.c.l.b16 %v1600
  %v1687 = vunpack.c.h.b16 %v1600
  %v1688 = vunpack.c.l.b16 %v1601
  %v1689 = vunpack.c.h.b16 %v1601
  %v1690 = vunpack.c.l.b16 %v1602
  %v1691 = vunpack.c.h.b16 %v1602
  %v1692 = vunpack.c.l.b16 %v1603
  %v1693 = vunpack.c.h.b16 %v1603
  %v1694 = vunpack.c.l.b16 %v1604
  %v1695 = vunpack.c.h.b16 %v1604
  %v1696 = vunpack.c.l.b16 %v1605
  %v1697 = vunpack.c.h.b16 %v1605
  %v1698 = vunpack.c.l.b16 %v1606
  %v1699 = vunpack.c.h.b16 %v1606
  %v1700 = vunpack.c.l.b16 %v1607
  %v1701 = vunpack.c.h.b16 %v1607
  %v1702 = vunpack.c.l.b16 %v1608
  %v1703 = vunpack.c.h.b16 %v1608
  %v1704 = vunpack.c.l.b16 %v1609
  %v1705 = vunpack.c.h.b16 %v1609
  %v1706 = vpack.c.b16 %v1642, %v1642
  %v1707 = vpack.c.b16 %v1643, %v1643
  %v1708 = vpack.c.b16 %v1644, %v1644
  %v1709 = vpack.c.b16 %v1645, %v1645
  %v1710 = vpack.c.b16 %v1646, %v1646
  %v1711 = vpack.c.b16 %v1647, %v1647
  %v1712 = vpack.c.b16 %v1648, %v1648
  %v1713 = vpack.c.b16 %v1649, %v1649
  %v1714 = vpack.c.b16 %v1650, %v1650
  %v1715 = vpack.c.b16 %v1651, %v1651
  %v1716 = vpack.c.b16 %v1652, %v1652
  %v1717 = vpack.c.b16 %v1653, %v1653
  %v1718 = vpack.c.b16 %v1654, %v1654
  %v1719 = vpack.c.b16 %v1655, %v1655
  %v1720 = vpack.c.b16 %v1656, %v1656
  %v1721 = vpack.c.b16 %v1657, %v1657
  %v1722 = vpack.c.b16 %v1658, %v1658
  %v1723 = vpack.c.b16 %v1659, %v1659
  %v1724 = vpack.c.b16 %v1660, %v1660
  %v1725 = vpack.c.b16 %v1661, %v1661
  %v1726 = vpack.c.b16 %v1662, %v1662
  %v1727 = vpack.c.b16 %v1663, %v1663
  %v1728 = vpack.c.b16 %v1664, %v1664
  %v1729 = vpack.c.b16 %v1665, %v1665
  %v1730 = vpack.c.b16 %v1666, %v1666
  %v1731 = vpack.c.b16 %v1667, %v1667
  %v1732 = vpack.c.b16 %v1668, %v1668
  %v1733 = vpack.c.b16 %v1669, %v1669
  %v1734 = vpack.c.b16 %v1670, %v1670
  %v1735 = vpack.c.b16 %v1671, %v1671
  %v1736 = vpack.c.b16 %v1672, %v1672
  %v1737 = vpack.c.b16 %v1673, %v1673
  %v1738 = vpack.c.b16 %v1674, %v1674
  %v1739 = vpack.c.b16 %v1675, %v1675
  %v1740 = vpack.c.b16 %v1676, %v1676
  %v1741 = vpack.c.b16 %v1677, %v1677
  %v1742 = vpack.c.b16 %v1678, %v1678
  %v1743 = vpack.c.b16 %v1679, %v1679
  %v1744 = vpack.c.b16 %v1680, %v1680
  %v1745 = vpack.c.b16 %v1681, %v1681
  %v1746 = vpack.c.b16 %v1682, %v1682
  %v1747 = vpack.c.b16 %v1683, %v1683
  %v1748 = vpack.c.b16 %v1684, %v1684
  %v1749 = vpack.c.b16 %v1685, %v1685
  %v1750 = vpack.c.b16 %v1686, %v1686
  %v1751 = vpack.c.b16 %v1687, %v1687
  %v1752 = vpack.c.b16 %v1688, %v1688
  %v1753 = vpack.c.b16 %v1689, %v1689
  %v1754 = vpack.c.b16 %v1690, %v1690
  %v1755 = vpack.c.b16 %v1691, %v1691
  %v1756 = vpack.c.b16 %v1692, %v1692
  %v1757 = vpack.c.b16 %v1693, %v1693
  %v1758 = vpack.c.b16 %v1694, %v1694
  %v1759 = vpack.c.b16 %v1695, %v1695
  %v1760 = vpack.c.b16 %v1696, %v1696
  %v1761 = vpack.c.b16 %v1697, %v1697
  %v1762 = vpack.c.b16 %v1698, %v1698
  %v1763 = vpack.c.b16 %v1699, %v1699
  %v1764 = vpack.c.b16 %v1700, %v1700
  %v1765 = vpack.c.b16 %v1701, %v1701
  %v1766 = vpack.c.b16 %v1702, %v1702
  %v1767 = vpack.c.b16 %v1703, %v1703
  %v1768 = vpack.c.b16 %v1704, %v1704
  %v1769 = vpack.c.b16 %v1705, %v1705
  %1834 = vst [vmem:[%s6] sm:$0xf] %v1706
  %1835 = vst [vmem:[%s6 + $0x4] sm:$0xf] %v1707
  %1836 = vst [vmem:[%s6 + $0x8] sm:$0xf] %v1708
  %1837 = vst [vmem:[%s6 + $0xc] sm:$0xf] %v1709
  %1838 = vst [vmem:[%s6 + $0x10] sm:$0xf] %v1710
  %1839 = vst [vmem:[%s6 + $0x14] sm:$0xf] %v1711
  %1840 = vst [vmem:[%s6 + $0x18] sm:$0xf] %v1712
  %1841 = vst [vmem:[%s6 + $0x1c] sm:$0xf] %v1713
  %1842 = vst [vmem:[%s6 + $0x20] sm:$0xf] %v1714
  %1843 = vst [vmem:[%s6 + $0x24] sm:$0xf] %v1715
  %1844 = vst [vmem:[%s6 + $0x28] sm:$0xf] %v1716
  %1845 = vst [vmem:[%s6 + $0x2c] sm:$0xf] %v1717
  %1846 = vst [vmem:[%s6 + $0x30] sm:$0xf] %v1718
  %1847 = vst [vmem:[%s6 + $0x34] sm:$0xf] %v1719
  %1848 = vst [vmem:[%s6 + $0x38] sm:$0xf] %v1720
  %1849 = vst [vmem:[%s6 + $0x3c] sm:$0xf] %v1721
  %1850 = vst [vmem:[%s6 + $0x40] sm:$0xf] %v1722
  %1851 = vst [vmem:[%s6 + $0x44] sm:$0xf] %v1723
  %1852 = vst [vmem:[%s6 + $0x48] sm:$0xf] %v1724
  %1853 = vst [vmem:[%s6 + $0x4c] sm:$0xf] %v1725
  %1854 = vst [vmem:[%s6 + $0x50] sm:$0xf] %v1726
  %1855 = vst [vmem:[%s6 + $0x54] sm:$0xf] %v1727
  %1856 = vst [vmem:[%s6 + $0x58] sm:$0xf] %v1728
  %1857 = vst [vmem:[%s6 + $0x5c] sm:$0xf] %v1729
  %1858 = vst [vmem:[%s6 + $0x60] sm:$0xf] %v1730
  %1859 = vst [vmem:[%s6 + $0x64] sm:$0xf] %v1731
  %1860 = vst [vmem:[%s6 + $0x68] sm:$0xf] %v1732
  %1861 = vst [vmem:[%s6 + $0x6c] sm:$0xf] %v1733
  %1862 = vst [vmem:[%s6 + $0x70] sm:$0xf] %v1734
  %1863 = vst [vmem:[%s6 + $0x74] sm:$0xf] %v1735
  %1864 = vst [vmem:[%s6 + $0x78] sm:$0xf] %v1736
  %1865 = vst [vmem:[%s6 + $0x7c] sm:$0xf] %v1737
  %1866 = vst [vmem:[%s6 + $0x80] sm:$0xf] %v1738
  %1867 = vst [vmem:[%s6 + $0x84] sm:$0xf] %v1739
  %1868 = vst [vmem:[%s6 + $0x88] sm:$0xf] %v1740
  %1869 = vst [vmem:[%s6 + $0x8c] sm:$0xf] %v1741
  %1870 = vst [vmem:[%s6 + $0x90] sm:$0xf] %v1742
  %1871 = vst [vmem:[%s6 + $0x94] sm:$0xf] %v1743
  %1872 = vst [vmem:[%s6 + $0x98] sm:$0xf] %v1744
  %1873 = vst [vmem:[%s6 + $0x9c] sm:$0xf] %v1745
  %1874 = vst [vmem:[%s6 + $0xa0] sm:$0xf] %v1746
  %1875 = vst [vmem:[%s6 + $0xa4] sm:$0xf] %v1747
  %1876 = vst [vmem:[%s6 + $0xa8] sm:$0xf] %v1748
  %1877 = vst [vmem:[%s6 + $0xac] sm:$0xf] %v1749
  %1878 = vst [vmem:[%s6 + $0xb0] sm:$0xf] %v1750
  %1879 = vst [vmem:[%s6 + $0xb4] sm:$0xf] %v1751
  %1880 = vst [vmem:[%s6 + $0xb8] sm:$0xf] %v1752
  %1881 = vst [vmem:[%s6 + $0xbc] sm:$0xf] %v1753
  %1882 = vst [vmem:[%s6 + $0xc0] sm:$0xf] %v1754
  %1883 = vst [vmem:[%s6 + $0xc4] sm:$0xf] %v1755
  %1884 = vst [vmem:[%s6 + $0xc8] sm:$0xf] %v1756
  %1885 = vst [vmem:[%s6 + $0xcc] sm:$0xf] %v1757
  %1886 = vst [vmem:[%s6 + $0xd0] sm:$0xf] %v1758
  %1887 = vst [vmem:[%s6 + $0xd4] sm:$0xf] %v1759
  %1888 = vst [vmem:[%s6 + $0xd8] sm:$0xf] %v1760
  %1889 = vst [vmem:[%s6 + $0xdc] sm:$0xf] %v1761
  %1890 = vst [vmem:[%s6 + $0xe0] sm:$0xf] %v1762
  %1891 = vst [vmem:[%s6 + $0xe4] sm:$0xf] %v1763
  %1892 = vst [vmem:[%s6 + $0xe8] sm:$0xf] %v1764
  %1893 = vst [vmem:[%s6 + $0xec] sm:$0xf] %v1765
  %1894 = vst [vmem:[%s6 + $0xf0] sm:$0xf] %v1766
  %1895 = vst [vmem:[%s6 + $0xf4] sm:$0xf] %v1767
  %1896 = vst [vmem:[%s6 + $0xf8] sm:$0xf] %v1768
  %1897 = vst [vmem:[%s6 + $0xfc] sm:$0xf] %v1769
  // Predicated region
  $region26: #{pcm_forward.7} parent=0 // pred_check
    _
  $region27: #{pcm_forward.7} parent=0 // pred_check_branch
    %1899 = sbr.rel (0) target = $region29
  $region28: #{pcm_forward.7} parent=0 // pred_region
    _
  $region29: #{pcm_forward.7} parent=0 // pred_fallthru
    _
  // Predicated region
  $region30: #{pcm_forward.7} parent=0 // pred_check
    _
  $region31: #{pcm_forward.7} parent=0 // pred_check_branch
    %1901 = sbr.rel (0) target = $region33
  $region32: #{pcm_forward.7} parent=0 // pred_region
    _
  $region33: #{pcm_forward.7} parent=0 // pred_fallthru
    _

// kernel: pcm_forward.9
$region0: #{pcm_forward.9}
  #allocation0 [shape = 'u32[]', space=smem, size = 0x4, offset = 0x4, fixed_abs, tag = 'smem constant byte address 0x4 - core index']
  #allocation1 [shape = 'u32[144,128]{1,0:T(1,128)}', space=vmem, size = 0x12000, scoped, tag = 'internal scratch']
  %s0 = inlined_call_operand.vmem [shape: bf16[2,256,128], index: 0, kind: input, shape index: {}]
  %s1 = inlined_call_operand.vmem [shape: bf16[2,256,128], index: 1, kind: input, shape index: {}]
  %s2 = inlined_call_operand.vmem [shape: bf16[2,256,128], index: 2, kind: input, shape index: {}]
  %s3 = inlined_call_operand.vmem [shape: bf16[2,256,128], index: 3, kind: input, shape index: {}]
  %s4 = inlined_call_operand.vmem [shape: bf16[128,128], index: 4, kind: input, shape index: {}]
  %s5 = inlined_call_operand.vmem [shape: bf16[128,128], index: 5, kind: input, shape index: {}]
  %s6 = inlined_call_operand.vmem [shape: f32[1,128], index: 6, kind: input, shape index: {}]
  %s7 = inlined_call_operand.vmem [shape: f32[2,128,256], index: 7, kind: output, shape index: {}]
  %s8 = sld [smem:[#allocation0]]
  $region61: #{pcm_forward.9} parent=0
    _
  %s10 = ssub.s32 1, %s8
  %s11 = scalar_select 0, %s10, %s8
  loop: start=0, step=1, limit=4
  $region2: #{pcm_forward.9} parent=0 // loop_pre_header
    _
  $region3: #{pcm_forward.9} parent=0 // loop_header
    %s13 = sphi 0, %s17
    %p14 = scmp.ge.s32.totalorder %s13, 4
    %s20 = sphi 0, %s32
    %s21 = sphi 0, %s28
    %s22 = sphi 0, %s20
    %s23 = sphi 0, %s21
    %s24 = sphi 0, %s22
    %s25 = sphi 0, %s23
    %s37 = sphi 0, %s39
    %s40 = sphi 0, %s37
    %s41 = sphi 0, %s40
    %s57 = sphi 0, %s41
    %s65 = sphi 0, %s67
    %s68 = sphi 0, %s65
    %s69 = sphi 0, %s68
    %s85 = sphi 0, %s69
    %s91 = sphi 0, %s93
    %s94 = sphi 0, %s91
    %s95 = sphi 0, %s94
    %s111 = sphi 0, %s95
    %s117 = sphi 0, %s119
    %s120 = sphi 0, %s117
    %s121 = sphi 0, %s120
    %s137 = sphi 0, %s121
    %s141 = sphi 0, %s141
    %s143 = sphi 0, %s141
    %s144 = sphi 0, %s143
    %s158 = sphi 0, %s144
    %s162 = sphi 0, %s162
    %s164 = sphi 0, %s162
    %s165 = sphi 0, %s164
    %s179 = sphi 0, %s165
    %s183 = sphi 0, %s183
    %s185 = sphi 0, %s183
    %s186 = sphi 0, %s185
    %s200 = sphi 0, %s186
    %s208 = sphi 0, %s210
    %s211 = sphi 0, %s208
    %s212 = sphi 0, %s211
    %s228 = sphi 0, %s212
  $region4: #{pcm_forward.9} parent=0 // loop_header_branch
    %16 = sbr.rel (%p14) target = $region8
  $region5: #{pcm_forward.9} parent=0 // loop_body
    %s18 = ssub.s32 %s13, 1
    %s19 = ssub.s32 %s13, 2
    %s26 = sadd.s32 1, %s21
    %p27 = scmp.ge.s32.totalorder %s26, 1
    %s28 = scalar_select %p27, 0, %s26
    %s29 = sadd.s32 1, %s20
    %s30 = scalar_select %p27, %s29, %s20
    %p31 = scmp.ge.s32.totalorder %s30, 2
    %s32 = scalar_select %p31, 0, %s30
    %s33 = ssub.s32 %s20, %s32
    %s34 = ssub.s32 %s21, %s28
    %s35 = sor.u32 %s33, %s34
    %p36 = scmp.eq.s32.totalorder %s35, 0
    %s38 = sadd.s32 %s37, 1
    %s39 = scalar_select %p36, %s37, %s38
    %p42 = pneg %p36
    %p43 = scmp.eq.s32.totalorder %s13, 1
    %p44 = por %p42, %p43
    %p45 = scmp.ne.s32.totalorder %s37, %s40
    %p46 = scmp.eq.s32.totalorder %s13, 0
    %p47 = por %p45, %p46
    %p48 = scmp.ne.s32.totalorder %s37, %s40
    %p49 = scmp.eq.s32.totalorder %s18, 1
    %p50 = por %p48, %p49
    %p51 = scmp.ne.s32.totalorder %s40, %s41
    %p52 = scmp.eq.s32.totalorder %s18, 0
    %p53 = por %p51, %p52
    %p54 = scmp.ne.s32.totalorder %s40, %s41
    %p55 = scmp.eq.s32.totalorder %s19, 1
    %p56 = por %p54, %p55
    %p58 = scmp.ne.s32.totalorder %s41, %s57
    %p59 = scmp.eq.s32.totalorder %s19, 0
    %p60 = por %p58, %p59
    %s61 = ssub.s32 %s20, %s32
    %s62 = ssub.s32 %s21, %s28
    %s63 = sor.u32 %s61, %s62
    %p64 = scmp.eq.s32.totalorder %s63, 0
    %s66 = sadd.s32 %s65, 1
    %s67 = scalar_select %p64, %s65, %s66
    %p70 = pneg %p64
    %p71 = scmp.eq.s32.totalorder %s13, 1
    %p72 = por %p70, %p71
    %p73 = scmp.ne.s32.totalorder %s65, %s68
    %p74 = scmp.eq.s32.totalorder %s13, 0
    %p75 = por %p73, %p74
    %p76 = scmp.ne.s32.totalorder %s65, %s68
    %p77 = scmp.eq.s32.totalorder %s18, 1
    %p78 = por %p76, %p77
    %p79 = scmp.ne.s32.totalorder %s68, %s69
    %p80 = scmp.eq.s32.totalorder %s18, 0
    %p81 = por %p79, %p80
    %p82 = scmp.ne.s32.totalorder %s68, %s69
    %p83 = scmp.eq.s32.totalorder %s19, 1
    %p84 = por %p82, %p83
    %p86 = scmp.ne.s32.totalorder %s69, %s85
    %p87 = scmp.eq.s32.totalorder %s19, 0
    %p88 = por %p86, %p87
    %s89 = ssub.s32 %s20, %s32
    %p90 = scmp.eq.s32.totalorder %s89, 0
    %s92 = sadd.s32 %s91, 1
    %s93 = scalar_select %p90, %s91, %s92
    %p96 = pneg %p90
    %p97 = scmp.eq.s32.totalorder %s13, 1
    %p98 = por %p96, %p97
    %p99 = scmp.ne.s32.totalorder %s91, %s94
    %p100 = scmp.eq.s32.totalorder %s13, 0
    %p101 = por %p99, %p100
    %p102 = scmp.ne.s32.totalorder %s91, %s94
    %p103 = scmp.eq.s32.totalorder %s18, 1
    %p104 = por %p102, %p103
    %p105 = scmp.ne.s32.totalorder %s94, %s95
    %p106 = scmp.eq.s32.totalorder %s18, 0
    %p107 = por %p105, %p106
    %p108 = scmp.ne.s32.totalorder %s94, %s95
    %p109 = scmp.eq.s32.totalorder %s19, 1
    %p110 = por %p108, %p109
    %p112 = scmp.ne.s32.totalorder %s95, %s111
    %p113 = scmp.eq.s32.totalorder %s19, 0
    %p114 = por %p112, %p113
    %s115 = ssub.s32 %s20, %s32
    %p116 = scmp.eq.s32.totalorder %s115, 0
    %s118 = sadd.s32 %s117, 1
    %s119 = scalar_select %p116, %s117, %s118
    %p122 = pneg %p116
    %p123 = scmp.eq.s32.totalorder %s13, 1
    %p124 = por %p122, %p123
    %p125 = scmp.ne.s32.totalorder %s117, %s120
    %p126 = scmp.eq.s32.totalorder %s13, 0
    %p127 = por %p125, %p126
    %p128 = scmp.ne.s32.totalorder %s117, %s120
    %p129 = scmp.eq.s32.totalorder %s18, 1
    %p130 = por %p128, %p129
    %p131 = scmp.ne.s32.totalorder %s120, %s121
    %p132 = scmp.eq.s32.totalorder %s18, 0
    %p133 = por %p131, %p132
    %p134 = scmp.ne.s32.totalorder %s120, %s121
    %p135 = scmp.eq.s32.totalorder %s19, 1
    %p136 = por %p134, %p135
    %p138 = scmp.ne.s32.totalorder %s121, %s137
    %p139 = scmp.eq.s32.totalorder %s19, 0
    %p140 = por %p138, %p139
    %s142 = sadd.s32 %s141, 1
    %p145 = scmp.eq.s32.totalorder %s13, 1
    %p146 = scmp.ne.s32.totalorder %s141, %s143
    %p147 = scmp.eq.s32.totalorder %s13, 0
    %p148 = por %p146, %p147
    %p149 = scmp.ne.s32.totalorder %s141, %s143
    %p150 = scmp.eq.s32.totalorder %s18, 1
    %p151 = por %p149, %p150
    %p152 = scmp.ne.s32.totalorder %s143, %s144
    %p153 = scmp.eq.s32.totalorder %s18, 0
    %p154 = por %p152, %p153
    %p155 = scmp.ne.s32.totalorder %s143, %s144
    %p156 = scmp.eq.s32.totalorder %s19, 1
    %p157 = por %p155, %p156
    %p159 = scmp.ne.s32.totalorder %s144, %s158
    %p160 = scmp.eq.s32.totalorder %s19, 0
    %p161 = por %p159, %p160
    %s163 = sadd.s32 %s162, 1
    %p166 = scmp.eq.s32.totalorder %s13, 1
    %p167 = scmp.ne.s32.totalorder %s162, %s164
    %p168 = scmp.eq.s32.totalorder %s13, 0
    %p169 = por %p167, %p168
    %p170 = scmp.ne.s32.totalorder %s162, %s164
    %p171 = scmp.eq.s32.totalorder %s18, 1
    %p172 = por %p170, %p171
    %p173 = scmp.ne.s32.totalorder %s164, %s165
    %p174 = scmp.eq.s32.totalorder %s18, 0
    %p175 = por %p173, %p174
    %p176 = scmp.ne.s32.totalorder %s164, %s165
    %p177 = scmp.eq.s32.totalorder %s19, 1
    %p178 = por %p176, %p177
    %p180 = scmp.ne.s32.totalorder %s165, %s179
    %p181 = scmp.eq.s32.totalorder %s19, 0
    %p182 = por %p180, %p181
    %s184 = sadd.s32 %s183, 1
    %p187 = scmp.eq.s32.totalorder %s13, 1
    %p188 = scmp.ne.s32.totalorder %s183, %s185
    %p189 = scmp.eq.s32.totalorder %s13, 0
    %p190 = por %p188, %p189
    %p191 = scmp.ne.s32.totalorder %s183, %s185
    %p192 = scmp.eq.s32.totalorder %s18, 1
    %p193 = por %p191, %p192
    %p194 = scmp.ne.s32.totalorder %s185, %s186
    %p195 = scmp.eq.s32.totalorder %s18, 0
    %p196 = por %p194, %p195
    %p197 = scmp.ne.s32.totalorder %s185, %s186
    %p198 = scmp.eq.s32.totalorder %s19, 1
    %p199 = por %p197, %p198
    %p201 = scmp.ne.s32.totalorder %s186, %s200
    %p202 = scmp.eq.s32.totalorder %s19, 0
    %p203 = por %p201, %p202
    %s204 = ssub.s32 %s20, %s32
    %s205 = ssub.s32 %s21, %s28
    %s206 = sor.u32 %s204, %s205
    %p207 = scmp.eq.s32.totalorder %s206, 0
    %s209 = sadd.s32 %s208, 1
    %s210 = scalar_select %p207, %s208, %s209
    %p213 = pneg %p207
    %p214 = scmp.eq.s32.totalorder %s13, 1
    %p215 = por %p213, %p214
    %p216 = scmp.ne.s32.totalorder %s208, %s211
    %p217 = scmp.eq.s32.totalorder %s13, 0
    %p218 = por %p216, %p217
    %p219 = scmp.ne.s32.totalorder %s208, %s211
    %p220 = scmp.eq.s32.totalorder %s18, 1
    %p221 = por %p219, %p220
    %p222 = scmp.ne.s32.totalorder %s211, %s212
    %p223 = scmp.eq.s32.totalorder %s18, 0
    %p224 = por %p222, %p223
    %p225 = scmp.ne.s32.totalorder %s211, %s212
    %p226 = scmp.eq.s32.totalorder %s19, 1
    %p227 = por %p225, %p226
    %p229 = scmp.ne.s32.totalorder %s212, %s228
    %p230 = scmp.eq.s32.totalorder %s19, 0
    %p231 = por %p229, %p230
    %p232 = scmp.le.s32.totalorder 1, %s13
    %p233 = scmp.lt.s32.totalorder %s13, 3
    %p234 = pnand %p232, %p233
    %p235 = pneg %p234
    // Predicated region
    $region9: #{pcm_forward.9} parent=5 // pred_check
      _
    $region10: #{pcm_forward.9} parent=5 // pred_check_branch
      %237 = sbr.rel (%p234) target = $region12
    $region11: #{pcm_forward.9} parent=5 // pred_region
      %s238 = ssub.s32 %s13, 1
      // Predicated region
      $region13: #{pcm_forward.9} parent=11 // pred_check
        %p239 = pneg %p154
      $region14: #{pcm_forward.9} parent=11 // pred_check_branch
        %241 = sbr.rel (%p239) target = $region16
      $region15: #{pcm_forward.9} parent=11 // pred_region
        _
      $region16: #{pcm_forward.9} parent=11 // pred_fallthru
        _
      // Predicated region
      $region17: #{pcm_forward.9} parent=11 // pred_check
        %p242 = pneg %p175
      $region18: #{pcm_forward.9} parent=11 // pred_check_branch
        %244 = sbr.rel (%p242) target = $region20
      $region19: #{pcm_forward.9} parent=11 // pred_region
        _
      $region20: #{pcm_forward.9} parent=11 // pred_fallthru
        _
      // Predicated region
      $region21: #{pcm_forward.9} parent=11 // pred_check
        %p245 = pneg %p196
      $region22: #{pcm_forward.9} parent=11 // pred_check_branch
        %247 = sbr.rel (%p245) target = $region24
      $region23: #{pcm_forward.9} parent=11 // pred_region
        _
      $region24: #{pcm_forward.9} parent=11 // pred_fallthru
        _
    $region12: #{pcm_forward.9} parent=5 // pred_fallthru
      _
    %p248 = scmp.lt.s32.totalorder %s13, 2
    // Predicated region
    $region25: #{pcm_forward.9} parent=5 // pred_check
      %p249 = pneg %p248
    $region26: #{pcm_forward.9} parent=5 // pred_check_branch
      %251 = sbr.rel (%p249) target = $region28
    $region27: #{pcm_forward.9} parent=5 // pred_region
      // Predicated region
      $region29: #{pcm_forward.9} parent=27 // pred_check
        %p252 = pneg %p47
      $region30: #{pcm_forward.9} parent=27 // pred_check_branch
        %254 = sbr.rel (%p252) target = $region32
      $region31: #{pcm_forward.9} parent=27 // pred_region
        %s255 = smul.u32 32, %s21
        %p256 = scmp.lt.s32.totalorder %s20, 1
        %s257 = scalar_select %p256, %s20, 1
        %p258 = scmp.lt.s32.totalorder %s255, 31
        %s259 = scalar_select %p258, %s255, 31
        %s260 = smul.addr %s257, 32
        %s261 = sadd.s32 %s259, %s260
        %s262 = smul.addr %s261, 4
        %s263 = scalar_lea.vmem %s0, %s262
        %s264 = smul.u32 32, %s21
      $region32: #{pcm_forward.9} parent=27 // pred_fallthru
        _
      // Predicated region
      $region33: #{pcm_forward.9} parent=27 // pred_check
        %p265 = pneg %p75
      $region34: #{pcm_forward.9} parent=27 // pred_check_branch
        %267 = sbr.rel (%p265) target = $region36
      $region35: #{pcm_forward.9} parent=27 // pred_region
        %s268 = smul.u32 32, %s21
        %p269 = scmp.lt.s32.totalorder %s20, 1
        %s270 = scalar_select %p269, %s20, 1
        %p271 = scmp.lt.s32.totalorder %s268, 31
        %s272 = scalar_select %p271, %s268, 31
        %s273 = smul.addr %s270, 32
        %s274 = sadd.s32 %s272, %s273
        %s275 = smul.addr %s274, 4
        %s276 = scalar_lea.vmem %s1, %s275
        %s277 = smul.u32 32, %s21
      $region36: #{pcm_forward.9} parent=27 // pred_fallthru
        _
      // Predicated region
      $region37: #{pcm_forward.9} parent=27 // pred_check
        %p278 = pneg %p101
      $region38: #{pcm_forward.9} parent=27 // pred_check_branch
        %280 = sbr.rel (%p278) target = $region40
      $region39: #{pcm_forward.9} parent=27 // pred_region
        %p281 = scmp.lt.s32.totalorder %s20, 1
        %s282 = scalar_select %p281, %s20, 1
        %s283 = smul.addr %s282, 32
        %s284 = smul.addr %s283, 4
        %s285 = scalar_lea.vmem %s2, %s284
      $region40: #{pcm_forward.9} parent=27 // pred_fallthru
        _
      // Predicated region
      $region41: #{pcm_forward.9} parent=27 // pred_check
        %p286 = pneg %p127
      $region42: #{pcm_forward.9} parent=27 // pred_check_branch
        %288 = sbr.rel (%p286) target = $region44
      $region43: #{pcm_forward.9} parent=27 // pred_region
        %p289 = scmp.lt.s32.totalorder %s20, 1
        %s290 = scalar_select %p289, %s20, 1
        %s291 = smul.addr %s290, 32
        %s292 = smul.addr %s291, 4
        %s293 = scalar_lea.vmem %s3, %s292
      $region44: #{pcm_forward.9} parent=27 // pred_fallthru
        _
    $region28: #{pcm_forward.9} parent=5 // pred_fallthru
      _
    %p294 = scmp.le.s32.totalorder 1, %s13
    %p295 = scmp.lt.s32.totalorder %s13, 3
    %p296 = pnand %p294, %p295
    %p297 = pneg %p296
    // Predicated region
    $region45: #{pcm_forward.9} parent=5 // pred_check
      _
    $region46: #{pcm_forward.9} parent=5 // pred_check_branch
      %299 = sbr.rel (%p296) target = $region48
    $region47: #{pcm_forward.9} parent=5 // pred_region
      %s300 = ssub.s32 %s13, 1
      %s301 = smul.u32 32, %s23
      %p302 = scmp.lt.s32.totalorder %s22, 1
      %s303 = scalar_select %p302, %s22, 1
      %p304 = scmp.lt.s32.totalorder %s301, 31
      %s305 = scalar_select %p304, %s301, 31
      %s306 = smul.addr %s303, 32
      %s307 = sadd.s32 %s305, %s306
      %s308 = smul.addr %s307, 4
      %s309 = scalar_lea.vmem %s0, %s308
      %p310 = pneg %p53
      %p311 = pneg %p50
      %s312 = smul.u32 32, %s23
      %p313 = scmp.lt.s32.totalorder %s22, 1
      %s314 = scalar_select %p313, %s22, 1
      %p315 = scmp.lt.s32.totalorder %s312, 31
      %s316 = scalar_select %p315, %s312, 31
      %s317 = smul.addr %s314, 32
      %s318 = sadd.s32 %s316, %s317
      %s319 = smul.addr %s318, 4
      %s320 = scalar_lea.vmem %s1, %s319
      %p321 = pneg %p81
      %p322 = pneg %p78
      %p323 = scmp.lt.s32.totalorder %s22, 1
      %s324 = scalar_select %p323, %s22, 1
      %s325 = smul.addr %s324, 32
      %s326 = smul.addr %s325, 4
      %s327 = scalar_lea.vmem %s2, %s326
      %p328 = pneg %p107
      %p329 = pneg %p104
      %p330 = scmp.lt.s32.totalorder %s22, 1
      %s331 = scalar_select %p330, %s22, 1
      %s332 = smul.addr %s331, 32
      %s333 = smul.addr %s332, 4
      %s334 = scalar_lea.vmem %s3, %s333
      %p335 = pneg %p133
      %p336 = pneg %p130
      %p337 = pneg %p154
      %p338 = pneg %p151
      %p339 = pneg %p175
      %p340 = pneg %p172
      %p341 = pneg %p196
      %p342 = pneg %p193
      %p343 = pneg %p224
      %p344 = pneg %p221
      %s345 = smul.u32 2, %s23
      %p346 = scmp.lt.s32.totalorder %s22, 1
      %s347 = scalar_select %p346, %s22, 1
      %p348 = scmp.lt.s32.totalorder %s345, 1
      %s349 = scalar_select %p348, %s345, 1
      %s350 = smul.addr %s347, 32
      %s351 = sadd.s32 %s349, %s350
      %s352 = smul.addr %s351, 8
      %s353 = scalar_lea.vmem %s7, %s352
      %s354 = smul.u32 32, %s23
      %p355 = scmp.lt.s32.totalorder %s22, 1
      %s356 = scalar_select %p355, %s22, 1
      %p357 = scmp.lt.s32.totalorder %s354, 31
      %s358 = scalar_select %p357, %s354, 31
      %s359 = smul.addr %s356, 32
      %s360 = sadd.s32 %s358, %s359
      %s361 = smul.addr %s360, 4
      %s362 = scalar_lea.vmem %s0, %s361
      %s363 = smul.u32 32, %s23
      %s364 = smul.u32 32, %s23
      %p365 = scmp.lt.s32.totalorder %s22, 1
      %s366 = scalar_select %p365, %s22, 1
      %p367 = scmp.lt.s32.totalorder %s364, 31
      %s368 = scalar_select %p367, %s364, 31
      %s369 = smul.addr %s366, 32
      %s370 = sadd.s32 %s368, %s369
      %s371 = smul.addr %s370, 4
      %s372 = scalar_lea.vmem %s1, %s371
      %s373 = smul.u32 32, %s23
      %p374 = scmp.lt.s32.totalorder %s22, 1
      %s375 = scalar_select %p374, %s22, 1
      %s376 = smul.addr %s375, 32
      %s377 = smul.addr %s376, 4
      %s378 = scalar_lea.vmem %s2, %s377
      %p379 = scmp.lt.s32.totalorder %s22, 1
      %s380 = scalar_select %p379, %s22, 1
      %s381 = smul.addr %s380, 32
      %s382 = smul.addr %s381, 4
      %s383 = scalar_lea.vmem %s3, %s382
      %s384 = smul.u32 2, %s23
      %p385 = scmp.lt.s32.totalorder %s22, 1
      %s386 = scalar_select %p385, %s22, 1
      %p387 = scmp.lt.s32.totalorder %s384, 1
      %s388 = scalar_select %p387, %s384, 1
      %s389 = smul.addr %s386, 32
      %s390 = sadd.s32 %s388, %s389
      %s391 = smul.addr %s390, 8
      %s392 = scalar_lea.vmem %s7, %s391
      %s393 = smul.u32 2, %s23
      %v395 = vld [vmem:[%s362] sm:$0xf]
      %v396 = vld [vmem:[%s362 + $0x4] sm:$0xf]
      %v397 = vld [vmem:[%s362 + $0x8] sm:$0xf]
      %v398 = vld [vmem:[%s362 + $0xc] sm:$0xf]
      %v399 = vld [vmem:[%s362 + $0x10] sm:$0xf]
      %v400 = vld [vmem:[%s362 + $0x14] sm:$0xf]
      %v401 = vld [vmem:[%s362 + $0x18] sm:$0xf]
      %v402 = vld [vmem:[%s362 + $0x1c] sm:$0xf]
      %v403 = vld [vmem:[%s362 + $0x20] sm:$0xf]
      %v404 = vld [vmem:[%s362 + $0x24] sm:$0xf]
      %v405 = vld [vmem:[%s362 + $0x28] sm:$0xf]
      %v406 = vld [vmem:[%s362 + $0x2c] sm:$0xf]
      %v407 = vld [vmem:[%s362 + $0x30] sm:$0xf]
      %v408 = vld [vmem:[%s362 + $0x34] sm:$0xf]
      %v409 = vld [vmem:[%s362 + $0x38] sm:$0xf]
      %v410 = vld [vmem:[%s362 + $0x3c] sm:$0xf]
      %v411 = vld [vmem:[%s362 + $0x40] sm:$0xf]
      %v412 = vld [vmem:[%s362 + $0x44] sm:$0xf]
      %v413 = vld [vmem:[%s362 + $0x48] sm:$0xf]
      %v414 = vld [vmem:[%s362 + $0x4c] sm:$0xf]
      %v415 = vld [vmem:[%s362 + $0x50] sm:$0xf]
      %v416 = vld [vmem:[%s362 + $0x54] sm:$0xf]
      %v417 = vld [vmem:[%s362 + $0x58] sm:$0xf]
      %v418 = vld [vmem:[%s362 + $0x5c] sm:$0xf]
      %v419 = vld [vmem:[%s362 + $0x60] sm:$0xf]
      %v420 = vld [vmem:[%s362 + $0x64] sm:$0xf]
      %v421 = vld [vmem:[%s362 + $0x68] sm:$0xf]
      %v422 = vld [vmem:[%s362 + $0x6c] sm:$0xf]
      %v423 = vld [vmem:[%s362 + $0x70] sm:$0xf]
      %v424 = vld [vmem:[%s362 + $0x74] sm:$0xf]
      %v425 = vld [vmem:[%s362 + $0x78] sm:$0xf]
      %v426 = vld [vmem:[%s362 + $0x7c] sm:$0xf]
      %v427 = vld [vmem:[%s378] sm:$0xf]
      %v428 = vld [vmem:[%s378 + $0x4] sm:$0xf]
      %v429 = vld [vmem:[%s378 + $0x8] sm:$0xf]
      %v430 = vld [vmem:[%s378 + $0xc] sm:$0xf]
      %v431 = vld [vmem:[%s378 + $0x10] sm:$0xf]
      %v432 = vld [vmem:[%s378 + $0x14] sm:$0xf]
      %v433 = vld [vmem:[%s378 + $0x18] sm:$0xf]
      %v434 = vld [vmem:[%s378 + $0x1c] sm:$0xf]
      %v435 = vld [vmem:[%s378 + $0x20] sm:$0xf]
      %v436 = vld [vmem:[%s378 + $0x24] sm:$0xf]
      %v437 = vld [vmem:[%s378 + $0x28] sm:$0xf]
      %v438 = vld [vmem:[%s378 + $0x2c] sm:$0xf]
      %v439 = vld [vmem:[%s378 + $0x30] sm:$0xf]
      %v440 = vld [vmem:[%s378 + $0x34] sm:$0xf]
      %v441 = vld [vmem:[%s378 + $0x38] sm:$0xf]
      %v442 = vld [vmem:[%s378 + $0x3c] sm:$0xf]
      %v443 = vld [vmem:[%s378 + $0x40] sm:$0xf]
      %v444 = vld [vmem:[%s378 + $0x44] sm:$0xf]
      %v445 = vld [vmem:[%s378 + $0x48] sm:$0xf]
      %v446 = vld [vmem:[%s378 + $0x4c] sm:$0xf]
      %v447 = vld [vmem:[%s378 + $0x50] sm:$0xf]
      %v448 = vld [vmem:[%s378 + $0x54] sm:$0xf]
      %v449 = vld [vmem:[%s378 + $0x58] sm:$0xf]
      %v450 = vld [vmem:[%s378 + $0x5c] sm:$0xf]
      %v451 = vld [vmem:[%s378 + $0x60] sm:$0xf]
      %v452 = vld [vmem:[%s378 + $0x64] sm:$0xf]
      %v453 = vld [vmem:[%s378 + $0x68] sm:$0xf]
      %v454 = vld [vmem:[%s378 + $0x6c] sm:$0xf]
      %v455 = vld [vmem:[%s378 + $0x70] sm:$0xf]
      %v456 = vld [vmem:[%s378 + $0x74] sm:$0xf]
      %v457 = vld [vmem:[%s378 + $0x78] sm:$0xf]
      %v458 = vld [vmem:[%s378 + $0x7c] sm:$0xf]
      %v491 = vunpack.c.l.b16 %v395
      %v492 = vunpack.c.l.b16 %v396
      %v493 = vunpack.c.l.b16 %v397
      %v494 = vunpack.c.l.b16 %v398
      %v495 = vunpack.c.l.b16 %v399
      %v496 = vunpack.c.l.b16 %v400
      %v497 = vunpack.c.l.b16 %v401
      %v498 = vunpack.c.l.b16 %v402
      %v499 = vunpack.c.l.b16 %v403
      %v500 = vunpack.c.l.b16 %v404
      %v501 = vunpack.c.l.b16 %v405
      %v502 = vunpack.c.l.b16 %v406
      %v503 = vunpack.c.l.b16 %v407
      %v504 = vunpack.c.l.b16 %v408
      %v505 = vunpack.c.l.b16 %v409
      %v506 = vunpack.c.l.b16 %v410
      %v507 = vunpack.c.l.b16 %v411
      %v508 = vunpack.c.l.b16 %v412
      %v509 = vunpack.c.l.b16 %v413
      %v510 = vunpack.c.l.b16 %v414
      %v511 = vunpack.c.l.b16 %v415
      %v512 = vunpack.c.l.b16 %v416
      %v513 = vunpack.c.l.b16 %v417
      %v514 = vunpack.c.l.b16 %v418
      %v515 = vunpack.c.l.b16 %v419
      %v516 = vunpack.c.l.b16 %v420
      %v517 = vunpack.c.l.b16 %v421
      %v518 = vunpack.c.l.b16 %v422
      %v519 = vunpack.c.l.b16 %v423
      %v520 = vunpack.c.l.b16 %v424
      %v521 = vunpack.c.l.b16 %v425
      %v522 = vunpack.c.l.b16 %v426
      %v523 = vpack.c.b16 %v492, %v491
      %v524 = vpack.c.b16 %v494, %v493
      %v525 = vpack.c.b16 %v496, %v495
      %v526 = vpack.c.b16 %v498, %v497
      %v527 = vpack.c.b16 %v500, %v499
      %v528 = vpack.c.b16 %v502, %v501
      %v529 = vpack.c.b16 %v504, %v503
      %v530 = vpack.c.b16 %v506, %v505
      %v531 = vpack.c.b16 %v508, %v507
      %v532 = vpack.c.b16 %v510, %v509
      %v533 = vpack.c.b16 %v512, %v511
      %v534 = vpack.c.b16 %v514, %v513
      %v535 = vpack.c.b16 %v516, %v515
      %v536 = vpack.c.b16 %v518, %v517
      %v537 = vpack.c.b16 %v520, %v519
      %v538 = vpack.c.b16 %v522, %v521
      %v587 = vunpack.c.l.b16 %v427
      %v588 = vunpack.c.l.b16 %v428
      %v589 = vunpack.c.l.b16 %v429
      %v590 = vunpack.c.l.b16 %v430
      %v591 = vunpack.c.l.b16 %v431
      %v592 = vunpack.c.l.b16 %v432
      %v593 = vunpack.c.l.b16 %v433
      %v594 = vunpack.c.l.b16 %v434
      %v595 = vunpack.c.l.b16 %v435
      %v596 = vunpack.c.l.b16 %v436
      %v597 = vunpack.c.l.b16 %v437
      %v598 = vunpack.c.l.b16 %v438
      %v599 = vunpack.c.l.b16 %v439
      %v600 = vunpack.c.l.b16 %v440
      %v601 = vunpack.c.l.b16 %v441
      %v602 = vunpack.c.l.b16 %v442
      %v603 = vunpack.c.l.b16 %v443
      %v604 = vunpack.c.l.b16 %v444
      %v605 = vunpack.c.l.b16 %v445
      %v606 = vunpack.c.l.b16 %v446
      %v607 = vunpack.c.l.b16 %v447
      %v608 = vunpack.c.l.b16 %v448
      %v609 = vunpack.c.l.b16 %v449
      %v610 = vunpack.c.l.b16 %v450
      %v611 = vunpack.c.l.b16 %v451
      %v612 = vunpack.c.l.b16 %v452
      %v613 = vunpack.c.l.b16 %v453
      %v614 = vunpack.c.l.b16 %v454
      %v615 = vunpack.c.l.b16 %v455
      %v616 = vunpack.c.l.b16 %v456
      %v617 = vunpack.c.l.b16 %v457
      %v618 = vunpack.c.l.b16 %v458
      %v619 = vpack.c.b16 %v588, %v587
      %v620 = vpack.c.b16 %v590, %v589
      %v621 = vpack.c.b16 %v592, %v591
      %v622 = vpack.c.b16 %v594, %v593
      %v623 = vpack.c.b16 %v596, %v595
      %v624 = vpack.c.b16 %v598, %v597
      %v625 = vpack.c.b16 %v600, %v599
      %v626 = vpack.c.b16 %v602, %v601
      %v627 = vpack.c.b16 %v604, %v603
      %v628 = vpack.c.b16 %v606, %v605
      %v629 = vpack.c.b16 %v608, %v607
      %v630 = vpack.c.b16 %v610, %v609
      %v631 = vpack.c.b16 %v612, %v611
      %v632 = vpack.c.b16 %v614, %v613
      %v633 = vpack.c.b16 %v616, %v615
      %v634 = vpack.c.b16 %v618, %v617
      %651 = vmatprep.subr.bf16.mxu0 0
      %652 = vmatpush1.bf16.xpose.msra.mxu0 %v619
      %653 = vmatprep.subr.bf16.mxu0 0
      %654 = vmatpush1.bf16.xpose.msra.mxu0 %v620
      %655 = vmatprep.subr.bf16.mxu0 0
      %656 = vmatpush1.bf16.xpose.msra.mxu0 %v621
      %657 = vmatprep.subr.bf16.mxu0 0
      %658 = vmatpush1.bf16.xpose.msra.mxu0 %v622
      %659 = vmatprep.subr.bf16.mxu0 0
      %660 = vmatpush1.bf16.xpose.msra.mxu0 %v623
      %661 = vmatprep.subr.bf16.mxu0 0
      %662 = vmatpush1.bf16.xpose.msra.mxu0 %v624
      %663 = vmatprep.subr.bf16.mxu0 0
      %664 = vmatpush1.bf16.xpose.msra.mxu0 %v625
      %665 = vmatprep.subr.bf16.mxu0 0
      %666 = vmatpush1.bf16.xpose.msra.mxu0 %v626
      %667 = vmatprep.subr.bf16.mxu0 0
      %668 = vmatpush1.bf16.xpose.msra.mxu0 %v627
      %669 = vmatprep.subr.bf16.mxu0 0
      %670 = vmatpush1.bf16.xpose.msra.mxu0 %v628
      %671 = vmatprep.subr.bf16.mxu0 0
      %672 = vmatpush1.bf16.xpose.msra.mxu0 %v629
      %673 = vmatprep.subr.bf16.mxu0 0
      %674 = vmatpush1.bf16.xpose.msra.mxu0 %v630
      %675 = vmatprep.subr.bf16.mxu0 0
      %676 = vmatpush1.bf16.xpose.msra.mxu0 %v631
      %677 = vmatprep.subr.bf16.mxu0 0
      %678 = vmatpush1.bf16.xpose.msra.mxu0 %v632
      %679 = vmatprep.subr.bf16.mxu0 0
      %680 = vmatpush1.bf16.xpose.msra.mxu0 %v633
      %681 = vmatprep.subr.bf16.mxu0 0
      %682 = vmatpush1.bf16.xpose.msra.mxu0 %v634
      %683 = vmatprep.mubr.bf16.mxu0 0
      %684 = vmatmul.mubr.bf16.gmra.mrb[0].mxu0 %v523
      %v685 = vpop.f32.mrb[0].mxu0
      %v686 = vadd.f32 0.0, %v685
      %v687 = vpop.f32.mrb[0].mxu0
      %v688 = vadd.f32 0.0, %v687
      %v689 = vpop.f32.mrb[0].mxu0
      %v690 = vadd.f32 0.0, %v689
      %v691 = vpop.f32.mrb[0].mxu0
      %v692 = vadd.f32 0.0, %v691
      %693 = vmatprep.mubr.bf16.mxu0 0
      %694 = vmatmul.mubr.bf16.gmra.mrb[0].mxu0 %v524
      %v695 = vpop.f32.mrb[0].mxu0
      %v696 = vadd.f32 0.0, %v695
      %v697 = vpop.f32.mrb[0].mxu0
      %v698 = vadd.f32 0.0, %v697
      %v699 = vpop.f32.mrb[0].mxu0
      %v700 = vadd.f32 0.0, %v699
      %v701 = vpop.f32.mrb[0].mxu0
      %v702 = vadd.f32 0.0, %v701
      %703 = vmatprep.mubr.bf16.mxu0 0
      %704 = vmatmul.mubr.bf16.gmra.mrb[0].mxu0 %v525
      %v705 = vpop.f32.mrb[0].mxu0
      %v706 = vadd.f32 0.0, %v705
      %v707 = vpop.f32.mrb[0].mxu0
      %v708 = vadd.f32 0.0, %v707
      %v709 = vpop.f32.mrb[0].mxu0
      %v710 = vadd.f32 0.0, %v709
      %v711 = vpop.f32.mrb[0].mxu0
      %v712 = vadd.f32 0.0, %v711
      %713 = vmatprep.mubr.bf16.mxu0 0
      %714 = vmatmul.mubr.bf16.gmra.mrb[0].mxu0 %v526
      %v715 = vpop.f32.mrb[0].mxu0
      %v716 = vadd.f32 0.0, %v715
      %v717 = vpop.f32.mrb[0].mxu0
      %v718 = vadd.f32 0.0, %v717
      %v719 = vpop.f32.mrb[0].mxu0
      %v720 = vadd.f32 0.0, %v719
      %v721 = vpop.f32.mrb[0].mxu0
      %v722 = vadd.f32 0.0, %v721
      %723 = vmatprep.mubr.bf16.mxu0 0
      %724 = vmatmul.mubr.bf16.gmra.mrb[0].mxu0 %v527
      %v725 = vpop.f32.mrb[0].mxu0
      %v726 = vadd.f32 0.0, %v725
      %v727 = vpop.f32.mrb[0].mxu0
      %v728 = vadd.f32 0.0, %v727
      %v729 = vpop.f32.mrb[0].mxu0
      %v730 = vadd.f32 0.0, %v729
      %v731 = vpop.f32.mrb[0].mxu0
      %v732 = vadd.f32 0.0, %v731
      %733 = vmatprep.mubr.bf16.mxu0 0
      %734 = vmatmul.mubr.bf16.gmra.mrb[0].mxu0 %v528
      %v735 = vpop.f32.mrb[0].mxu0
      %v736 = vadd.f32 0.0, %v735
      %v737 = vpop.f32.mrb[0].mxu0
      %v738 = vadd.f32 0.0, %v737
      %v739 = vpop.f32.mrb[0].mxu0
      %v740 = vadd.f32 0.0, %v739
      %v741 = vpop.f32.mrb[0].mxu0
      %v742 = vadd.f32 0.0, %v741
      %743 = vmatprep.mubr.bf16.mxu0 0
      %744 = vmatmul.mubr.bf16.gmra.mrb[0].mxu0 %v529
      %v745 = vpop.f32.mrb[0].mxu0
      %v746 = vadd.f32 0.0, %v745
      %v747 = vpop.f32.mrb[0].mxu0
      %v748 = vadd.f32 0.0, %v747
      %v749 = vpop.f32.mrb[0].mxu0
      %v750 = vadd.f32 0.0, %v749
      %v751 = vpop.f32.mrb[0].mxu0
      %v752 = vadd.f32 0.0, %v751
      %753 = vmatprep.mubr.bf16.mxu0 0
      %754 = vmatmul.mubr.bf16.gmra.mrb[0].mxu0 %v530
      %v755 = vpop.f32.mrb[0].mxu0
      %v756 = vadd.f32 0.0, %v755
      %v757 = vpop.f32.mrb[0].mxu0
      %v758 = vadd.f32 0.0, %v757
      %v759 = vpop.f32.mrb[0].mxu0
      %v760 = vadd.f32 0.0, %v759
      %v761 = vpop.f32.mrb[0].mxu0
      %v762 = vadd.f32 0.0, %v761
      %763 = vmatprep.mubr.bf16.mxu0 0
      %764 = vmatmul.mubr.bf16.gmra.mrb[0].mxu0 %v531
      %v765 = vpop.f32.mrb[0].mxu0
      %v766 = vadd.f32 0.0, %v765
      %v767 = vpop.f32.mrb[0].mxu0
      %v768 = vadd.f32 0.0, %v767
      %v769 = vpop.f32.mrb[0].mxu0
      %v770 = vadd.f32 0.0, %v769
      %v771 = vpop.f32.mrb[0].mxu0
      %v772 = vadd.f32 0.0, %v771
      %773 = vmatprep.mubr.bf16.mxu0 0
      %774 = vmatmul.mubr.bf16.gmra.mrb[0].mxu0 %v532
      %v775 = vpop.f32.mrb[0].mxu0
      %v776 = vadd.f32 0.0, %v775
      %v777 = vpop.f32.mrb[0].mxu0
      %v778 = vadd.f32 0.0, %v777
      %v779 = vpop.f32.mrb[0].mxu0
      %v780 = vadd.f32 0.0, %v779
      %v781 = vpop.f32.mrb[0].mxu0
      %v782 = vadd.f32 0.0, %v781
      %783 = vmatprep.mubr.bf16.mxu0 0
      %784 = vmatmul.mubr.bf16.gmra.mrb[0].mxu0 %v533
      %v785 = vpop.f32.mrb[0].mxu0
      %v786 = vadd.f32 0.0, %v785
      %v787 = vpop.f32.mrb[0].mxu0
      %v788 = vadd.f32 0.0, %v787
      %v789 = vpop.f32.mrb[0].mxu0
      %v790 = vadd.f32 0.0, %v789
      %v791 = vpop.f32.mrb[0].mxu0
      %v792 = vadd.f32 0.0, %v791
      %793 = vmatprep.mubr.bf16.mxu0 0
      %794 = vmatmul.mubr.bf16.gmra.mrb[0].mxu0 %v534
      %v795 = vpop.f32.mrb[0].mxu0
      %v796 = vadd.f32 0.0, %v795
      %v797 = vpop.f32.mrb[0].mxu0
      %v798 = vadd.f32 0.0, %v797
      %v799 = vpop.f32.mrb[0].mxu0
      %v800 = vadd.f32 0.0, %v799
      %v801 = vpop.f32.mrb[0].mxu0
      %v802 = vadd.f32 0.0, %v801
      %803 = vmatprep.mubr.bf16.mxu0 0
      %804 = vmatmul.mubr.bf16.gmra.mrb[0].mxu0 %v535
      %v805 = vpop.f32.mrb[0].mxu0
      %v806 = vadd.f32 0.0, %v805
      %v807 = vpop.f32.mrb[0].mxu0
      %v808 = vadd.f32 0.0, %v807
      %v809 = vpop.f32.mrb[0].mxu0
      %v810 = vadd.f32 0.0, %v809
      %v811 = vpop.f32.mrb[0].mxu0
      %v812 = vadd.f32 0.0, %v811
      %813 = vmatprep.mubr.bf16.mxu0 0
      %814 = vmatmul.mubr.bf16.gmra.mrb[0].mxu0 %v536
      %v815 = vpop.f32.mrb[0].mxu0
      %v816 = vadd.f32 0.0, %v815
      %v817 = vpop.f32.mrb[0].mxu0
      %v818 = vadd.f32 0.0, %v817
      %v819 = vpop.f32.mrb[0].mxu0
      %v820 = vadd.f32 0.0, %v819
      %v821 = vpop.f32.mrb[0].mxu0
      %v822 = vadd.f32 0.0, %v821
      %823 = vmatprep.mubr.bf16.mxu0 0
      %824 = vmatmul.mubr.bf16.gmra.mrb[0].mxu0 %v537
      %v825 = vpop.f32.mrb[0].mxu0
      %v826 = vadd.f32 0.0, %v825
      %v827 = vpop.f32.mrb[0].mxu0
      %v828 = vadd.f32 0.0, %v827
      %v829 = vpop.f32.mrb[0].mxu0
      %v830 = vadd.f32 0.0, %v829
      %v831 = vpop.f32.mrb[0].mxu0
      %v832 = vadd.f32 0.0, %v831
      %833 = vmatprep.mubr.bf16.mxu0 0
      %834 = vmatmul.mubr.bf16.gmra.mrb[0].mxu0 %v538
      %v835 = vpop.f32.mrb[0].mxu0
      %v836 = vadd.f32 0.0, %v835
      %v837 = vpop.f32.mrb[0].mxu0
      %v838 = vadd.f32 0.0, %v837
      %v839 = vpop.f32.mrb[0].mxu0
      %v840 = vadd.f32 0.0, %v839
      %v841 = vpop.f32.mrb[0].mxu0
      %v842 = vadd.f32 0.0, %v841
      %843 = vdwg.mxu0
      %v844 = vlaneseq
      %v845 = vand.u32 %v844, 127
      %v846 = vadd.s32 %v845, 128
      %vm847 = vcmp.lt.s32.totalorder %v845, 180
      %vm848 = vcmp.lt.s32.totalorder %v846, 180
      %v849 = vsel %vm847, %v686, -1e+30
      %v850 = vsel %vm848, %v688, -1e+30
      %v851 = vsel %vm847, %v690, -1e+30
      %v852 = vsel %vm848, %v692, -1e+30
      %v853 = vsel %vm847, %v696, -1e+30
      %v854 = vsel %vm848, %v698, -1e+30
      %v855 = vsel %vm847, %v700, -1e+30
      %v856 = vsel %vm848, %v702, -1e+30
      %v857 = vsel %vm847, %v706, -1e+30
      %v858 = vsel %vm848, %v708, -1e+30
      %v859 = vsel %vm847, %v710, -1e+30
      %v860 = vsel %vm848, %v712, -1e+30
      %v861 = vsel %vm847, %v716, -1e+30
      %v862 = vsel %vm848, %v718, -1e+30
      %v863 = vsel %vm847, %v720, -1e+30
      %v864 = vsel %vm848, %v722, -1e+30
      %v865 = vsel %vm847, %v726, -1e+30
      %v866 = vsel %vm848, %v728, -1e+30
      %v867 = vsel %vm847, %v730, -1e+30
      %v868 = vsel %vm848, %v732, -1e+30
      %v869 = vsel %vm847, %v736, -1e+30
      %v870 = vsel %vm848, %v738, -1e+30
      %v871 = vsel %vm847, %v740, -1e+30
      %v872 = vsel %vm848, %v742, -1e+30
      %v873 = vsel %vm847, %v746, -1e+30
      %v874 = vsel %vm848, %v748, -1e+30
      %v875 = vsel %vm847, %v750, -1e+30
      %v876 = vsel %vm848, %v752, -1e+30
      %v877 = vsel %vm847, %v756, -1e+30
      %v878 = vsel %vm848, %v758, -1e+30
      %v879 = vsel %vm847, %v760, -1e+30
      %v880 = vsel %vm848, %v762, -1e+30
      %v881 = vsel %vm847, %v766, -1e+30
      %v882 = vsel %vm848, %v768, -1e+30
      %v883 = vsel %vm847, %v770, -1e+30
      %v884 = vsel %vm848, %v772, -1e+30
      %v885 = vsel %vm847, %v776, -1e+30
      %v886 = vsel %vm848, %v778, -1e+30
      %v887 = vsel %vm847, %v780, -1e+30
      %v888 = vsel %vm848, %v782, -1e+30
      %v889 = vsel %vm847, %v786, -1e+30
      %v890 = vsel %vm848, %v788, -1e+30
      %v891 = vsel %vm847, %v790, -1e+30
      %v892 = vsel %vm848, %v792, -1e+30
      %v893 = vsel %vm847, %v796, -1e+30
      %v894 = vsel %vm848, %v798, -1e+30
      %v895 = vsel %vm847, %v800, -1e+30
      %v896 = vsel %vm848, %v802, -1e+30
      %v897 = vsel %vm847, %v806, -1e+30
      %v898 = vsel %vm848, %v808, -1e+30
      %v899 = vsel %vm847, %v810, -1e+30
      %v900 = vsel %vm848, %v812, -1e+30
      %v901 = vsel %vm847, %v816, -1e+30
      %v902 = vsel %vm848, %v818, -1e+30
      %v903 = vsel %vm847, %v820, -1e+30
      %v904 = vsel %vm848, %v822, -1e+30
      %v905 = vsel %vm847, %v826, -1e+30
      %v906 = vsel %vm848, %v828, -1e+30
      %v907 = vsel %vm847, %v830, -1e+30
      %v908 = vsel %vm848, %v832, -1e+30
      %v909 = vsel %vm847, %v836, -1e+30
      %v910 = vsel %vm848, %v838, -1e+30
      %v911 = vsel %vm847, %v840, -1e+30
      %v912 = vsel %vm848, %v842, -1e+30
      %v913 = vmax.f32 %v849, %v850
      %914 = vmax.xlane.f32.xlu0 %v913
      %v915 = vpop.xlane.xlu0 %914
      %v916 = vmax.f32 %v851, %v852
      %917 = vmax.xlane.f32.xlu0 %v916
      %v918 = vpop.xlane.xlu0 %917
      %v919 = vmax.f32 %v853, %v854
      %920 = vmax.xlane.f32.xlu0 %v919
      %v921 = vpop.xlane.xlu0 %920
      %v922 = vmax.f32 %v855, %v856
      %923 = vmax.xlane.f32.xlu0 %v922
      %v924 = vpop.xlane.xlu0 %923
      %v925 = vmax.f32 %v857, %v858
      %926 = vmax.xlane.f32.xlu0 %v925
      %v927 = vpop.xlane.xlu0 %926
      %v928 = vmax.f32 %v859, %v860
      %929 = vmax.xlane.f32.xlu0 %v928
      %v930 = vpop.xlane.xlu0 %929
      %v931 = vmax.f32 %v861, %v862
      %932 = vmax.xlane.f32.xlu0 %v931
      %v933 = vpop.xlane.xlu0 %932
      %v934 = vmax.f32 %v863, %v864
      %935 = vmax.xlane.f32.xlu0 %v934
      %v936 = vpop.xlane.xlu0 %935
      %v937 = vmax.f32 %v865, %v866
      %938 = vmax.xlane.f32.xlu0 %v937
      %v939 = vpop.xlane.xlu0 %938
      %v940 = vmax.f32 %v867, %v868
      %941 = vmax.xlane.f32.xlu0 %v940
      %v942 = vpop.xlane.xlu0 %941
      %v943 = vmax.f32 %v869, %v870
      %944 = vmax.xlane.f32.xlu0 %v943
      %v945 = vpop.xlane.xlu0 %944
      %v946 = vmax.f32 %v871, %v872
      %947 = vmax.xlane.f32.xlu0 %v946
      %v948 = vpop.xlane.xlu0 %947
      %v949 = vmax.f32 %v873, %v874
      %950 = vmax.xlane.f32.xlu0 %v949
      %v951 = vpop.xlane.xlu0 %950
      %v952 = vmax.f32 %v875, %v876
      %953 = vmax.xlane.f32.xlu0 %v952
      %v954 = vpop.xlane.xlu0 %953
      %v955 = vmax.f32 %v877, %v878
      %956 = vmax.xlane.f32.xlu0 %v955
      %v957 = vpop.xlane.xlu0 %956
      %v958 = vmax.f32 %v879, %v880
      %959 = vmax.xlane.f32.xlu0 %v958
      %v960 = vpop.xlane.xlu0 %959
      %v961 = vmax.f32 %v881, %v882
      %962 = vmax.xlane.f32.xlu0 %v961
      %v963 = vpop.xlane.xlu0 %962
      %v964 = vmax.f32 %v883, %v884
      %965 = vmax.xlane.f32.xlu0 %v964
      %v966 = vpop.xlane.xlu0 %965
      %v967 = vmax.f32 %v885, %v886
      %968 = vmax.xlane.f32.xlu0 %v967
      %v969 = vpop.xlane.xlu0 %968
      %v970 = vmax.f32 %v887, %v888
      %971 = vmax.xlane.f32.xlu0 %v970
      %v972 = vpop.xlane.xlu0 %971
      %v973 = vmax.f32 %v889, %v890
      %974 = vmax.xlane.f32.xlu0 %v973
      %v975 = vpop.xlane.xlu0 %974
      %v976 = vmax.f32 %v891, %v892
      %977 = vmax.xlane.f32.xlu0 %v976
      %v978 = vpop.xlane.xlu0 %977
      %v979 = vmax.f32 %v893, %v894
      %980 = vmax.xlane.f32.xlu0 %v979
      %v981 = vpop.xlane.xlu0 %980
      %v982 = vmax.f32 %v895, %v896
      %983 = vmax.xlane.f32.xlu0 %v982
      %v984 = vpop.xlane.xlu0 %983
      %v985 = vmax.f32 %v897, %v898
      %986 = vmax.xlane.f32.xlu0 %v985
      %v987 = vpop.xlane.xlu0 %986
      %v988 = vmax.f32 %v899, %v900
      %989 = vmax.xlane.f32.xlu0 %v988
      %v990 = vpop.xlane.xlu0 %989
      %v991 = vmax.f32 %v901, %v902
      %992 = vmax.xlane.f32.xlu0 %v991
      %v993 = vpop.xlane.xlu0 %992
      %v994 = vmax.f32 %v903, %v904
      %995 = vmax.xlane.f32.xlu0 %v994
      %v996 = vpop.xlane.xlu0 %995
      %v997 = vmax.f32 %v905, %v906
      %998 = vmax.xlane.f32.xlu0 %v997
      %v999 = vpop.xlane.xlu0 %998
      %v1000 = vmax.f32 %v907, %v908
      %1001 = vmax.xlane.f32.xlu0 %v1000
      %v1002 = vpop.xlane.xlu0 %1001
      %v1003 = vmax.f32 %v909, %v910
      %1004 = vmax.xlane.f32.xlu0 %v1003
      %v1005 = vpop.xlane.xlu0 %1004
      %v1006 = vmax.f32 %v911, %v912
      %1007 = vmax.xlane.f32.xlu0 %v1006
      %v1008 = vpop.xlane.xlu0 %1007
      %v1009 = vsub.f32 %v849, %v915
      %v1010 = vsub.f32 %v850, %v915
      %v1011 = vsub.f32 %v851, %v918
      %v1012 = vsub.f32 %v852, %v918
      %v1013 = vsub.f32 %v853, %v921
      %v1014 = vsub.f32 %v854, %v921
      %v1015 = vsub.f32 %v855, %v924
      %v1016 = vsub.f32 %v856, %v924
      %v1017 = vsub.f32 %v857, %v927
      %v1018 = vsub.f32 %v858, %v927
      %v1019 = vsub.f32 %v859, %v930
      %v1020 = vsub.f32 %v860, %v930
      %v1021 = vsub.f32 %v861, %v933
      %v1022 = vsub.f32 %v862, %v933
      %v1023 = vsub.f32 %v863, %v936
      %v1024 = vsub.f32 %v864, %v936
      %v1025 = vsub.f32 %v865, %v939
      %v1026 = vsub.f32 %v866, %v939
      %v1027 = vsub.f32 %v867, %v942
      %v1028 = vsub.f32 %v868, %v942
      %v1029 = vsub.f32 %v869, %v945
      %v1030 = vsub.f32 %v870, %v945
      %v1031 = vsub.f32 %v871, %v948
      %v1032 = vsub.f32 %v872, %v948
      %v1033 = vsub.f32 %v873, %v951
      %v1034 = vsub.f32 %v874, %v951
      %v1035 = vsub.f32 %v875, %v954
      %v1036 = vsub.f32 %v876, %v954
      %v1037 = vsub.f32 %v877, %v957
      %v1038 = vsub.f32 %v878, %v957
      %v1039 = vsub.f32 %v879, %v960
      %v1040 = vsub.f32 %v880, %v960
      %v1041 = vsub.f32 %v881, %v963
      %v1042 = vsub.f32 %v882, %v963
      %v1043 = vsub.f32 %v883, %v966
      %v1044 = vsub.f32 %v884, %v966
      %v1045 = vsub.f32 %v885, %v969
      %v1046 = vsub.f32 %v886, %v969
      %v1047 = vsub.f32 %v887, %v972
      %v1048 = vsub.f32 %v888, %v972
      %v1049 = vsub.f32 %v889, %v975
      %v1050 = vsub.f32 %v890, %v975
      %v1051 = vsub.f32 %v891, %v978
      %v1052 = vsub.f32 %v892, %v978
      %v1053 = vsub.f32 %v893, %v981
      %v1054 = vsub.f32 %v894, %v981
      %v1055 = vsub.f32 %v895, %v984
      %v1056 = vsub.f32 %v896, %v984
      %v1057 = vsub.f32 %v897, %v987
      %v1058 = vsub.f32 %v898, %v987
      %v1059 = vsub.f32 %v899, %v990
      %v1060 = vsub.f32 %v900, %v990
      %v1061 = vsub.f32 %v901, %v993
      %v1062 = vsub.f32 %v902, %v993
      %v1063 = vsub.f32 %v903, %v996
      %v1064 = vsub.f32 %v904, %v996
      %v1065 = vsub.f32 %v905, %v999
      %v1066 = vsub.f32 %v906, %v999
      %v1067 = vsub.f32 %v907, %v1002
      %v1068 = vsub.f32 %v908, %v1002
      %v1069 = vsub.f32 %v909, %v1005
      %v1070 = vsub.f32 %v910, %v1005
      %v1071 = vsub.f32 %v911, %v1008
      %v1072 = vsub.f32 %v912, %v1008
      %v1073 = vmul.f32 %v1009, 1.442695
      %v1074 = vpow.pop %v1073
      %v1075 = vmul.f32 %v1010, 1.442695
      %v1076 = vpow.pop %v1075
      %v1077 = vmul.f32 %v1011, 1.442695
      %v1078 = vpow.pop %v1077
      %v1079 = vmul.f32 %v1012, 1.442695
      %v1080 = vpow.pop %v1079
      %v1081 = vmul.f32 %v1013, 1.442695
      %v1082 = vpow.pop %v1081
      %v1083 = vmul.f32 %v1014, 1.442695
      %v1084 = vpow.pop %v1083
      %v1085 = vmul.f32 %v1015, 1.442695
      %v1086 = vpow.pop %v1085
      %v1087 = vmul.f32 %v1016, 1.442695
      %v1088 = vpow.pop %v1087
      %v1089 = vmul.f32 %v1017, 1.442695
      %v1090 = vpow.pop %v1089
      %v1091 = vmul.f32 %v1018, 1.442695
      %v1092 = vpow.pop %v1091
      %v1093 = vmul.f32 %v1019, 1.442695
      %v1094 = vpow.pop %v1093
      %v1095 = vmul.f32 %v1020, 1.442695
      %v1096 = vpow.pop %v1095
      %v1097 = vmul.f32 %v1021, 1.442695
      %v1098 = vpow.pop %v1097
      %v1099 = vmul.f32 %v1022, 1.442695
      %v1100 = vpow.pop %v1099
      %v1101 = vmul.f32 %v1023, 1.442695
      %v1102 = vpow.pop %v1101
      %v1103 = vmul.f32 %v1024, 1.442695
      %v1104 = vpow.pop %v1103
      %v1105 = vmul.f32 %v1025, 1.442695
      %v1106 = vpow.pop %v1105
      %v1107 = vmul.f32 %v1026, 1.442695
      %v1108 = vpow.pop %v1107
      %v1109 = vmul.f32 %v1027, 1.442695
      %v1110 = vpow.pop %v1109
      %v1111 = vmul.f32 %v1028, 1.442695
      %v1112 = vpow.pop %v1111
      %v1113 = vmul.f32 %v1029, 1.442695
      %v1114 = vpow.pop %v1113
      %v1115 = vmul.f32 %v1030, 1.442695
      %v1116 = vpow.pop %v1115
      %v1117 = vmul.f32 %v1031, 1.442695
      %v1118 = vpow.pop %v1117
      %v1119 = vmul.f32 %v1032, 1.442695
      %v1120 = vpow.pop %v1119
      %v1121 = vmul.f32 %v1033, 1.442695
      %v1122 = vpow.pop %v1121
      %v1123 = vmul.f32 %v1034, 1.442695
      %v1124 = vpow.pop %v1123
      %v1125 = vmul.f32 %v1035, 1.442695
      %v1126 = vpow.pop %v1125
      %v1127 = vmul.f32 %v1036, 1.442695
      %v1128 = vpow.pop %v1127
      %v1129 = vmul.f32 %v1037, 1.442695
      %v1130 = vpow.pop %v1129
      %v1131 = vmul.f32 %v1038, 1.442695
      %v1132 = vpow.pop %v1131
      %v1133 = vmul.f32 %v1039, 1.442695
      %v1134 = vpow.pop %v1133
      %v1135 = vmul.f32 %v1040, 1.442695
      %v1136 = vpow.pop %v1135
      %v1137 = vmul.f32 %v1041, 1.442695
      %v1138 = vpow.pop %v1137
      %v1139 = vmul.f32 %v1042, 1.442695
      %v1140 = vpow.pop %v1139
      %v1141 = vmul.f32 %v1043, 1.442695
      %v1142 = vpow.pop %v1141
      %v1143 = vmul.f32 %v1044, 1.442695
      %v1144 = vpow.pop %v1143
      %v1145 = vmul.f32 %v1045, 1.442695
      %v1146 = vpow.pop %v1145
      %v1147 = vmul.f32 %v1046, 1.442695
      %v1148 = vpow.pop %v1147
      %v1149 = vmul.f32 %v1047, 1.442695
      %v1150 = vpow.pop %v1149
      %v1151 = vmul.f32 %v1048, 1.442695
      %v1152 = vpow.pop %v1151
      %v1153 = vmul.f32 %v1049, 1.442695
      %v1154 = vpow.pop %v1153
      %v1155 = vmul.f32 %v1050, 1.442695
      %v1156 = vpow.pop %v1155
      %v1157 = vmul.f32 %v1051, 1.442695
      %v1158 = vpow.pop %v1157
      %v1159 = vmul.f32 %v1052, 1.442695
      %v1160 = vpow.pop %v1159
      %v1161 = vmul.f32 %v1053, 1.442695
      %v1162 = vpow.pop %v1161
      %v1163 = vmul.f32 %v1054, 1.442695
      %v1164 = vpow.pop %v1163
      %v1165 = vmul.f32 %v1055, 1.442695
      %v1166 = vpow.pop %v1165
      %v1167 = vmul.f32 %v1056, 1.442695
      %v1168 = vpow.pop %v1167
      %v1169 = vmul.f32 %v1057, 1.442695
      %v1170 = vpow.pop %v1169
      %v1171 = vmul.f32 %v1058, 1.442695
      %v1172 = vpow.pop %v1171
      %v1173 = vmul.f32 %v1059, 1.442695
      %v1174 = vpow.pop %v1173
      %v1175 = vmul.f32 %v1060, 1.442695
      %v1176 = vpow.pop %v1175
      %v1177 = vmul.f32 %v1061, 1.442695
      %v1178 = vpow.pop %v1177
      %v1179 = vmul.f32 %v1062, 1.442695
      %v1180 = vpow.pop %v1179
      %v1181 = vmul.f32 %v1063, 1.442695
      %v1182 = vpow.pop %v1181
      %v1183 = vmul.f32 %v1064, 1.442695
      %v1184 = vpow.pop %v1183
      %v1185 = vmul.f32 %v1065, 1.442695
      %v1186 = vpow.pop %v1185
      %v1187 = vmul.f32 %v1066, 1.442695
      %v1188 = vpow.pop %v1187
      %v1189 = vmul.f32 %v1067, 1.442695
      %v1190 = vpow.pop %v1189
      %v1191 = vmul.f32 %v1068, 1.442695
      %v1192 = vpow.pop %v1191
      %v1193 = vmul.f32 %v1069, 1.442695
      %v1194 = vpow.pop %v1193
      %v1195 = vmul.f32 %v1070, 1.442695
      %v1196 = vpow.pop %v1195
      %v1197 = vmul.f32 %v1071, 1.442695
      %v1198 = vpow.pop %v1197
      %v1199 = vmul.f32 %v1072, 1.442695
      %v1200 = vpow.pop %v1199
      %v1201 = vadd.f32 %v1074, %v1076
      %1202 = vadd.xlane.f32.xlu0 %v1201
      %v1203 = vpop.xlane.xlu0 %1202
      %v1204 = vadd.f32 %v1078, %v1080
      %1205 = vadd.xlane.f32.xlu0 %v1204
      %v1206 = vpop.xlane.xlu0 %1205
      %v1207 = vadd.f32 %v1082, %v1084
      %1208 = vadd.xlane.f32.xlu0 %v1207
      %v1209 = vpop.xlane.xlu0 %1208
      %v1210 = vadd.f32 %v1086, %v1088
      %1211 = vadd.xlane.f32.xlu0 %v1210
      %v1212 = vpop.xlane.xlu0 %1211
      %v1213 = vadd.f32 %v1090, %v1092
      %1214 = vadd.xlane.f32.xlu0 %v1213
      %v1215 = vpop.xlane.xlu0 %1214
      %v1216 = vadd.f32 %v1094, %v1096
      %1217 = vadd.xlane.f32.xlu0 %v1216
      %v1218 = vpop.xlane.xlu0 %1217
      %v1219 = vadd.f32 %v1098, %v1100
      %1220 = vadd.xlane.f32.xlu0 %v1219
      %v1221 = vpop.xlane.xlu0 %1220
      %v1222 = vadd.f32 %v1102, %v1104
      %1223 = vadd.xlane.f32.xlu0 %v1222
      %v1224 = vpop.xlane.xlu0 %1223
      %v1225 = vadd.f32 %v1106, %v1108
      %1226 = vadd.xlane.f32.xlu0 %v1225
      %v1227 = vpop.xlane.xlu0 %1226
      %v1228 = vadd.f32 %v1110, %v1112
      %1229 = vadd.xlane.f32.xlu0 %v1228
      %v1230 = vpop.xlane.xlu0 %1229
      %v1231 = vadd.f32 %v1114, %v1116
      %1232 = vadd.xlane.f32.xlu0 %v1231
      %v1233 = vpop.xlane.xlu0 %1232
      %v1234 = vadd.f32 %v1118, %v1120
      %1235 = vadd.xlane.f32.xlu0 %v1234
      %v1236 = vpop.xlane.xlu0 %1235
      %v1237 = vadd.f32 %v1122, %v1124
      %1238 = vadd.xlane.f32.xlu0 %v1237
      %v1239 = vpop.xlane.xlu0 %1238
      %v1240 = vadd.f32 %v1126, %v1128
      %1241 = vadd.xlane.f32.xlu0 %v1240
      %v1242 = vpop.xlane.xlu0 %1241
      %v1243 = vadd.f32 %v1130, %v1132
      %1244 = vadd.xlane.f32.xlu0 %v1243
      %v1245 = vpop.xlane.xlu0 %1244
      %v1246 = vadd.f32 %v1134, %v1136
      %1247 = vadd.xlane.f32.xlu0 %v1246
      %v1248 = vpop.xlane.xlu0 %1247
      %v1249 = vadd.f32 %v1138, %v1140
      %1250 = vadd.xlane.f32.xlu0 %v1249
      %v1251 = vpop.xlane.xlu0 %1250
      %v1252 = vadd.f32 %v1142, %v1144
      %1253 = vadd.xlane.f32.xlu0 %v1252
      %v1254 = vpop.xlane.xlu0 %1253
      %v1255 = vadd.f32 %v1146, %v1148
      %1256 = vadd.xlane.f32.xlu0 %v1255
      %v1257 = vpop.xlane.xlu0 %1256
      %v1258 = vadd.f32 %v1150, %v1152
      %1259 = vadd.xlane.f32.xlu0 %v1258
      %v1260 = vpop.xlane.xlu0 %1259
      %v1261 = vadd.f32 %v1154, %v1156
      %1262 = vadd.xlane.f32.xlu0 %v1261
      %v1263 = vpop.xlane.xlu0 %1262
      %v1264 = vadd.f32 %v1158, %v1160
      %1265 = vadd.xlane.f32.xlu0 %v1264
      %v1266 = vpop.xlane.xlu0 %1265
      %v1267 = vadd.f32 %v1162, %v1164
      %1268 = vadd.xlane.f32.xlu0 %v1267
      %v1269 = vpop.xlane.xlu0 %1268
      %v1270 = vadd.f32 %v1166, %v1168
      %1271 = vadd.xlane.f32.xlu0 %v1270
      %v1272 = vpop.xlane.xlu0 %1271
      %v1273 = vadd.f32 %v1170, %v1172
      %1274 = vadd.xlane.f32.xlu0 %v1273
      %v1275 = vpop.xlane.xlu0 %1274
      %v1276 = vadd.f32 %v1174, %v1176
      %1277 = vadd.xlane.f32.xlu0 %v1276
      %v1278 = vpop.xlane.xlu0 %1277
      %v1279 = vadd.f32 %v1178, %v1180
      %1280 = vadd.xlane.f32.xlu0 %v1279
      %v1281 = vpop.xlane.xlu0 %1280
      %v1282 = vadd.f32 %v1182, %v1184
      %1283 = vadd.xlane.f32.xlu0 %v1282
      %v1284 = vpop.xlane.xlu0 %1283
      %v1285 = vadd.f32 %v1186, %v1188
      %1286 = vadd.xlane.f32.xlu0 %v1285
      %v1287 = vpop.xlane.xlu0 %1286
      %v1288 = vadd.f32 %v1190, %v1192
      %1289 = vadd.xlane.f32.xlu0 %v1288
      %v1290 = vpop.xlane.xlu0 %1289
      %v1291 = vadd.f32 %v1194, %v1196
      %1292 = vadd.xlane.f32.xlu0 %v1291
      %v1293 = vpop.xlane.xlu0 %1292
      %v1294 = vadd.f32 %v1198, %v1200
      %1295 = vadd.xlane.f32.xlu0 %v1294
      %v1296 = vpop.xlane.xlu0 %1295
      %v1297 = vrcp.pop %v1203
      %v1298 = vrcp.pop %v1206
      %v1299 = vrcp.pop %v1209
      %v1300 = vrcp.pop %v1212
      %v1301 = vrcp.pop %v1215
      %v1302 = vrcp.pop %v1218
      %v1303 = vrcp.pop %v1221
      %v1304 = vrcp.pop %v1224
      %v1305 = vrcp.pop %v1227
      %v1306 = vrcp.pop %v1230
      %v1307 = vrcp.pop %v1233
      %v1308 = vrcp.pop %v1236
      %v1309 = vrcp.pop %v1239
      %v1310 = vrcp.pop %v1242
      %v1311 = vrcp.pop %v1245
      %v1312 = vrcp.pop %v1248
      %v1313 = vrcp.pop %v1251
      %v1314 = vrcp.pop %v1254
      %v1315 = vrcp.pop %v1257
      %v1316 = vrcp.pop %v1260
      %v1317 = vrcp.pop %v1263
      %v1318 = vrcp.pop %v1266
      %v1319 = vrcp.pop %v1269
      %v1320 = vrcp.pop %v1272
      %v1321 = vrcp.pop %v1275
      %v1322 = vrcp.pop %v1278
      %v1323 = vrcp.pop %v1281
      %v1324 = vrcp.pop %v1284
      %v1325 = vrcp.pop %v1287
      %v1326 = vrcp.pop %v1290
      %v1327 = vrcp.pop %v1293
      %v1328 = vrcp.pop %v1296
      %v1329 = vmul.f32 %v1074, %v1297
      %v1330 = vmul.f32 %v1076, %v1297
      %v1331 = vmul.f32 %v1078, %v1298
      %v1332 = vmul.f32 %v1080, %v1298
      %v1333 = vmul.f32 %v1082, %v1299
      %v1334 = vmul.f32 %v1084, %v1299
      %v1335 = vmul.f32 %v1086, %v1300
      %v1336 = vmul.f32 %v1088, %v1300
      %v1337 = vmul.f32 %v1090, %v1301
      %v1338 = vmul.f32 %v1092, %v1301
      %v1339 = vmul.f32 %v1094, %v1302
      %v1340 = vmul.f32 %v1096, %v1302
      %v1341 = vmul.f32 %v1098, %v1303
      %v1342 = vmul.f32 %v1100, %v1303
      %v1343 = vmul.f32 %v1102, %v1304
      %v1344 = vmul.f32 %v1104, %v1304
      %v1345 = vmul.f32 %v1106, %v1305
      %v1346 = vmul.f32 %v1108, %v1305
      %v1347 = vmul.f32 %v1110, %v1306
      %v1348 = vmul.f32 %v1112, %v1306
      %v1349 = vmul.f32 %v1114, %v1307
      %v1350 = vmul.f32 %v1116, %v1307
      %v1351 = vmul.f32 %v1118, %v1308
      %v1352 = vmul.f32 %v1120, %v1308
      %v1353 = vmul.f32 %v1122, %v1309
      %v1354 = vmul.f32 %v1124, %v1309
      %v1355 = vmul.f32 %v1126, %v1310
      %v1356 = vmul.f32 %v1128, %v1310
      %v1357 = vmul.f32 %v1130, %v1311
      %v1358 = vmul.f32 %v1132, %v1311
      %v1359 = vmul.f32 %v1134, %v1312
      %v1360 = vmul.f32 %v1136, %v1312
      %v1361 = vmul.f32 %v1138, %v1313
      %v1362 = vmul.f32 %v1140, %v1313
      %v1363 = vmul.f32 %v1142, %v1314
      %v1364 = vmul.f32 %v1144, %v1314
      %v1365 = vmul.f32 %v1146, %v1315
      %v1366 = vmul.f32 %v1148, %v1315
      %v1367 = vmul.f32 %v1150, %v1316
      %v1368 = vmul.f32 %v1152, %v1316
      %v1369 = vmul.f32 %v1154, %v1317
      %v1370 = vmul.f32 %v1156, %v1317
      %v1371 = vmul.f32 %v1158, %v1318
      %v1372 = vmul.f32 %v1160, %v1318
      %v1373 = vmul.f32 %v1162, %v1319
      %v1374 = vmul.f32 %v1164, %v1319
      %v1375 = vmul.f32 %v1166, %v1320
      %v1376 = vmul.f32 %v1168, %v1320
      %v1377 = vmul.f32 %v1170, %v1321
      %v1378 = vmul.f32 %v1172, %v1321
      %v1379 = vmul.f32 %v1174, %v1322
      %v1380 = vmul.f32 %v1176, %v1322
      %v1381 = vmul.f32 %v1178, %v1323
      %v1382 = vmul.f32 %v1180, %v1323
      %v1383 = vmul.f32 %v1182, %v1324
      %v1384 = vmul.f32 %v1184, %v1324
      %v1385 = vmul.f32 %v1186, %v1325
      %v1386 = vmul.f32 %v1188, %v1325
      %v1387 = vmul.f32 %v1190, %v1326
      %v1388 = vmul.f32 %v1192, %v1326
      %v1389 = vmul.f32 %v1194, %v1327
      %v1390 = vmul.f32 %v1196, %v1327
      %v1391 = vmul.f32 %v1198, %v1328
      %v1392 = vmul.f32 %v1200, %v1328
      %v1393 = vpack.c.bf16 %v1331, %v1329
      %v1394 = vpack.c.bf16 %v1332, %v1330
      %v1395 = vpack.c.bf16 %v1335, %v1333
      %v1396 = vpack.c.bf16 %v1336, %v1334
      %v1397 = vpack.c.bf16 %v1339, %v1337
      %v1398 = vpack.c.bf16 %v1340, %v1338
      %v1399 = vpack.c.bf16 %v1343, %v1341
      %v1400 = vpack.c.bf16 %v1344, %v1342
      %v1401 = vpack.c.bf16 %v1347, %v1345
      %v1402 = vpack.c.bf16 %v1348, %v1346
      %v1403 = vpack.c.bf16 %v1351, %v1349
      %v1404 = vpack.c.bf16 %v1352, %v1350
      %v1405 = vpack.c.bf16 %v1355, %v1353
      %v1406 = vpack.c.bf16 %v1356, %v1354
      %v1407 = vpack.c.bf16 %v1359, %v1357
      %v1408 = vpack.c.bf16 %v1360, %v1358
      %v1409 = vpack.c.bf16 %v1363, %v1361
      %v1410 = vpack.c.bf16 %v1364, %v1362
      %v1411 = vpack.c.bf16 %v1367, %v1365
      %v1412 = vpack.c.bf16 %v1368, %v1366
      %v1413 = vpack.c.bf16 %v1371, %v1369
      %v1414 = vpack.c.bf16 %v1372, %v1370
      %v1415 = vpack.c.bf16 %v1375, %v1373
      %v1416 = vpack.c.bf16 %v1376, %v1374
      %v1417 = vpack.c.bf16 %v1379, %v1377
      %v1418 = vpack.c.bf16 %v1380, %v1378
      %v1419 = vpack.c.bf16 %v1383, %v1381
      %v1420 = vpack.c.bf16 %v1384, %v1382
      %v1421 = vpack.c.bf16 %v1387, %v1385
      %v1422 = vpack.c.bf16 %v1388, %v1386
      %v1423 = vpack.c.bf16 %v1391, %v1389
      %v1424 = vpack.c.bf16 %v1392, %v1390
      %v1425 = vld [vmem:[%s383] sm:$0xf]
      %v1426 = vld [vmem:[%s383 + $0x4] sm:$0xf]
      %v1427 = vld [vmem:[%s383 + $0x8] sm:$0xf]
      %v1428 = vld [vmem:[%s383 + $0xc] sm:$0xf]
      %v1429 = vld [vmem:[%s383 + $0x10] sm:$0xf]
      %v1430 = vld [vmem:[%s383 + $0x14] sm:$0xf]
      %v1431 = vld [vmem:[%s383 + $0x18] sm:$0xf]
      %v1432 = vld [vmem:[%s383 + $0x1c] sm:$0xf]
      %v1433 = vld [vmem:[%s383 + $0x20] sm:$0xf]
      %v1434 = vld [vmem:[%s383 + $0x24] sm:$0xf]
      %v1435 = vld [vmem:[%s383 + $0x28] sm:$0xf]
      %v1436 = vld [vmem:[%s383 + $0x2c] sm:$0xf]
      %v1437 = vld [vmem:[%s383 + $0x30] sm:$0xf]
      %v1438 = vld [vmem:[%s383 + $0x34] sm:$0xf]
      %v1439 = vld [vmem:[%s383 + $0x38] sm:$0xf]
      %v1440 = vld [vmem:[%s383 + $0x3c] sm:$0xf]
      %v1441 = vld [vmem:[%s383 + $0x40] sm:$0xf]
      %v1442 = vld [vmem:[%s383 + $0x44] sm:$0xf]
      %v1443 = vld [vmem:[%s383 + $0x48] sm:$0xf]
      %v1444 = vld [vmem:[%s383 + $0x4c] sm:$0xf]
      %v1445 = vld [vmem:[%s383 + $0x50] sm:$0xf]
      %v1446 = vld [vmem:[%s383 + $0x54] sm:$0xf]
      %v1447 = vld [vmem:[%s383 + $0x58] sm:$0xf]
      %v1448 = vld [vmem:[%s383 + $0x5c] sm:$0xf]
      %v1449 = vld [vmem:[%s383 + $0x60] sm:$0xf]
      %v1450 = vld [vmem:[%s383 + $0x64] sm:$0xf]
      %v1451 = vld [vmem:[%s383 + $0x68] sm:$0xf]
      %v1452 = vld [vmem:[%s383 + $0x6c] sm:$0xf]
      %v1453 = vld [vmem:[%s383 + $0x70] sm:$0xf]
      %v1454 = vld [vmem:[%s383 + $0x74] sm:$0xf]
      %v1455 = vld [vmem:[%s383 + $0x78] sm:$0xf]
      %v1456 = vld [vmem:[%s383 + $0x7c] sm:$0xf]
      %v1489 = vunpack.c.l.b16 %v1425
      %v1490 = vunpack.c.l.b16 %v1426
      %v1491 = vunpack.c.l.b16 %v1427
      %v1492 = vunpack.c.l.b16 %v1428
      %v1493 = vunpack.c.l.b16 %v1429
      %v1494 = vunpack.c.l.b16 %v1430
      %v1495 = vunpack.c.l.b16 %v1431
      %v1496 = vunpack.c.l.b16 %v1432
      %v1497 = vunpack.c.l.b16 %v1433
      %v1498 = vunpack.c.l.b16 %v1434
      %v1499 = vunpack.c.l.b16 %v1435
      %v1500 = vunpack.c.l.b16 %v1436
      %v1501 = vunpack.c.l.b16 %v1437
      %v1502 = vunpack.c.l.b16 %v1438
      %v1503 = vunpack.c.l.b16 %v1439
      %v1504 = vunpack.c.l.b16 %v1440
      %v1505 = vunpack.c.l.b16 %v1441
      %v1506 = vunpack.c.l.b16 %v1442
      %v1507 = vunpack.c.l.b16 %v1443
      %v1508 = vunpack.c.l.b16 %v1444
      %v1509 = vunpack.c.l.b16 %v1445
      %v1510 = vunpack.c.l.b16 %v1446
      %v1511 = vunpack.c.l.b16 %v1447
      %v1512 = vunpack.c.l.b16 %v1448
      %v1513 = vunpack.c.l.b16 %v1449
      %v1514 = vunpack.c.l.b16 %v1450
      %v1515 = vunpack.c.l.b16 %v1451
      %v1516 = vunpack.c.l.b16 %v1452
      %v1517 = vunpack.c.l.b16 %v1453
      %v1518 = vunpack.c.l.b16 %v1454
      %v1519 = vunpack.c.l.b16 %v1455
      %v1520 = vunpack.c.l.b16 %v1456
      %v1521 = vpack.c.b16 %v1490, %v1489
      %v1522 = vpack.c.b16 %v1492, %v1491
      %v1523 = vpack.c.b16 %v1494, %v1493
      %v1524 = vpack.c.b16 %v1496, %v1495
      %v1525 = vpack.c.b16 %v1498, %v1497
      %v1526 = vpack.c.b16 %v1500, %v1499
      %v1527 = vpack.c.b16 %v1502, %v1501
      %v1528 = vpack.c.b16 %v1504, %v1503
      %v1529 = vpack.c.b16 %v1506, %v1505
      %v1530 = vpack.c.b16 %v1508, %v1507
      %v1531 = vpack.c.b16 %v1510, %v1509
      %v1532 = vpack.c.b16 %v1512, %v1511
      %v1533 = vpack.c.b16 %v1514, %v1513
      %v1534 = vpack.c.b16 %v1516, %v1515
      %v1535 = vpack.c.b16 %v1518, %v1517
      %v1536 = vpack.c.b16 %v1520, %v1519
      %1553 = vmatprep.subr.bf16.mxu0 0
      %1554 = vmatpush1.bf16.msra.mxu0 %v1521
      %1555 = vmatprep.subr.bf16.mxu0 0
      %1556 = vmatpush1.bf16.msra.mxu0 %v1522
      %1557 = vmatprep.subr.bf16.mxu0 0
      %1558 = vmatpush1.bf16.msra.mxu0 %v1523
      %1559 = vmatprep.subr.bf16.mxu0 0
      %1560 = vmatpush1.bf16.msra.mxu0 %v1524
      %1561 = vmatprep.subr.bf16.mxu0 0
      %1562 = vmatpush1.bf16.msra.mxu0 %v1525
      %1563 = vmatprep.subr.bf16.mxu0 0
      %1564 = vmatpush1.bf16.msra.mxu0 %v1526
      %1565 = vmatprep.subr.bf16.mxu0 0
      %1566 = vmatpush1.bf16.msra.mxu0 %v1527
      %1567 = vmatprep.subr.bf16.mxu0 0
      %1568 = vmatpush1.bf16.msra.mxu0 %v1528
      %1569 = vmatprep.subr.bf16.mxu0 0
      %1570 = vmatpush1.bf16.msra.mxu0 %v1529
      %1571 = vmatprep.subr.bf16.mxu0 0
      %1572 = vmatpush1.bf16.msra.mxu0 %v1530
      %1573 = vmatprep.subr.bf16.mxu0 0
      %1574 = vmatpush1.bf16.msra.mxu0 %v1531
      %1575 = vmatprep.subr.bf16.mxu0 0
      %1576 = vmatpush1.bf16.msra.mxu0 %v1532
      %1577 = vmatprep.subr.bf16.mxu0 0
      %1578 = vmatpush1.bf16.msra.mxu0 %v1533
      %1579 = vmatprep.subr.bf16.mxu0 0
      %1580 = vmatpush1.bf16.msra.mxu0 %v1534
      %1581 = vmatprep.subr.bf16.mxu0 0
      %1582 = vmatpush1.bf16.msra.mxu0 %v1535
      %1583 = vmatprep.subr.bf16.mxu0 0
      %1584 = vmatpush1.bf16.msra.mxu0 %v1536
      %1585 = vmatprep.mubr.bf16.mxu0 %v1394
      %1586 = vmatmul.mubr.bf16.gmra.mrb[0].mxu0 %v1393
      %v1587 = vpop.f32.mrb[0].mxu0
      %v1588 = vadd.f32 0.0, %v1587
      %v1589 = vpop.f32.mrb[0].mxu0
      %v1590 = vpop.f32.mrb[0].mxu0
      %v1591 = vadd.f32 0.0, %v1590
      %v1592 = vpop.f32.mrb[0].mxu0
      %1593 = vmatprep.mubr.bf16.mxu0 %v1396
      %1594 = vmatmul.mubr.bf16.gmra.mrb[0].mxu0 %v1395
      %v1595 = vpop.f32.mrb[0].mxu0
      %v1596 = vadd.f32 0.0, %v1595
      %v1597 = vpop.f32.mrb[0].mxu0
      %v1598 = vpop.f32.mrb[0].mxu0
      %v1599 = vadd.f32 0.0, %v1598
      %v1600 = vpop.f32.mrb[0].mxu0
      %1601 = vmatprep.mubr.bf16.mxu0 %v1398
      %1602 = vmatmul.mubr.bf16.gmra.mrb[0].mxu0 %v1397
      %v1603 = vpop.f32.mrb[0].mxu0
      %v1604 = vadd.f32 0.0, %v1603
      %v1605 = vpop.f32.mrb[0].mxu0
      %v1606 = vpop.f32.mrb[0].mxu0
      %v1607 = vadd.f32 0.0, %v1606
      %v1608 = vpop.f32.mrb[0].mxu0
      %1609 = vmatprep.mubr.bf16.mxu0 %v1400
      %1610 = vmatmul.mubr.bf16.gmra.mrb[0].mxu0 %v1399
      %v1611 = vpop.f32.mrb[0].mxu0
      %v1612 = vadd.f32 0.0, %v1611
      %v1613 = vpop.f32.mrb[0].mxu0
      %v1614 = vpop.f32.mrb[0].mxu0
      %v1615 = vadd.f32 0.0, %v1614
      %v1616 = vpop.f32.mrb[0].mxu0
      %1617 = vmatprep.mubr.bf16.mxu0 %v1402
      %1618 = vmatmul.mubr.bf16.gmra.mrb[0].mxu0 %v1401
      %v1619 = vpop.f32.mrb[0].mxu0
      %v1620 = vadd.f32 0.0, %v1619
      %v1621 = vpop.f32.mrb[0].mxu0
      %v1622 = vpop.f32.mrb[0].mxu0
      %v1623 = vadd.f32 0.0, %v1622
      %v1624 = vpop.f32.mrb[0].mxu0
      %1625 = vmatprep.mubr.bf16.mxu0 %v1404
      %1626 = vmatmul.mubr.bf16.gmra.mrb[0].mxu0 %v1403
      %v1627 = vpop.f32.mrb[0].mxu0
      %v1628 = vadd.f32 0.0, %v1627
      %v1629 = vpop.f32.mrb[0].mxu0
      %v1630 = vpop.f32.mrb[0].mxu0
      %v1631 = vadd.f32 0.0, %v1630
      %v1632 = vpop.f32.mrb[0].mxu0
      %1633 = vmatprep.mubr.bf16.mxu0 %v1406
      %1634 = vmatmul.mubr.bf16.gmra.mrb[0].mxu0 %v1405
      %v1635 = vpop.f32.mrb[0].mxu0
      %v1636 = vadd.f32 0.0, %v1635
      %v1637 = vpop.f32.mrb[0].mxu0
      %v1638 = vpop.f32.mrb[0].mxu0
      %v1639 = vadd.f32 0.0, %v1638
      %v1640 = vpop.f32.mrb[0].mxu0
      %1641 = vmatprep.mubr.bf16.mxu0 %v1408
      %1642 = vmatmul.mubr.bf16.gmra.mrb[0].mxu0 %v1407
      %v1643 = vpop.f32.mrb[0].mxu0
      %v1644 = vadd.f32 0.0, %v1643
      %v1645 = vpop.f32.mrb[0].mxu0
      %v1646 = vpop.f32.mrb[0].mxu0
      %v1647 = vadd.f32 0.0, %v1646
      %v1648 = vpop.f32.mrb[0].mxu0
      %1649 = vmatprep.mubr.bf16.mxu0 %v1410
      %1650 = vmatmul.mubr.bf16.gmra.mrb[0].mxu0 %v1409
      %v1651 = vpop.f32.mrb[0].mxu0
      %v1652 = vadd.f32 0.0, %v1651
      %v1653 = vpop.f32.mrb[0].mxu0
      %v1654 = vpop.f32.mrb[0].mxu0
      %v1655 = vadd.f32 0.0, %v1654
      %v1656 = vpop.f32.mrb[0].mxu0
      %1657 = vmatprep.mubr.bf16.mxu0 %v1412
      %1658 = vmatmul.mubr.bf16.gmra.mrb[0].mxu0 %v1411
      %v1659 = vpop.f32.mrb[0].mxu0
      %v1660 = vadd.f32 0.0, %v1659
      %v1661 = vpop.f32.mrb[0].mxu0
      %v1662 = vpop.f32.mrb[0].mxu0
      %v1663 = vadd.f32 0.0, %v1662
      %v1664 = vpop.f32.mrb[0].mxu0
      %1665 = vmatprep.mubr.bf16.mxu0 %v1414
      %1666 = vmatmul.mubr.bf16.gmra.mrb[0].mxu0 %v1413
      %v1667 = vpop.f32.mrb[0].mxu0
      %v1668 = vadd.f32 0.0, %v1667
      %v1669 = vpop.f32.mrb[0].mxu0
      %v1670 = vpop.f32.mrb[0].mxu0
      %v1671 = vadd.f32 0.0, %v1670
      %v1672 = vpop.f32.mrb[0].mxu0
      %1673 = vmatprep.mubr.bf16.mxu0 %v1416
      %1674 = vmatmul.mubr.bf16.gmra.mrb[0].mxu0 %v1415
      %v1675 = vpop.f32.mrb[0].mxu0
      %v1676 = vadd.f32 0.0, %v1675
      %v1677 = vpop.f32.mrb[0].mxu0
      %v1678 = vpop.f32.mrb[0].mxu0
      %v1679 = vadd.f32 0.0, %v1678
      %v1680 = vpop.f32.mrb[0].mxu0
      %1681 = vmatprep.mubr.bf16.mxu0 %v1418
      %1682 = vmatmul.mubr.bf16.gmra.mrb[0].mxu0 %v1417
      %v1683 = vpop.f32.mrb[0].mxu0
      %v1684 = vadd.f32 0.0, %v1683
      %v1685 = vpop.f32.mrb[0].mxu0
      %v1686 = vpop.f32.mrb[0].mxu0
      %v1687 = vadd.f32 0.0, %v1686
      %v1688 = vpop.f32.mrb[0].mxu0
      %1689 = vmatprep.mubr.bf16.mxu0 %v1420
      %1690 = vmatmul.mubr.bf16.gmra.mrb[0].mxu0 %v1419
      %v1691 = vpop.f32.mrb[0].mxu0
      %v1692 = vadd.f32 0.0, %v1691
      %v1693 = vpop.f32.mrb[0].mxu0
      %v1694 = vpop.f32.mrb[0].mxu0
      %v1695 = vadd.f32 0.0, %v1694
      %v1696 = vpop.f32.mrb[0].mxu0
      %1697 = vmatprep.mubr.bf16.mxu0 %v1422
      %1698 = vmatmul.mubr.bf16.gmra.mrb[0].mxu0 %v1421
      %v1699 = vpop.f32.mrb[0].mxu0
      %v1700 = vadd.f32 0.0, %v1699
      %v1701 = vpop.f32.mrb[0].mxu0
      %v1702 = vpop.f32.mrb[0].mxu0
      %v1703 = vadd.f32 0.0, %v1702
      %v1704 = vpop.f32.mrb[0].mxu0
      %1705 = vmatprep.mubr.bf16.mxu0 %v1424
      %1706 = vmatmul.mubr.bf16.gmra.mrb[0].mxu0 %v1423
      %v1707 = vpop.f32.mrb[0].mxu0
      %v1708 = vadd.f32 0.0, %v1707
      %v1709 = vpop.f32.mrb[0].mxu0
      %v1710 = vpop.f32.mrb[0].mxu0
      %v1711 = vadd.f32 0.0, %v1710
      %v1712 = vpop.f32.mrb[0].mxu0
      %1713 = vdwg.mxu0
      %v1714 = vld [vmem:[%s372] sm:$0xf]
      %v1715 = vld [vmem:[%s372 + $0x4] sm:$0xf]
      %v1716 = vld [vmem:[%s372 + $0x8] sm:$0xf]
      %v1717 = vld [vmem:[%s372 + $0xc] sm:$0xf]
      %v1718 = vld [vmem:[%s372 + $0x10] sm:$0xf]
      %v1719 = vld [vmem:[%s372 + $0x14] sm:$0xf]
      %v1720 = vld [vmem:[%s372 + $0x18] sm:$0xf]
      %v1721 = vld [vmem:[%s372 + $0x1c] sm:$0xf]
      %v1722 = vld [vmem:[%s372 + $0x20] sm:$0xf]
      %v1723 = vld [vmem:[%s372 + $0x24] sm:$0xf]
      %v1724 = vld [vmem:[%s372 + $0x28] sm:$0xf]
      %v1725 = vld [vmem:[%s372 + $0x2c] sm:$0xf]
      %v1726 = vld [vmem:[%s372 + $0x30] sm:$0xf]
      %v1727 = vld [vmem:[%s372 + $0x34] sm:$0xf]
      %v1728 = vld [vmem:[%s372 + $0x38] sm:$0xf]
      %v1729 = vld [vmem:[%s372 + $0x3c] sm:$0xf]
      %v1730 = vld [vmem:[%s372 + $0x40] sm:$0xf]
      %v1731 = vld [vmem:[%s372 + $0x44] sm:$0xf]
      %v1732 = vld [vmem:[%s372 + $0x48] sm:$0xf]
      %v1733 = vld [vmem:[%s372 + $0x4c] sm:$0xf]
      %v1734 = vld [vmem:[%s372 + $0x50] sm:$0xf]
      %v1735 = vld [vmem:[%s372 + $0x54] sm:$0xf]
      %v1736 = vld [vmem:[%s372 + $0x58] sm:$0xf]
      %v1737 = vld [vmem:[%s372 + $0x5c] sm:$0xf]
      %v1738 = vld [vmem:[%s372 + $0x60] sm:$0xf]
      %v1739 = vld [vmem:[%s372 + $0x64] sm:$0xf]
      %v1740 = vld [vmem:[%s372 + $0x68] sm:$0xf]
      %v1741 = vld [vmem:[%s372 + $0x6c] sm:$0xf]
      %v1742 = vld [vmem:[%s372 + $0x70] sm:$0xf]
      %v1743 = vld [vmem:[%s372 + $0x74] sm:$0xf]
      %v1744 = vld [vmem:[%s372 + $0x78] sm:$0xf]
      %v1745 = vld [vmem:[%s372 + $0x7c] sm:$0xf]
      %v1746 = vld [vmem:[%s4] sm:$0xf]
      %v1747 = vld [vmem:[%s4 + $0x4] sm:$0xf]
      %v1748 = vld [vmem:[%s4 + $0x8] sm:$0xf]
      %v1749 = vld [vmem:[%s4 + $0xc] sm:$0xf]
      %v1750 = vld [vmem:[%s4 + $0x10] sm:$0xf]
      %v1751 = vld [vmem:[%s4 + $0x14] sm:$0xf]
      %v1752 = vld [vmem:[%s4 + $0x18] sm:$0xf]
      %v1753 = vld [vmem:[%s4 + $0x1c] sm:$0xf]
      %v1754 = vld [vmem:[%s4 + $0x20] sm:$0xf]
      %v1755 = vld [vmem:[%s4 + $0x24] sm:$0xf]
      %v1756 = vld [vmem:[%s4 + $0x28] sm:$0xf]
      %v1757 = vld [vmem:[%s4 + $0x2c] sm:$0xf]
      %v1758 = vld [vmem:[%s4 + $0x30] sm:$0xf]
      %v1759 = vld [vmem:[%s4 + $0x34] sm:$0xf]
      %v1760 = vld [vmem:[%s4 + $0x38] sm:$0xf]
      %v1761 = vld [vmem:[%s4 + $0x3c] sm:$0xf]
      %v1762 = vpack.c.bf16 %v1591, %v1588
      %v1763 = vpack.c.bf16 %v1599, %v1596
      %v1764 = vpack.c.bf16 %v1607, %v1604
      %v1765 = vpack.c.bf16 %v1615, %v1612
      %v1766 = vpack.c.bf16 %v1623, %v1620
      %v1767 = vpack.c.bf16 %v1631, %v1628
      %v1768 = vpack.c.bf16 %v1639, %v1636
      %v1769 = vpack.c.bf16 %v1647, %v1644
      %v1770 = vpack.c.bf16 %v1655, %v1652
      %v1771 = vpack.c.bf16 %v1663, %v1660
      %v1772 = vpack.c.bf16 %v1671, %v1668
      %v1773 = vpack.c.bf16 %v1679, %v1676
      %v1774 = vpack.c.bf16 %v1687, %v1684
      %v1775 = vpack.c.bf16 %v1695, %v1692
      %v1776 = vpack.c.bf16 %v1703, %v1700
      %v1777 = vpack.c.bf16 %v1711, %v1708
      %v1778 = vld [vmem:[%s5] sm:$0xf]
      %v1779 = vld [vmem:[%s5 + $0x4] sm:$0xf]
      %v1780 = vld [vmem:[%s5 + $0x8] sm:$0xf]
      %v1781 = vld [vmem:[%s5 + $0xc] sm:$0xf]
      %v1782 = vld [vmem:[%s5 + $0x10] sm:$0xf]
      %v1783 = vld [vmem:[%s5 + $0x14] sm:$0xf]
      %v1784 = vld [vmem:[%s5 + $0x18] sm:$0xf]
      %v1785 = vld [vmem:[%s5 + $0x1c] sm:$0xf]
      %v1786 = vld [vmem:[%s5 + $0x20] sm:$0xf]
      %v1787 = vld [vmem:[%s5 + $0x24] sm:$0xf]
      %v1788 = vld [vmem:[%s5 + $0x28] sm:$0xf]
      %v1789 = vld [vmem:[%s5 + $0x2c] sm:$0xf]
      %v1790 = vld [vmem:[%s5 + $0x30] sm:$0xf]
      %v1791 = vld [vmem:[%s5 + $0x34] sm:$0xf]
      %v1792 = vld [vmem:[%s5 + $0x38] sm:$0xf]
      %v1793 = vld [vmem:[%s5 + $0x3c] sm:$0xf]
      %v1810 = vunpack.c.l.b16 %v1778
      %v1811 = vunpack.c.l.b16 %v1779
      %v1812 = vunpack.c.l.b16 %v1780
      %v1813 = vunpack.c.l.b16 %v1781
      %v1814 = vunpack.c.l.b16 %v1782
      %v1815 = vunpack.c.l.b16 %v1783
      %v1816 = vunpack.c.l.b16 %v1784
      %v1817 = vunpack.c.l.b16 %v1785
      %v1818 = vunpack.c.l.b16 %v1786
      %v1819 = vunpack.c.l.b16 %v1787
      %v1820 = vunpack.c.l.b16 %v1788
      %v1821 = vunpack.c.l.b16 %v1789
      %v1822 = vunpack.c.l.b16 %v1790
      %v1823 = vunpack.c.l.b16 %v1791
      %v1824 = vunpack.c.l.b16 %v1792
      %v1825 = vunpack.c.l.b16 %v1793
      %v1826 = vpack.c.b16 %v1811, %v1810
      %v1827 = vpack.c.b16 %v1813, %v1812
      %v1828 = vpack.c.b16 %v1815, %v1814
      %v1829 = vpack.c.b16 %v1817, %v1816
      %v1830 = vpack.c.b16 %v1819, %v1818
      %v1831 = vpack.c.b16 %v1821, %v1820
      %v1832 = vpack.c.b16 %v1823, %v1822
      %v1833 = vpack.c.b16 %v1825, %v1824
      %1842 = vmatprep.subr.bf16.mxu0 0
      %1843 = vmatpush1.bf16.msra.mxu0 %v1826
      %1844 = vmatprep.subr.bf16.mxu0 0
      %1845 = vmatpush1.bf16.msra.mxu0 %v1827
      %1846 = vmatprep.subr.bf16.mxu0 0
      %1847 = vmatpush1.bf16.msra.mxu0 %v1828
      %1848 = vmatprep.subr.bf16.mxu0 0
      %1849 = vmatpush1.bf16.msra.mxu0 %v1829
      %1850 = vmatprep.subr.bf16.mxu0 0
      %1851 = vmatpush1.bf16.msra.mxu0 %v1830
      %1852 = vmatprep.subr.bf16.mxu0 0
      %1853 = vmatpush1.bf16.msra.mxu0 %v1831
      %1854 = vmatprep.subr.bf16.mxu0 0
      %1855 = vmatpush1.bf16.msra.mxu0 %v1832
      %1856 = vmatprep.subr.bf16.mxu0 0
      %1857 = vmatpush1.bf16.msra.mxu0 %v1833
      %1858 = vmatprep.subr.bf16.mxu0 0
      %1859 = vmatpush1.bf16.msra.mxu0 0
      %1860 = vmatprep.subr.bf16.mxu0 0
      %1861 = vmatpush1.bf16.msra.mxu0 0
      %1862 = vmatprep.subr.bf16.mxu0 0
      %1863 = vmatpush1.bf16.msra.mxu0 0
      %1864 = vmatprep.subr.bf16.mxu0 0
      %1865 = vmatpush1.bf16.msra.mxu0 0
      %1866 = vmatprep.subr.bf16.mxu0 0
      %1867 = vmatpush1.bf16.msra.mxu0 0
      %1868 = vmatprep.subr.bf16.mxu0 0
      %1869 = vmatpush1.bf16.msra.mxu0 0
      %1870 = vmatprep.subr.bf16.mxu0 0
      %1871 = vmatpush1.bf16.msra.mxu0 0
      %1872 = vmatprep.subr.bf16.mxu0 0
      %1873 = vmatpush1.bf16.msra.mxu0 0
      %1874 = vmatprep.mubr.bf16.mxu0 0
      %1875 = vmatmul.mubr.bf16.gmra.mrb[0].mxu0 %v1762
      %v1876 = vpop.f32.mrb[0].mxu0
      %v1877 = vadd.f32 0.0, %v1876
      %v1878 = vpop.f32.mrb[0].mxu0
      %v1879 = vpop.f32.mrb[0].mxu0
      %v1880 = vadd.f32 0.0, %v1879
      %v1881 = vpop.f32.mrb[0].mxu0
      %1882 = vmatprep.mubr.bf16.mxu0 0
      %1883 = vmatmul.mubr.bf16.gmra.mrb[0].mxu0 %v1763
      %v1884 = vpop.f32.mrb[0].mxu0
      %v1885 = vadd.f32 0.0, %v1884
      %v1886 = vpop.f32.mrb[0].mxu0
      %v1887 = vpop.f32.mrb[0].mxu0
      %v1888 = vadd.f32 0.0, %v1887
      %v1889 = vpop.f32.mrb[0].mxu0
      %1890 = vmatprep.mubr.bf16.mxu0 0
      %1891 = vmatmul.mubr.bf16.gmra.mrb[0].mxu0 %v1764
      %v1892 = vpop.f32.mrb[0].mxu0
      %v1893 = vadd.f32 0.0, %v1892
      %v1894 = vpop.f32.mrb[0].mxu0
      %v1895 = vpop.f32.mrb[0].mxu0
      %v1896 = vadd.f32 0.0, %v1895
      %v1897 = vpop.f32.mrb[0].mxu0
      %1898 = vmatprep.mubr.bf16.mxu0 0
      %1899 = vmatmul.mubr.bf16.gmra.mrb[0].mxu0 %v1765
      %v1900 = vpop.f32.mrb[0].mxu0
      %v1901 = vadd.f32 0.0, %v1900
      %v1902 = vpop.f32.mrb[0].mxu0
      %v1903 = vpop.f32.mrb[0].mxu0
      %v1904 = vadd.f32 0.0, %v1903
      %v1905 = vpop.f32.mrb[0].mxu0
      %1906 = vmatprep.mubr.bf16.mxu0 0
      %1907 = vmatmul.mubr.bf16.gmra.mrb[0].mxu0 %v1766
      %v1908 = vpop.f32.mrb[0].mxu0
      %v1909 = vadd.f32 0.0, %v1908
      %v1910 = vpop.f32.mrb[0].mxu0
      %v1911 = vpop.f32.mrb[0].mxu0
      %v1912 = vadd.f32 0.0, %v1911
      %v1913 = vpop.f32.mrb[0].mxu0
      %1914 = vmatprep.mubr.bf16.mxu0 0
      %1915 = vmatmul.mubr.bf16.gmra.mrb[0].mxu0 %v1767
      %v1916 = vpop.f32.mrb[0].mxu0
      %v1917 = vadd.f32 0.0, %v1916
      %v1918 = vpop.f32.mrb[0].mxu0
      %v1919 = vpop.f32.mrb[0].mxu0
      %v1920 = vadd.f32 0.0, %v1919
      %v1921 = vpop.f32.mrb[0].mxu0
      %1922 = vmatprep.mubr.bf16.mxu0 0
      %1923 = vmatmul.mubr.bf16.gmra.mrb[0].mxu0 %v1768
      %v1924 = vpop.f32.mrb[0].mxu0
      %v1925 = vadd.f32 0.0, %v1924
      %v1926 = vpop.f32.mrb[0].mxu0
      %v1927 = vpop.f32.mrb[0].mxu0
      %v1928 = vadd.f32 0.0, %v1927
      %v1929 = vpop.f32.mrb[0].mxu0
      %1930 = vmatprep.mubr.bf16.mxu0 0
      %1931 = vmatmul.mubr.bf16.gmra.mrb[0].mxu0 %v1769
      %v1932 = vpop.f32.mrb[0].mxu0
      %v1933 = vadd.f32 0.0, %v1932
      %v1934 = vpop.f32.mrb[0].mxu0
      %v1935 = vpop.f32.mrb[0].mxu0
      %v1936 = vadd.f32 0.0, %v1935
      %v1937 = vpop.f32.mrb[0].mxu0
      %1938 = vmatprep.mubr.bf16.mxu0 0
      %1939 = vmatmul.mubr.bf16.gmra.mrb[0].mxu0 %v1770
      %v1940 = vpop.f32.mrb[0].mxu0
      %v1941 = vadd.f32 0.0, %v1940
      %v1942 = vpop.f32.mrb[0].mxu0
      %v1943 = vpop.f32.mrb[0].mxu0
      %v1944 = vadd.f32 0.0, %v1943
      %v1945 = vpop.f32.mrb[0].mxu0
      %1946 = vmatprep.mubr.bf16.mxu0 0
      %1947 = vmatmul.mubr.bf16.gmra.mrb[0].mxu0 %v1771
      %v1948 = vpop.f32.mrb[0].mxu0
      %v1949 = vadd.f32 0.0, %v1948
      %v1950 = vpop.f32.mrb[0].mxu0
      %v1951 = vpop.f32.mrb[0].mxu0
      %v1952 = vadd.f32 0.0, %v1951
      %v1953 = vpop.f32.mrb[0].mxu0
      %1954 = vmatprep.mubr.bf16.mxu0 0
      %1955 = vmatmul.mubr.bf16.gmra.mrb[0].mxu0 %v1772
      %v1956 = vpop.f32.mrb[0].mxu0
      %v1957 = vadd.f32 0.0, %v1956
      %v1958 = vpop.f32.mrb[0].mxu0
      %v1959 = vpop.f32.mrb[0].mxu0
      %v1960 = vadd.f32 0.0, %v1959
      %v1961 = vpop.f32.mrb[0].mxu0
      %1962 = vmatprep.mubr.bf16.mxu0 0
      %1963 = vmatmul.mubr.bf16.gmra.mrb[0].mxu0 %v1773
      %v1964 = vpop.f32.mrb[0].mxu0
      %v1965 = vadd.f32 0.0, %v1964
      %v1966 = vpop.f32.mrb[0].mxu0
      %v1967 = vpop.f32.mrb[0].mxu0
      %v1968 = vadd.f32 0.0, %v1967
      %v1969 = vpop.f32.mrb[0].mxu0
      %1970 = vmatprep.mubr.bf16.mxu0 0
      %1971 = vmatmul.mubr.bf16.gmra.mrb[0].mxu0 %v1774
      %v1972 = vpop.f32.mrb[0].mxu0
      %v1973 = vadd.f32 0.0, %v1972
      %v1974 = vpop.f32.mrb[0].mxu0
      %v1975 = vpop.f32.mrb[0].mxu0
      %v1976 = vadd.f32 0.0, %v1975
      %v1977 = vpop.f32.mrb[0].mxu0
      %1978 = vmatprep.mubr.bf16.mxu0 0
      %1979 = vmatmul.mubr.bf16.gmra.mrb[0].mxu0 %v1775
      %v1980 = vpop.f32.mrb[0].mxu0
      %v1981 = vadd.f32 0.0, %v1980
      %v1982 = vpop.f32.mrb[0].mxu0
      %v1983 = vpop.f32.mrb[0].mxu0
      %v1984 = vadd.f32 0.0, %v1983
      %v1985 = vpop.f32.mrb[0].mxu0
      %1986 = vmatprep.mubr.bf16.mxu0 0
      %1987 = vmatmul.mubr.bf16.gmra.mrb[0].mxu0 %v1776
      %v1988 = vpop.f32.mrb[0].mxu0
      %v1989 = vadd.f32 0.0, %v1988
      %v1990 = vpop.f32.mrb[0].mxu0
      %v1991 = vpop.f32.mrb[0].mxu0
      %v1992 = vadd.f32 0.0, %v1991
      %v1993 = vpop.f32.mrb[0].mxu0
      %1994 = vmatprep.mubr.bf16.mxu0 0
      %1995 = vmatmul.mubr.bf16.gmra.mrb[0].mxu0 %v1777
      %v1996 = vpop.f32.mrb[0].mxu0
      %v1997 = vadd.f32 0.0, %v1996
      %v1998 = vpop.f32.mrb[0].mxu0
      %v1999 = vpop.f32.mrb[0].mxu0
      %v2000 = vadd.f32 0.0, %v1999
      %v2001 = vpop.f32.mrb[0].mxu0
      %2002 = vdwg.mxu0
      %v2035 = vunpack.c.l.b16 %v1714
      %v2036 = vunpack.c.l.b16 %v1715
      %v2037 = vunpack.c.l.b16 %v1716
      %v2038 = vunpack.c.l.b16 %v1717
      %v2039 = vunpack.c.l.b16 %v1718
      %v2040 = vunpack.c.l.b16 %v1719
      %v2041 = vunpack.c.l.b16 %v1720
      %v2042 = vunpack.c.l.b16 %v1721
      %v2043 = vunpack.c.l.b16 %v1722
      %v2044 = vunpack.c.l.b16 %v1723
      %v2045 = vunpack.c.l.b16 %v1724
      %v2046 = vunpack.c.l.b16 %v1725
      %v2047 = vunpack.c.l.b16 %v1726
      %v2048 = vunpack.c.l.b16 %v1727
      %v2049 = vunpack.c.l.b16 %v1728
      %v2050 = vunpack.c.l.b16 %v1729
      %v2051 = vunpack.c.l.b16 %v1730
      %v2052 = vunpack.c.l.b16 %v1731
      %v2053 = vunpack.c.l.b16 %v1732
      %v2054 = vunpack.c.l.b16 %v1733
      %v2055 = vunpack.c.l.b16 %v1734
      %v2056 = vunpack.c.l.b16 %v1735
      %v2057 = vunpack.c.l.b16 %v1736
      %v2058 = vunpack.c.l.b16 %v1737
      %v2059 = vunpack.c.l.b16 %v1738
      %v2060 = vunpack.c.l.b16 %v1739
      %v2061 = vunpack.c.l.b16 %v1740
      %v2062 = vunpack.c.l.b16 %v1741
      %v2063 = vunpack.c.l.b16 %v1742
      %v2064 = vunpack.c.l.b16 %v1743
      %v2065 = vunpack.c.l.b16 %v1744
      %v2066 = vunpack.c.l.b16 %v1745
      %v2067 = vpack.c.b16 %v2036, %v2035
      %v2068 = vpack.c.b16 %v2038, %v2037
      %v2069 = vpack.c.b16 %v2040, %v2039
      %v2070 = vpack.c.b16 %v2042, %v2041
      %v2071 = vpack.c.b16 %v2044, %v2043
      %v2072 = vpack.c.b16 %v2046, %v2045
      %v2073 = vpack.c.b16 %v2048, %v2047
      %v2074 = vpack.c.b16 %v2050, %v2049
      %v2075 = vpack.c.b16 %v2052, %v2051
      %v2076 = vpack.c.b16 %v2054, %v2053
      %v2077 = vpack.c.b16 %v2056, %v2055
      %v2078 = vpack.c.b16 %v2058, %v2057
      %v2079 = vpack.c.b16 %v2060, %v2059
      %v2080 = vpack.c.b16 %v2062, %v2061
      %v2081 = vpack.c.b16 %v2064, %v2063
      %v2082 = vpack.c.b16 %v2066, %v2065
      %v2115 = vunpack.c.l.b16 %v1746
      %v2116 = vunpack.c.l.b16 %v1747
      %v2117 = vunpack.c.l.b16 %v1748
      %v2118 = vunpack.c.l.b16 %v1749
      %v2119 = vunpack.c.l.b16 %v1750
      %v2120 = vunpack.c.l.b16 %v1751
      %v2121 = vunpack.c.l.b16 %v1752
      %v2122 = vunpack.c.l.b16 %v1753
      %v2123 = vunpack.c.l.b16 %v1754
      %v2124 = vunpack.c.l.b16 %v1755
      %v2125 = vunpack.c.l.b16 %v1756
      %v2126 = vunpack.c.l.b16 %v1757
      %v2127 = vunpack.c.l.b16 %v1758
      %v2128 = vunpack.c.l.b16 %v1759
      %v2129 = vunpack.c.l.b16 %v1760
      %v2130 = vunpack.c.l.b16 %v1761
      %v2131 = vpack.c.b16 %v2116, %v2115
      %v2132 = vpack.c.b16 %v2118, %v2117
      %v2133 = vpack.c.b16 %v2120, %v2119
      %v2134 = vpack.c.b16 %v2122, %v2121
      %v2135 = vpack.c.b16 %v2124, %v2123
      %v2136 = vpack.c.b16 %v2126, %v2125
      %v2137 = vpack.c.b16 %v2128, %v2127
      %v2138 = vpack.c.b16 %v2130, %v2129
      %2147 = vmatprep.subr.bf16.mxu0 0
      %2148 = vmatpush1.bf16.msra.mxu0 %v2131
      %2149 = vmatprep.subr.bf16.mxu0 0
      %2150 = vmatpush1.bf16.msra.mxu0 %v2132
      %2151 = vmatprep.subr.bf16.mxu0 0
      %2152 = vmatpush1.bf16.msra.mxu0 %v2133
      %2153 = vmatprep.subr.bf16.mxu0 0
      %2154 = vmatpush1.bf16.msra.mxu0 %v2134
      %2155 = vmatprep.subr.bf16.mxu0 0
      %2156 = vmatpush1.bf16.msra.mxu0 %v2135
      %2157 = vmatprep.subr.bf16.mxu0 0
      %2158 = vmatpush1.bf16.msra.mxu0 %v2136
      %2159 = vmatprep.subr.bf16.mxu0 0
      %2160 = vmatpush1.bf16.msra.mxu0 %v2137
      %2161 = vmatprep.subr.bf16.mxu0 0
      %2162 = vmatpush1.bf16.msra.mxu0 %v2138
      %2163 = vmatprep.subr.bf16.mxu0 0
      %2164 = vmatpush1.bf16.msra.mxu0 0
      %2165 = vmatprep.subr.bf16.mxu0 0
      %2166 = vmatpush1.bf16.msra.mxu0 0
      %2167 = vmatprep.subr.bf16.mxu0 0
      %2168 = vmatpush1.bf16.msra.mxu0 0
      %2169 = vmatprep.subr.bf16.mxu0 0
      %2170 = vmatpush1.bf16.msra.mxu0 0
      %2171 = vmatprep.subr.bf16.mxu0 0
      %2172 = vmatpush1.bf16.msra.mxu0 0
      %2173 = vmatprep.subr.bf16.mxu0 0
      %2174 = vmatpush1.bf16.msra.mxu0 0
      %2175 = vmatprep.subr.bf16.mxu0 0
      %2176 = vmatpush1.bf16.msra.mxu0 0
      %2177 = vmatprep.subr.bf16.mxu0 0
      %2178 = vmatpush1.bf16.msra.mxu0 0
      %2179 = vmatprep.mubr.bf16.mxu0 0
      %2180 = vmatmul.mubr.bf16.gmra.mrb[0].mxu0 %v2067
      %v2181 = vpop.f32.mrb[0].mxu0
      %v2182 = vadd.f32 %v1877, %v2181
      %v2183 = vpop.f32.mrb[0].mxu0
      %v2184 = vpop.f32.mrb[0].mxu0
      %v2185 = vadd.f32 %v1880, %v2184
      %v2186 = vpop.f32.mrb[0].mxu0
      %2187 = vmatprep.mubr.bf16.mxu0 0
      %2188 = vmatmul.mubr.bf16.gmra.mrb[0].mxu0 %v2068
      %v2189 = vpop.f32.mrb[0].mxu0
      %v2190 = vadd.f32 %v1885, %v2189
      %v2191 = vpop.f32.mrb[0].mxu0
      %v2192 = vpop.f32.mrb[0].mxu0
      %v2193 = vadd.f32 %v1888, %v2192
      %v2194 = vpop.f32.mrb[0].mxu0
      %2195 = vmatprep.mubr.bf16.mxu0 0
      %2196 = vmatmul.mubr.bf16.gmra.mrb[0].mxu0 %v2069
      %v2197 = vpop.f32.mrb[0].mxu0
      %v2198 = vadd.f32 %v1893, %v2197
      %v2199 = vpop.f32.mrb[0].mxu0
      %v2200 = vpop.f32.mrb[0].mxu0
      %v2201 = vadd.f32 %v1896, %v2200
      %v2202 = vpop.f32.mrb[0].mxu0
      %2203 = vmatprep.mubr.bf16.mxu0 0
      %2204 = vmatmul.mubr.bf16.gmra.mrb[0].mxu0 %v2070
      %v2205 = vpop.f32.mrb[0].mxu0
      %v2206 = vadd.f32 %v1901, %v2205
      %v2207 = vpop.f32.mrb[0].mxu0
      %v2208 = vpop.f32.mrb[0].mxu0
      %v2209 = vadd.f32 %v1904, %v2208
      %v2210 = vpop.f32.mrb[0].mxu0
      %2211 = vmatprep.mubr.bf16.mxu0 0
      %2212 = vmatmul.mubr.bf16.gmra.mrb[0].mxu0 %v2071
      %v2213 = vpop.f32.mrb[0].mxu0
      %v2214 = vadd.f32 %v1909, %v2213
      %v2215 = vpop.f32.mrb[0].mxu0
      %v2216 = vpop.f32.mrb[0].mxu0
      %v2217 = vadd.f32 %v1912, %v2216
      %v2218 = vpop.f32.mrb[0].mxu0
      %2219 = vmatprep.mubr.bf16.mxu0 0
      %2220 = vmatmul.mubr.bf16.gmra.mrb[0].mxu0 %v2072
      %v2221 = vpop.f32.mrb[0].mxu0
      %v2222 = vadd.f32 %v1917, %v2221
      %v2223 = vpop.f32.mrb[0].mxu0
      %v2224 = vpop.f32.mrb[0].mxu0
      %v2225 = vadd.f32 %v1920, %v2224
      %v2226 = vpop.f32.mrb[0].mxu0
      %2227 = vmatprep.mubr.bf16.mxu0 0
      %2228 = vmatmul.mubr.bf16.gmra.mrb[0].mxu0 %v2073
      %v2229 = vpop.f32.mrb[0].mxu0
      %v2230 = vadd.f32 %v1925, %v2229
      %v2231 = vpop.f32.mrb[0].mxu0
      %v2232 = vpop.f32.mrb[0].mxu0
      %v2233 = vadd.f32 %v1928, %v2232
      %v2234 = vpop.f32.mrb[0].mxu0
      %2235 = vmatprep.mubr.bf16.mxu0 0
      %2236 = vmatmul.mubr.bf16.gmra.mrb[0].mxu0 %v2074
      %v2237 = vpop.f32.mrb[0].mxu0
      %v2238 = vadd.f32 %v1933, %v2237
      %v2239 = vpop.f32.mrb[0].mxu0
      %v2240 = vpop.f32.mrb[0].mxu0
      %v2241 = vadd.f32 %v1936, %v2240
      %v2242 = vpop.f32.mrb[0].mxu0
      %2243 = vmatprep.mubr.bf16.mxu0 0
      %2244 = vmatmul.mubr.bf16.gmra.mrb[0].mxu0 %v2075
      %v2245 = vpop.f32.mrb[0].mxu0
      %v2246 = vadd.f32 %v1941, %v2245
      %v2247 = vpop.f32.mrb[0].mxu0
      %v2248 = vpop.f32.mrb[0].mxu0
      %v2249 = vadd.f32 %v1944, %v2248
      %v2250 = vpop.f32.mrb[0].mxu0
      %2251 = vmatprep.mubr.bf16.mxu0 0
      %2252 = vmatmul.mubr.bf16.gmra.mrb[0].mxu0 %v2076
      %v2253 = vpop.f32.mrb[0].mxu0
      %v2254 = vadd.f32 %v1949, %v2253
      %v2255 = vpop.f32.mrb[0].mxu0
      %v2256 = vpop.f32.mrb[0].mxu0
      %v2257 = vadd.f32 %v1952, %v2256
      %v2258 = vpop.f32.mrb[0].mxu0
      %2259 = vmatprep.mubr.bf16.mxu0 0
      %2260 = vmatmul.mubr.bf16.gmra.mrb[0].mxu0 %v2077
      %v2261 = vpop.f32.mrb[0].mxu0
      %v2262 = vadd.f32 %v1957, %v2261
      %v2263 = vpop.f32.mrb[0].mxu0
      %v2264 = vpop.f32.mrb[0].mxu0
      %v2265 = vadd.f32 %v1960, %v2264
      %v2266 = vpop.f32.mrb[0].mxu0
      %2267 = vmatprep.mubr.bf16.mxu0 0
      %2268 = vmatmul.mubr.bf16.gmra.mrb[0].mxu0 %v2078
      %v2269 = vpop.f32.mrb[0].mxu0
      %v2270 = vadd.f32 %v1965, %v2269
      %v2271 = vpop.f32.mrb[0].mxu0
      %v2272 = vpop.f32.mrb[0].mxu0
      %v2273 = vadd.f32 %v1968, %v2272
      %v2274 = vpop.f32.mrb[0].mxu0
      %2275 = vmatprep.mubr.bf16.mxu0 0
      %2276 = vmatmul.mubr.bf16.gmra.mrb[0].mxu0 %v2079
      %v2277 = vpop.f32.mrb[0].mxu0
      %v2278 = vadd.f32 %v1973, %v2277
      %v2279 = vpop.f32.mrb[0].mxu0
      %v2280 = vpop.f32.mrb[0].mxu0
      %v2281 = vadd.f32 %v1976, %v2280
      %v2282 = vpop.f32.mrb[0].mxu0
      %2283 = vmatprep.mubr.bf16.mxu0 0
      %2284 = vmatmul.mubr.bf16.gmra.mrb[0].mxu0 %v2080
      %v2285 = vpop.f32.mrb[0].mxu0
      %v2286 = vadd.f32 %v1981, %v2285
      %v2287 = vpop.f32.mrb[0].mxu0
      %v2288 = vpop.f32.mrb[0].mxu0
      %v2289 = vadd.f32 %v1984, %v2288
      %v2290 = vpop.f32.mrb[0].mxu0
      %2291 = vmatprep.mubr.bf16.mxu0 0
      %2292 = vmatmul.mubr.bf16.gmra.mrb[0].mxu0 %v2081
      %v2293 = vpop.f32.mrb[0].mxu0
      %v2294 = vadd.f32 %v1989, %v2293
      %v2295 = vpop.f32.mrb[0].mxu0
      %v2296 = vpop.f32.mrb[0].mxu0
      %v2297 = vadd.f32 %v1992, %v2296
      %v2298 = vpop.f32.mrb[0].mxu0
      %2299 = vmatprep.mubr.bf16.mxu0 0
      %2300 = vmatmul.mubr.bf16.gmra.mrb[0].mxu0 %v2082
      %v2301 = vpop.f32.mrb[0].mxu0
      %v2302 = vadd.f32 %v1997, %v2301
      %v2303 = vpop.f32.mrb[0].mxu0
      %v2304 = vpop.f32.mrb[0].mxu0
      %v2305 = vadd.f32 %v2000, %v2304
      %v2306 = vpop.f32.mrb[0].mxu0
      %2307 = vdwg.mxu0
      %v2308 = vld [vmem:[%s6] sm:$0x1]
      %v2310 = vlaneseq
      %v2311 = vshrl.u32 %v2310, 7
      %v2312 = vsub.s32 0, %v2311
      %v2313 = vrot.slane %v2308, %v2312
      %v2315 = vadd.f32 %v2182, %v2313
      %v2316 = vadd.f32 %v2185, %v2313
      %v2317 = vadd.f32 %v2190, %v2313
      %v2318 = vadd.f32 %v2193, %v2313
      %v2319 = vadd.f32 %v2198, %v2313
      %v2320 = vadd.f32 %v2201, %v2313
      %v2321 = vadd.f32 %v2206, %v2313
      %v2322 = vadd.f32 %v2209, %v2313
      %v2323 = vadd.f32 %v2214, %v2313
      %v2324 = vadd.f32 %v2217, %v2313
      %v2325 = vadd.f32 %v2222, %v2313
      %v2326 = vadd.f32 %v2225, %v2313
      %v2327 = vadd.f32 %v2230, %v2313
      %v2328 = vadd.f32 %v2233, %v2313
      %v2329 = vadd.f32 %v2238, %v2313
      %v2330 = vadd.f32 %v2241, %v2313
      %v2331 = vadd.f32 %v2246, %v2313
      %v2332 = vadd.f32 %v2249, %v2313
      %v2333 = vadd.f32 %v2254, %v2313
      %v2334 = vadd.f32 %v2257, %v2313
      %v2335 = vadd.f32 %v2262, %v2313
      %v2336 = vadd.f32 %v2265, %v2313
      %v2337 = vadd.f32 %v2270, %v2313
      %v2338 = vadd.f32 %v2273, %v2313
      %v2339 = vadd.f32 %v2278, %v2313
      %v2340 = vadd.f32 %v2281, %v2313
      %v2341 = vadd.f32 %v2286, %v2313
      %v2342 = vadd.f32 %v2289, %v2313
      %v2343 = vadd.f32 %v2294, %v2313
      %v2344 = vadd.f32 %v2297, %v2313
      %v2345 = vadd.f32 %v2302, %v2313
      %v2346 = vadd.f32 %v2305, %v2313
      %v2347 = vmax.f32 %v2315, 0.0
      %v2348 = vmax.f32 %v2316, 0.0
      %v2349 = vmax.f32 %v2317, 0.0
      %v2350 = vmax.f32 %v2318, 0.0
      %v2351 = vmax.f32 %v2319, 0.0
      %v2352 = vmax.f32 %v2320, 0.0
      %v2353 = vmax.f32 %v2321, 0.0
      %v2354 = vmax.f32 %v2322, 0.0
      %v2355 = vmax.f32 %v2323, 0.0
      %v2356 = vmax.f32 %v2324, 0.0
      %v2357 = vmax.f32 %v2325, 0.0
      %v2358 = vmax.f32 %v2326, 0.0
      %v2359 = vmax.f32 %v2327, 0.0
      %v2360 = vmax.f32 %v2328, 0.0
      %v2361 = vmax.f32 %v2329, 0.0
      %v2362 = vmax.f32 %v2330, 0.0
      %v2363 = vmax.f32 %v2331, 0.0
      %v2364 = vmax.f32 %v2332, 0.0
      %v2365 = vmax.f32 %v2333, 0.0
      %v2366 = vmax.f32 %v2334, 0.0
      %v2367 = vmax.f32 %v2335, 0.0
      %v2368 = vmax.f32 %v2336, 0.0
      %v2369 = vmax.f32 %v2337, 0.0
      %v2370 = vmax.f32 %v2338, 0.0
      %v2371 = vmax.f32 %v2339, 0.0
      %v2372 = vmax.f32 %v2340, 0.0
      %v2373 = vmax.f32 %v2341, 0.0
      %v2374 = vmax.f32 %v2342, 0.0
      %v2375 = vmax.f32 %v2343, 0.0
      %v2376 = vmax.f32 %v2344, 0.0
      %v2377 = vmax.f32 %v2345, 0.0
      %v2378 = vmax.f32 %v2346, 0.0
      %2379 = vxpose.xlu0.b32.start [1/16] %v2347, 128
      %2380 = vxpose.xlu0.b32.cont [2/16] %v2348, 128
      %2381 = vxpose.xlu0.b32.cont [3/16] %v2349, 128
      %2382 = vxpose.xlu0.b32.cont [4/16] %v2350, 128
      %2383 = vxpose.xlu0.b32.cont [5/16] %v2351, 128
      %2384 = vxpose.xlu0.b32.cont [6/16] %v2352, 128
      %2385 = vxpose.xlu0.b32.cont [7/16] %v2353, 128
      %2386 = vxpose.xlu0.b32.cont [8/16] %v2354, 128
      %2387 = vxpose.xlu0.b32.cont [9/16] %v2355, 128
      %2388 = vxpose.xlu0.b32.cont [10/16] %v2356, 128
      %2389 = vxpose.xlu0.b32.cont [11/16] %v2357, 128
      %2390 = vxpose.xlu0.b32.cont [12/16] %v2358, 128
      %2391 = vxpose.xlu0.b32.cont [13/16] %v2359, 128
      %2392 = vxpose.xlu0.b32.cont [14/16] %v2360, 128
      %2393 = vxpose.xlu0.b32.cont [15/16] %v2361, 128
      %2394 = vxpose.xlu0.b32.end [16/16] %v2362, 128
      %v2395 = vpop.trf.xlu0
      %v2396 = vpop.trf.xlu0
      %v2397 = vpop.trf.xlu0
      %v2398 = vpop.trf.xlu0
      %v2399 = vpop.trf.xlu0
      %v2400 = vpop.trf.xlu0
      %v2401 = vpop.trf.xlu0
      %v2402 = vpop.trf.xlu0
      %v2403 = vpop.trf.xlu0
      %v2404 = vpop.trf.xlu0
      %v2405 = vpop.trf.xlu0
      %v2406 = vpop.trf.xlu0
      %v2407 = vpop.trf.xlu0
      %v2408 = vpop.trf.xlu0
      %v2409 = vpop.trf.xlu0
      %v2410 = vpop.trf.xlu0
      %2411 = vxpose.xlu0.b32.start [1/16] %v2363, 128
      %2412 = vxpose.xlu0.b32.cont [2/16] %v2364, 128
      %2413 = vxpose.xlu0.b32.cont [3/16] %v2365, 128
      %2414 = vxpose.xlu0.b32.cont [4/16] %v2366, 128
      %2415 = vxpose.xlu0.b32.cont [5/16] %v2367, 128
      %2416 = vxpose.xlu0.b32.cont [6/16] %v2368, 128
      %2417 = vxpose.xlu0.b32.cont [7/16] %v2369, 128
      %2418 = vxpose.xlu0.b32.cont [8/16] %v2370, 128
      %2419 = vxpose.xlu0.b32.cont [9/16] %v2371, 128
      %2420 = vxpose.xlu0.b32.cont [10/16] %v2372, 128
      %2421 = vxpose.xlu0.b32.cont [11/16] %v2373, 128
      %2422 = vxpose.xlu0.b32.cont [12/16] %v2374, 128
      %2423 = vxpose.xlu0.b32.cont [13/16] %v2375, 128
      %2424 = vxpose.xlu0.b32.cont [14/16] %v2376, 128
      %2425 = vxpose.xlu0.b32.cont [15/16] %v2377, 128
      %2426 = vxpose.xlu0.b32.end [16/16] %v2378, 128
      %v2427 = vpop.trf.xlu0
      %v2428 = vpop.trf.xlu0
      %v2429 = vpop.trf.xlu0
      %v2430 = vpop.trf.xlu0
      %v2431 = vpop.trf.xlu0
      %v2432 = vpop.trf.xlu0
      %v2433 = vpop.trf.xlu0
      %v2434 = vpop.trf.xlu0
      %v2435 = vpop.trf.xlu0
      %v2436 = vpop.trf.xlu0
      %v2437 = vpop.trf.xlu0
      %v2438 = vpop.trf.xlu0
      %v2439 = vpop.trf.xlu0
      %v2440 = vpop.trf.xlu0
      %v2441 = vpop.trf.xlu0
      %v2442 = vpop.trf.xlu0
      %2443 = vst [vmem:[%s392] sm:$0xff] %v2395
      %2444 = vst [vmem:[%s392 + $0x8] sm:$0xff] %v2427
      %2445 = vst [vmem:[%s392 + $0x10] sm:$0xff] %v2396
      %2446 = vst [vmem:[%s392 + $0x18] sm:$0xff] %v2428
      %2447 = vst [vmem:[%s392 + $0x20] sm:$0xff] %v2397
      %2448 = vst [vmem:[%s392 + $0x28] sm:$0xff] %v2429
      %2449 = vst [vmem:[%s392 + $0x30] sm:$0xff] %v2398
      %2450 = vst [vmem:[%s392 + $0x38] sm:$0xff] %v2430
      %2451 = vst [vmem:[%s392 + $0x40] sm:$0xff] %v2399
      %2452 = vst [vmem:[%s392 + $0x48] sm:$0xff] %v2431
      %2453 = vst [vmem:[%s392 + $0x50] sm:$0xff] %v2400
      %2454 = vst [vmem:[%s392 + $0x58] sm:$0xff] %v2432
      %2455 = vst [vmem:[%s392 + $0x60] sm:$0xff] %v2401
      %2456 = vst [vmem:[%s392 + $0x68] sm:$0xff] %v2433
      %2457 = vst [vmem:[%s392 + $0x70] sm:$0xff] %v2402
      %2458 = vst [vmem:[%s392 + $0x78] sm:$0xff] %v2434
      %2459 = vst [vmem:[%s392 + $0x80] sm:$0xff] %v2403
      %2460 = vst [vmem:[%s392 + $0x88] sm:$0xff] %v2435
      %2461 = vst [vmem:[%s392 + $0x90] sm:$0xff] %v2404
      %2462 = vst [vmem:[%s392 + $0x98] sm:$0xff] %v2436
      %2463 = vst [vmem:[%s392 + $0xa0] sm:$0xff] %v2405
      %2464 = vst [vmem:[%s392 + $0xa8] sm:$0xff] %v2437
      %2465 = vst [vmem:[%s392 + $0xb0] sm:$0xff] %v2406
      %2466 = vst [vmem:[%s392 + $0xb8] sm:$0xff] %v2438
      %2467 = vst [vmem:[%s392 + $0xc0] sm:$0xff] %v2407
      %2468 = vst [vmem:[%s392 + $0xc8] sm:$0xff] %v2439
      %2469 = vst [vmem:[%s392 + $0xd0] sm:$0xff] %v2408
      %2470 = vst [vmem:[%s392 + $0xd8] sm:$0xff] %v2440
      %2471 = vst [vmem:[%s392 + $0xe0] sm:$0xff] %v2409
      %2472 = vst [vmem:[%s392 + $0xe8] sm:$0xff] %v2441
      %2473 = vst [vmem:[%s392 + $0xf0] sm:$0xff] %v2410
      %2474 = vst [vmem:[%s392 + $0xf8] sm:$0xff] %v2442
      %s2475 = smul.u32 2, %s23
      %p2476 = scmp.lt.s32.totalorder %s22, 1
      %s2477 = scalar_select %p2476, %s22, 1
      %p2478 = scmp.lt.s32.totalorder %s2475, 1
      %s2479 = scalar_select %p2478, %s2475, 1
      %s2480 = smul.addr %s2477, 32
      %s2481 = sadd.s32 %s2479, %s2480
      %s2482 = smul.addr %s2481, 8
      %s2483 = scalar_lea.vmem %s7, %s2482
      // Predicated region
      $region49: #{pcm_forward.9} parent=47 // pred_check
        %p2484 = pneg %p221
      $region50: #{pcm_forward.9} parent=47 // pred_check_branch
        %2486 = sbr.rel (%p2484) target = $region52
      $region51: #{pcm_forward.9} parent=47 // pred_region
        %s2487 = smul.u32 2, %s23
      $region52: #{pcm_forward.9} parent=47 // pred_fallthru
        _
    $region48: #{pcm_forward.9} parent=5 // pred_fallthru
      _
    %p2488 = scmp.le.s32.totalorder 2, %s13
    // Predicated region
    $region53: #{pcm_forward.9} parent=5 // pred_check
      %p2489 = pneg %p2488
    $region54: #{pcm_forward.9} parent=5 // pred_check_branch
      %2491 = sbr.rel (%p2489) target = $region56
    $region55: #{pcm_forward.9} parent=5 // pred_region
      %s2492 = ssub.s32 %s13, 2
      // Predicated region
      $region57: #{pcm_forward.9} parent=55 // pred_check
        %p2493 = pneg %p227
      $region58: #{pcm_forward.9} parent=55 // pred_check_branch
        %2495 = sbr.rel (%p2493) target = $region60
      $region59: #{pcm_forward.9} parent=55 // pred_region
        %s2496 = smul.u32 2, %s25
        %p2497 = scmp.lt.s32.totalorder %s24, 1
        %s2498 = scalar_select %p2497, %s24, 1
        %p2499 = scmp.lt.s32.totalorder %s2496, 1
        %s2500 = scalar_select %p2499, %s2496, 1
        %s2501 = smul.addr %s2498, 32
        %s2502 = sadd.s32 %s2500, %s2501
        %s2503 = smul.addr %s2502, 8
        %s2504 = scalar_lea.vmem %s7, %s2503
      $region60: #{pcm_forward.9} parent=55 // pred_fallthru
        _
    $region56: #{pcm_forward.9} parent=5 // pred_fallthru
      _
  $region6: #{pcm_forward.9} parent=0 // loop_footer
    %s17 = sadd.s32 1, %s13
  $region7: #{pcm_forward.9} parent=0 // loop_footer_branch
    %12 = sbr.rel target = $region3
  $region8: #{pcm_forward.9} parent=0 // loop_exit
    _

</llo_original>
